<compile_context>
chip_gen: v5e
topology: v5e:2x2
jax: 0.10.0
libtpu: 0.0.40
codegen_flags: <defaults>
</compile_context>

<pallas_src>
import functools
import math

import numpy as np
import jax
import jax.numpy as jnp
from jax.experimental import pallas as pl
from jax.experimental.pallas import tpu as pltpu


def _round_up(x, m):
    return ((x + m - 1) // m) * m


def _tile_cfg():
    """Generation-gated tile sizes: big tiles on v5e/v6e (128 MiB VMEM),
    conservative on v7x / unknown (64 MiB VMEM)."""
    try:
        kind = jax.devices()[0].device_kind.lower()
    except Exception:
        kind = ""
    if ("v5" in kind) or ("v6" in kind):
        return {"tq": 512, "tp": 512, "vmem": 100 * 1024 * 1024}
    return {"tq": 256, "tp": 256, "vmem": None}


_CFG = _tile_cfg()


def _cparams(dims):
    kw = {"dimension_semantics": dims}
    if _CFG["vmem"] is not None:
        kw["vmem_limit_bytes"] = _CFG["vmem"]
    return pltpu.CompilerParams(**kw)


# Column layout of the shared activation slab (all offsets are multiples of the
# per-layer block width so they map to integer out-spec block indices, and every
# block is >=128 lanes wide -> unmasked stores).
SLAB_COLS = 640
_SLAB_COL = {"conv4": 0, "conv3": 256, "conv1": 384, "conv2": 512}
_REAL_OUT = {"conv1": 64, "conv2": 64, "conv3": 128, "conv4": 256}
_PAD_OUT = {"conv1": 128, "conv2": 128, "conv3": 128, "conv4": 256}


# ----------------------------------------------------------------------------
# Pallas kernels
# ----------------------------------------------------------------------------

def knn_kernel(q_ref, xt_ref, xsqh_ref, idx_ref, *, k, idx_bits):
    """Fused pairwise-score + top-k neighbor indices for one query row tile.

    q_ref    : (1, TQ, C) bf16   query points (row tile)
    xt_ref   : (1, C, N)  bf16   all points of this cloud, pre-transposed
    xsqh_ref : (1, 1, N)  f32    precomputed 0.5*||x_j||^2
    idx_ref  : (1, TQ, K) int32  output neighbor indices

    score[i, j] = q_i . x_j - 0.5*||x_j||^2 orders j exactly like
    -||q_i - x_j||^2 (per-row ||q_i||^2 term is constant).  Score and lane id
    are packed into one sortable int32 so every top-k step is a single
    cross-lane max reduce.
    """
    q = q_ref[0]                                              # (TQ, C)
    xt = xt_ref[0]                                            # (C, N)
    inner = jnp.dot(q, xt, preferred_element_type=jnp.float32)  # (TQ, N) on MXU
    score = inner - xsqh_ref[0]                               # (TQ, N) f32

    tq, n = score.shape
    bits = pltpu.bitcast(score, jnp.int32)
    # Order-preserving map from f32 bits to signed-int32 comparisons.
    key = jnp.where(bits < 0, bits ^ jnp.int32(0x7FFFFFFF), bits)
    mask = jnp.int32((1 << idx_bits) - 1)
    keep = jnp.int32(-(1 << idx_bits))                        # ~mask
    lane_ids = jax.lax.broadcasted_iota(jnp.int32, (tq, n), 1)
    # Low bits carry (mask - lane) so exact ties resolve to the smallest index.
    packed = (key & keep) | (mask - lane_ids)

    k_ids = jax.lax.broadcasted_iota(jnp.int32, (tq, k), 1)
    out = jnp.zeros((tq, k), jnp.int32)
    neg_min = jnp.int32(-(2 ** 31))
    for kk in range(k):                                       # static unroll, k small
        best = jnp.max(packed, axis=-1, keepdims=True)        # one XLU reduce / step
        sel = mask - (best & mask)                            # (TQ, 1) selected lane
        out = jnp.where(k_ids == kk, sel, out)
        packed = jnp.where(lane_ids == sel, neg_min, packed)  # mask selected column
    idx_ref[0] = out


def edgeconv_kernel(nbr_ref, ctr_ref, wa_ref, wd_ref, scale_ref, shift_ref,
                    o_ref, *, k, hoist_act):
    """Fused EdgeConv without materialized concat:

        concat(x_j - x_i, x_i) @ W  ==  x_j @ Wa + x_i @ (Wb - Wa)

    nbr_ref : (1, K, TP, C) bf16 gathered neighbors
    ctr_ref : (1, TP, C)    bf16 center points
    wa/wd   : (C, Cout)     bf16
    scale/shift : (1, Cout) f32 (folded BN)
    o_ref   : (1, TP, Cout) bf16 column block of the shared activation slab
    """
    _, kk_, tp, c = nbr_ref.shape
    cout = wa_ref.shape[1]
    nbr = nbr_ref[0].reshape(k * tp, c)                       # layout-preserving merge
    yn = jnp.dot(nbr, wa_ref[...], preferred_element_type=jnp.float32)  # (K*TP, Cout)
    yc = jnp.dot(ctr_ref[0], wd_ref[...], preferred_element_type=jnp.float32)  # (TP, Cout)
    y = yn.reshape(k, tp, cout) + yc[None]
    if hoist_act:
        # folded BN scale > 0 everywhere (checked statically at fold time):
        # affine + LeakyReLU is monotone, so it commutes with max over neighbors.
        y = jnp.max(y, axis=0)
        y = y * scale_ref[...] + shift_ref[...]
        y = jnp.where(y > 0, y, 0.2 * y)
    else:
        y = y * scale_ref[...] + shift_ref[...]
        y = jnp.where(y > 0, y, 0.2 * y)
        y = jnp.max(y, axis=0)
    o_ref[0] = y.astype(o_ref.dtype)


def conv5_pool_kernel(xc_ref, w_ref, scale_ref, shift_ref, o_ref,
                      max_acc, sum_acc, *, n_valid):
    """Fused conv5 (1x1 conv + folded BN + LeakyReLU) + global max/mean pooling.

    Accumulator pattern over the row-tile grid axis; the per-point embedding
    never leaves VMEM.
    """
    i = pl.program_id(1)
    tp = xc_ref.shape[1]

    @pl.when(i == 0)
    def _():
        max_acc[...] = jnp.full_like(max_acc, -jnp.inf)
        sum_acc[...] = jnp.zeros_like(sum_acc)

    y = jnp.dot(xc_ref[0], w_ref[...], preferred_element_type=jnp.float32)
    y = y * scale_ref[...] + shift_ref[...]
    y = jnp.where(y > 0, y, 0.2 * y)                          # (TP, emb) f32

    rows = i * tp + jax.lax.broadcasted_iota(jnp.int32, (tp, 1), 0)
    valid = rows < n_valid
    max_acc[...] = jnp.maximum(
        max_acc[...],
        jnp.max(jnp.where(valid, y, -jnp.inf), axis=0, keepdims=True))
    sum_acc[...] = sum_acc[...] + jnp.sum(
        jnp.where(valid, y, 0.0), axis=0, keepdims=True)

    @pl.when(i == pl.num_programs(1) - 1)
    def _():
        pooled = jnp.concatenate(
            [max_acc[...], sum_acc[...] * (1.0 / n_valid)], axis=-1)
        o_ref[0] = pooled.astype(o_ref.dtype)


def head_kernel(g_ref, w1_ref, s1_ref, b1_ref, w2_ref, s2_ref, b2_ref,
                w3_ref, s3_ref, b3_ref, o_ref):
    """Whole classifier head (lin1 -> lin2 -> lin3) in one kernel; weights fit
    comfortably in VMEM, removing two HBM round trips + launches."""
    h = jnp.dot(g_ref[...], w1_ref[...], preferred_element_type=jnp.float32)
    h = h * s1_ref[...] + b1_ref[...]
    h = jnp.where(h > 0, h, 0.2 * h)
    h = jnp.dot(h.astype(jnp.bfloat16), w2_ref[...],
                preferred_element_type=jnp.float32)
    h = h * s2_ref[...] + b2_ref[...]
    h = jnp.where(h > 0, h, 0.2 * h)
    y = jnp.dot(h.astype(jnp.bfloat16), w3_ref[...],
                preferred_element_type=jnp.float32)
    o_ref[...] = y * s3_ref[...] + b3_ref[...]


# ----------------------------------------------------------------------------
# pallas_call wrappers
# ----------------------------------------------------------------------------

def knn_indices(pts_b, k):
    """pts_b: (B, N, C) bf16 -> (B, N, K) int32 neighbor indices (self included)."""
    B, N, C = pts_b.shape
    tq = min(_CFG["tq"], _round_up(N, 8))
    n_pad = _round_up(N, tq)
    q = pts_b if n_pad == N else jnp.pad(pts_b, ((0, 0), (0, n_pad - N), (0, 0)))
    xt = jnp.swapaxes(pts_b, 1, 2)                            # (B, C, N), one-time
    xf = pts_b.astype(jnp.float32)
    xsqh = 0.5 * jnp.sum(xf * xf, axis=-1)[:, None, :]        # (B, 1, N) f32
    idx_bits = max(1, int(math.ceil(math.log2(max(N, 2)))))
    kern = functools.partial(knn_kernel, k=k, idx_bits=idx_bits)
    idx = pl.pallas_call(
        kern,
        out_shape=jax.ShapeDtypeStruct((B, n_pad, k), jnp.int32),
        grid=(B, n_pad // tq),
        in_specs=[
            pl.BlockSpec((1, tq, C), lambda b, i: (b, i, 0)),
            pl.BlockSpec((1, C, N), lambda b, i: (b, 0, 0)),
            pl.BlockSpec((1, 1, N), lambda b, i: (b, 0, 0)),
        ],
        out_specs=pl.BlockSpec((1, tq, k), lambda b, i: (b, i, 0)),
        compiler_params=_cparams(("parallel", "parallel")),
    )(q, xt, xsqh)
    return idx[:, :N]


def edge_conv_into_slab(nbrs, ctr, wa, wd, scale, shift, *, slab, slab_shape,
                        col_start, hoist, tp):
    """nbrs: (B, K, Np, C) bf16, ctr: (B, Np, C) bf16.  Writes the EdgeConv
    output into slab[:, :, col_start:col_start+Cout].  If slab is None a fresh
    slab buffer is created (other columns are written by later layers)."""
    B, K, Np, C = nbrs.shape
    Cout = wa.shape[1]
    assert col_start % Cout == 0
    col_blk = col_start // Cout

    base = functools.partial(edgeconv_kernel, k=K, hoist_act=hoist)
    in_specs = [
        pl.BlockSpec((1, K, tp, C), lambda b, i: (b, 0, i, 0)),
        pl.BlockSpec((1, tp, C), lambda b, i: (b, i, 0)),
        pl.BlockSpec((C, Cout), lambda b, i: (0, 0)),
        pl.BlockSpec((C, Cout), lambda b, i: (0, 0)),
        pl.BlockSpec((1, Cout), lambda b, i: (0, 0)),
        pl.BlockSpec((1, Cout), lambda b, i: (0, 0)),
    ]
    out_spec = pl.BlockSpec((1, tp, Cout), lambda b, i, cb=col_blk: (b, i, cb))
    args = [nbrs, ctr, wa, wd, scale, shift]
    aliases = {}
    if slab is None:
        kernel = base
    else:
        # Alias the existing slab to the output so other columns are preserved
        # and no fresh buffer / XLA concat is needed.
        kernel = (lambda n, c, a, d, s, h, _slab, o: base(n, c, a, d, s, h, o))
        in_specs.append(pl.BlockSpec((1, tp, Cout),
                                     lambda b, i, cb=col_blk: (b, i, cb)))
        args.append(slab)
        aliases = {6: 0}

    return pl.pallas_call(
        kernel,
        out_shape=jax.ShapeDtypeStruct(slab_shape, jnp.bfloat16),
        grid=(B, Np // tp),
        in_specs=in_specs,
        out_specs=out_spec,
        input_output_aliases=aliases,
        compiler_params=_cparams(("parallel", "parallel")),
    )(*args)


def conv5_global_pool(slab, w5, scale, shift, *, n_valid, tp):
    """slab: (B, Np, 640) bf16 -> (B, 1, 2*emb) bf16 pooled (max ++ mean)."""
    B, Np, Cs = slab.shape
    emb = w5.shape[1]
    kern = functools.partial(conv5_pool_kernel, n_valid=n_valid)
    return pl.pallas_call(
        kern,
        out_shape=jax.ShapeDtypeStruct((B, 1, 2 * emb), jnp.bfloat16),
        grid=(B, Np // tp),
        in_specs=[
            pl.BlockSpec((1, tp, Cs), lambda b, i: (b, i, 0)),
            pl.BlockSpec((Cs, emb), lambda b, i: (0, 0)),
            pl.BlockSpec((1, emb), lambda b, i: (0, 0)),
            pl.BlockSpec((1, emb), lambda b, i: (0, 0)),
        ],
        out_specs=pl.BlockSpec((1, 1, 2 * emb), lambda b, i: (b, 0, 0)),
        scratch_shapes=[pltpu.VMEM((1, emb), jnp.float32),
                        pltpu.VMEM((1, emb), jnp.float32)],
        compiler_params=_cparams(("parallel", "arbitrary")),
    )(slab, w5, scale, shift)


def mlp_head(g, p1, p2, p3):
    """g: (B, 2*emb) bf16 -> (B, n_classes) f32 logits; single fused kernel."""
    B = g.shape[0]
    n_classes = p3[0].shape[1]
    return pl.pallas_call(
        head_kernel,
        out_shape=jax.ShapeDtypeStruct((B, n_classes), jnp.float32),
    )(g, p1[0], p1[1], p1[2], p2[0], p2[1], p2[2], p3[0], p3[1], p3[2])


# ----------------------------------------------------------------------------
# DGCNN forward (glue in plain JAX, hot paths in Pallas)
# ----------------------------------------------------------------------------

def dgcnn_forward(x, params, *, hoist, k=4):
    """x: (B, 3, N) float32 (PyTorch NCW) -> (B, n_classes) float32 logits."""
    B, _, N = x.shape
    TP = min(_CFG["tp"], _round_up(N, 8))
    Np = _round_up(N, TP)
    slab_shape = (B, Np, SLAB_COLS)

    def pad_rows(a, axis):
        if Np == N:
            return a
        pad = [(0, 0)] * a.ndim
        pad[axis] = (0, Np - N)
        return jnp.pad(a, pad)

    feat = jnp.transpose(x, (0, 2, 1)).astype(jnp.bfloat16)   # (B, N, 3)
    slab = None
    for name in ("conv1", "conv2", "conv3", "conv4"):
        idx = knn_indices(feat, k)                            # (B, N, K)   [Pallas]
        # TODO(synk): fuse this XLA gather into the EdgeConv kernel (in-kernel
        #             dynamic gather / scalar-prefetch DMA) to drop the
        #             (B, K, N, C) HBM round trip entirely.
        nbrs = jax.vmap(lambda p, it: p[it])(feat, jnp.swapaxes(idx, 1, 2))
        nbrs = pad_rows(nbrs, 2)                              # (B, K, Np, C) bf16
        ctr = pad_rows(feat, 1)                               # (B, Np, C)   bf16
        wa, wd, s, b = params[name]
        slab = edge_conv_into_slab(nbrs, ctr, wa, wd, s, b,   # [Pallas]
                                   slab=slab, slab_shape=slab_shape,
                                   col_start=_SLAB_COL[name],
                                   hoist=hoist[name], tp=TP)
        if name != "conv4":
            off = _SLAB_COL[name]
            feat = jax.lax.slice(slab, (0, 0, off),
                                 (B, N, off + _REAL_OUT[name]))

    w5, s5, b5 = params["conv5"]
    pooled = conv5_global_pool(slab, w5, s5, b5, n_valid=N, tp=TP)  # [Pallas]
    g = pooled[:, 0, :]                                       # (B, 2*emb) bf16
    logits = mlp_head(g, params["lin1"], params["lin2"], params["lin3"])  # [Pallas]
    return logits


# ----------------------------------------------------------------------------
# Deterministic synthetic parameters (BN folded into (scale, shift); EdgeConv
# weights split into (Wa, Wb - Wa); conv1/conv2/conv5-input widths padded to the
# lane-dense slab layout; activation-hoist flags decided here, statically)
# ----------------------------------------------------------------------------

def init_params(key, emb=64, n_classes=8):
    eps = 1e-5

    def fold_bn(kk, cout):
        k2, k3 = jax.random.split(kk)
        gamma = 1.0 + 0.1 * jax.random.normal(k2, (1, cout), jnp.float32)
        beta = 0.1 * jax.random.normal(k3, (1, cout), jnp.float32)
        scale = gamma / math.sqrt(1.0 + eps)   # eval BN with running stats (0, 1)
        return scale, beta

    def edge_layer(kk, c_in, cout, cout_pad):
        k1, k2 = jax.random.split(kk)
        w = jax.random.normal(k1, (2 * c_in, cout), jnp.float32) / math.sqrt(2 * c_in)
        scale, shift = fold_bn(k2, cout)
        wa = w[:c_in]                      # multiplies x_j
        wd = w[c_in:] - w[:c_in]           # multiplies x_i  (Wb - Wa)
        if cout_pad > cout:
            z = jnp.zeros((c_in, cout_pad - cout), jnp.float32)
            wa = jnp.concatenate([wa, z], axis=1)
            wd = jnp.concatenate([wd, z], axis=1)
            scale = jnp.concatenate(
                [scale, jnp.ones((1, cout_pad - cout), jnp.float32)], axis=1)
            shift = jnp.concatenate(
                [shift, jnp.zeros((1, cout_pad - cout), jnp.float32)], axis=1)
        hoist = bool(np.all(np.asarray(scale) > 0))   # static, decided at fold time
        return (wa.astype(jnp.bfloat16), wd.astype(jnp.bfloat16), scale, shift), hoist

    def lin_layer(kk, cin, cout):
        k1, k2 = jax.random.split(kk)
        w = (jax.random.normal(k1, (cin, cout), jnp.float32)
             / math.sqrt(cin)).astype(jnp.bfloat16)
        scale, shift = fold_bn(k2, cout)
        return w, scale, shift

    keys = jax.random.split(key, 8)
    params, hoist = {}, {}
    params["conv1"], hoist["conv1"] = edge_layer(keys[0], 3, 64, _PAD_OUT["conv1"])
    params["conv2"], hoist["conv2"] = edge_layer(keys[1], 64, 64, _PAD_OUT["conv2"])
    params["conv3"], hoist["conv3"] = edge_layer(keys[2], 64, 128, _PAD_OUT["conv3"])
    params["conv4"], hoist["conv4"] = edge_layer(keys[3], 128, 256, _PAD_OUT["conv4"])

    # conv5: original (512, emb) weight, scattered into the slab column layout
    # [x4 0:256 | x3 256:384 | x1 384:448 | pad | x2 512:576 | pad].
    k1, k2 = jax.random.split(keys[4])
    w5 = jax.random.normal(k1, (512, emb), jnp.float32) / math.sqrt(512)
    zpad = jnp.zeros((64, emb), jnp.float32)
    w5_eff = jnp.concatenate(
        [w5[256:512], w5[128:256], w5[0:64], zpad, w5[64:128], zpad],
        axis=0).astype(jnp.bfloat16)                              # (640, emb)
    s5, b5 = fold_bn(k2, emb)
    params["conv5"] = (w5_eff, s5, b5)

    params["lin1"] = lin_layer(keys[5], 2 * emb, 512)
    params["lin2"] = lin_layer(keys[6], 512, 256)
    kw, kb = jax.random.split(keys[7])
    w3 = (jax.random.normal(kw, (256, n_classes), jnp.float32)
          / math.sqrt(256)).astype(jnp.bfloat16)
    b3 = 0.1 * jax.random.normal(kb, (1, n_classes), jnp.float32)
    params["lin3"] = (w3, jnp.ones((1, n_classes), jnp.float32), b3)  # plain linear
    return params, hoist


if __name__ == "__main__":
    key = jax.random.PRNGKey(0)
    kx, kp = jax.random.split(key)

    B, N, n_classes, emb, K = 2, 16, 8, 64, 4
    x = jax.random.normal(kx, (B, 3, N), jnp.float32)     # (B, 3, N) point cloud
    params, hoist = init_params(kp, emb=emb, n_classes=n_classes)

    fwd = jax.jit(functools.partial(dgcnn_forward, hoist=hoist, k=K))
    logits = jax.block_until_ready(fwd(x, params))
    assert logits.shape == (B, n_classes), logits.shape
    assert bool(jnp.all(jnp.isfinite(logits)))
    print("KERNEL_OK")
</pallas_src>

<mosaic_0001>
module attributes {stable_mosaic.version = 11 : i64} {
  func.func @knn_kernel(%arg0: i32, %arg1: i32, %arg2: memref<1x16x3xbf16, #tpu.memory_space<vmem>>, %arg3: memref<1x3x16xbf16, #tpu.memory_space<vmem>>, %arg4: memref<1x1x16xf32, #tpu.memory_space<vmem>>, %arg5: memref<1x16x4xi32, #tpu.memory_space<vmem>>) attributes {dimension_semantics = [#tpu.dimension_semantics<parallel>, #tpu.dimension_semantics<parallel>], iteration_bounds = array<i64: 2, 1>, scalar_prefetch = 0 : i64, scratch_operands = 0 : i64, tpu.core_type = #tpu.core_type<tc>, window_params = [{transform_indices = @transform_0, window_bounds = array<i64: 1, 16, 3>}, {transform_indices = @transform_1, window_bounds = array<i64: 1, 3, 16>}, {transform_indices = @transform_2, window_bounds = array<i64: 1, 1, 16>}, {transform_indices = @transform_3, window_bounds = array<i64: 1, 16, 4>}]} {
    %c0 = arith.constant 0 : index
    %c0_0 = arith.constant 0 : index
    %c0_1 = arith.constant 0 : index
    %0 = vector.load %arg2[%c0, %c0_0, %c0_1] : memref<1x16x3xbf16, #tpu.memory_space<vmem>>, vector<1x16x3xbf16>
    %1 = vector.shape_cast %0 : vector<1x16x3xbf16> to vector<16x3xbf16>
    %c0_2 = arith.constant 0 : index
    %c0_3 = arith.constant 0 : index
    %c0_4 = arith.constant 0 : index
    %2 = vector.load %arg3[%c0_2, %c0_3, %c0_4] : memref<1x3x16xbf16, #tpu.memory_space<vmem>>, vector<1x3x16xbf16>
    %3 = vector.shape_cast %2 : vector<1x3x16xbf16> to vector<3x16xbf16>
    %cst = arith.constant dense<0.000000e+00> : vector<16x16xf32>
    %4 = tpu.matmul %1, %3, %cst {dimension_numbers = #tpu.dot_dimension_numbers<[1], [0], [0], [1], [0, 0, 1, 1], [], []>} : vector<16x3xbf16>, vector<3x16xbf16>, vector<16x16xf32> -> vector<16x16xf32>
    %c0_5 = arith.constant 0 : index
    %c0_6 = arith.constant 0 : index
    %c0_7 = arith.constant 0 : index
    %5 = vector.load %arg4[%c0_5, %c0_6, %c0_7] : memref<1x1x16xf32, #tpu.memory_space<vmem>>, vector<1x1x16xf32>
    %6 = vector.shape_cast %5 : vector<1x1x16xf32> to vector<1x16xf32>
    %7 = vector.broadcast %6 : vector<1x16xf32> to vector<16x16xf32>
    %8 = arith.subf %4, %7 : vector<16x16xf32>
    %9 = tpu.bitcast %8 : vector<16x16xf32> -> vector<16x16xi32>
    %c0_i32 = arith.constant 0 : i32
    %10 = vector.broadcast %c0_i32 : i32 to vector<16x16xi32>
    %11 = arith.cmpi slt, %9, %10 : vector<16x16xi32>
    %c2147483647_i32 = arith.constant 2147483647 : i32
    %12 = vector.broadcast %c2147483647_i32 : i32 to vector<16x16xi32>
    %13 = arith.xori %9, %12 : vector<16x16xi32>
    %14 = arith.select %11, %13, %9 : vector<16x16xi1>, vector<16x16xi32>
    %15 = tpu.iota {dimensions = array<i32: 1>} : vector<16x16xi32>
    %c-16_i32 = arith.constant -16 : i32
    %16 = vector.broadcast %c-16_i32 : i32 to vector<16x16xi32>
    %17 = arith.andi %14, %16 : vector<16x16xi32>
    %c15_i32 = arith.constant 15 : i32
    %18 = vector.broadcast %c15_i32 : i32 to vector<16x16xi32>
    %19 = arith.subi %18, %15 : vector<16x16xi32>
    %20 = arith.ori %17, %19 : vector<16x16xi32>
    %21 = tpu.iota {dimensions = array<i32: 1>} : vector<16x4xi32>
    %c0_i32_8 = arith.constant 0 : i32
    %22 = vector.broadcast %c0_i32_8 : i32 to vector<16x4xi32>
    %cst_9 = arith.constant dense<-2147483648> : vector<16xi32>
    %23 = vector.multi_reduction <maxsi>, %20, %cst_9 [1] : vector<16x16xi32> to vector<16xi32>
    %24 = vector.shape_cast %23 : vector<16xi32> to vector<16x1xi32>
    %c15_i32_10 = arith.constant 15 : i32
    %25 = vector.broadcast %c15_i32_10 : i32 to vector<16x1xi32>
    %26 = arith.andi %24, %25 : vector<16x1xi32>
    %c15_i32_11 = arith.constant 15 : i32
    %27 = vector.broadcast %c15_i32_11 : i32 to vector<16x1xi32>
    %28 = arith.subi %27, %26 : vector<16x1xi32>
    %c0_i32_12 = arith.constant 0 : i32
    %29 = vector.broadcast %c0_i32_12 : i32 to vector<16x4xi32>
    %30 = arith.cmpi eq, %21, %29 : vector<16x4xi32>
    %31 = vector.shape_cast %28 : vector<16x1xi32> to vector<16x1xi32>
    %32 = vector.broadcast %31 : vector<16x1xi32> to vector<16x4xi32>
    %33 = arith.select %30, %32, %22 : vector<16x4xi1>, vector<16x4xi32>
    %34 = vector.broadcast %28 : vector<16x1xi32> to vector<16x16xi32>
    %35 = arith.cmpi eq, %15, %34 : vector<16x16xi32>
    %c-2147483648_i32 = arith.constant -2147483648 : i32
    %36 = vector.broadcast %c-2147483648_i32 : i32 to vector<16x16xi32>
    %37 = arith.select %35, %36, %20 : vector<16x16xi1>, vector<16x16xi32>
    %cst_13 = arith.constant dense<-2147483648> : vector<16xi32>
    %38 = vector.multi_reduction <maxsi>, %37, %cst_13 [1] : vector<16x16xi32> to vector<16xi32>
    %39 = vector.shape_cast %38 : vector<16xi32> to vector<16x1xi32>
    %c15_i32_14 = arith.constant 15 : i32
    %40 = vector.broadcast %c15_i32_14 : i32 to vector<16x1xi32>
    %41 = arith.andi %39, %40 : vector<16x1xi32>
    %c15_i32_15 = arith.constant 15 : i32
    %42 = vector.broadcast %c15_i32_15 : i32 to vector<16x1xi32>
    %43 = arith.subi %42, %41 : vector<16x1xi32>
    %c1_i32 = arith.constant 1 : i32
    %44 = vector.broadcast %c1_i32 : i32 to vector<16x4xi32>
    %45 = arith.cmpi eq, %21, %44 : vector<16x4xi32>
    %46 = vector.shape_cast %43 : vector<16x1xi32> to vector<16x1xi32>
    %47 = vector.broadcast %46 : vector<16x1xi32> to vector<16x4xi32>
    %48 = arith.select %45, %47, %33 : vector<16x4xi1>, vector<16x4xi32>
    %49 = vector.broadcast %43 : vector<16x1xi32> to vector<16x16xi32>
    %50 = arith.cmpi eq, %15, %49 : vector<16x16xi32>
    %c-2147483648_i32_16 = arith.constant -2147483648 : i32
    %51 = vector.broadcast %c-2147483648_i32_16 : i32 to vector<16x16xi32>
    %52 = arith.select %50, %51, %37 : vector<16x16xi1>, vector<16x16xi32>
    %cst_17 = arith.constant dense<-2147483648> : vector<16xi32>
    %53 = vector.multi_reduction <maxsi>, %52, %cst_17 [1] : vector<16x16xi32> to vector<16xi32>
    %54 = vector.shape_cast %53 : vector<16xi32> to vector<16x1xi32>
    %c15_i32_18 = arith.constant 15 : i32
    %55 = vector.broadcast %c15_i32_18 : i32 to vector<16x1xi32>
    %56 = arith.andi %54, %55 : vector<16x1xi32>
    %c15_i32_19 = arith.constant 15 : i32
    %57 = vector.broadcast %c15_i32_19 : i32 to vector<16x1xi32>
    %58 = arith.subi %57, %56 : vector<16x1xi32>
    %c2_i32 = arith.constant 2 : i32
    %59 = vector.broadcast %c2_i32 : i32 to vector<16x4xi32>
    %60 = arith.cmpi eq, %21, %59 : vector<16x4xi32>
    %61 = vector.shape_cast %58 : vector<16x1xi32> to vector<16x1xi32>
    %62 = vector.broadcast %61 : vector<16x1xi32> to vector<16x4xi32>
    %63 = arith.select %60, %62, %48 : vector<16x4xi1>, vector<16x4xi32>
    %64 = vector.broadcast %58 : vector<16x1xi32> to vector<16x16xi32>
    %65 = arith.cmpi eq, %15, %64 : vector<16x16xi32>
    %c-2147483648_i32_20 = arith.constant -2147483648 : i32
    %66 = vector.broadcast %c-2147483648_i32_20 : i32 to vector<16x16xi32>
    %67 = arith.select %65, %66, %52 : vector<16x16xi1>, vector<16x16xi32>
    %cst_21 = arith.constant dense<-2147483648> : vector<16xi32>
    %68 = vector.multi_reduction <maxsi>, %67, %cst_21 [1] : vector<16x16xi32> to vector<16xi32>
    %69 = vector.shape_cast %68 : vector<16xi32> to vector<16x1xi32>
    %c15_i32_22 = arith.constant 15 : i32
    %70 = vector.broadcast %c15_i32_22 : i32 to vector<16x1xi32>
    %71 = arith.andi %69, %70 : vector<16x1xi32>
    %c15_i32_23 = arith.constant 15 : i32
    %72 = vector.broadcast %c15_i32_23 : i32 to vector<16x1xi32>
    %73 = arith.subi %72, %71 : vector<16x1xi32>
    %c3_i32 = arith.constant 3 : i32
    %74 = vector.broadcast %c3_i32 : i32 to vector<16x4xi32>
    %75 = arith.cmpi eq, %21, %74 : vector<16x4xi32>
    %76 = vector.shape_cast %73 : vector<16x1xi32> to vector<16x1xi32>
    %77 = vector.broadcast %76 : vector<16x1xi32> to vector<16x4xi32>
    %78 = arith.select %75, %77, %63 : vector<16x4xi1>, vector<16x4xi32>
    %c0_24 = arith.constant 0 : index
    %c0_25 = arith.constant 0 : index
    %c0_26 = arith.constant 0 : index
    %79 = vector.load %arg5[%c0_24, %c0_25, %c0_26] : memref<1x16x4xi32, #tpu.memory_space<vmem>>, vector<1x16x4xi32>
    %80 = vector.shape_cast %79 : vector<1x16x4xi32> to vector<16x4xi32>
    %81 = vector.shape_cast %78 : vector<16x4xi32> to vector<1x16x4xi32>
    tpu.vector_store %arg5[%c0_24, %c0_25, %c0_26], %81 {strides = array<i32>} : memref<1x16x4xi32, #tpu.memory_space<vmem>>, vector<1x16x4xi32>,
    return
  }
  func.func @transform_0(%arg0: i32, %arg1: i32) -> (i32, i32, i32) {
    %c0_i32 = arith.constant 0 : i32
    %c0_i32_0 = arith.constant 0 : i32
    return %arg0, %arg1, %c0_i32 : i32, i32, i32
  }
  func.func @transform_1(%arg0: i32, %arg1: i32) -> (i32, i32, i32) {
    %c0_i32 = arith.constant 0 : i32
    %c0_i32_0 = arith.constant 0 : i32
    %c0_i32_1 = arith.constant 0 : i32
    return %arg0, %c0_i32, %c0_i32_0 : i32, i32, i32
  }
  func.func @transform_2(%arg0: i32, %arg1: i32) -> (i32, i32, i32) {
    %c0_i32 = arith.constant 0 : i32
    %c0_i32_0 = arith.constant 0 : i32
    %c0_i32_1 = arith.constant 0 : i32
    return %arg0, %c0_i32, %c0_i32_0 : i32, i32, i32
  }
  func.func @transform_3(%arg0: i32, %arg1: i32) -> (i32, i32, i32) {
    %c0_i32 = arith.constant 0 : i32
    %c0_i32_0 = arith.constant 0 : i32
    return %arg0, %arg1, %c0_i32 : i32, i32, i32
  }
}

module attributes {stable_mosaic.version = 11 : i64} {
  func.func @knn_kernel(%arg0: i32, %arg1: i32, %arg2: memref<1x16x64xbf16, #tpu.memory_space<vmem>>, %arg3: memref<1x64x16xbf16, #tpu.memory_space<vmem>>, %arg4: memref<1x1x16xf32, #tpu.memory_space<vmem>>, %arg5: memref<1x16x4xi32, #tpu.memory_space<vmem>>) attributes {dimension_semantics = [#tpu.dimension_semantics<parallel>, #tpu.dimension_semantics<parallel>], iteration_bounds = array<i64: 2, 1>, scalar_prefetch = 0 : i64, scratch_operands = 0 : i64, tpu.core_type = #tpu.core_type<tc>, window_params = [{transform_indices = @transform_0, window_bounds = array<i64: 1, 16, 64>}, {transform_indices = @transform_1, window_bounds = array<i64: 1, 64, 16>}, {transform_indices = @transform_2, window_bounds = array<i64: 1, 1, 16>}, {transform_indices = @transform_3, window_bounds = array<i64: 1, 16, 4>}]} {
    %c0 = arith.constant 0 : index
    %c0_0 = arith.constant 0 : index
    %c0_1 = arith.constant 0 : index
    %0 = vector.load %arg2[%c0, %c0_0, %c0_1] : memref<1x16x64xbf16, #tpu.memory_space<vmem>>, vector<1x16x64xbf16>
    %1 = vector.shape_cast %0 : vector<1x16x64xbf16> to vector<16x64xbf16>
    %c0_2 = arith.constant 0 : index
    %c0_3 = arith.constant 0 : index
    %c0_4 = arith.constant 0 : index
    %2 = vector.load %arg3[%c0_2, %c0_3, %c0_4] : memref<1x64x16xbf16, #tpu.memory_space<vmem>>, vector<1x64x16xbf16>
    %3 = vector.shape_cast %2 : vector<1x64x16xbf16> to vector<64x16xbf16>
    %cst = arith.constant dense<0.000000e+00> : vector<16x16xf32>
    %4 = tpu.matmul %1, %3, %cst {dimension_numbers = #tpu.dot_dimension_numbers<[1], [0], [0], [1], [0, 0, 1, 1], [], []>} : vector<16x64xbf16>, vector<64x16xbf16>, vector<16x16xf32> -> vector<16x16xf32>
    %c0_5 = arith.constant 0 : index
    %c0_6 = arith.constant 0 : index
    %c0_7 = arith.constant 0 : index
    %5 = vector.load %arg4[%c0_5, %c0_6, %c0_7] : memref<1x1x16xf32, #tpu.memory_space<vmem>>, vector<1x1x16xf32>
    %6 = vector.shape_cast %5 : vector<1x1x16xf32> to vector<1x16xf32>
    %7 = vector.broadcast %6 : vector<1x16xf32> to vector<16x16xf32>
    %8 = arith.subf %4, %7 : vector<16x16xf32>
    %9 = tpu.bitcast %8 : vector<16x16xf32> -> vector<16x16xi32>
    %c0_i32 = arith.constant 0 : i32
    %10 = vector.broadcast %c0_i32 : i32 to vector<16x16xi32>
    %11 = arith.cmpi slt, %9, %10 : vector<16x16xi32>
    %c2147483647_i32 = arith.constant 2147483647 : i32
    %12 = vector.broadcast %c2147483647_i32 : i32 to vector<16x16xi32>
    %13 = arith.xori %9, %12 : vector<16x16xi32>
    %14 = arith.select %11, %13, %9 : vector<16x16xi1>, vector<16x16xi32>
    %15 = tpu.iota {dimensions = array<i32: 1>} : vector<16x16xi32>
    %c-16_i32 = arith.constant -16 : i32
    %16 = vector.broadcast %c-16_i32 : i32 to vector<16x16xi32>
    %17 = arith.andi %14, %16 : vector<16x16xi32>
    %c15_i32 = arith.constant 15 : i32
    %18 = vector.broadcast %c15_i32 : i32 to vector<16x16xi32>
    %19 = arith.subi %18, %15 : vector<16x16xi32>
    %20 = arith.ori %17, %19 : vector<16x16xi32>
    %21 = tpu.iota {dimensions = array<i32: 1>} : vector<16x4xi32>
    %c0_i32_8 = arith.constant 0 : i32
    %22 = vector.broadcast %c0_i32_8 : i32 to vector<16x4xi32>
    %cst_9 = arith.constant dense<-2147483648> : vector<16xi32>
    %23 = vector.multi_reduction <maxsi>, %20, %cst_9 [1] : vector<16x16xi32> to vector<16xi32>
    %24 = vector.shape_cast %23 : vector<16xi32> to vector<16x1xi32>
    %c15_i32_10 = arith.constant 15 : i32
    %25 = vector.broadcast %c15_i32_10 : i32 to vector<16x1xi32>
    %26 = arith.andi %24, %25 : vector<16x1xi32>
    %c15_i32_11 = arith.constant 15 : i32
    %27 = vector.broadcast %c15_i32_11 : i32 to vector<16x1xi32>
    %28 = arith.subi %27, %26 : vector<16x1xi32>
    %c0_i32_12 = arith.constant 0 : i32
    %29 = vector.broadcast %c0_i32_12 : i32 to vector<16x4xi32>
    %30 = arith.cmpi eq, %21, %29 : vector<16x4xi32>
    %31 = vector.shape_cast %28 : vector<16x1xi32> to vector<16x1xi32>
    %32 = vector.broadcast %31 : vector<16x1xi32> to vector<16x4xi32>
    %33 = arith.select %30, %32, %22 : vector<16x4xi1>, vector<16x4xi32>
    %34 = vector.broadcast %28 : vector<16x1xi32> to vector<16x16xi32>
    %35 = arith.cmpi eq, %15, %34 : vector<16x16xi32>
    %c-2147483648_i32 = arith.constant -2147483648 : i32
    %36 = vector.broadcast %c-2147483648_i32 : i32 to vector<16x16xi32>
    %37 = arith.select %35, %36, %20 : vector<16x16xi1>, vector<16x16xi32>
    %cst_13 = arith.constant dense<-2147483648> : vector<16xi32>
    %38 = vector.multi_reduction <maxsi>, %37, %cst_13 [1] : vector<16x16xi32> to vector<16xi32>
    %39 = vector.shape_cast %38 : vector<16xi32> to vector<16x1xi32>
    %c15_i32_14 = arith.constant 15 : i32
    %40 = vector.broadcast %c15_i32_14 : i32 to vector<16x1xi32>
    %41 = arith.andi %39, %40 : vector<16x1xi32>
    %c15_i32_15 = arith.constant 15 : i32
    %42 = vector.broadcast %c15_i32_15 : i32 to vector<16x1xi32>
    %43 = arith.subi %42, %41 : vector<16x1xi32>
    %c1_i32 = arith.constant 1 : i32
    %44 = vector.broadcast %c1_i32 : i32 to vector<16x4xi32>
    %45 = arith.cmpi eq, %21, %44 : vector<16x4xi32>
    %46 = vector.shape_cast %43 : vector<16x1xi32> to vector<16x1xi32>
    %47 = vector.broadcast %46 : vector<16x1xi32> to vector<16x4xi32>
    %48 = arith.select %45, %47, %33 : vector<16x4xi1>, vector<16x4xi32>
    %49 = vector.broadcast %43 : vector<16x1xi32> to vector<16x16xi32>
    %50 = arith.cmpi eq, %15, %49 : vector<16x16xi32>
    %c-2147483648_i32_16 = arith.constant -2147483648 : i32
    %51 = vector.broadcast %c-2147483648_i32_16 : i32 to vector<16x16xi32>
    %52 = arith.select %50, %51, %37 : vector<16x16xi1>, vector<16x16xi32>
    %cst_17 = arith.constant dense<-2147483648> : vector<16xi32>
    %53 = vector.multi_reduction <maxsi>, %52, %cst_17 [1] : vector<16x16xi32> to vector<16xi32>
    %54 = vector.shape_cast %53 : vector<16xi32> to vector<16x1xi32>
    %c15_i32_18 = arith.constant 15 : i32
    %55 = vector.broadcast %c15_i32_18 : i32 to vector<16x1xi32>
    %56 = arith.andi %54, %55 : vector<16x1xi32>
    %c15_i32_19 = arith.constant 15 : i32
    %57 = vector.broadcast %c15_i32_19 : i32 to vector<16x1xi32>
    %58 = arith.subi %57, %56 : vector<16x1xi32>
    %c2_i32 = arith.constant 2 : i32
    %59 = vector.broadcast %c2_i32 : i32 to vector<16x4xi32>
    %60 = arith.cmpi eq, %21, %59 : vector<16x4xi32>
    %61 = vector.shape_cast %58 : vector<16x1xi32> to vector<16x1xi32>
    %62 = vector.broadcast %61 : vector<16x1xi32> to vector<16x4xi32>
    %63 = arith.select %60, %62, %48 : vector<16x4xi1>, vector<16x4xi32>
    %64 = vector.broadcast %58 : vector<16x1xi32> to vector<16x16xi32>
    %65 = arith.cmpi eq, %15, %64 : vector<16x16xi32>
    %c-2147483648_i32_20 = arith.constant -2147483648 : i32
    %66 = vector.broadcast %c-2147483648_i32_20 : i32 to vector<16x16xi32>
    %67 = arith.select %65, %66, %52 : vector<16x16xi1>, vector<16x16xi32>
    %cst_21 = arith.constant dense<-2147483648> : vector<16xi32>
    %68 = vector.multi_reduction <maxsi>, %67, %cst_21 [1] : vector<16x16xi32> to vector<16xi32>
    %69 = vector.shape_cast %68 : vector<16xi32> to vector<16x1xi32>
    %c15_i32_22 = arith.constant 15 : i32
    %70 = vector.broadcast %c15_i32_22 : i32 to vector<16x1xi32>
    %71 = arith.andi %69, %70 : vector<16x1xi32>
    %c15_i32_23 = arith.constant 15 : i32
    %72 = vector.broadcast %c15_i32_23 : i32 to vector<16x1xi32>
    %73 = arith.subi %72, %71 : vector<16x1xi32>
    %c3_i32 = arith.constant 3 : i32
    %74 = vector.broadcast %c3_i32 : i32 to vector<16x4xi32>
    %75 = arith.cmpi eq, %21, %74 : vector<16x4xi32>
    %76 = vector.shape_cast %73 : vector<16x1xi32> to vector<16x1xi32>
    %77 = vector.broadcast %76 : vector<16x1xi32> to vector<16x4xi32>
    %78 = arith.select %75, %77, %63 : vector<16x4xi1>, vector<16x4xi32>
    %c0_24 = arith.constant 0 : index
    %c0_25 = arith.constant 0 : index
    %c0_26 = arith.constant 0 : index
    %79 = vector.load %arg5[%c0_24, %c0_25, %c0_26] : memref<1x16x4xi32, #tpu.memory_space<vmem>>, vector<1x16x4xi32>
    %80 = vector.shape_cast %79 : vector<1x16x4xi32> to vector<16x4xi32>
    %81 = vector.shape_cast %78 : vector<16x4xi32> to vector<1x16x4xi32>
    tpu.vector_store %arg5[%c0_24, %c0_25, %c0_26], %81 {strides = array<i32>} : memref<1x16x4xi32, #tpu.memory_space<vmem>>, vector<1x16x4xi32>,
    return
  }
  func.func @transform_0(%arg0: i32, %arg1: i32) -> (i32, i32, i32) {
    %c0_i32 = arith.constant 0 : i32
    %c0_i32_0 = arith.constant 0 : i32
    return %arg0, %arg1, %c0_i32 : i32, i32, i32
  }
  func.func @transform_1(%arg0: i32, %arg1: i32) -> (i32, i32, i32) {
    %c0_i32 = arith.constant 0 : i32
    %c0_i32_0 = arith.constant 0 : i32
    %c0_i32_1 = arith.constant 0 : i32
    return %arg0, %c0_i32, %c0_i32_0 : i32, i32, i32
  }
  func.func @transform_2(%arg0: i32, %arg1: i32) -> (i32, i32, i32) {
    %c0_i32 = arith.constant 0 : i32
    %c0_i32_0 = arith.constant 0 : i32
    %c0_i32_1 = arith.constant 0 : i32
    return %arg0, %c0_i32, %c0_i32_0 : i32, i32, i32
  }
  func.func @transform_3(%arg0: i32, %arg1: i32) -> (i32, i32, i32) {
    %c0_i32 = arith.constant 0 : i32
    %c0_i32_0 = arith.constant 0 : i32
    return %arg0, %arg1, %c0_i32 : i32, i32, i32
  }
}

module attributes {stable_mosaic.version = 11 : i64} {
  func.func @edgeconv_kernel(%arg0: i32, %arg1: i32, %arg2: memref<1x4x16x3xbf16, #tpu.memory_space<vmem>>, %arg3: memref<1x16x3xbf16, #tpu.memory_space<vmem>>, %arg4: memref<3x128xbf16, #tpu.memory_space<vmem>>, %arg5: memref<3x128xbf16, #tpu.memory_space<vmem>>, %arg6: memref<1x128xf32, #tpu.memory_space<vmem>>, %arg7: memref<1x128xf32, #tpu.memory_space<vmem>>, %arg8: memref<1x16x128xbf16, #tpu.memory_space<vmem>>) attributes {dimension_semantics = [#tpu.dimension_semantics<parallel>, #tpu.dimension_semantics<parallel>], iteration_bounds = array<i64: 2, 1>, scalar_prefetch = 0 : i64, scratch_operands = 0 : i64, tpu.core_type = #tpu.core_type<tc>, window_params = [{transform_indices = @transform_0, window_bounds = array<i64: 1, 4, 16, 3>}, {transform_indices = @transform_1, window_bounds = array<i64: 1, 16, 3>}, {pipeline_mode = #tpu.pipeline_mode<synchronous>, transform_indices = @transform_2, window_bounds = array<i64: 3, 128>}, {pipeline_mode = #tpu.pipeline_mode<synchronous>, transform_indices = @transform_3, window_bounds = array<i64: 3, 128>}, {pipeline_mode = #tpu.pipeline_mode<synchronous>, transform_indices = @transform_4, window_bounds = array<i64: 1, 128>}, {pipeline_mode = #tpu.pipeline_mode<synchronous>, transform_indices = @transform_5, window_bounds = array<i64: 1, 128>}, {transform_indices = @transform_6, window_bounds = array<i64: 1, 16, 128>}]} {
    %c0 = arith.constant 0 : index
    %c0_0 = arith.constant 0 : index
    %c0_1 = arith.constant 0 : index
    %c0_2 = arith.constant 0 : index
    %0 = vector.load %arg2[%c0, %c0_0, %c0_1, %c0_2] : memref<1x4x16x3xbf16, #tpu.memory_space<vmem>>, vector<1x4x16x3xbf16>
    %1 = vector.shape_cast %0 : vector<1x4x16x3xbf16> to vector<4x16x3xbf16>
    %2 = vector.shape_cast %1 : vector<4x16x3xbf16> to vector<64x3xbf16>
    %c0_3 = arith.constant 0 : index
    %c0_4 = arith.constant 0 : index
    %3 = vector.load %arg4[%c0_3, %c0_4] : memref<3x128xbf16, #tpu.memory_space<vmem>>, vector<3x128xbf16>
    %cst = arith.constant dense<0.000000e+00> : vector<64x128xf32>
    %4 = tpu.matmul %2, %3, %cst {dimension_numbers = #tpu.dot_dimension_numbers<[1], [0], [0], [1], [0, 0, 1, 1], [], []>} : vector<64x3xbf16>, vector<3x128xbf16>, vector<64x128xf32> -> vector<64x128xf32>
    %c0_5 = arith.constant 0 : index
    %c0_6 = arith.constant 0 : index
    %c0_7 = arith.constant 0 : index
    %5 = vector.load %arg3[%c0_5, %c0_6, %c0_7] : memref<1x16x3xbf16, #tpu.memory_space<vmem>>, vector<1x16x3xbf16>
    %6 = vector.shape_cast %5 : vector<1x16x3xbf16> to vector<16x3xbf16>
    %c0_8 = arith.constant 0 : index
    %c0_9 = arith.constant 0 : index
    %7 = vector.load %arg5[%c0_8, %c0_9] : memref<3x128xbf16, #tpu.memory_space<vmem>>, vector<3x128xbf16>
    %cst_10 = arith.constant dense<0.000000e+00> : vector<16x128xf32>
    %8 = tpu.matmul %6, %7, %cst_10 {dimension_numbers = #tpu.dot_dimension_numbers<[1], [0], [0], [1], [0, 0, 1, 1], [], []>} : vector<16x3xbf16>, vector<3x128xbf16>, vector<16x128xf32> -> vector<16x128xf32>
    %9 = vector.shape_cast %4 : vector<64x128xf32> to vector<4x16x128xf32>
    %10 = vector.shape_cast %8 : vector<16x128xf32> to vector<1x16x128xf32>
    %11 = vector.broadcast %10 : vector<1x16x128xf32> to vector<4x16x128xf32>
    %12 = arith.addf %9, %11 : vector<4x16x128xf32>
    %cst_11 = arith.constant dense<0xFF800000> : vector<16x128xf32>
    %13 = vector.multi_reduction <maximumf>, %12, %cst_11 [0] : vector<4x16x128xf32> to vector<16x128xf32>
    %c0_12 = arith.constant 0 : index
    %c0_13 = arith.constant 0 : index
    %14 = vector.load %arg6[%c0_12, %c0_13] : memref<1x128xf32, #tpu.memory_space<vmem>>, vector<1x128xf32>
    %15 = vector.broadcast %14 : vector<1x128xf32> to vector<16x128xf32>
    %16 = arith.mulf %13, %15 : vector<16x128xf32>
    %c0_14 = arith.constant 0 : index
    %c0_15 = arith.constant 0 : index
    %17 = vector.load %arg7[%c0_14, %c0_15] : memref<1x128xf32, #tpu.memory_space<vmem>>, vector<1x128xf32>
    %18 = vector.broadcast %17 : vector<1x128xf32> to vector<16x128xf32>
    %19 = arith.addf %16, %18 : vector<16x128xf32>
    %cst_16 = arith.constant 0.000000e+00 : f32
    %20 = vector.broadcast %cst_16 : f32 to vector<16x128xf32>
    %21 = arith.cmpf ogt, %19, %20 : vector<16x128xf32>
    %cst_17 = arith.constant 2.000000e-01 : f32
    %22 = vector.broadcast %cst_17 : f32 to vector<16x128xf32>
    %23 = arith.mulf %22, %19 : vector<16x128xf32>
    %24 = arith.select %21, %19, %23 : vector<16x128xi1>, vector<16x128xf32>
    %25 = arith.truncf %24 : vector<16x128xf32> to vector<16x128xbf16>
    %c0_18 = arith.constant 0 : index
    %c0_19 = arith.constant 0 : index
    %c0_20 = arith.constant 0 : index
    %26 = vector.load %arg8[%c0_18, %c0_19, %c0_20] : memref<1x16x128xbf16, #tpu.memory_space<vmem>>, vector<1x16x128xbf16>
    %27 = vector.shape_cast %26 : vector<1x16x128xbf16> to vector<16x128xbf16>
    %28 = vector.shape_cast %25 : vector<16x128xbf16> to vector<1x16x128xbf16>
    tpu.vector_store %arg8[%c0_18, %c0_19, %c0_20], %28 {strides = array<i32>} : memref<1x16x128xbf16, #tpu.memory_space<vmem>>, vector<1x16x128xbf16>,
    return
  }
  func.func @transform_0(%arg0: i32, %arg1: i32) -> (i32, i32, i32, i32) {
    %c0_i32 = arith.constant 0 : i32
    %c0_i32_0 = arith.constant 0 : i32
    %c0_i32_1 = arith.constant 0 : i32
    return %arg0, %c0_i32, %arg1, %c0_i32_0 : i32, i32, i32, i32
  }
  func.func @transform_1(%arg0: i32, %arg1: i32) -> (i32, i32, i32) {
    %c0_i32 = arith.constant 0 : i32
    %c0_i32_0 = arith.constant 0 : i32
    return %arg0, %arg1, %c0_i32 : i32, i32, i32
  }
  func.func @transform_2(%arg0: i32, %arg1: i32) -> (i32, i32) {
    %c0_i32 = arith.constant 0 : i32
    %c0_i32_0 = arith.constant 0 : i32
    %c0_i32_1 = arith.constant 0 : i32
    return %c0_i32, %c0_i32_0 : i32, i32
  }
  func.func @transform_3(%arg0: i32, %arg1: i32) -> (i32, i32) {
    %c0_i32 = arith.constant 0 : i32
    %c0_i32_0 = arith.constant 0 : i32
    %c0_i32_1 = arith.constant 0 : i32
    return %c0_i32, %c0_i32_0 : i32, i32
  }
  func.func @transform_4(%arg0: i32, %arg1: i32) -> (i32, i32) {
    %c0_i32 = arith.constant 0 : i32
    %c0_i32_0 = arith.constant 0 : i32
    %c0_i32_1 = arith.constant 0 : i32
    return %c0_i32, %c0_i32_0 : i32, i32
  }
  func.func @transform_5(%arg0: i32, %arg1: i32) -> (i32, i32) {
    %c0_i32 = arith.constant 0 : i32
    %c0_i32_0 = arith.constant 0 : i32
    %c0_i32_1 = arith.constant 0 : i32
    return %c0_i32, %c0_i32_0 : i32, i32
  }
  func.func @transform_6(%arg0: i32, %arg1: i32) -> (i32, i32, i32) {
    %c3_i32 = arith.constant 3 : i32
    %c0_i32 = arith.constant 0 : i32
    return %arg0, %arg1, %c3_i32 : i32, i32, i32
  }
}

module attributes {stable_mosaic.version = 11 : i64} {
  func.func @_lambda_(%arg0: i32, %arg1: i32, %arg2: memref<1x4x16x64xbf16, #tpu.memory_space<vmem>>, %arg3: memref<1x16x64xbf16, #tpu.memory_space<vmem>>, %arg4: memref<64x128xbf16, #tpu.memory_space<vmem>>, %arg5: memref<64x128xbf16, #tpu.memory_space<vmem>>, %arg6: memref<1x128xf32, #tpu.memory_space<vmem>>, %arg7: memref<1x128xf32, #tpu.memory_space<vmem>>, %arg8: memref<1x16x128xbf16, #tpu.memory_space<vmem>>, %arg9: memref<1x16x128xbf16, #tpu.memory_space<vmem>>) attributes {dimension_semantics = [#tpu.dimension_semantics<parallel>, #tpu.dimension_semantics<parallel>], iteration_bounds = array<i64: 2, 1>, scalar_prefetch = 0 : i64, scratch_operands = 0 : i64, tpu.core_type = #tpu.core_type<tc>, window_params = [{transform_indices = @transform_0, window_bounds = array<i64: 1, 4, 16, 64>}, {transform_indices = @transform_1, window_bounds = array<i64: 1, 16, 64>}, {pipeline_mode = #tpu.pipeline_mode<synchronous>, transform_indices = @transform_2, window_bounds = array<i64: 64, 128>}, {pipeline_mode = #tpu.pipeline_mode<synchronous>, transform_indices = @transform_3, window_bounds = array<i64: 64, 128>}, {pipeline_mode = #tpu.pipeline_mode<synchronous>, transform_indices = @transform_4, window_bounds = array<i64: 1, 128>}, {pipeline_mode = #tpu.pipeline_mode<synchronous>, transform_indices = @transform_5, window_bounds = array<i64: 1, 128>}, {transform_indices = @transform_6, window_bounds = array<i64: 1, 16, 128>}, {transform_indices = @transform_7, window_bounds = array<i64: 1, 16, 128>}]} {
    %c0 = arith.constant 0 : index
    %c0_0 = arith.constant 0 : index
    %c0_1 = arith.constant 0 : index
    %c0_2 = arith.constant 0 : index
    %0 = vector.load %arg2[%c0, %c0_0, %c0_1, %c0_2] : memref<1x4x16x64xbf16, #tpu.memory_space<vmem>>, vector<1x4x16x64xbf16>
    %1 = vector.shape_cast %0 : vector<1x4x16x64xbf16> to vector<4x16x64xbf16>
    %2 = vector.shape_cast %1 : vector<4x16x64xbf16> to vector<64x64xbf16>
    %c0_3 = arith.constant 0 : index
    %c0_4 = arith.constant 0 : index
    %3 = vector.load %arg4[%c0_3, %c0_4] : memref<64x128xbf16, #tpu.memory_space<vmem>>, vector<64x128xbf16>
    %cst = arith.constant dense<0.000000e+00> : vector<64x128xf32>
    %4 = tpu.matmul %2, %3, %cst {dimension_numbers = #tpu.dot_dimension_numbers<[1], [0], [0], [1], [0, 0, 1, 1], [], []>} : vector<64x64xbf16>, vector<64x128xbf16>, vector<64x128xf32> -> vector<64x128xf32>
    %c0_5 = arith.constant 0 : index
    %c0_6 = arith.constant 0 : index
    %c0_7 = arith.constant 0 : index
    %5 = vector.load %arg3[%c0_5, %c0_6, %c0_7] : memref<1x16x64xbf16, #tpu.memory_space<vmem>>, vector<1x16x64xbf16>
    %6 = vector.shape_cast %5 : vector<1x16x64xbf16> to vector<16x64xbf16>
    %c0_8 = arith.constant 0 : index
    %c0_9 = arith.constant 0 : index
    %7 = vector.load %arg5[%c0_8, %c0_9] : memref<64x128xbf16, #tpu.memory_space<vmem>>, vector<64x128xbf16>
    %cst_10 = arith.constant dense<0.000000e+00> : vector<16x128xf32>
    %8 = tpu.matmul %6, %7, %cst_10 {dimension_numbers = #tpu.dot_dimension_numbers<[1], [0], [0], [1], [0, 0, 1, 1], [], []>} : vector<16x64xbf16>, vector<64x128xbf16>, vector<16x128xf32> -> vector<16x128xf32>
    %9 = vector.shape_cast %4 : vector<64x128xf32> to vector<4x16x128xf32>
    %10 = vector.shape_cast %8 : vector<16x128xf32> to vector<1x16x128xf32>
    %11 = vector.broadcast %10 : vector<1x16x128xf32> to vector<4x16x128xf32>
    %12 = arith.addf %9, %11 : vector<4x16x128xf32>
    %cst_11 = arith.constant dense<0xFF800000> : vector<16x128xf32>
    %13 = vector.multi_reduction <maximumf>, %12, %cst_11 [0] : vector<4x16x128xf32> to vector<16x128xf32>
    %c0_12 = arith.constant 0 : index
    %c0_13 = arith.constant 0 : index
    %14 = vector.load %arg6[%c0_12, %c0_13] : memref<1x128xf32, #tpu.memory_space<vmem>>, vector<1x128xf32>
    %15 = vector.broadcast %14 : vector<1x128xf32> to vector<16x128xf32>
    %16 = arith.mulf %13, %15 : vector<16x128xf32>
    %c0_14 = arith.constant 0 : index
    %c0_15 = arith.constant 0 : index
    %17 = vector.load %arg7[%c0_14, %c0_15] : memref<1x128xf32, #tpu.memory_space<vmem>>, vector<1x128xf32>
    %18 = vector.broadcast %17 : vector<1x128xf32> to vector<16x128xf32>
    %19 = arith.addf %16, %18 : vector<16x128xf32>
    %cst_16 = arith.constant 0.000000e+00 : f32
    %20 = vector.broadcast %cst_16 : f32 to vector<16x128xf32>
    %21 = arith.cmpf ogt, %19, %20 : vector<16x128xf32>
    %cst_17 = arith.constant 2.000000e-01 : f32
    %22 = vector.broadcast %cst_17 : f32 to vector<16x128xf32>
    %23 = arith.mulf %22, %19 : vector<16x128xf32>
    %24 = arith.select %21, %19, %23 : vector<16x128xi1>, vector<16x128xf32>
    %25 = arith.truncf %24 : vector<16x128xf32> to vector<16x128xbf16>
    %c0_18 = arith.constant 0 : index
    %c0_19 = arith.constant 0 : index
    %c0_20 = arith.constant 0 : index
    %26 = vector.load %arg9[%c0_18, %c0_19, %c0_20] : memref<1x16x128xbf16, #tpu.memory_space<vmem>>, vector<1x16x128xbf16>
    %27 = vector.shape_cast %26 : vector<1x16x128xbf16> to vector<16x128xbf16>
    %28 = vector.shape_cast %25 : vector<16x128xbf16> to vector<1x16x128xbf16>
    tpu.vector_store %arg9[%c0_18, %c0_19, %c0_20], %28 {strides = array<i32>} : memref<1x16x128xbf16, #tpu.memory_space<vmem>>, vector<1x16x128xbf16>,
    return
  }
  func.func @transform_0(%arg0: i32, %arg1: i32) -> (i32, i32, i32, i32) {
    %c0_i32 = arith.constant 0 : i32
    %c0_i32_0 = arith.constant 0 : i32
    %c0_i32_1 = arith.constant 0 : i32
    return %arg0, %c0_i32, %arg1, %c0_i32_0 : i32, i32, i32, i32
  }
  func.func @transform_1(%arg0: i32, %arg1: i32) -> (i32, i32, i32) {
    %c0_i32 = arith.constant 0 : i32
    %c0_i32_0 = arith.constant 0 : i32
    return %arg0, %arg1, %c0_i32 : i32, i32, i32
  }
  func.func @transform_2(%arg0: i32, %arg1: i32) -> (i32, i32) {
    %c0_i32 = arith.constant 0 : i32
    %c0_i32_0 = arith.constant 0 : i32
    %c0_i32_1 = arith.constant 0 : i32
    return %c0_i32, %c0_i32_0 : i32, i32
  }
  func.func @transform_3(%arg0: i32, %arg1: i32) -> (i32, i32) {
    %c0_i32 = arith.constant 0 : i32
    %c0_i32_0 = arith.constant 0 : i32
    %c0_i32_1 = arith.constant 0 : i32
    return %c0_i32, %c0_i32_0 : i32, i32
  }
  func.func @transform_4(%arg0: i32, %arg1: i32) -> (i32, i32) {
    %c0_i32 = arith.constant 0 : i32
    %c0_i32_0 = arith.constant 0 : i32
    %c0_i32_1 = arith.constant 0 : i32
    return %c0_i32, %c0_i32_0 : i32, i32
  }
  func.func @transform_5(%arg0: i32, %arg1: i32) -> (i32, i32) {
    %c0_i32 = arith.constant 0 : i32
    %c0_i32_0 = arith.constant 0 : i32
    %c0_i32_1 = arith.constant 0 : i32
    return %c0_i32, %c0_i32_0 : i32, i32
  }
  func.func @transform_6(%arg0: i32, %arg1: i32) -> (i32, i32, i32) {
    %c4_i32 = arith.constant 4 : i32
    %c0_i32 = arith.constant 0 : i32
    return %arg0, %arg1, %c4_i32 : i32, i32, i32
  }
  func.func @transform_7(%arg0: i32, %arg1: i32) -> (i32, i32, i32) {
    %c4_i32 = arith.constant 4 : i32
    %c0_i32 = arith.constant 0 : i32
    return %arg0, %arg1, %c4_i32 : i32, i32, i32
  }
}

module attributes {stable_mosaic.version = 11 : i64} {
  func.func @_lambda_(%arg0: i32, %arg1: i32, %arg2: memref<1x4x16x64xbf16, #tpu.memory_space<vmem>>, %arg3: memref<1x16x64xbf16, #tpu.memory_space<vmem>>, %arg4: memref<64x128xbf16, #tpu.memory_space<vmem>>, %arg5: memref<64x128xbf16, #tpu.memory_space<vmem>>, %arg6: memref<1x128xf32, #tpu.memory_space<vmem>>, %arg7: memref<1x128xf32, #tpu.memory_space<vmem>>, %arg8: memref<1x16x128xbf16, #tpu.memory_space<vmem>>, %arg9: memref<1x16x128xbf16, #tpu.memory_space<vmem>>) attributes {dimension_semantics = [#tpu.dimension_semantics<parallel>, #tpu.dimension_semantics<parallel>], iteration_bounds = array<i64: 2, 1>, scalar_prefetch = 0 : i64, scratch_operands = 0 : i64, tpu.core_type = #tpu.core_type<tc>, window_params = [{transform_indices = @transform_0, window_bounds = array<i64: 1, 4, 16, 64>}, {transform_indices = @transform_1, window_bounds = array<i64: 1, 16, 64>}, {pipeline_mode = #tpu.pipeline_mode<synchronous>, transform_indices = @transform_2, window_bounds = array<i64: 64, 128>}, {pipeline_mode = #tpu.pipeline_mode<synchronous>, transform_indices = @transform_3, window_bounds = array<i64: 64, 128>}, {pipeline_mode = #tpu.pipeline_mode<synchronous>, transform_indices = @transform_4, window_bounds = array<i64: 1, 128>}, {pipeline_mode = #tpu.pipeline_mode<synchronous>, transform_indices = @transform_5, window_bounds = array<i64: 1, 128>}, {transform_indices = @transform_6, window_bounds = array<i64: 1, 16, 128>}, {transform_indices = @transform_7, window_bounds = array<i64: 1, 16, 128>}]} {
    %c0 = arith.constant 0 : index
    %c0_0 = arith.constant 0 : index
    %c0_1 = arith.constant 0 : index
    %c0_2 = arith.constant 0 : index
    %0 = vector.load %arg2[%c0, %c0_0, %c0_1, %c0_2] : memref<1x4x16x64xbf16, #tpu.memory_space<vmem>>, vector<1x4x16x64xbf16>
    %1 = vector.shape_cast %0 : vector<1x4x16x64xbf16> to vector<4x16x64xbf16>
    %2 = vector.shape_cast %1 : vector<4x16x64xbf16> to vector<64x64xbf16>
    %c0_3 = arith.constant 0 : index
    %c0_4 = arith.constant 0 : index
    %3 = vector.load %arg4[%c0_3, %c0_4] : memref<64x128xbf16, #tpu.memory_space<vmem>>, vector<64x128xbf16>
    %cst = arith.constant dense<0.000000e+00> : vector<64x128xf32>
    %4 = tpu.matmul %2, %3, %cst {dimension_numbers = #tpu.dot_dimension_numbers<[1], [0], [0], [1], [0, 0, 1, 1], [], []>} : vector<64x64xbf16>, vector<64x128xbf16>, vector<64x128xf32> -> vector<64x128xf32>
    %c0_5 = arith.constant 0 : index
    %c0_6 = arith.constant 0 : index
    %c0_7 = arith.constant 0 : index
    %5 = vector.load %arg3[%c0_5, %c0_6, %c0_7] : memref<1x16x64xbf16, #tpu.memory_space<vmem>>, vector<1x16x64xbf16>
    %6 = vector.shape_cast %5 : vector<1x16x64xbf16> to vector<16x64xbf16>
    %c0_8 = arith.constant 0 : index
    %c0_9 = arith.constant 0 : index
    %7 = vector.load %arg5[%c0_8, %c0_9] : memref<64x128xbf16, #tpu.memory_space<vmem>>, vector<64x128xbf16>
    %cst_10 = arith.constant dense<0.000000e+00> : vector<16x128xf32>
    %8 = tpu.matmul %6, %7, %cst_10 {dimension_numbers = #tpu.dot_dimension_numbers<[1], [0], [0], [1], [0, 0, 1, 1], [], []>} : vector<16x64xbf16>, vector<64x128xbf16>, vector<16x128xf32> -> vector<16x128xf32>
    %9 = vector.shape_cast %4 : vector<64x128xf32> to vector<4x16x128xf32>
    %10 = vector.shape_cast %8 : vector<16x128xf32> to vector<1x16x128xf32>
    %11 = vector.broadcast %10 : vector<1x16x128xf32> to vector<4x16x128xf32>
    %12 = arith.addf %9, %11 : vector<4x16x128xf32>
    %cst_11 = arith.constant dense<0xFF800000> : vector<16x128xf32>
    %13 = vector.multi_reduction <maximumf>, %12, %cst_11 [0] : vector<4x16x128xf32> to vector<16x128xf32>
    %c0_12 = arith.constant 0 : index
    %c0_13 = arith.constant 0 : index
    %14 = vector.load %arg6[%c0_12, %c0_13] : memref<1x128xf32, #tpu.memory_space<vmem>>, vector<1x128xf32>
    %15 = vector.broadcast %14 : vector<1x128xf32> to vector<16x128xf32>
    %16 = arith.mulf %13, %15 : vector<16x128xf32>
    %c0_14 = arith.constant 0 : index
    %c0_15 = arith.constant 0 : index
    %17 = vector.load %arg7[%c0_14, %c0_15] : memref<1x128xf32, #tpu.memory_space<vmem>>, vector<1x128xf32>
    %18 = vector.broadcast %17 : vector<1x128xf32> to vector<16x128xf32>
    %19 = arith.addf %16, %18 : vector<16x128xf32>
    %cst_16 = arith.constant 0.000000e+00 : f32
    %20 = vector.broadcast %cst_16 : f32 to vector<16x128xf32>
    %21 = arith.cmpf ogt, %19, %20 : vector<16x128xf32>
    %cst_17 = arith.constant 2.000000e-01 : f32
    %22 = vector.broadcast %cst_17 : f32 to vector<16x128xf32>
    %23 = arith.mulf %22, %19 : vector<16x128xf32>
    %24 = arith.select %21, %19, %23 : vector<16x128xi1>, vector<16x128xf32>
    %25 = arith.truncf %24 : vector<16x128xf32> to vector<16x128xbf16>
    %c0_18 = arith.constant 0 : index
    %c0_19 = arith.constant 0 : index
    %c0_20 = arith.constant 0 : index
    %26 = vector.load %arg9[%c0_18, %c0_19, %c0_20] : memref<1x16x128xbf16, #tpu.memory_space<vmem>>, vector<1x16x128xbf16>
    %27 = vector.shape_cast %26 : vector<1x16x128xbf16> to vector<16x128xbf16>
    %28 = vector.shape_cast %25 : vector<16x128xbf16> to vector<1x16x128xbf16>
    tpu.vector_store %arg9[%c0_18, %c0_19, %c0_20], %28 {strides = array<i32>} : memref<1x16x128xbf16, #tpu.memory_space<vmem>>, vector<1x16x128xbf16>,
    return
  }
  func.func @transform_0(%arg0: i32, %arg1: i32) -> (i32, i32, i32, i32) {
    %c0_i32 = arith.constant 0 : i32
    %c0_i32_0 = arith.constant 0 : i32
    %c0_i32_1 = arith.constant 0 : i32
    return %arg0, %c0_i32, %arg1, %c0_i32_0 : i32, i32, i32, i32
  }
  func.func @transform_1(%arg0: i32, %arg1: i32) -> (i32, i32, i32) {
    %c0_i32 = arith.constant 0 : i32
    %c0_i32_0 = arith.constant 0 : i32
    return %arg0, %arg1, %c0_i32 : i32, i32, i32
  }
  func.func @transform_2(%arg0: i32, %arg1: i32) -> (i32, i32) {
    %c0_i32 = arith.constant 0 : i32
    %c0_i32_0 = arith.constant 0 : i32
    %c0_i32_1 = arith.constant 0 : i32
    return %c0_i32, %c0_i32_0 : i32, i32
  }
  func.func @transform_3(%arg0: i32, %arg1: i32) -> (i32, i32) {
    %c0_i32 = arith.constant 0 : i32
    %c0_i32_0 = arith.constant 0 : i32
    %c0_i32_1 = arith.constant 0 : i32
    return %c0_i32, %c0_i32_0 : i32, i32
  }
  func.func @transform_4(%arg0: i32, %arg1: i32) -> (i32, i32) {
    %c0_i32 = arith.constant 0 : i32
    %c0_i32_0 = arith.constant 0 : i32
    %c0_i32_1 = arith.constant 0 : i32
    return %c0_i32, %c0_i32_0 : i32, i32
  }
  func.func @transform_5(%arg0: i32, %arg1: i32) -> (i32, i32) {
    %c0_i32 = arith.constant 0 : i32
    %c0_i32_0 = arith.constant 0 : i32
    %c0_i32_1 = arith.constant 0 : i32
    return %c0_i32, %c0_i32_0 : i32, i32
  }
  func.func @transform_6(%arg0: i32, %arg1: i32) -> (i32, i32, i32) {
    %c2_i32 = arith.constant 2 : i32
    %c0_i32 = arith.constant 0 : i32
    return %arg0, %arg1, %c2_i32 : i32, i32, i32
  }
  func.func @transform_7(%arg0: i32, %arg1: i32) -> (i32, i32, i32) {
    %c2_i32 = arith.constant 2 : i32
    %c0_i32 = arith.constant 0 : i32
    return %arg0, %arg1, %c2_i32 : i32, i32, i32
  }
}

module attributes {stable_mosaic.version = 11 : i64} {
  func.func @knn_kernel(%arg0: i32, %arg1: i32, %arg2: memref<1x16x128xbf16, #tpu.memory_space<vmem>>, %arg3: memref<1x128x16xbf16, #tpu.memory_space<vmem>>, %arg4: memref<1x1x16xf32, #tpu.memory_space<vmem>>, %arg5: memref<1x16x4xi32, #tpu.memory_space<vmem>>) attributes {dimension_semantics = [#tpu.dimension_semantics<parallel>, #tpu.dimension_semantics<parallel>], iteration_bounds = array<i64: 2, 1>, scalar_prefetch = 0 : i64, scratch_operands = 0 : i64, tpu.core_type = #tpu.core_type<tc>, window_params = [{transform_indices = @transform_0, window_bounds = array<i64: 1, 16, 128>}, {transform_indices = @transform_1, window_bounds = array<i64: 1, 128, 16>}, {transform_indices = @transform_2, window_bounds = array<i64: 1, 1, 16>}, {transform_indices = @transform_3, window_bounds = array<i64: 1, 16, 4>}]} {
    %c0 = arith.constant 0 : index
    %c0_0 = arith.constant 0 : index
    %c0_1 = arith.constant 0 : index
    %0 = vector.load %arg2[%c0, %c0_0, %c0_1] : memref<1x16x128xbf16, #tpu.memory_space<vmem>>, vector<1x16x128xbf16>
    %1 = vector.shape_cast %0 : vector<1x16x128xbf16> to vector<16x128xbf16>
    %c0_2 = arith.constant 0 : index
    %c0_3 = arith.constant 0 : index
    %c0_4 = arith.constant 0 : index
    %2 = vector.load %arg3[%c0_2, %c0_3, %c0_4] : memref<1x128x16xbf16, #tpu.memory_space<vmem>>, vector<1x128x16xbf16>
    %3 = vector.shape_cast %2 : vector<1x128x16xbf16> to vector<128x16xbf16>
    %cst = arith.constant dense<0.000000e+00> : vector<16x16xf32>
    %4 = tpu.matmul %1, %3, %cst {dimension_numbers = #tpu.dot_dimension_numbers<[1], [0], [0], [1], [0, 0, 1, 1], [], []>} : vector<16x128xbf16>, vector<128x16xbf16>, vector<16x16xf32> -> vector<16x16xf32>
    %c0_5 = arith.constant 0 : index
    %c0_6 = arith.constant 0 : index
    %c0_7 = arith.constant 0 : index
    %5 = vector.load %arg4[%c0_5, %c0_6, %c0_7] : memref<1x1x16xf32, #tpu.memory_space<vmem>>, vector<1x1x16xf32>
    %6 = vector.shape_cast %5 : vector<1x1x16xf32> to vector<1x16xf32>
    %7 = vector.broadcast %6 : vector<1x16xf32> to vector<16x16xf32>
    %8 = arith.subf %4, %7 : vector<16x16xf32>
    %9 = tpu.bitcast %8 : vector<16x16xf32> -> vector<16x16xi32>
    %c0_i32 = arith.constant 0 : i32
    %10 = vector.broadcast %c0_i32 : i32 to vector<16x16xi32>
    %11 = arith.cmpi slt, %9, %10 : vector<16x16xi32>
    %c2147483647_i32 = arith.constant 2147483647 : i32
    %12 = vector.broadcast %c2147483647_i32 : i32 to vector<16x16xi32>
    %13 = arith.xori %9, %12 : vector<16x16xi32>
    %14 = arith.select %11, %13, %9 : vector<16x16xi1>, vector<16x16xi32>
    %15 = tpu.iota {dimensions = array<i32: 1>} : vector<16x16xi32>
    %c-16_i32 = arith.constant -16 : i32
    %16 = vector.broadcast %c-16_i32 : i32 to vector<16x16xi32>
    %17 = arith.andi %14, %16 : vector<16x16xi32>
    %c15_i32 = arith.constant 15 : i32
    %18 = vector.broadcast %c15_i32 : i32 to vector<16x16xi32>
    %19 = arith.subi %18, %15 : vector<16x16xi32>
    %20 = arith.ori %17, %19 : vector<16x16xi32>
    %21 = tpu.iota {dimensions = array<i32: 1>} : vector<16x4xi32>
    %c0_i32_8 = arith.constant 0 : i32
    %22 = vector.broadcast %c0_i32_8 : i32 to vector<16x4xi32>
    %cst_9 = arith.constant dense<-2147483648> : vector<16xi32>
    %23 = vector.multi_reduction <maxsi>, %20, %cst_9 [1] : vector<16x16xi32> to vector<16xi32>
    %24 = vector.shape_cast %23 : vector<16xi32> to vector<16x1xi32>
    %c15_i32_10 = arith.constant 15 : i32
    %25 = vector.broadcast %c15_i32_10 : i32 to vector<16x1xi32>
    %26 = arith.andi %24, %25 : vector<16x1xi32>
    %c15_i32_11 = arith.constant 15 : i32
    %27 = vector.broadcast %c15_i32_11 : i32 to vector<16x1xi32>
    %28 = arith.subi %27, %26 : vector<16x1xi32>
    %c0_i32_12 = arith.constant 0 : i32
    %29 = vector.broadcast %c0_i32_12 : i32 to vector<16x4xi32>
    %30 = arith.cmpi eq, %21, %29 : vector<16x4xi32>
    %31 = vector.shape_cast %28 : vector<16x1xi32> to vector<16x1xi32>
    %32 = vector.broadcast %31 : vector<16x1xi32> to vector<16x4xi32>
    %33 = arith.select %30, %32, %22 : vector<16x4xi1>, vector<16x4xi32>
    %34 = vector.broadcast %28 : vector<16x1xi32> to vector<16x16xi32>
    %35 = arith.cmpi eq, %15, %34 : vector<16x16xi32>
    %c-2147483648_i32 = arith.constant -2147483648 : i32
    %36 = vector.broadcast %c-2147483648_i32 : i32 to vector<16x16xi32>
    %37 = arith.select %35, %36, %20 : vector<16x16xi1>, vector<16x16xi32>
    %cst_13 = arith.constant dense<-2147483648> : vector<16xi32>
    %38 = vector.multi_reduction <maxsi>, %37, %cst_13 [1] : vector<16x16xi32> to vector<16xi32>
    %39 = vector.shape_cast %38 : vector<16xi32> to vector<16x1xi32>
    %c15_i32_14 = arith.constant 15 : i32
    %40 = vector.broadcast %c15_i32_14 : i32 to vector<16x1xi32>
    %41 = arith.andi %39, %40 : vector<16x1xi32>
    %c15_i32_15 = arith.constant 15 : i32
    %42 = vector.broadcast %c15_i32_15 : i32 to vector<16x1xi32>
    %43 = arith.subi %42, %41 : vector<16x1xi32>
    %c1_i32 = arith.constant 1 : i32
    %44 = vector.broadcast %c1_i32 : i32 to vector<16x4xi32>
    %45 = arith.cmpi eq, %21, %44 : vector<16x4xi32>
    %46 = vector.shape_cast %43 : vector<16x1xi32> to vector<16x1xi32>
    %47 = vector.broadcast %46 : vector<16x1xi32> to vector<16x4xi32>
    %48 = arith.select %45, %47, %33 : vector<16x4xi1>, vector<16x4xi32>
    %49 = vector.broadcast %43 : vector<16x1xi32> to vector<16x16xi32>
    %50 = arith.cmpi eq, %15, %49 : vector<16x16xi32>
    %c-2147483648_i32_16 = arith.constant -2147483648 : i32
    %51 = vector.broadcast %c-2147483648_i32_16 : i32 to vector<16x16xi32>
    %52 = arith.select %50, %51, %37 : vector<16x16xi1>, vector<16x16xi32>
    %cst_17 = arith.constant dense<-2147483648> : vector<16xi32>
    %53 = vector.multi_reduction <maxsi>, %52, %cst_17 [1] : vector<16x16xi32> to vector<16xi32>
    %54 = vector.shape_cast %53 : vector<16xi32> to vector<16x1xi32>
    %c15_i32_18 = arith.constant 15 : i32
    %55 = vector.broadcast %c15_i32_18 : i32 to vector<16x1xi32>
    %56 = arith.andi %54, %55 : vector<16x1xi32>
    %c15_i32_19 = arith.constant 15 : i32
    %57 = vector.broadcast %c15_i32_19 : i32 to vector<16x1xi32>
    %58 = arith.subi %57, %56 : vector<16x1xi32>
    %c2_i32 = arith.constant 2 : i32
    %59 = vector.broadcast %c2_i32 : i32 to vector<16x4xi32>
    %60 = arith.cmpi eq, %21, %59 : vector<16x4xi32>
    %61 = vector.shape_cast %58 : vector<16x1xi32> to vector<16x1xi32>
    %62 = vector.broadcast %61 : vector<16x1xi32> to vector<16x4xi32>
    %63 = arith.select %60, %62, %48 : vector<16x4xi1>, vector<16x4xi32>
    %64 = vector.broadcast %58 : vector<16x1xi32> to vector<16x16xi32>
    %65 = arith.cmpi eq, %15, %64 : vector<16x16xi32>
    %c-2147483648_i32_20 = arith.constant -2147483648 : i32
    %66 = vector.broadcast %c-2147483648_i32_20 : i32 to vector<16x16xi32>
    %67 = arith.select %65, %66, %52 : vector<16x16xi1>, vector<16x16xi32>
    %cst_21 = arith.constant dense<-2147483648> : vector<16xi32>
    %68 = vector.multi_reduction <maxsi>, %67, %cst_21 [1] : vector<16x16xi32> to vector<16xi32>
    %69 = vector.shape_cast %68 : vector<16xi32> to vector<16x1xi32>
    %c15_i32_22 = arith.constant 15 : i32
    %70 = vector.broadcast %c15_i32_22 : i32 to vector<16x1xi32>
    %71 = arith.andi %69, %70 : vector<16x1xi32>
    %c15_i32_23 = arith.constant 15 : i32
    %72 = vector.broadcast %c15_i32_23 : i32 to vector<16x1xi32>
    %73 = arith.subi %72, %71 : vector<16x1xi32>
    %c3_i32 = arith.constant 3 : i32
    %74 = vector.broadcast %c3_i32 : i32 to vector<16x4xi32>
    %75 = arith.cmpi eq, %21, %74 : vector<16x4xi32>
    %76 = vector.shape_cast %73 : vector<16x1xi32> to vector<16x1xi32>
    %77 = vector.broadcast %76 : vector<16x1xi32> to vector<16x4xi32>
    %78 = arith.select %75, %77, %63 : vector<16x4xi1>, vector<16x4xi32>
    %c0_24 = arith.constant 0 : index
    %c0_25 = arith.constant 0 : index
    %c0_26 = arith.constant 0 : index
    %79 = vector.load %arg5[%c0_24, %c0_25, %c0_26] : memref<1x16x4xi32, #tpu.memory_space<vmem>>, vector<1x16x4xi32>
    %80 = vector.shape_cast %79 : vector<1x16x4xi32> to vector<16x4xi32>
    %81 = vector.shape_cast %78 : vector<16x4xi32> to vector<1x16x4xi32>
    tpu.vector_store %arg5[%c0_24, %c0_25, %c0_26], %81 {strides = array<i32>} : memref<1x16x4xi32, #tpu.memory_space<vmem>>, vector<1x16x4xi32>,
    return
  }
  func.func @transform_0(%arg0: i32, %arg1: i32) -> (i32, i32, i32) {
    %c0_i32 = arith.constant 0 : i32
    %c0_i32_0 = arith.constant 0 : i32
    return %arg0, %arg1, %c0_i32 : i32, i32, i32
  }
  func.func @transform_1(%arg0: i32, %arg1: i32) -> (i32, i32, i32) {
    %c0_i32 = arith.constant 0 : i32
    %c0_i32_0 = arith.constant 0 : i32
    %c0_i32_1 = arith.constant 0 : i32
    return %arg0, %c0_i32, %c0_i32_0 : i32, i32, i32
  }
  func.func @transform_2(%arg0: i32, %arg1: i32) -> (i32, i32, i32) {
    %c0_i32 = arith.constant 0 : i32
    %c0_i32_0 = arith.constant 0 : i32
    %c0_i32_1 = arith.constant 0 : i32
    return %arg0, %c0_i32, %c0_i32_0 : i32, i32, i32
  }
  func.func @transform_3(%arg0: i32, %arg1: i32) -> (i32, i32, i32) {
    %c0_i32 = arith.constant 0 : i32
    %c0_i32_0 = arith.constant 0 : i32
    return %arg0, %arg1, %c0_i32 : i32, i32, i32
  }
}

module attributes {stable_mosaic.version = 11 : i64} {
  func.func @_lambda_(%arg0: i32, %arg1: i32, %arg2: memref<1x4x16x128xbf16, #tpu.memory_space<vmem>>, %arg3: memref<1x16x128xbf16, #tpu.memory_space<vmem>>, %arg4: memref<128x256xbf16, #tpu.memory_space<vmem>>, %arg5: memref<128x256xbf16, #tpu.memory_space<vmem>>, %arg6: memref<1x256xf32, #tpu.memory_space<vmem>>, %arg7: memref<1x256xf32, #tpu.memory_space<vmem>>, %arg8: memref<1x16x256xbf16, #tpu.memory_space<vmem>>, %arg9: memref<1x16x256xbf16, #tpu.memory_space<vmem>>) attributes {dimension_semantics = [#tpu.dimension_semantics<parallel>, #tpu.dimension_semantics<parallel>], iteration_bounds = array<i64: 2, 1>, scalar_prefetch = 0 : i64, scratch_operands = 0 : i64, tpu.core_type = #tpu.core_type<tc>, window_params = [{transform_indices = @transform_0, window_bounds = array<i64: 1, 4, 16, 128>}, {transform_indices = @transform_1, window_bounds = array<i64: 1, 16, 128>}, {pipeline_mode = #tpu.pipeline_mode<synchronous>, transform_indices = @transform_2, window_bounds = array<i64: 128, 256>}, {pipeline_mode = #tpu.pipeline_mode<synchronous>, transform_indices = @transform_3, window_bounds = array<i64: 128, 256>}, {pipeline_mode = #tpu.pipeline_mode<synchronous>, transform_indices = @transform_4, window_bounds = array<i64: 1, 256>}, {pipeline_mode = #tpu.pipeline_mode<synchronous>, transform_indices = @transform_5, window_bounds = array<i64: 1, 256>}, {transform_indices = @transform_6, window_bounds = array<i64: 1, 16, 256>}, {transform_indices = @transform_7, window_bounds = array<i64: 1, 16, 256>}]} {
    %c0 = arith.constant 0 : index
    %c0_0 = arith.constant 0 : index
    %c0_1 = arith.constant 0 : index
    %c0_2 = arith.constant 0 : index
    %0 = vector.load %arg2[%c0, %c0_0, %c0_1, %c0_2] : memref<1x4x16x128xbf16, #tpu.memory_space<vmem>>, vector<1x4x16x128xbf16>
    %1 = vector.shape_cast %0 : vector<1x4x16x128xbf16> to vector<4x16x128xbf16>
    %2 = vector.shape_cast %1 : vector<4x16x128xbf16> to vector<64x128xbf16>
    %c0_3 = arith.constant 0 : index
    %c0_4 = arith.constant 0 : index
    %3 = vector.load %arg4[%c0_3, %c0_4] : memref<128x256xbf16, #tpu.memory_space<vmem>>, vector<128x256xbf16>
    %cst = arith.constant dense<0.000000e+00> : vector<64x256xf32>
    %4 = tpu.matmul %2, %3, %cst {dimension_numbers = #tpu.dot_dimension_numbers<[1], [0], [0], [1], [0, 0, 1, 1], [], []>} : vector<64x128xbf16>, vector<128x256xbf16>, vector<64x256xf32> -> vector<64x256xf32>
    %c0_5 = arith.constant 0 : index
    %c0_6 = arith.constant 0 : index
    %c0_7 = arith.constant 0 : index
    %5 = vector.load %arg3[%c0_5, %c0_6, %c0_7] : memref<1x16x128xbf16, #tpu.memory_space<vmem>>, vector<1x16x128xbf16>
    %6 = vector.shape_cast %5 : vector<1x16x128xbf16> to vector<16x128xbf16>
    %c0_8 = arith.constant 0 : index
    %c0_9 = arith.constant 0 : index
    %7 = vector.load %arg5[%c0_8, %c0_9] : memref<128x256xbf16, #tpu.memory_space<vmem>>, vector<128x256xbf16>
    %cst_10 = arith.constant dense<0.000000e+00> : vector<16x256xf32>
    %8 = tpu.matmul %6, %7, %cst_10 {dimension_numbers = #tpu.dot_dimension_numbers<[1], [0], [0], [1], [0, 0, 1, 1], [], []>} : vector<16x128xbf16>, vector<128x256xbf16>, vector<16x256xf32> -> vector<16x256xf32>
    %9 = vector.shape_cast %4 : vector<64x256xf32> to vector<4x16x256xf32>
    %10 = vector.shape_cast %8 : vector<16x256xf32> to vector<1x16x256xf32>
    %11 = vector.broadcast %10 : vector<1x16x256xf32> to vector<4x16x256xf32>
    %12 = arith.addf %9, %11 : vector<4x16x256xf32>
    %cst_11 = arith.constant dense<0xFF800000> : vector<16x256xf32>
    %13 = vector.multi_reduction <maximumf>, %12, %cst_11 [0] : vector<4x16x256xf32> to vector<16x256xf32>
    %c0_12 = arith.constant 0 : index
    %c0_13 = arith.constant 0 : index
    %14 = vector.load %arg6[%c0_12, %c0_13] : memref<1x256xf32, #tpu.memory_space<vmem>>, vector<1x256xf32>
    %15 = vector.broadcast %14 : vector<1x256xf32> to vector<16x256xf32>
    %16 = arith.mulf %13, %15 : vector<16x256xf32>
    %c0_14 = arith.constant 0 : index
    %c0_15 = arith.constant 0 : index
    %17 = vector.load %arg7[%c0_14, %c0_15] : memref<1x256xf32, #tpu.memory_space<vmem>>, vector<1x256xf32>
    %18 = vector.broadcast %17 : vector<1x256xf32> to vector<16x256xf32>
    %19 = arith.addf %16, %18 : vector<16x256xf32>
    %cst_16 = arith.constant 0.000000e+00 : f32
    %20 = vector.broadcast %cst_16 : f32 to vector<16x256xf32>
    %21 = arith.cmpf ogt, %19, %20 : vector<16x256xf32>
    %cst_17 = arith.constant 2.000000e-01 : f32
    %22 = vector.broadcast %cst_17 : f32 to vector<16x256xf32>
    %23 = arith.mulf %22, %19 : vector<16x256xf32>
    %24 = arith.select %21, %19, %23 : vector<16x256xi1>, vector<16x256xf32>
    %25 = arith.truncf %24 : vector<16x256xf32> to vector<16x256xbf16>
    %c0_18 = arith.constant 0 : index
    %c0_19 = arith.constant 0 : index
    %c0_20 = arith.constant 0 : index
    %26 = vector.load %arg9[%c0_18, %c0_19, %c0_20] : memref<1x16x256xbf16, #tpu.memory_space<vmem>>, vector<1x16x256xbf16>
    %27 = vector.shape_cast %26 : vector<1x16x256xbf16> to vector<16x256xbf16>
    %28 = vector.shape_cast %25 : vector<16x256xbf16> to vector<1x16x256xbf16>
    tpu.vector_store %arg9[%c0_18, %c0_19, %c0_20], %28 {strides = array<i32>} : memref<1x16x256xbf16, #tpu.memory_space<vmem>>, vector<1x16x256xbf16>,
    return
  }
  func.func @transform_0(%arg0: i32, %arg1: i32) -> (i32, i32, i32, i32) {
    %c0_i32 = arith.constant 0 : i32
    %c0_i32_0 = arith.constant 0 : i32
    %c0_i32_1 = arith.constant 0 : i32
    return %arg0, %c0_i32, %arg1, %c0_i32_0 : i32, i32, i32, i32
  }
  func.func @transform_1(%arg0: i32, %arg1: i32) -> (i32, i32, i32) {
    %c0_i32 = arith.constant 0 : i32
    %c0_i32_0 = arith.constant 0 : i32
    return %arg0, %arg1, %c0_i32 : i32, i32, i32
  }
  func.func @transform_2(%arg0: i32, %arg1: i32) -> (i32, i32) {
    %c0_i32 = arith.constant 0 : i32
    %c0_i32_0 = arith.constant 0 : i32
    %c0_i32_1 = arith.constant 0 : i32
    return %c0_i32, %c0_i32_0 : i32, i32
  }
  func.func @transform_3(%arg0: i32, %arg1: i32) -> (i32, i32) {
    %c0_i32 = arith.constant 0 : i32
    %c0_i32_0 = arith.constant 0 : i32
    %c0_i32_1 = arith.constant 0 : i32
    return %c0_i32, %c0_i32_0 : i32, i32
  }
  func.func @transform_4(%arg0: i32, %arg1: i32) -> (i32, i32) {
    %c0_i32 = arith.constant 0 : i32
    %c0_i32_0 = arith.constant 0 : i32
    %c0_i32_1 = arith.constant 0 : i32
    return %c0_i32, %c0_i32_0 : i32, i32
  }
  func.func @transform_5(%arg0: i32, %arg1: i32) -> (i32, i32) {
    %c0_i32 = arith.constant 0 : i32
    %c0_i32_0 = arith.constant 0 : i32
    %c0_i32_1 = arith.constant 0 : i32
    return %c0_i32, %c0_i32_0 : i32, i32
  }
  func.func @transform_6(%arg0: i32, %arg1: i32) -> (i32, i32, i32) {
    %c0_i32 = arith.constant 0 : i32
    %c0_i32_0 = arith.constant 0 : i32
    return %arg0, %arg1, %c0_i32 : i32, i32, i32
  }
  func.func @transform_7(%arg0: i32, %arg1: i32) -> (i32, i32, i32) {
    %c0_i32 = arith.constant 0 : i32
    %c0_i32_0 = arith.constant 0 : i32
    return %arg0, %arg1, %c0_i32 : i32, i32, i32
  }
}

module attributes {stable_mosaic.version = 11 : i64} {
  func.func @conv5_pool_kernel(%arg0: i32, %arg1: i32, %arg2: memref<1x16x640xbf16, #tpu.memory_space<vmem>>, %arg3: memref<640x64xbf16, #tpu.memory_space<vmem>>, %arg4: memref<1x64xf32, #tpu.memory_space<vmem>>, %arg5: memref<1x64xf32, #tpu.memory_space<vmem>>, %arg6: memref<1x1x128xbf16, #tpu.memory_space<vmem>>, %arg7: memref<1x64xf32, #tpu.memory_space<vmem>>, %arg8: memref<1x64xf32, #tpu.memory_space<vmem>>) attributes {dimension_semantics = [#tpu.dimension_semantics<parallel>, #tpu.dimension_semantics<arbitrary>], iteration_bounds = array<i64: 2, 1>, scalar_prefetch = 0 : i64, scratch_operands = 2 : i64, tpu.core_type = #tpu.core_type<tc>, window_params = [{transform_indices = @transform_0, window_bounds = array<i64: 1, 16, 640>}, {pipeline_mode = #tpu.pipeline_mode<synchronous>, transform_indices = @transform_1, window_bounds = array<i64: 640, 64>}, {pipeline_mode = #tpu.pipeline_mode<synchronous>, transform_indices = @transform_2, window_bounds = array<i64: 1, 64>}, {pipeline_mode = #tpu.pipeline_mode<synchronous>, transform_indices = @transform_3, window_bounds = array<i64: 1, 64>}, {transform_indices = @transform_4, window_bounds = array<i64: 1, 1, 128>}]} {
    %c0_i32 = arith.constant 0 : i32
    %0 = arith.cmpi eq, %arg1, %c0_i32 : i32
    %1 = arith.extui %0 : i1 to i32
    %c0_i32_0 = arith.constant 0 : i32
    %2 = arith.cmpi ne, %1, %c0_i32_0 : i32
    scf.if %2 {
      %cst_26 = arith.constant 0xFF800000 : f32
      %45 = vector.broadcast %cst_26 : f32 to vector<1x64xf32>
      %c0_27 = arith.constant 0 : index
      %c0_28 = arith.constant 0 : index
      %46 = vector.load %arg7[%c0_27, %c0_28] : memref<1x64xf32, #tpu.memory_space<vmem>>, vector<1x64xf32>
      tpu.vector_store %arg7[%c0_27, %c0_28], %45 {strides = array<i32>} : memref<1x64xf32, #tpu.memory_space<vmem>>, vector<1x64xf32>,
      %cst_29 = arith.constant 0.000000e+00 : f32
      %47 = vector.broadcast %cst_29 : f32 to vector<1x64xf32>
      %c0_30 = arith.constant 0 : index
      %c0_31 = arith.constant 0 : index
      %48 = vector.load %arg8[%c0_30, %c0_31] : memref<1x64xf32, #tpu.memory_space<vmem>>, vector<1x64xf32>
      tpu.vector_store %arg8[%c0_30, %c0_31], %47 {strides = array<i32>} : memref<1x64xf32, #tpu.memory_space<vmem>>, vector<1x64xf32>,
    } else {
    }
    %c0 = arith.constant 0 : index
    %c0_1 = arith.constant 0 : index
    %c0_2 = arith.constant 0 : index
    %3 = vector.load %arg2[%c0, %c0_1, %c0_2] : memref<1x16x640xbf16, #tpu.memory_space<vmem>>, vector<1x16x640xbf16>
    %4 = vector.shape_cast %3 : vector<1x16x640xbf16> to vector<16x640xbf16>
    %c0_3 = arith.constant 0 : index
    %c0_4 = arith.constant 0 : index
    %5 = vector.load %arg3[%c0_3, %c0_4] : memref<640x64xbf16, #tpu.memory_space<vmem>>, vector<640x64xbf16>
    %cst = arith.constant dense<0.000000e+00> : vector<16x64xf32>
    %6 = tpu.matmul %4, %5, %cst {dimension_numbers = #tpu.dot_dimension_numbers<[1], [0], [0], [1], [0, 0, 1, 1], [], []>} : vector<16x640xbf16>, vector<640x64xbf16>, vector<16x64xf32> -> vector<16x64xf32>
    %c0_5 = arith.constant 0 : index
    %c0_6 = arith.constant 0 : index
    %7 = vector.load %arg4[%c0_5, %c0_6] : memref<1x64xf32, #tpu.memory_space<vmem>>, vector<1x64xf32>
    %8 = vector.broadcast %7 : vector<1x64xf32> to vector<16x64xf32>
    %9 = arith.mulf %6, %8 : vector<16x64xf32>
    %c0_7 = arith.constant 0 : index
    %c0_8 = arith.constant 0 : index
    %10 = vector.load %arg5[%c0_7, %c0_8] : memref<1x64xf32, #tpu.memory_space<vmem>>, vector<1x64xf32>
    %11 = vector.broadcast %10 : vector<1x64xf32> to vector<16x64xf32>
    %12 = arith.addf %9, %11 : vector<16x64xf32>
    %cst_9 = arith.constant 0.000000e+00 : f32
    %13 = vector.broadcast %cst_9 : f32 to vector<16x64xf32>
    %14 = arith.cmpf ogt, %12, %13 : vector<16x64xf32>
    %cst_10 = arith.constant 2.000000e-01 : f32
    %15 = vector.broadcast %cst_10 : f32 to vector<16x64xf32>
    %16 = arith.mulf %15, %12 : vector<16x64xf32>
    %17 = arith.select %14, %12, %16 : vector<16x64xi1>, vector<16x64xf32>
    %c16_i32 = arith.constant 16 : i32
    %18 = arith.muli %arg1, %c16_i32 : i32
    %19 = tpu.iota {dimensions = array<i32: 0>} : vector<16x1xi32>
    %20 = vector.broadcast %18 : i32 to vector<16x1xi32>
    %21 = arith.addi %20, %19 : vector<16x1xi32>
    %c16_i32_11 = arith.constant 16 : i32
    %22 = vector.broadcast %c16_i32_11 : i32 to vector<16x1xi32>
    %23 = arith.cmpi slt, %21, %22 : vector<16x1xi32>
    %c0_12 = arith.constant 0 : index
    %c0_13 = arith.constant 0 : index
    %24 = vector.load %arg7[%c0_12, %c0_13] : memref<1x64xf32, #tpu.memory_space<vmem>>, vector<1x64xf32>
    %cst_14 = arith.constant 0xFF800000 : f32
    %25 = vector.shape_cast %23 : vector<16x1xi1> to vector<16x1xi1>
    %26 = vector.broadcast %25 : vector<16x1xi1> to vector<16x64xi1>
    %27 = vector.broadcast %cst_14 : f32 to vector<16x64xf32>
    %28 = arith.select %26, %17, %27 : vector<16x64xi1>, vector<16x64xf32>
    %cst_15 = arith.constant dense<0xFF800000> : vector<64xf32>
    %29 = vector.multi_reduction <maximumf>, %28, %cst_15 [0] : vector<16x64xf32> to vector<64xf32>
    %30 = vector.shape_cast %29 : vector<64xf32> to vector<1x64xf32>
    %31 = arith.maximumf %24, %30 : vector<1x64xf32>
    %c0_16 = arith.constant 0 : index
    %c0_17 = arith.constant 0 : index
    %32 = vector.load %arg7[%c0_16, %c0_17] : memref<1x64xf32, #tpu.memory_space<vmem>>, vector<1x64xf32>
    tpu.vector_store %arg7[%c0_16, %c0_17], %31 {strides = array<i32>} : memref<1x64xf32, #tpu.memory_space<vmem>>, vector<1x64xf32>,
    %c0_18 = arith.constant 0 : index
    %c0_19 = arith.constant 0 : index
    %33 = vector.load %arg8[%c0_18, %c0_19] : memref<1x64xf32, #tpu.memory_space<vmem>>, vector<1x64xf32>
    %cst_20 = arith.constant 0.000000e+00 : f32
    %34 = vector.shape_cast %23 : vector<16x1xi1> to vector<16x1xi1>
    %35 = vector.broadcast %34 : vector<16x1xi1> to vector<16x64xi1>
    %36 = vector.broadcast %cst_20 : f32 to vector<16x64xf32>
    %37 = arith.select %35, %17, %36 : vector<16x64xi1>, vector<16x64xf32>
    %cst_21 = arith.constant dense<0.000000e+00> : vector<64xf32>
    %38 = vector.multi_reduction <add>, %37, %cst_21 [0] : vector<16x64xf32> to vector<64xf32>
    %39 = vector.shape_cast %38 : vector<64xf32> to vector<1x64xf32>
    %40 = arith.addf %33, %39 : vector<1x64xf32>
    %c0_22 = arith.constant 0 : index
    %c0_23 = arith.constant 0 : index
    %41 = vector.load %arg8[%c0_22, %c0_23] : memref<1x64xf32, #tpu.memory_space<vmem>>, vector<1x64xf32>
    tpu.vector_store %arg8[%c0_22, %c0_23], %40 {strides = array<i32>} : memref<1x64xf32, #tpu.memory_space<vmem>>, vector<1x64xf32>,
    %c0_i32_24 = arith.constant 0 : i32
    %42 = arith.cmpi eq, %arg1, %c0_i32_24 : i32
    %43 = arith.extui %42 : i1 to i32
    %c0_i32_25 = arith.constant 0 : i32
    %44 = arith.cmpi ne, %43, %c0_i32_25 : i32
    scf.if %44 {
      %c0_26 = arith.constant 0 : index
      %c0_27 = arith.constant 0 : index
      %45 = vector.load %arg7[%c0_26, %c0_27] : memref<1x64xf32, #tpu.memory_space<vmem>>, vector<1x64xf32>
      %c0_28 = arith.constant 0 : index
      %c0_29 = arith.constant 0 : index
      %46 = vector.load %arg8[%c0_28, %c0_29] : memref<1x64xf32, #tpu.memory_space<vmem>>, vector<1x64xf32>
      %cst_30 = arith.constant 6.250000e-02 : f32
      %47 = vector.broadcast %cst_30 : f32 to vector<1x64xf32>
      %48 = arith.mulf %46, %47 : vector<1x64xf32>
      %49 = tpu.concatenate %45, %48 in 1 : vector<1x64xf32>, vector<1x64xf32> -> vector<1x128xf32>
      %50 = arith.truncf %49 : vector<1x128xf32> to vector<1x128xbf16>
      %c0_31 = arith.constant 0 : index
      %c0_32 = arith.constant 0 : index
      %c0_33 = arith.constant 0 : index
      %51 = vector.load %arg6[%c0_31, %c0_32, %c0_33] : memref<1x1x128xbf16, #tpu.memory_space<vmem>>, vector<1x1x128xbf16>
      %52 = vector.shape_cast %51 : vector<1x1x128xbf16> to vector<1x128xbf16>
      %53 = vector.shape_cast %50 : vector<1x128xbf16> to vector<1x1x128xbf16>
      tpu.vector_store %arg6[%c0_31, %c0_32, %c0_33], %53 {strides = array<i32>} : memref<1x1x128xbf16, #tpu.memory_space<vmem>>, vector<1x1x128xbf16>,
    } else {
    }
    return
  }
  func.func @transform_0(%arg0: i32, %arg1: i32) -> (i32, i32, i32) {
    %c0_i32 = arith.constant 0 : i32
    %c0_i32_0 = arith.constant 0 : i32
    return %arg0, %arg1, %c0_i32 : i32, i32, i32
  }
  func.func @transform_1(%arg0: i32, %arg1: i32) -> (i32, i32) {
    %c0_i32 = arith.constant 0 : i32
    %c0_i32_0 = arith.constant 0 : i32
    %c0_i32_1 = arith.constant 0 : i32
    return %c0_i32, %c0_i32_0 : i32, i32
  }
  func.func @transform_2(%arg0: i32, %arg1: i32) -> (i32, i32) {
    %c0_i32 = arith.constant 0 : i32
    %c0_i32_0 = arith.constant 0 : i32
    %c0_i32_1 = arith.constant 0 : i32
    return %c0_i32, %c0_i32_0 : i32, i32
  }
  func.func @transform_3(%arg0: i32, %arg1: i32) -> (i32, i32) {
    %c0_i32 = arith.constant 0 : i32
    %c0_i32_0 = arith.constant 0 : i32
    %c0_i32_1 = arith.constant 0 : i32
    return %c0_i32, %c0_i32_0 : i32, i32
  }
  func.func @transform_4(%arg0: i32, %arg1: i32) -> (i32, i32, i32) {
    %c0_i32 = arith.constant 0 : i32
    %c0_i32_0 = arith.constant 0 : i32
    %c0_i32_1 = arith.constant 0 : i32
    return %arg0, %c0_i32, %c0_i32_0 : i32, i32, i32
  }
}

module attributes {stable_mosaic.version = 11 : i64} {
  func.func @head_kernel(%arg0: memref<2x128xbf16, #tpu.memory_space<vmem>>, %arg1: memref<128x512xbf16, #tpu.memory_space<vmem>>, %arg2: memref<1x512xf32, #tpu.memory_space<vmem>>, %arg3: memref<1x512xf32, #tpu.memory_space<vmem>>, %arg4: memref<512x256xbf16, #tpu.memory_space<vmem>>, %arg5: memref<1x256xf32, #tpu.memory_space<vmem>>, %arg6: memref<1x256xf32, #tpu.memory_space<vmem>>, %arg7: memref<256x8xbf16, #tpu.memory_space<vmem>>, %arg8: memref<1x8xf32, #tpu.memory_space<vmem>>, %arg9: memref<1x8xf32, #tpu.memory_space<vmem>>, %arg10: memref<2x8xf32, #tpu.memory_space<vmem>>) attributes {dimension_semantics = [], scalar_prefetch = 0 : i64, scratch_operands = 0 : i64, tpu.core_type = #tpu.core_type<tc>} {
    %c0 = arith.constant 0 : index
    %c0_0 = arith.constant 0 : index
    %0 = vector.load %arg0[%c0, %c0_0] : memref<2x128xbf16, #tpu.memory_space<vmem>>, vector<2x128xbf16>
    %c0_1 = arith.constant 0 : index
    %c0_2 = arith.constant 0 : index
    %1 = vector.load %arg1[%c0_1, %c0_2] : memref<128x512xbf16, #tpu.memory_space<vmem>>, vector<128x512xbf16>
    %cst = arith.constant dense<0.000000e+00> : vector<2x512xf32>
    %2 = tpu.matmul %0, %1, %cst {dimension_numbers = #tpu.dot_dimension_numbers<[1], [0], [0], [1], [0, 0, 1, 1], [], []>} : vector<2x128xbf16>, vector<128x512xbf16>, vector<2x512xf32> -> vector<2x512xf32>
    %c0_3 = arith.constant 0 : index
    %c0_4 = arith.constant 0 : index
    %3 = vector.load %arg2[%c0_3, %c0_4] : memref<1x512xf32, #tpu.memory_space<vmem>>, vector<1x512xf32>
    %4 = vector.broadcast %3 : vector<1x512xf32> to vector<2x512xf32>
    %5 = arith.mulf %2, %4 : vector<2x512xf32>
    %c0_5 = arith.constant 0 : index
    %c0_6 = arith.constant 0 : index
    %6 = vector.load %arg3[%c0_5, %c0_6] : memref<1x512xf32, #tpu.memory_space<vmem>>, vector<1x512xf32>
    %7 = vector.broadcast %6 : vector<1x512xf32> to vector<2x512xf32>
    %8 = arith.addf %5, %7 : vector<2x512xf32>
    %cst_7 = arith.constant 0.000000e+00 : f32
    %9 = vector.broadcast %cst_7 : f32 to vector<2x512xf32>
    %10 = arith.cmpf ogt, %8, %9 : vector<2x512xf32>
    %cst_8 = arith.constant 2.000000e-01 : f32
    %11 = vector.broadcast %cst_8 : f32 to vector<2x512xf32>
    %12 = arith.mulf %11, %8 : vector<2x512xf32>
    %13 = arith.select %10, %8, %12 : vector<2x512xi1>, vector<2x512xf32>
    %14 = arith.truncf %13 : vector<2x512xf32> to vector<2x512xbf16>
    %c0_9 = arith.constant 0 : index
    %c0_10 = arith.constant 0 : index
    %15 = vector.load %arg4[%c0_9, %c0_10] : memref<512x256xbf16, #tpu.memory_space<vmem>>, vector<512x256xbf16>
    %cst_11 = arith.constant dense<0.000000e+00> : vector<2x256xf32>
    %16 = tpu.matmul %14, %15, %cst_11 {dimension_numbers = #tpu.dot_dimension_numbers<[1], [0], [0], [1], [0, 0, 1, 1], [], []>} : vector<2x512xbf16>, vector<512x256xbf16>, vector<2x256xf32> -> vector<2x256xf32>
    %c0_12 = arith.constant 0 : index
    %c0_13 = arith.constant 0 : index
    %17 = vector.load %arg5[%c0_12, %c0_13] : memref<1x256xf32, #tpu.memory_space<vmem>>, vector<1x256xf32>
    %18 = vector.broadcast %17 : vector<1x256xf32> to vector<2x256xf32>
    %19 = arith.mulf %16, %18 : vector<2x256xf32>
    %c0_14 = arith.constant 0 : index
    %c0_15 = arith.constant 0 : index
    %20 = vector.load %arg6[%c0_14, %c0_15] : memref<1x256xf32, #tpu.memory_space<vmem>>, vector<1x256xf32>
    %21 = vector.broadcast %20 : vector<1x256xf32> to vector<2x256xf32>
    %22 = arith.addf %19, %21 : vector<2x256xf32>
    %cst_16 = arith.constant 0.000000e+00 : f32
    %23 = vector.broadcast %cst_16 : f32 to vector<2x256xf32>
    %24 = arith.cmpf ogt, %22, %23 : vector<2x256xf32>
    %cst_17 = arith.constant 2.000000e-01 : f32
    %25 = vector.broadcast %cst_17 : f32 to vector<2x256xf32>
    %26 = arith.mulf %25, %22 : vector<2x256xf32>
    %27 = arith.select %24, %22, %26 : vector<2x256xi1>, vector<2x256xf32>
    %28 = arith.truncf %27 : vector<2x256xf32> to vector<2x256xbf16>
    %c0_18 = arith.constant 0 : index
    %c0_19 = arith.constant 0 : index
    %29 = vector.load %arg7[%c0_18, %c0_19] : memref<256x8xbf16, #tpu.memory_space<vmem>>, vector<256x8xbf16>
    %cst_20 = arith.constant dense<0.000000e+00> : vector<2x8xf32>
    %30 = tpu.matmul %28, %29, %cst_20 {dimension_numbers = #tpu.dot_dimension_numbers<[1], [0], [0], [1], [0, 0, 1, 1], [], []>} : vector<2x256xbf16>, vector<256x8xbf16>, vector<2x8xf32> -> vector<2x8xf32>
    %c0_21 = arith.constant 0 : index
    %c0_22 = arith.constant 0 : index
    %31 = vector.load %arg8[%c0_21, %c0_22] : memref<1x8xf32, #tpu.memory_space<vmem>>, vector<1x8xf32>
    %32 = vector.broadcast %31 : vector<1x8xf32> to vector<2x8xf32>
    %33 = arith.mulf %30, %32 : vector<2x8xf32>
    %c0_23 = arith.constant 0 : index
    %c0_24 = arith.constant 0 : index
    %34 = vector.load %arg9[%c0_23, %c0_24] : memref<1x8xf32, #tpu.memory_space<vmem>>, vector<1x8xf32>
    %35 = vector.broadcast %34 : vector<1x8xf32> to vector<2x8xf32>
    %36 = arith.addf %33, %35 : vector<2x8xf32>
    %c0_25 = arith.constant 0 : index
    %c0_26 = arith.constant 0 : index
    %37 = vector.load %arg10[%c0_25, %c0_26] : memref<2x8xf32, #tpu.memory_space<vmem>>, vector<2x8xf32>
    tpu.vector_store %arg10[%c0_25, %c0_26], %36 {strides = array<i32>} : memref<2x8xf32, #tpu.memory_space<vmem>>, vector<2x8xf32>,
    return
  }
}

</mosaic_0001>

<llo_original>
// kernel: dgcnn_forward.12
$region0: #{dgcnn_forward.12}
  #allocation0 [shape = 'u32[]', space=smem, size = 0x4, offset = 0x4, fixed_abs, tag = 'smem constant byte address 0x4 - core index']
  #allocation1 [shape = 'u32[72,128]{1,0:T(1,128)}', space=vmem, size = 0x9000, scoped, tag = 'internal scratch']
  %s0 = inlined_call_operand.vmem [shape: bf16[2,16,64], index: 0, kind: input, shape index: {}]
  %s1 = inlined_call_operand.vmem [shape: bf16[2,64,16], index: 1, kind: input, shape index: {}]
  %s2 = inlined_call_operand.vmem [shape: f32[2,1,16], index: 2, kind: input, shape index: {}]
  %s3 = inlined_call_operand.vmem [shape: s32[2,16,4], index: 3, kind: output, shape index: {}]
  %s4 = sld [smem:[#allocation0]]
  $region45: #{dgcnn_forward.12} parent=0
    _
  %s6 = ssub.s32 1, %s4
  %s7 = scalar_select 0, %s6, %s4
  loop: start=0, step=1, limit=4
  $region2: #{dgcnn_forward.12} parent=0 // loop_pre_header
    _
  $region3: #{dgcnn_forward.12} parent=0 // loop_header
    %s9 = sphi 0, %s13
    %p10 = scmp.ge.s32.totalorder %s9, 4
    %s16 = sphi 0, %s28
    %s17 = sphi 0, %s24
    %s18 = sphi 0, %s16
    %s19 = sphi 0, %s17
    %s20 = sphi 0, %s18
    %s21 = sphi 0, %s19
    %s33 = sphi 0, %s35
    %s36 = sphi 0, %s33
    %s37 = sphi 0, %s36
    %s53 = sphi 0, %s37
    %s59 = sphi 0, %s61
    %s62 = sphi 0, %s59
    %s63 = sphi 0, %s62
    %s79 = sphi 0, %s63
    %s85 = sphi 0, %s87
    %s88 = sphi 0, %s85
    %s89 = sphi 0, %s88
    %s105 = sphi 0, %s89
    %s113 = sphi 0, %s115
    %s116 = sphi 0, %s113
    %s117 = sphi 0, %s116
    %s133 = sphi 0, %s117
  $region4: #{dgcnn_forward.12} parent=0 // loop_header_branch
    %12 = sbr.rel (%p10) target = $region8
  $region5: #{dgcnn_forward.12} parent=0 // loop_body
    %s14 = ssub.s32 %s9, 1
    %s15 = ssub.s32 %s9, 2
    %s22 = sadd.s32 1, %s17
    %p23 = scmp.ge.s32.totalorder %s22, 1
    %s24 = scalar_select %p23, 0, %s22
    %s25 = sadd.s32 1, %s16
    %s26 = scalar_select %p23, %s25, %s16
    %p27 = scmp.ge.s32.totalorder %s26, 2
    %s28 = scalar_select %p27, 0, %s26
    %s29 = ssub.s32 %s16, %s28
    %s30 = ssub.s32 %s17, %s24
    %s31 = sor.u32 %s29, %s30
    %p32 = scmp.eq.s32.totalorder %s31, 0
    %s34 = sadd.s32 %s33, 1
    %s35 = scalar_select %p32, %s33, %s34
    %p38 = pneg %p32
    %p39 = scmp.eq.s32.totalorder %s9, 1
    %p40 = por %p38, %p39
    %p41 = scmp.ne.s32.totalorder %s33, %s36
    %p42 = scmp.eq.s32.totalorder %s9, 0
    %p43 = por %p41, %p42
    %p44 = scmp.ne.s32.totalorder %s33, %s36
    %p45 = scmp.eq.s32.totalorder %s14, 1
    %p46 = por %p44, %p45
    %p47 = scmp.ne.s32.totalorder %s36, %s37
    %p48 = scmp.eq.s32.totalorder %s14, 0
    %p49 = por %p47, %p48
    %p50 = scmp.ne.s32.totalorder %s36, %s37
    %p51 = scmp.eq.s32.totalorder %s15, 1
    %p52 = por %p50, %p51
    %p54 = scmp.ne.s32.totalorder %s37, %s53
    %p55 = scmp.eq.s32.totalorder %s15, 0
    %p56 = por %p54, %p55
    %s57 = ssub.s32 %s16, %s28
    %p58 = scmp.eq.s32.totalorder %s57, 0
    %s60 = sadd.s32 %s59, 1
    %s61 = scalar_select %p58, %s59, %s60
    %p64 = pneg %p58
    %p65 = scmp.eq.s32.totalorder %s9, 1
    %p66 = por %p64, %p65
    %p67 = scmp.ne.s32.totalorder %s59, %s62
    %p68 = scmp.eq.s32.totalorder %s9, 0
    %p69 = por %p67, %p68
    %p70 = scmp.ne.s32.totalorder %s59, %s62
    %p71 = scmp.eq.s32.totalorder %s14, 1
    %p72 = por %p70, %p71
    %p73 = scmp.ne.s32.totalorder %s62, %s63
    %p74 = scmp.eq.s32.totalorder %s14, 0
    %p75 = por %p73, %p74
    %p76 = scmp.ne.s32.totalorder %s62, %s63
    %p77 = scmp.eq.s32.totalorder %s15, 1
    %p78 = por %p76, %p77
    %p80 = scmp.ne.s32.totalorder %s63, %s79
    %p81 = scmp.eq.s32.totalorder %s15, 0
    %p82 = por %p80, %p81
    %s83 = ssub.s32 %s16, %s28
    %p84 = scmp.eq.s32.totalorder %s83, 0
    %s86 = sadd.s32 %s85, 1
    %s87 = scalar_select %p84, %s85, %s86
    %p90 = pneg %p84
    %p91 = scmp.eq.s32.totalorder %s9, 1
    %p92 = por %p90, %p91
    %p93 = scmp.ne.s32.totalorder %s85, %s88
    %p94 = scmp.eq.s32.totalorder %s9, 0
    %p95 = por %p93, %p94
    %p96 = scmp.ne.s32.totalorder %s85, %s88
    %p97 = scmp.eq.s32.totalorder %s14, 1
    %p98 = por %p96, %p97
    %p99 = scmp.ne.s32.totalorder %s88, %s89
    %p100 = scmp.eq.s32.totalorder %s14, 0
    %p101 = por %p99, %p100
    %p102 = scmp.ne.s32.totalorder %s88, %s89
    %p103 = scmp.eq.s32.totalorder %s15, 1
    %p104 = por %p102, %p103
    %p106 = scmp.ne.s32.totalorder %s89, %s105
    %p107 = scmp.eq.s32.totalorder %s15, 0
    %p108 = por %p106, %p107
    %s109 = ssub.s32 %s16, %s28
    %s110 = ssub.s32 %s17, %s24
    %s111 = sor.u32 %s109, %s110
    %p112 = scmp.eq.s32.totalorder %s111, 0
    %s114 = sadd.s32 %s113, 1
    %s115 = scalar_select %p112, %s113, %s114
    %p118 = pneg %p112
    %p119 = scmp.eq.s32.totalorder %s9, 1
    %p120 = por %p118, %p119
    %p121 = scmp.ne.s32.totalorder %s113, %s116
    %p122 = scmp.eq.s32.totalorder %s9, 0
    %p123 = por %p121, %p122
    %p124 = scmp.ne.s32.totalorder %s113, %s116
    %p125 = scmp.eq.s32.totalorder %s14, 1
    %p126 = por %p124, %p125
    %p127 = scmp.ne.s32.totalorder %s116, %s117
    %p128 = scmp.eq.s32.totalorder %s14, 0
    %p129 = por %p127, %p128
    %p130 = scmp.ne.s32.totalorder %s116, %s117
    %p131 = scmp.eq.s32.totalorder %s15, 1
    %p132 = por %p130, %p131
    %p134 = scmp.ne.s32.totalorder %s117, %s133
    %p135 = scmp.eq.s32.totalorder %s15, 0
    %p136 = por %p134, %p135
    %p137 = scmp.le.s32.totalorder 1, %s9
    %p138 = scmp.lt.s32.totalorder %s9, 3
    %p139 = pnand %p137, %p138
    %p140 = pneg %p139
    // Predicated region
    $region9: #{dgcnn_forward.12} parent=5 // pred_check
      _
    $region10: #{dgcnn_forward.12} parent=5 // pred_check_branch
      %142 = sbr.rel (%p139) target = $region12
    $region11: #{dgcnn_forward.12} parent=5 // pred_region
      %s143 = ssub.s32 %s9, 1
    $region12: #{dgcnn_forward.12} parent=5 // pred_fallthru
      _
    %p144 = scmp.lt.s32.totalorder %s9, 2
    // Predicated region
    $region13: #{dgcnn_forward.12} parent=5 // pred_check
      %p145 = pneg %p144
    $region14: #{dgcnn_forward.12} parent=5 // pred_check_branch
      %147 = sbr.rel (%p145) target = $region16
    $region15: #{dgcnn_forward.12} parent=5 // pred_region
      // Predicated region
      $region17: #{dgcnn_forward.12} parent=15 // pred_check
        %p148 = pneg %p43
      $region18: #{dgcnn_forward.12} parent=15 // pred_check_branch
        %150 = sbr.rel (%p148) target = $region20
      $region19: #{dgcnn_forward.12} parent=15 // pred_region
        %s151 = smul.u32 2, %s17
        %p152 = scmp.lt.s32.totalorder %s16, 1
        %s153 = scalar_select %p152, %s16, 1
        %p154 = scmp.lt.s32.totalorder %s151, 1
        %s155 = scalar_select %p154, %s151, 1
        %s156 = smul.addr %s153, 2
        %s157 = sadd.s32 %s155, %s156
        %s158 = smul.addr %s157, 4
        %s159 = scalar_lea.vmem %s0, %s158
        %s160 = smul.u32 2, %s17
      $region20: #{dgcnn_forward.12} parent=15 // pred_fallthru
        _
      // Predicated region
      $region21: #{dgcnn_forward.12} parent=15 // pred_check
        %p161 = pneg %p69
      $region22: #{dgcnn_forward.12} parent=15 // pred_check_branch
        %163 = sbr.rel (%p161) target = $region24
      $region23: #{dgcnn_forward.12} parent=15 // pred_region
        %p164 = scmp.lt.s32.totalorder %s16, 1
        %s165 = scalar_select %p164, %s16, 1
        %s166 = smul.addr %s165, 8
        %s167 = smul.addr %s166, 4
        %s168 = scalar_lea.vmem %s1, %s167
      $region24: #{dgcnn_forward.12} parent=15 // pred_fallthru
        _
      // Predicated region
      $region25: #{dgcnn_forward.12} parent=15 // pred_check
        %p169 = pneg %p95
      $region26: #{dgcnn_forward.12} parent=15 // pred_check_branch
        %171 = sbr.rel (%p169) target = $region28
      $region27: #{dgcnn_forward.12} parent=15 // pred_region
        %p172 = scmp.lt.s32.totalorder %s16, 1
        %s173 = scalar_select %p172, %s16, 1
        %s174 = scalar_lea.vmem %s2, %s173
      $region28: #{dgcnn_forward.12} parent=15 // pred_fallthru
        _
    $region16: #{dgcnn_forward.12} parent=5 // pred_fallthru
      _
    %p175 = scmp.le.s32.totalorder 1, %s9
    %p176 = scmp.lt.s32.totalorder %s9, 3
    %p177 = pnand %p175, %p176
    %p178 = pneg %p177
    // Predicated region
    $region29: #{dgcnn_forward.12} parent=5 // pred_check
      _
    $region30: #{dgcnn_forward.12} parent=5 // pred_check_branch
      %180 = sbr.rel (%p177) target = $region32
    $region31: #{dgcnn_forward.12} parent=5 // pred_region
      %s181 = ssub.s32 %s9, 1
      %s182 = smul.u32 2, %s19
      %p183 = scmp.lt.s32.totalorder %s18, 1
      %s184 = scalar_select %p183, %s18, 1
      %p185 = scmp.lt.s32.totalorder %s182, 1
      %s186 = scalar_select %p185, %s182, 1
      %s187 = smul.addr %s184, 2
      %s188 = sadd.s32 %s186, %s187
      %s189 = smul.addr %s188, 4
      %s190 = scalar_lea.vmem %s0, %s189
      %p191 = pneg %p49
      %p192 = pneg %p46
      %p193 = scmp.lt.s32.totalorder %s18, 1
      %s194 = scalar_select %p193, %s18, 1
      %s195 = smul.addr %s194, 8
      %s196 = smul.addr %s195, 4
      %s197 = scalar_lea.vmem %s1, %s196
      %p198 = pneg %p75
      %p199 = pneg %p72
      %p200 = scmp.lt.s32.totalorder %s18, 1
      %s201 = scalar_select %p200, %s18, 1
      %s202 = scalar_lea.vmem %s2, %s201
      %p203 = pneg %p101
      %p204 = pneg %p98
      %p205 = pneg %p129
      %p206 = pneg %p126
      %s207 = smul.u32 2, %s19
      %p208 = scmp.lt.s32.totalorder %s18, 1
      %s209 = scalar_select %p208, %s18, 1
      %p210 = scmp.lt.s32.totalorder %s207, 1
      %s211 = scalar_select %p210, %s207, 1
      %s212 = smul.addr %s209, 2
      %s213 = sadd.s32 %s211, %s212
      %s214 = smul.addr %s213, 8
      %s215 = scalar_lea.vmem %s3, %s214
      %s216 = smul.u32 2, %s19
      %p217 = scmp.lt.s32.totalorder %s18, 1
      %s218 = scalar_select %p217, %s18, 1
      %p219 = scmp.lt.s32.totalorder %s216, 1
      %s220 = scalar_select %p219, %s216, 1
      %s221 = smul.addr %s218, 2
      %s222 = sadd.s32 %s220, %s221
      %s223 = smul.addr %s222, 4
      %s224 = scalar_lea.vmem %s0, %s223
      %s225 = smul.u32 2, %s19
      %p226 = scmp.lt.s32.totalorder %s18, 1
      %s227 = scalar_select %p226, %s18, 1
      %s228 = smul.addr %s227, 8
      %s229 = smul.addr %s228, 4
      %s230 = scalar_lea.vmem %s1, %s229
      %p231 = scmp.lt.s32.totalorder %s18, 1
      %s232 = scalar_select %p231, %s18, 1
      %s233 = scalar_lea.vmem %s2, %s232
      %s234 = smul.u32 2, %s19
      %p235 = scmp.lt.s32.totalorder %s18, 1
      %s236 = scalar_select %p235, %s18, 1
      %p237 = scmp.lt.s32.totalorder %s234, 1
      %s238 = scalar_select %p237, %s234, 1
      %s239 = smul.addr %s236, 2
      %s240 = sadd.s32 %s238, %s239
      %s241 = smul.addr %s240, 8
      %s242 = scalar_lea.vmem %s3, %s241
      %s243 = smul.u32 2, %s19
      %v245 = vld [vmem:[%s224] sm:$0xf]
      %v246 = vld [vmem:[%s224 + $0x4] sm:$0xf]
      %v247 = vld [vmem:[%s230] sm:$0xf]
      %v248 = vld [vmem:[%s230 + $0x4] sm:$0xf]
      %v249 = vld [vmem:[%s230 + $0x8] sm:$0xf]
      %v250 = vld [vmem:[%s230 + $0xc] sm:$0xf]
      %v251 = vld [vmem:[%s230 + $0x10] sm:$0xf]
      %v252 = vld [vmem:[%s230 + $0x14] sm:$0xf]
      %v253 = vld [vmem:[%s230 + $0x18] sm:$0xf]
      %v254 = vld [vmem:[%s230 + $0x1c] sm:$0xf]
      %v257 = vunpack.c.l.b16 %v245
      %v258 = vunpack.c.l.b16 %v246
      %v259 = vpack.c.b16 %v258, %v257
      %v268 = vunpack.c.l.b16 %v247
      %v269 = vunpack.c.l.b16 %v248
      %v270 = vunpack.c.l.b16 %v249
      %v271 = vunpack.c.l.b16 %v250
      %v272 = vunpack.c.l.b16 %v251
      %v273 = vunpack.c.l.b16 %v252
      %v274 = vunpack.c.l.b16 %v253
      %v275 = vunpack.c.l.b16 %v254
      %v276 = vpack.c.b16 %v269, %v268
      %v277 = vpack.c.b16 %v271, %v270
      %v278 = vpack.c.b16 %v273, %v272
      %v279 = vpack.c.b16 %v275, %v274
      %vm284 = vcmask 523264
      %v286 = vsel %vm284, %v259, 0
      %288 = vmatpush.bf16.msra.mxu0 0
      %289 = vmatpush.bf16.msra.mxu0 0
      %290 = vmatpush.bf16.msra.mxu0 0
      %291 = vmatpush.bf16.msra.mxu0 0
      %292 = vmatpush.bf16.msra.mxu0 %v279
      %293 = vmatpush.bf16.msra.mxu0 %v278
      %294 = vmatpush.bf16.msra.mxu0 %v277
      %295 = vmatpush.bf16.msra.mxu0 %v276
      %296 = vmatmul.bf16.gmra.mxu0 %v286
      %v297 = vpop.f32.mrf.mxu0
      %v298 = vadd.f32 0.0, %v297
      %v299 = vpop.f32.mrf.mxu0
      %v300 = vadd.f32 0.0, %v299
      %301 = vdwg.mxu0
      %v302 = vld [vmem:[%s233] sm:$0x1]
      %v304 = vperm.slane %v302, 0
      %v306 = vsub.f32 %v298, %v304
      %v307 = vsub.f32 %v300, %v304
      %vm310 = vcmp.lt.s32.totalorder %v306, 0
      %vm311 = vcmp.lt.s32.totalorder %v307, 0
      %v312 = vxor.u32 %v306, 2147483647
      %v313 = vxor.u32 %v307, 2147483647
      %v314 = vsel %vm310, %v312, %v306
      %v315 = vsel %vm311, %v313, %v307
      %v316 = vlaneseq
      %v317 = vand.u32 %v316, 127
      %v318 = vand.u32 %v314, 4294967280
      %v319 = vand.u32 %v315, 4294967280
      %v320 = vsub.s32 15, %v317
      %v321 = vor.u32 %v318, %v320
      %v322 = vor.u32 %v319, %v320
      %vm323 = vcmask 130048
      %v324 = vsel %vm323, %v321, 2147483648
      %v325 = vand.u32 %v324, 65535
      %v326 = vshra.s32 %v324, 16
      %v327 = vcvt.s32.f32 %v325
      %v328 = vcvt.s32.f32 %v326
      %329 = vmax.xlane.f32.xlu0 %v328
      %v330 = vpop.xlane.xlu0 %329
      %vm331 = vcmp.eq.f32.partialorder %v328, %v330
      %v332 = vsel %vm331, %v327, -inf
      %333 = vmax.xlane.f32.xlu0 %v332
      %v334 = vpop.xlane.xlu0 %333
      %v335 = vcvt.f32.s32 %v334
      %v336 = vcvt.f32.s32 %v330
      %v337 = vshll.u32 %v336, 16
      %v338 = vadd.s32 %v337, %v335
      %v339 = vsel %vm323, %v322, 2147483648
      %v340 = vand.u32 %v339, 65535
      %v341 = vshra.s32 %v339, 16
      %v342 = vcvt.s32.f32 %v340
      %v343 = vcvt.s32.f32 %v341
      %344 = vmax.xlane.f32.xlu0 %v343
      %v345 = vpop.xlane.xlu0 %344
      %vm346 = vcmp.eq.f32.partialorder %v343, %v345
      %v347 = vsel %vm346, %v342, -inf
      %348 = vmax.xlane.f32.xlu0 %v347
      %v349 = vpop.xlane.xlu0 %348
      %v350 = vcvt.f32.s32 %v349
      %v351 = vcvt.f32.s32 %v345
      %v352 = vshll.u32 %v351, 16
      %v353 = vadd.s32 %v352, %v350
      %v354 = vand.u32 %v338, 15
      %v355 = vand.u32 %v353, 15
      %v356 = vsub.s32 15, %v354
      %v357 = vsub.s32 15, %v355
      %vm358 = vcmp.eq.s32.totalorder %v317, 0
      %v359 = vsel %vm358, %v356, 0
      %v360 = vsel %vm358, %v357, 0
      %vm361 = vcmp.eq.s32.totalorder %v317, %v356
      %vm362 = vcmp.eq.s32.totalorder %v317, %v357
      %v363 = vsel %vm361, 2147483648, %v321
      %v364 = vsel %vm362, 2147483648, %v322
      %v365 = vsel %vm323, %v363, 2147483648
      %v366 = vand.u32 %v365, 65535
      %v367 = vshra.s32 %v365, 16
      %v368 = vcvt.s32.f32 %v366
      %v369 = vcvt.s32.f32 %v367
      %370 = vmax.xlane.f32.xlu0 %v369
      %v371 = vpop.xlane.xlu0 %370
      %vm372 = vcmp.eq.f32.partialorder %v369, %v371
      %v373 = vsel %vm372, %v368, -inf
      %374 = vmax.xlane.f32.xlu0 %v373
      %v375 = vpop.xlane.xlu0 %374
      %v376 = vcvt.f32.s32 %v375
      %v377 = vcvt.f32.s32 %v371
      %v378 = vshll.u32 %v377, 16
      %v379 = vadd.s32 %v378, %v376
      %v380 = vsel %vm323, %v364, 2147483648
      %v381 = vand.u32 %v380, 65535
      %v382 = vshra.s32 %v380, 16
      %v383 = vcvt.s32.f32 %v381
      %v384 = vcvt.s32.f32 %v382
      %385 = vmax.xlane.f32.xlu0 %v384
      %v386 = vpop.xlane.xlu0 %385
      %vm387 = vcmp.eq.f32.partialorder %v384, %v386
      %v388 = vsel %vm387, %v383, -inf
      %389 = vmax.xlane.f32.xlu0 %v388
      %v390 = vpop.xlane.xlu0 %389
      %v391 = vcvt.f32.s32 %v390
      %v392 = vcvt.f32.s32 %v386
      %v393 = vshll.u32 %v392, 16
      %v394 = vadd.s32 %v393, %v391
      %v395 = vand.u32 %v379, 15
      %v396 = vand.u32 %v394, 15
      %v397 = vsub.s32 15, %v395
      %v398 = vsub.s32 15, %v396
      %vm399 = vcmp.eq.s32.totalorder %v317, 1
      %v400 = vsel %vm399, %v397, %v359
      %v401 = vsel %vm399, %v398, %v360
      %vm402 = vcmp.eq.s32.totalorder %v317, %v397
      %vm403 = vcmp.eq.s32.totalorder %v317, %v398
      %v404 = vsel %vm402, 2147483648, %v363
      %v405 = vsel %vm403, 2147483648, %v364
      %v406 = vsel %vm323, %v404, 2147483648
      %v407 = vand.u32 %v406, 65535
      %v408 = vshra.s32 %v406, 16
      %v409 = vcvt.s32.f32 %v407
      %v410 = vcvt.s32.f32 %v408
      %411 = vmax.xlane.f32.xlu0 %v410
      %v412 = vpop.xlane.xlu0 %411
      %vm413 = vcmp.eq.f32.partialorder %v410, %v412
      %v414 = vsel %vm413, %v409, -inf
      %415 = vmax.xlane.f32.xlu0 %v414
      %v416 = vpop.xlane.xlu0 %415
      %v417 = vcvt.f32.s32 %v416
      %v418 = vcvt.f32.s32 %v412
      %v419 = vshll.u32 %v418, 16
      %v420 = vadd.s32 %v419, %v417
      %v421 = vsel %vm323, %v405, 2147483648
      %v422 = vand.u32 %v421, 65535
      %v423 = vshra.s32 %v421, 16
      %v424 = vcvt.s32.f32 %v422
      %v425 = vcvt.s32.f32 %v423
      %426 = vmax.xlane.f32.xlu0 %v425
      %v427 = vpop.xlane.xlu0 %426
      %vm428 = vcmp.eq.f32.partialorder %v425, %v427
      %v429 = vsel %vm428, %v424, -inf
      %430 = vmax.xlane.f32.xlu0 %v429
      %v431 = vpop.xlane.xlu0 %430
      %v432 = vcvt.f32.s32 %v431
      %v433 = vcvt.f32.s32 %v427
      %v434 = vshll.u32 %v433, 16
      %v435 = vadd.s32 %v434, %v432
      %v436 = vand.u32 %v420, 15
      %v437 = vand.u32 %v435, 15
      %v438 = vsub.s32 15, %v436
      %v439 = vsub.s32 15, %v437
      %vm440 = vcmp.eq.s32.totalorder %v317, 2
      %v441 = vsel %vm440, %v438, %v400
      %v442 = vsel %vm440, %v439, %v401
      %vm443 = vcmp.eq.s32.totalorder %v317, %v438
      %vm444 = vcmp.eq.s32.totalorder %v317, %v439
      %v445 = vsel %vm443, 2147483648, %v404
      %v446 = vsel %vm444, 2147483648, %v405
      %v447 = vsel %vm323, %v445, 2147483648
      %v448 = vand.u32 %v447, 65535
      %v449 = vshra.s32 %v447, 16
      %v450 = vcvt.s32.f32 %v448
      %v451 = vcvt.s32.f32 %v449
      %452 = vmax.xlane.f32.xlu0 %v451
      %v453 = vpop.xlane.xlu0 %452
      %vm454 = vcmp.eq.f32.partialorder %v451, %v453
      %v455 = vsel %vm454, %v450, -inf
      %456 = vmax.xlane.f32.xlu0 %v455
      %v457 = vpop.xlane.xlu0 %456
      %v458 = vcvt.f32.s32 %v457
      %v459 = vcvt.f32.s32 %v453
      %v460 = vshll.u32 %v459, 16
      %v461 = vadd.s32 %v460, %v458
      %v462 = vsel %vm323, %v446, 2147483648
      %v463 = vand.u32 %v462, 65535
      %v464 = vshra.s32 %v462, 16
      %v465 = vcvt.s32.f32 %v463
      %v466 = vcvt.s32.f32 %v464
      %467 = vmax.xlane.f32.xlu0 %v466
      %v468 = vpop.xlane.xlu0 %467
      %vm469 = vcmp.eq.f32.partialorder %v466, %v468
      %v470 = vsel %vm469, %v465, -inf
      %471 = vmax.xlane.f32.xlu0 %v470
      %v472 = vpop.xlane.xlu0 %471
      %v473 = vcvt.f32.s32 %v472
      %v474 = vcvt.f32.s32 %v468
      %v475 = vshll.u32 %v474, 16
      %v476 = vadd.s32 %v475, %v473
      %v477 = vand.u32 %v461, 15
      %v478 = vand.u32 %v476, 15
      %v479 = vsub.s32 15, %v477
      %v480 = vsub.s32 15, %v478
      %vm481 = vcmp.eq.s32.totalorder %v317, 3
      %v482 = vsel %vm481, %v479, %v441
      %v483 = vsel %vm481, %v480, %v442
      %vm484 = vcmask 31744
      %485 = vst.msk [vmem:[%s242] sm:$0xff] %vm484, %v482
      %486 = vst.msk [vmem:[%s242 + $0x8] sm:$0xff] %vm484, %v483
      %s487 = smul.u32 2, %s19
      %p488 = scmp.lt.s32.totalorder %s18, 1
      %s489 = scalar_select %p488, %s18, 1
      %p490 = scmp.lt.s32.totalorder %s487, 1
      %s491 = scalar_select %p490, %s487, 1
      %s492 = smul.addr %s489, 2
      %s493 = sadd.s32 %s491, %s492
      %s494 = smul.addr %s493, 8
      %s495 = scalar_lea.vmem %s3, %s494
      // Predicated region
      $region33: #{dgcnn_forward.12} parent=31 // pred_check
        %p496 = pneg %p126
      $region34: #{dgcnn_forward.12} parent=31 // pred_check_branch
        %498 = sbr.rel (%p496) target = $region36
      $region35: #{dgcnn_forward.12} parent=31 // pred_region
        %s499 = smul.u32 2, %s19
      $region36: #{dgcnn_forward.12} parent=31 // pred_fallthru
        _
    $region32: #{dgcnn_forward.12} parent=5 // pred_fallthru
      _
    %p500 = scmp.le.s32.totalorder 2, %s9
    // Predicated region
    $region37: #{dgcnn_forward.12} parent=5 // pred_check
      %p501 = pneg %p500
    $region38: #{dgcnn_forward.12} parent=5 // pred_check_branch
      %503 = sbr.rel (%p501) target = $region40
    $region39: #{dgcnn_forward.12} parent=5 // pred_region
      %s504 = ssub.s32 %s9, 2
      // Predicated region
      $region41: #{dgcnn_forward.12} parent=39 // pred_check
        %p505 = pneg %p132
      $region42: #{dgcnn_forward.12} parent=39 // pred_check_branch
        %507 = sbr.rel (%p505) target = $region44
      $region43: #{dgcnn_forward.12} parent=39 // pred_region
        %s508 = smul.u32 2, %s21
        %p509 = scmp.lt.s32.totalorder %s20, 1
        %s510 = scalar_select %p509, %s20, 1
        %p511 = scmp.lt.s32.totalorder %s508, 1
        %s512 = scalar_select %p511, %s508, 1
        %s513 = smul.addr %s510, 2
        %s514 = sadd.s32 %s512, %s513
        %s515 = smul.addr %s514, 8
        %s516 = scalar_lea.vmem %s3, %s515
      $region44: #{dgcnn_forward.12} parent=39 // pred_fallthru
        _
    $region40: #{dgcnn_forward.12} parent=5 // pred_fallthru
      _
  $region6: #{dgcnn_forward.12} parent=0 // loop_footer
    %s13 = sadd.s32 1, %s9
  $region7: #{dgcnn_forward.12} parent=0 // loop_footer_branch
    %8 = sbr.rel target = $region3
  $region8: #{dgcnn_forward.12} parent=0 // loop_exit
    _

// kernel: dgcnn_forward.10
$region0: #{dgcnn_forward.10}
  #allocation0 [shape = 'u32[]', space=smem, size = 0x4, offset = 0x4, fixed_abs, tag = 'smem constant byte address 0x4 - core index']
  #allocation1 [shape = 'u32[72,128]{1,0:T(1,128)}', space=vmem, size = 0x9000, scoped, tag = 'internal scratch']
  %s0 = inlined_call_operand.vmem [shape: bf16[2,16,3], index: 0, kind: input, shape index: {}]
  %s1 = inlined_call_operand.vmem [shape: bf16[2,3,16], index: 1, kind: input, shape index: {}]
  %s2 = inlined_call_operand.vmem [shape: f32[2,1,16], index: 2, kind: input, shape index: {}]
  %s3 = inlined_call_operand.vmem [shape: s32[2,16,4], index: 3, kind: output, shape index: {}]
  %s4 = sld [smem:[#allocation0]]
  $region45: #{dgcnn_forward.10} parent=0
    _
  %s6 = ssub.s32 1, %s4
  %s7 = scalar_select 0, %s6, %s4
  loop: start=0, step=1, limit=4
  $region2: #{dgcnn_forward.10} parent=0 // loop_pre_header
    _
  $region3: #{dgcnn_forward.10} parent=0 // loop_header
    %s9 = sphi 0, %s13
    %p10 = scmp.ge.s32.totalorder %s9, 4
    %s16 = sphi 0, %s28
    %s17 = sphi 0, %s24
    %s18 = sphi 0, %s16
    %s19 = sphi 0, %s17
    %s20 = sphi 0, %s18
    %s21 = sphi 0, %s19
    %s33 = sphi 0, %s35
    %s36 = sphi 0, %s33
    %s37 = sphi 0, %s36
    %s53 = sphi 0, %s37
    %s59 = sphi 0, %s61
    %s62 = sphi 0, %s59
    %s63 = sphi 0, %s62
    %s79 = sphi 0, %s63
    %s85 = sphi 0, %s87
    %s88 = sphi 0, %s85
    %s89 = sphi 0, %s88
    %s105 = sphi 0, %s89
    %s113 = sphi 0, %s115
    %s116 = sphi 0, %s113
    %s117 = sphi 0, %s116
    %s133 = sphi 0, %s117
  $region4: #{dgcnn_forward.10} parent=0 // loop_header_branch
    %12 = sbr.rel (%p10) target = $region8
  $region5: #{dgcnn_forward.10} parent=0 // loop_body
    %s14 = ssub.s32 %s9, 1
    %s15 = ssub.s32 %s9, 2
    %s22 = sadd.s32 1, %s17
    %p23 = scmp.ge.s32.totalorder %s22, 1
    %s24 = scalar_select %p23, 0, %s22
    %s25 = sadd.s32 1, %s16
    %s26 = scalar_select %p23, %s25, %s16
    %p27 = scmp.ge.s32.totalorder %s26, 2
    %s28 = scalar_select %p27, 0, %s26
    %s29 = ssub.s32 %s16, %s28
    %s30 = ssub.s32 %s17, %s24
    %s31 = sor.u32 %s29, %s30
    %p32 = scmp.eq.s32.totalorder %s31, 0
    %s34 = sadd.s32 %s33, 1
    %s35 = scalar_select %p32, %s33, %s34
    %p38 = pneg %p32
    %p39 = scmp.eq.s32.totalorder %s9, 1
    %p40 = por %p38, %p39
    %p41 = scmp.ne.s32.totalorder %s33, %s36
    %p42 = scmp.eq.s32.totalorder %s9, 0
    %p43 = por %p41, %p42
    %p44 = scmp.ne.s32.totalorder %s33, %s36
    %p45 = scmp.eq.s32.totalorder %s14, 1
    %p46 = por %p44, %p45
    %p47 = scmp.ne.s32.totalorder %s36, %s37
    %p48 = scmp.eq.s32.totalorder %s14, 0
    %p49 = por %p47, %p48
    %p50 = scmp.ne.s32.totalorder %s36, %s37
    %p51 = scmp.eq.s32.totalorder %s15, 1
    %p52 = por %p50, %p51
    %p54 = scmp.ne.s32.totalorder %s37, %s53
    %p55 = scmp.eq.s32.totalorder %s15, 0
    %p56 = por %p54, %p55
    %s57 = ssub.s32 %s16, %s28
    %p58 = scmp.eq.s32.totalorder %s57, 0
    %s60 = sadd.s32 %s59, 1
    %s61 = scalar_select %p58, %s59, %s60
    %p64 = pneg %p58
    %p65 = scmp.eq.s32.totalorder %s9, 1
    %p66 = por %p64, %p65
    %p67 = scmp.ne.s32.totalorder %s59, %s62
    %p68 = scmp.eq.s32.totalorder %s9, 0
    %p69 = por %p67, %p68
    %p70 = scmp.ne.s32.totalorder %s59, %s62
    %p71 = scmp.eq.s32.totalorder %s14, 1
    %p72 = por %p70, %p71
    %p73 = scmp.ne.s32.totalorder %s62, %s63
    %p74 = scmp.eq.s32.totalorder %s14, 0
    %p75 = por %p73, %p74
    %p76 = scmp.ne.s32.totalorder %s62, %s63
    %p77 = scmp.eq.s32.totalorder %s15, 1
    %p78 = por %p76, %p77
    %p80 = scmp.ne.s32.totalorder %s63, %s79
    %p81 = scmp.eq.s32.totalorder %s15, 0
    %p82 = por %p80, %p81
    %s83 = ssub.s32 %s16, %s28
    %p84 = scmp.eq.s32.totalorder %s83, 0
    %s86 = sadd.s32 %s85, 1
    %s87 = scalar_select %p84, %s85, %s86
    %p90 = pneg %p84
    %p91 = scmp.eq.s32.totalorder %s9, 1
    %p92 = por %p90, %p91
    %p93 = scmp.ne.s32.totalorder %s85, %s88
    %p94 = scmp.eq.s32.totalorder %s9, 0
    %p95 = por %p93, %p94
    %p96 = scmp.ne.s32.totalorder %s85, %s88
    %p97 = scmp.eq.s32.totalorder %s14, 1
    %p98 = por %p96, %p97
    %p99 = scmp.ne.s32.totalorder %s88, %s89
    %p100 = scmp.eq.s32.totalorder %s14, 0
    %p101 = por %p99, %p100
    %p102 = scmp.ne.s32.totalorder %s88, %s89
    %p103 = scmp.eq.s32.totalorder %s15, 1
    %p104 = por %p102, %p103
    %p106 = scmp.ne.s32.totalorder %s89, %s105
    %p107 = scmp.eq.s32.totalorder %s15, 0
    %p108 = por %p106, %p107
    %s109 = ssub.s32 %s16, %s28
    %s110 = ssub.s32 %s17, %s24
    %s111 = sor.u32 %s109, %s110
    %p112 = scmp.eq.s32.totalorder %s111, 0
    %s114 = sadd.s32 %s113, 1
    %s115 = scalar_select %p112, %s113, %s114
    %p118 = pneg %p112
    %p119 = scmp.eq.s32.totalorder %s9, 1
    %p120 = por %p118, %p119
    %p121 = scmp.ne.s32.totalorder %s113, %s116
    %p122 = scmp.eq.s32.totalorder %s9, 0
    %p123 = por %p121, %p122
    %p124 = scmp.ne.s32.totalorder %s113, %s116
    %p125 = scmp.eq.s32.totalorder %s14, 1
    %p126 = por %p124, %p125
    %p127 = scmp.ne.s32.totalorder %s116, %s117
    %p128 = scmp.eq.s32.totalorder %s14, 0
    %p129 = por %p127, %p128
    %p130 = scmp.ne.s32.totalorder %s116, %s117
    %p131 = scmp.eq.s32.totalorder %s15, 1
    %p132 = por %p130, %p131
    %p134 = scmp.ne.s32.totalorder %s117, %s133
    %p135 = scmp.eq.s32.totalorder %s15, 0
    %p136 = por %p134, %p135
    %p137 = scmp.le.s32.totalorder 1, %s9
    %p138 = scmp.lt.s32.totalorder %s9, 3
    %p139 = pnand %p137, %p138
    %p140 = pneg %p139
    // Predicated region
    $region9: #{dgcnn_forward.10} parent=5 // pred_check
      _
    $region10: #{dgcnn_forward.10} parent=5 // pred_check_branch
      %142 = sbr.rel (%p139) target = $region12
    $region11: #{dgcnn_forward.10} parent=5 // pred_region
      %s143 = ssub.s32 %s9, 1
    $region12: #{dgcnn_forward.10} parent=5 // pred_fallthru
      _
    %p144 = scmp.lt.s32.totalorder %s9, 2
    // Predicated region
    $region13: #{dgcnn_forward.10} parent=5 // pred_check
      %p145 = pneg %p144
    $region14: #{dgcnn_forward.10} parent=5 // pred_check_branch
      %147 = sbr.rel (%p145) target = $region16
    $region15: #{dgcnn_forward.10} parent=5 // pred_region
      // Predicated region
      $region17: #{dgcnn_forward.10} parent=15 // pred_check
        %p148 = pneg %p43
      $region18: #{dgcnn_forward.10} parent=15 // pred_check_branch
        %150 = sbr.rel (%p148) target = $region20
      $region19: #{dgcnn_forward.10} parent=15 // pred_region
        %s151 = smul.u32 2, %s17
        %p152 = scmp.lt.s32.totalorder %s16, 1
        %s153 = scalar_select %p152, %s16, 1
        %p154 = scmp.lt.s32.totalorder %s151, 1
        %s155 = scalar_select %p154, %s151, 1
        %s156 = smul.addr %s153, 2
        %s157 = sadd.s32 %s155, %s156
        %s158 = smul.addr %s157, 4
        %s159 = scalar_lea.vmem %s0, %s158
        %s160 = smul.u32 2, %s17
      $region20: #{dgcnn_forward.10} parent=15 // pred_fallthru
        _
      // Predicated region
      $region21: #{dgcnn_forward.10} parent=15 // pred_check
        %p161 = pneg %p69
      $region22: #{dgcnn_forward.10} parent=15 // pred_check_branch
        %163 = sbr.rel (%p161) target = $region24
      $region23: #{dgcnn_forward.10} parent=15 // pred_region
        %p164 = scmp.lt.s32.totalorder %s16, 1
        %s165 = scalar_select %p164, %s16, 1
        %s166 = smul.addr %s165, 2
        %s167 = scalar_lea.vmem %s1, %s166
      $region24: #{dgcnn_forward.10} parent=15 // pred_fallthru
        _
      // Predicated region
      $region25: #{dgcnn_forward.10} parent=15 // pred_check
        %p168 = pneg %p95
      $region26: #{dgcnn_forward.10} parent=15 // pred_check_branch
        %170 = sbr.rel (%p168) target = $region28
      $region27: #{dgcnn_forward.10} parent=15 // pred_region
        %p171 = scmp.lt.s32.totalorder %s16, 1
        %s172 = scalar_select %p171, %s16, 1
        %s173 = scalar_lea.vmem %s2, %s172
      $region28: #{dgcnn_forward.10} parent=15 // pred_fallthru
        _
    $region16: #{dgcnn_forward.10} parent=5 // pred_fallthru
      _
    %p174 = scmp.le.s32.totalorder 1, %s9
    %p175 = scmp.lt.s32.totalorder %s9, 3
    %p176 = pnand %p174, %p175
    %p177 = pneg %p176
    // Predicated region
    $region29: #{dgcnn_forward.10} parent=5 // pred_check
      _
    $region30: #{dgcnn_forward.10} parent=5 // pred_check_branch
      %179 = sbr.rel (%p176) target = $region32
    $region31: #{dgcnn_forward.10} parent=5 // pred_region
      %s180 = ssub.s32 %s9, 1
      %s181 = smul.u32 2, %s19
      %p182 = scmp.lt.s32.totalorder %s18, 1
      %s183 = scalar_select %p182, %s18, 1
      %p184 = scmp.lt.s32.totalorder %s181, 1
      %s185 = scalar_select %p184, %s181, 1
      %s186 = smul.addr %s183, 2
      %s187 = sadd.s32 %s185, %s186
      %s188 = smul.addr %s187, 4
      %s189 = scalar_lea.vmem %s0, %s188
      %p190 = pneg %p49
      %p191 = pneg %p46
      %p192 = scmp.lt.s32.totalorder %s18, 1
      %s193 = scalar_select %p192, %s18, 1
      %s194 = smul.addr %s193, 2
      %s195 = scalar_lea.vmem %s1, %s194
      %p196 = pneg %p75
      %p197 = pneg %p72
      %p198 = scmp.lt.s32.totalorder %s18, 1
      %s199 = scalar_select %p198, %s18, 1
      %s200 = scalar_lea.vmem %s2, %s199
      %p201 = pneg %p101
      %p202 = pneg %p98
      %p203 = pneg %p129
      %p204 = pneg %p126
      %s205 = smul.u32 2, %s19
      %p206 = scmp.lt.s32.totalorder %s18, 1
      %s207 = scalar_select %p206, %s18, 1
      %p208 = scmp.lt.s32.totalorder %s205, 1
      %s209 = scalar_select %p208, %s205, 1
      %s210 = smul.addr %s207, 2
      %s211 = sadd.s32 %s209, %s210
      %s212 = smul.addr %s211, 8
      %s213 = scalar_lea.vmem %s3, %s212
      %s214 = smul.u32 2, %s19
      %p215 = scmp.lt.s32.totalorder %s18, 1
      %s216 = scalar_select %p215, %s18, 1
      %p217 = scmp.lt.s32.totalorder %s214, 1
      %s218 = scalar_select %p217, %s214, 1
      %s219 = smul.addr %s216, 2
      %s220 = sadd.s32 %s218, %s219
      %s221 = smul.addr %s220, 4
      %s222 = scalar_lea.vmem %s0, %s221
      %s223 = smul.u32 2, %s19
      %p224 = scmp.lt.s32.totalorder %s18, 1
      %s225 = scalar_select %p224, %s18, 1
      %s226 = smul.addr %s225, 2
      %s227 = scalar_lea.vmem %s1, %s226
      %p228 = scmp.lt.s32.totalorder %s18, 1
      %s229 = scalar_select %p228, %s18, 1
      %s230 = scalar_lea.vmem %s2, %s229
      %s231 = smul.u32 2, %s19
      %p232 = scmp.lt.s32.totalorder %s18, 1
      %s233 = scalar_select %p232, %s18, 1
      %p234 = scmp.lt.s32.totalorder %s231, 1
      %s235 = scalar_select %p234, %s231, 1
      %s236 = smul.addr %s233, 2
      %s237 = sadd.s32 %s235, %s236
      %s238 = smul.addr %s237, 8
      %s239 = scalar_lea.vmem %s3, %s238
      %s240 = smul.u32 2, %s19
      %v242 = vld [vmem:[%s222] sm:$0xf]
      %v243 = vld [vmem:[%s222 + $0x4] sm:$0xf]
      %v244 = vld [vmem:[%s227] sm:$0x3]
      %v247 = vunpack.c.l.b16 %v242
      %v248 = vunpack.c.l.b16 %v243
      %v249 = vpack.c.b16 %v248, %v247
      %vm250 = vcmask 23552
      %v252 = vsel %vm250, %v249, 0
      %vm254 = vcmask 1040384
      %vm255 = vcmask 1041408
      %v256 = vsel %vm254, 4294967295, 65535
      %v257 = vsel %vm255, %v256, 0
      %v259 = vand.u32 %v244, %v257
      %261 = vmatpush.bf16.msra.mxu0 0
      %262 = vmatpush.bf16.msra.mxu0 0
      %263 = vmatpush.bf16.msra.mxu0 0
      %264 = vmatpush.bf16.msra.mxu0 0
      %265 = vmatpush.bf16.msra.mxu0 0
      %266 = vmatpush.bf16.msra.mxu0 0
      %267 = vmatpush.bf16.msra.mxu0 0
      %268 = vmatpush.bf16.msra.mxu0 %v259
      %269 = vmatmul.bf16.gmra.mxu0 %v252
      %v270 = vpop.f32.mrf.mxu0
      %v271 = vadd.f32 0.0, %v270
      %v272 = vpop.f32.mrf.mxu0
      %v273 = vadd.f32 0.0, %v272
      %274 = vdwg.mxu0
      %v275 = vld [vmem:[%s230] sm:$0x1]
      %v277 = vperm.slane %v275, 0
      %v279 = vsub.f32 %v271, %v277
      %v280 = vsub.f32 %v273, %v277
      %vm283 = vcmp.lt.s32.totalorder %v279, 0
      %vm284 = vcmp.lt.s32.totalorder %v280, 0
      %v285 = vxor.u32 %v279, 2147483647
      %v286 = vxor.u32 %v280, 2147483647
      %v287 = vsel %vm283, %v285, %v279
      %v288 = vsel %vm284, %v286, %v280
      %v289 = vlaneseq
      %v290 = vand.u32 %v289, 127
      %v291 = vand.u32 %v287, 4294967280
      %v292 = vand.u32 %v288, 4294967280
      %v293 = vsub.s32 15, %v290
      %v294 = vor.u32 %v291, %v293
      %v295 = vor.u32 %v292, %v293
      %vm296 = vcmask 130048
      %v297 = vsel %vm296, %v294, 2147483648
      %v298 = vand.u32 %v297, 65535
      %v299 = vshra.s32 %v297, 16
      %v300 = vcvt.s32.f32 %v298
      %v301 = vcvt.s32.f32 %v299
      %302 = vmax.xlane.f32.xlu0 %v301
      %v303 = vpop.xlane.xlu0 %302
      %vm304 = vcmp.eq.f32.partialorder %v301, %v303
      %v305 = vsel %vm304, %v300, -inf
      %306 = vmax.xlane.f32.xlu0 %v305
      %v307 = vpop.xlane.xlu0 %306
      %v308 = vcvt.f32.s32 %v307
      %v309 = vcvt.f32.s32 %v303
      %v310 = vshll.u32 %v309, 16
      %v311 = vadd.s32 %v310, %v308
      %v312 = vsel %vm296, %v295, 2147483648
      %v313 = vand.u32 %v312, 65535
      %v314 = vshra.s32 %v312, 16
      %v315 = vcvt.s32.f32 %v313
      %v316 = vcvt.s32.f32 %v314
      %317 = vmax.xlane.f32.xlu0 %v316
      %v318 = vpop.xlane.xlu0 %317
      %vm319 = vcmp.eq.f32.partialorder %v316, %v318
      %v320 = vsel %vm319, %v315, -inf
      %321 = vmax.xlane.f32.xlu0 %v320
      %v322 = vpop.xlane.xlu0 %321
      %v323 = vcvt.f32.s32 %v322
      %v324 = vcvt.f32.s32 %v318
      %v325 = vshll.u32 %v324, 16
      %v326 = vadd.s32 %v325, %v323
      %v327 = vand.u32 %v311, 15
      %v328 = vand.u32 %v326, 15
      %v329 = vsub.s32 15, %v327
      %v330 = vsub.s32 15, %v328
      %vm331 = vcmp.eq.s32.totalorder %v290, 0
      %v332 = vsel %vm331, %v329, 0
      %v333 = vsel %vm331, %v330, 0
      %vm334 = vcmp.eq.s32.totalorder %v290, %v329
      %vm335 = vcmp.eq.s32.totalorder %v290, %v330
      %v336 = vsel %vm334, 2147483648, %v294
      %v337 = vsel %vm335, 2147483648, %v295
      %v338 = vsel %vm296, %v336, 2147483648
      %v339 = vand.u32 %v338, 65535
      %v340 = vshra.s32 %v338, 16
      %v341 = vcvt.s32.f32 %v339
      %v342 = vcvt.s32.f32 %v340
      %343 = vmax.xlane.f32.xlu0 %v342
      %v344 = vpop.xlane.xlu0 %343
      %vm345 = vcmp.eq.f32.partialorder %v342, %v344
      %v346 = vsel %vm345, %v341, -inf
      %347 = vmax.xlane.f32.xlu0 %v346
      %v348 = vpop.xlane.xlu0 %347
      %v349 = vcvt.f32.s32 %v348
      %v350 = vcvt.f32.s32 %v344
      %v351 = vshll.u32 %v350, 16
      %v352 = vadd.s32 %v351, %v349
      %v353 = vsel %vm296, %v337, 2147483648
      %v354 = vand.u32 %v353, 65535
      %v355 = vshra.s32 %v353, 16
      %v356 = vcvt.s32.f32 %v354
      %v357 = vcvt.s32.f32 %v355
      %358 = vmax.xlane.f32.xlu0 %v357
      %v359 = vpop.xlane.xlu0 %358
      %vm360 = vcmp.eq.f32.partialorder %v357, %v359
      %v361 = vsel %vm360, %v356, -inf
      %362 = vmax.xlane.f32.xlu0 %v361
      %v363 = vpop.xlane.xlu0 %362
      %v364 = vcvt.f32.s32 %v363
      %v365 = vcvt.f32.s32 %v359
      %v366 = vshll.u32 %v365, 16
      %v367 = vadd.s32 %v366, %v364
      %v368 = vand.u32 %v352, 15
      %v369 = vand.u32 %v367, 15
      %v370 = vsub.s32 15, %v368
      %v371 = vsub.s32 15, %v369
      %vm372 = vcmp.eq.s32.totalorder %v290, 1
      %v373 = vsel %vm372, %v370, %v332
      %v374 = vsel %vm372, %v371, %v333
      %vm375 = vcmp.eq.s32.totalorder %v290, %v370
      %vm376 = vcmp.eq.s32.totalorder %v290, %v371
      %v377 = vsel %vm375, 2147483648, %v336
      %v378 = vsel %vm376, 2147483648, %v337
      %v379 = vsel %vm296, %v377, 2147483648
      %v380 = vand.u32 %v379, 65535
      %v381 = vshra.s32 %v379, 16
      %v382 = vcvt.s32.f32 %v380
      %v383 = vcvt.s32.f32 %v381
      %384 = vmax.xlane.f32.xlu0 %v383
      %v385 = vpop.xlane.xlu0 %384
      %vm386 = vcmp.eq.f32.partialorder %v383, %v385
      %v387 = vsel %vm386, %v382, -inf
      %388 = vmax.xlane.f32.xlu0 %v387
      %v389 = vpop.xlane.xlu0 %388
      %v390 = vcvt.f32.s32 %v389
      %v391 = vcvt.f32.s32 %v385
      %v392 = vshll.u32 %v391, 16
      %v393 = vadd.s32 %v392, %v390
      %v394 = vsel %vm296, %v378, 2147483648
      %v395 = vand.u32 %v394, 65535
      %v396 = vshra.s32 %v394, 16
      %v397 = vcvt.s32.f32 %v395
      %v398 = vcvt.s32.f32 %v396
      %399 = vmax.xlane.f32.xlu0 %v398
      %v400 = vpop.xlane.xlu0 %399
      %vm401 = vcmp.eq.f32.partialorder %v398, %v400
      %v402 = vsel %vm401, %v397, -inf
      %403 = vmax.xlane.f32.xlu0 %v402
      %v404 = vpop.xlane.xlu0 %403
      %v405 = vcvt.f32.s32 %v404
      %v406 = vcvt.f32.s32 %v400
      %v407 = vshll.u32 %v406, 16
      %v408 = vadd.s32 %v407, %v405
      %v409 = vand.u32 %v393, 15
      %v410 = vand.u32 %v408, 15
      %v411 = vsub.s32 15, %v409
      %v412 = vsub.s32 15, %v410
      %vm413 = vcmp.eq.s32.totalorder %v290, 2
      %v414 = vsel %vm413, %v411, %v373
      %v415 = vsel %vm413, %v412, %v374
      %vm416 = vcmp.eq.s32.totalorder %v290, %v411
      %vm417 = vcmp.eq.s32.totalorder %v290, %v412
      %v418 = vsel %vm416, 2147483648, %v377
      %v419 = vsel %vm417, 2147483648, %v378
      %v420 = vsel %vm296, %v418, 2147483648
      %v421 = vand.u32 %v420, 65535
      %v422 = vshra.s32 %v420, 16
      %v423 = vcvt.s32.f32 %v421
      %v424 = vcvt.s32.f32 %v422
      %425 = vmax.xlane.f32.xlu0 %v424
      %v426 = vpop.xlane.xlu0 %425
      %vm427 = vcmp.eq.f32.partialorder %v424, %v426
      %v428 = vsel %vm427, %v423, -inf
      %429 = vmax.xlane.f32.xlu0 %v428
      %v430 = vpop.xlane.xlu0 %429
      %v431 = vcvt.f32.s32 %v430
      %v432 = vcvt.f32.s32 %v426
      %v433 = vshll.u32 %v432, 16
      %v434 = vadd.s32 %v433, %v431
      %v435 = vsel %vm296, %v419, 2147483648
      %v436 = vand.u32 %v435, 65535
      %v437 = vshra.s32 %v435, 16
      %v438 = vcvt.s32.f32 %v436
      %v439 = vcvt.s32.f32 %v437
      %440 = vmax.xlane.f32.xlu0 %v439
      %v441 = vpop.xlane.xlu0 %440
      %vm442 = vcmp.eq.f32.partialorder %v439, %v441
      %v443 = vsel %vm442, %v438, -inf
      %444 = vmax.xlane.f32.xlu0 %v443
      %v445 = vpop.xlane.xlu0 %444
      %v446 = vcvt.f32.s32 %v445
      %v447 = vcvt.f32.s32 %v441
      %v448 = vshll.u32 %v447, 16
      %v449 = vadd.s32 %v448, %v446
      %v450 = vand.u32 %v434, 15
      %v451 = vand.u32 %v449, 15
      %v452 = vsub.s32 15, %v450
      %v453 = vsub.s32 15, %v451
      %vm454 = vcmp.eq.s32.totalorder %v290, 3
      %v455 = vsel %vm454, %v452, %v414
      %v456 = vsel %vm454, %v453, %v415
      %vm457 = vcmask 31744
      %458 = vst.msk [vmem:[%s239] sm:$0xff] %vm457, %v455
      %459 = vst.msk [vmem:[%s239 + $0x8] sm:$0xff] %vm457, %v456
      %s460 = smul.u32 2, %s19
      %p461 = scmp.lt.s32.totalorder %s18, 1
      %s462 = scalar_select %p461, %s18, 1
      %p463 = scmp.lt.s32.totalorder %s460, 1
      %s464 = scalar_select %p463, %s460, 1
      %s465 = smul.addr %s462, 2
      %s466 = sadd.s32 %s464, %s465
      %s467 = smul.addr %s466, 8
      %s468 = scalar_lea.vmem %s3, %s467
      // Predicated region
      $region33: #{dgcnn_forward.10} parent=31 // pred_check
        %p469 = pneg %p126
      $region34: #{dgcnn_forward.10} parent=31 // pred_check_branch
        %471 = sbr.rel (%p469) target = $region36
      $region35: #{dgcnn_forward.10} parent=31 // pred_region
        %s472 = smul.u32 2, %s19
      $region36: #{dgcnn_forward.10} parent=31 // pred_fallthru
        _
    $region32: #{dgcnn_forward.10} parent=5 // pred_fallthru
      _
    %p473 = scmp.le.s32.totalorder 2, %s9
    // Predicated region
    $region37: #{dgcnn_forward.10} parent=5 // pred_check
      %p474 = pneg %p473
    $region38: #{dgcnn_forward.10} parent=5 // pred_check_branch
      %476 = sbr.rel (%p474) target = $region40
    $region39: #{dgcnn_forward.10} parent=5 // pred_region
      %s477 = ssub.s32 %s9, 2
      // Predicated region
      $region41: #{dgcnn_forward.10} parent=39 // pred_check
        %p478 = pneg %p132
      $region42: #{dgcnn_forward.10} parent=39 // pred_check_branch
        %480 = sbr.rel (%p478) target = $region44
      $region43: #{dgcnn_forward.10} parent=39 // pred_region
        %s481 = smul.u32 2, %s21
        %p482 = scmp.lt.s32.totalorder %s20, 1
        %s483 = scalar_select %p482, %s20, 1
        %p484 = scmp.lt.s32.totalorder %s481, 1
        %s485 = scalar_select %p484, %s481, 1
        %s486 = smul.addr %s483, 2
        %s487 = sadd.s32 %s485, %s486
        %s488 = smul.addr %s487, 8
        %s489 = scalar_lea.vmem %s3, %s488
      $region44: #{dgcnn_forward.10} parent=39 // pred_fallthru
        _
    $region40: #{dgcnn_forward.10} parent=5 // pred_fallthru
      _
  $region6: #{dgcnn_forward.10} parent=0 // loop_footer
    %s13 = sadd.s32 1, %s9
  $region7: #{dgcnn_forward.10} parent=0 // loop_footer_branch
    %8 = sbr.rel target = $region3
  $region8: #{dgcnn_forward.10} parent=0 // loop_exit
    _

// kernel: dgcnn_forward.11
$region0: #{dgcnn_forward.11}
  #allocation0 [shape = 'u32[]', space=smem, size = 0x4, offset = 0x4, fixed_abs, tag = 'smem constant byte address 0x4 - core index']
  #allocation1 [shape = 'u32[72,128]{1,0:T(1,128)}', space=vmem, size = 0x9000, scoped, tag = 'internal scratch']
  %s0 = inlined_call_operand.vmem [shape: bf16[2,4,16,3], index: 0, kind: input, shape index: {}]
  %s1 = inlined_call_operand.vmem [shape: bf16[2,16,3], index: 1, kind: input, shape index: {}]
  %s2 = inlined_call_operand.vmem [shape: bf16[3,128], index: 2, kind: input, shape index: {}]
  %s3 = inlined_call_operand.vmem [shape: bf16[3,128], index: 3, kind: input, shape index: {}]
  %s4 = inlined_call_operand.vmem [shape: f32[1,128], index: 4, kind: input, shape index: {}]
  %s5 = inlined_call_operand.vmem [shape: f32[1,128], index: 5, kind: input, shape index: {}]
  %s6 = inlined_call_operand.vmem [shape: bf16[2,16,640], index: 6, kind: output, shape index: {}]
  %s7 = sld [smem:[#allocation0]]
  $region94: #{dgcnn_forward.11} parent=0
    _
  %s9 = ssub.s32 1, %s7
  %s10 = scalar_select 0, %s9, %s7
  $region1: #{dgcnn_forward.11} parent=0
    #allocation2 [shape = 'u8[8192]{0}', space=vmem, size = 0x2000, scoped, tag = 'output window, operand 0']
    loop: start=0, step=1, limit=4
    $region2: #{dgcnn_forward.11} parent=1 // loop_pre_header
      _
    $region3: #{dgcnn_forward.11} parent=1 // loop_header
      %s12 = sphi 0, %s16
      %p13 = scmp.ge.s32.totalorder %s12, 4
      %s19 = sphi 0, %s31
      %s20 = sphi 0, %s27
      %s21 = sphi 0, %s19
      %s22 = sphi 0, %s20
      %s23 = sphi 0, %s21
      %s24 = sphi 0, %s22
      %s36 = sphi 0, %s38
      %s39 = sphi 0, %s36
      %s40 = sphi 0, %s39
      %s56 = sphi 0, %s40
      %s64 = sphi 0, %s66
      %s67 = sphi 0, %s64
      %s68 = sphi 0, %s67
      %s84 = sphi 0, %s68
      %s88 = sphi 0, %s88
      %s90 = sphi 0, %s88
      %s91 = sphi 0, %s90
      %s105 = sphi 0, %s91
      %s109 = sphi 0, %s109
      %s111 = sphi 0, %s109
      %s112 = sphi 0, %s111
      %s126 = sphi 0, %s112
      %s130 = sphi 0, %s130
      %s132 = sphi 0, %s130
      %s133 = sphi 0, %s132
      %s147 = sphi 0, %s133
      %s151 = sphi 0, %s151
      %s153 = sphi 0, %s151
      %s154 = sphi 0, %s153
      %s168 = sphi 0, %s154
      %s176 = sphi 0, %s178
      %s179 = sphi 0, %s176
      %s180 = sphi 0, %s179
      %s196 = sphi 0, %s180
    $region4: #{dgcnn_forward.11} parent=1 // loop_header_branch
      %15 = sbr.rel (%p13) target = $region8
    $region5: #{dgcnn_forward.11} parent=1 // loop_body
      %s17 = ssub.s32 %s12, 1
      %s18 = ssub.s32 %s12, 2
      %s25 = sadd.s32 1, %s20
      %p26 = scmp.ge.s32.totalorder %s25, 1
      %s27 = scalar_select %p26, 0, %s25
      %s28 = sadd.s32 1, %s19
      %s29 = scalar_select %p26, %s28, %s19
      %p30 = scmp.ge.s32.totalorder %s29, 2
      %s31 = scalar_select %p30, 0, %s29
      %s32 = ssub.s32 %s19, %s31
      %s33 = ssub.s32 %s20, %s27
      %s34 = sor.u32 %s32, %s33
      %p35 = scmp.eq.s32.totalorder %s34, 0
      %s37 = sadd.s32 %s36, 1
      %s38 = scalar_select %p35, %s36, %s37
      %p41 = pneg %p35
      %p42 = scmp.eq.s32.totalorder %s12, 1
      %p43 = por %p41, %p42
      %p44 = scmp.ne.s32.totalorder %s36, %s39
      %p45 = scmp.eq.s32.totalorder %s12, 0
      %p46 = por %p44, %p45
      %p47 = scmp.ne.s32.totalorder %s36, %s39
      %p48 = scmp.eq.s32.totalorder %s17, 1
      %p49 = por %p47, %p48
      %p50 = scmp.ne.s32.totalorder %s39, %s40
      %p51 = scmp.eq.s32.totalorder %s17, 0
      %p52 = por %p50, %p51
      %p53 = scmp.ne.s32.totalorder %s39, %s40
      %p54 = scmp.eq.s32.totalorder %s18, 1
      %p55 = por %p53, %p54
      %p57 = scmp.ne.s32.totalorder %s40, %s56
      %p58 = scmp.eq.s32.totalorder %s18, 0
      %p59 = por %p57, %p58
      %s60 = ssub.s32 %s19, %s31
      %s61 = ssub.s32 %s20, %s27
      %s62 = sor.u32 %s60, %s61
      %p63 = scmp.eq.s32.totalorder %s62, 0
      %s65 = sadd.s32 %s64, 1
      %s66 = scalar_select %p63, %s64, %s65
      %p69 = pneg %p63
      %p70 = scmp.eq.s32.totalorder %s12, 1
      %p71 = por %p69, %p70
      %p72 = scmp.ne.s32.totalorder %s64, %s67
      %p73 = scmp.eq.s32.totalorder %s12, 0
      %p74 = por %p72, %p73
      %p75 = scmp.ne.s32.totalorder %s64, %s67
      %p76 = scmp.eq.s32.totalorder %s17, 1
      %p77 = por %p75, %p76
      %p78 = scmp.ne.s32.totalorder %s67, %s68
      %p79 = scmp.eq.s32.totalorder %s17, 0
      %p80 = por %p78, %p79
      %p81 = scmp.ne.s32.totalorder %s67, %s68
      %p82 = scmp.eq.s32.totalorder %s18, 1
      %p83 = por %p81, %p82
      %p85 = scmp.ne.s32.totalorder %s68, %s84
      %p86 = scmp.eq.s32.totalorder %s18, 0
      %p87 = por %p85, %p86
      %s89 = sadd.s32 %s88, 1
      %p92 = scmp.eq.s32.totalorder %s12, 1
      %p93 = scmp.ne.s32.totalorder %s88, %s90
      %p94 = scmp.eq.s32.totalorder %s12, 0
      %p95 = por %p93, %p94
      %p96 = scmp.ne.s32.totalorder %s88, %s90
      %p97 = scmp.eq.s32.totalorder %s17, 1
      %p98 = por %p96, %p97
      %p99 = scmp.ne.s32.totalorder %s90, %s91
      %p100 = scmp.eq.s32.totalorder %s17, 0
      %p101 = por %p99, %p100
      %p102 = scmp.ne.s32.totalorder %s90, %s91
      %p103 = scmp.eq.s32.totalorder %s18, 1
      %p104 = por %p102, %p103
      %p106 = scmp.ne.s32.totalorder %s91, %s105
      %p107 = scmp.eq.s32.totalorder %s18, 0
      %p108 = por %p106, %p107
      %s110 = sadd.s32 %s109, 1
      %p113 = scmp.eq.s32.totalorder %s12, 1
      %p114 = scmp.ne.s32.totalorder %s109, %s111
      %p115 = scmp.eq.s32.totalorder %s12, 0
      %p116 = por %p114, %p115
      %p117 = scmp.ne.s32.totalorder %s109, %s111
      %p118 = scmp.eq.s32.totalorder %s17, 1
      %p119 = por %p117, %p118
      %p120 = scmp.ne.s32.totalorder %s111, %s112
      %p121 = scmp.eq.s32.totalorder %s17, 0
      %p122 = por %p120, %p121
      %p123 = scmp.ne.s32.totalorder %s111, %s112
      %p124 = scmp.eq.s32.totalorder %s18, 1
      %p125 = por %p123, %p124
      %p127 = scmp.ne.s32.totalorder %s112, %s126
      %p128 = scmp.eq.s32.totalorder %s18, 0
      %p129 = por %p127, %p128
      %s131 = sadd.s32 %s130, 1
      %p134 = scmp.eq.s32.totalorder %s12, 1
      %p135 = scmp.ne.s32.totalorder %s130, %s132
      %p136 = scmp.eq.s32.totalorder %s12, 0
      %p137 = por %p135, %p136
      %p138 = scmp.ne.s32.totalorder %s130, %s132
      %p139 = scmp.eq.s32.totalorder %s17, 1
      %p140 = por %p138, %p139
      %p141 = scmp.ne.s32.totalorder %s132, %s133
      %p142 = scmp.eq.s32.totalorder %s17, 0
      %p143 = por %p141, %p142
      %p144 = scmp.ne.s32.totalorder %s132, %s133
      %p145 = scmp.eq.s32.totalorder %s18, 1
      %p146 = por %p144, %p145
      %p148 = scmp.ne.s32.totalorder %s133, %s147
      %p149 = scmp.eq.s32.totalorder %s18, 0
      %p150 = por %p148, %p149
      %s152 = sadd.s32 %s151, 1
      %p155 = scmp.eq.s32.totalorder %s12, 1
      %p156 = scmp.ne.s32.totalorder %s151, %s153
      %p157 = scmp.eq.s32.totalorder %s12, 0
      %p158 = por %p156, %p157
      %p159 = scmp.ne.s32.totalorder %s151, %s153
      %p160 = scmp.eq.s32.totalorder %s17, 1
      %p161 = por %p159, %p160
      %p162 = scmp.ne.s32.totalorder %s153, %s154
      %p163 = scmp.eq.s32.totalorder %s17, 0
      %p164 = por %p162, %p163
      %p165 = scmp.ne.s32.totalorder %s153, %s154
      %p166 = scmp.eq.s32.totalorder %s18, 1
      %p167 = por %p165, %p166
      %p169 = scmp.ne.s32.totalorder %s154, %s168
      %p170 = scmp.eq.s32.totalorder %s18, 0
      %p171 = por %p169, %p170
      %s172 = ssub.s32 %s19, %s31
      %s173 = ssub.s32 %s20, %s27
      %s174 = sor.u32 %s172, %s173
      %p175 = scmp.eq.s32.totalorder %s174, 0
      %s177 = sadd.s32 %s176, 1
      %s178 = scalar_select %p175, %s176, %s177
      %p181 = pneg %p175
      %p182 = scmp.eq.s32.totalorder %s12, 1
      %p183 = por %p181, %p182
      %p184 = scmp.ne.s32.totalorder %s176, %s179
      %p185 = scmp.eq.s32.totalorder %s12, 0
      %p186 = por %p184, %p185
      %p187 = scmp.ne.s32.totalorder %s176, %s179
      %p188 = scmp.eq.s32.totalorder %s17, 1
      %p189 = por %p187, %p188
      %p190 = scmp.ne.s32.totalorder %s179, %s180
      %p191 = scmp.eq.s32.totalorder %s17, 0
      %p192 = por %p190, %p191
      %p193 = scmp.ne.s32.totalorder %s179, %s180
      %p194 = scmp.eq.s32.totalorder %s18, 1
      %p195 = por %p193, %p194
      %p197 = scmp.ne.s32.totalorder %s180, %s196
      %p198 = scmp.eq.s32.totalorder %s18, 0
      %p199 = por %p197, %p198
      %p200 = scmp.le.s32.totalorder 1, %s12
      %p201 = scmp.lt.s32.totalorder %s12, 3
      %p202 = pnand %p200, %p201
      %p203 = pneg %p202
      // Predicated region
      $region9: #{dgcnn_forward.11} parent=5 // pred_check
        _
      $region10: #{dgcnn_forward.11} parent=5 // pred_check_branch
        %205 = sbr.rel (%p202) target = $region12
      $region11: #{dgcnn_forward.11} parent=5 // pred_region
        %s206 = ssub.s32 %s12, 1
        // Predicated region
        $region13: #{dgcnn_forward.11} parent=11 // pred_check
          %p207 = pneg %p101
        $region14: #{dgcnn_forward.11} parent=11 // pred_check_branch
          %209 = sbr.rel (%p207) target = $region16
        $region15: #{dgcnn_forward.11} parent=11 // pred_region
          _
        $region16: #{dgcnn_forward.11} parent=11 // pred_fallthru
          _
        // Predicated region
        $region17: #{dgcnn_forward.11} parent=11 // pred_check
          %p210 = pneg %p122
        $region18: #{dgcnn_forward.11} parent=11 // pred_check_branch
          %212 = sbr.rel (%p210) target = $region20
        $region19: #{dgcnn_forward.11} parent=11 // pred_region
          _
        $region20: #{dgcnn_forward.11} parent=11 // pred_fallthru
          _
        // Predicated region
        $region21: #{dgcnn_forward.11} parent=11 // pred_check
          %p213 = pneg %p143
        $region22: #{dgcnn_forward.11} parent=11 // pred_check_branch
          %215 = sbr.rel (%p213) target = $region24
        $region23: #{dgcnn_forward.11} parent=11 // pred_region
          _
        $region24: #{dgcnn_forward.11} parent=11 // pred_fallthru
          _
        // Predicated region
        $region25: #{dgcnn_forward.11} parent=11 // pred_check
          %p216 = pneg %p164
        $region26: #{dgcnn_forward.11} parent=11 // pred_check_branch
          %218 = sbr.rel (%p216) target = $region28
        $region27: #{dgcnn_forward.11} parent=11 // pred_region
          _
        $region28: #{dgcnn_forward.11} parent=11 // pred_fallthru
          _
      $region12: #{dgcnn_forward.11} parent=5 // pred_fallthru
        _
      %p219 = scmp.lt.s32.totalorder %s12, 2
      // Predicated region
      $region29: #{dgcnn_forward.11} parent=5 // pred_check
        %p220 = pneg %p219
      $region30: #{dgcnn_forward.11} parent=5 // pred_check_branch
        %222 = sbr.rel (%p220) target = $region32
      $region31: #{dgcnn_forward.11} parent=5 // pred_region
        // Predicated region
        $region33: #{dgcnn_forward.11} parent=31 // pred_check
          %p223 = pneg %p46
        $region34: #{dgcnn_forward.11} parent=31 // pred_check_branch
          %225 = sbr.rel (%p223) target = $region36
        $region35: #{dgcnn_forward.11} parent=31 // pred_region
          %s226 = smul.u32 2, %s20
          %p227 = scmp.lt.s32.totalorder %s19, 1
          %s228 = scalar_select %p227, %s19, 1
          %p229 = scmp.lt.s32.totalorder %s226, 1
          %s230 = scalar_select %p229, %s226, 1
          %s231 = smul.addr %s228, 8
          %s232 = sadd.s32 %s230, %s231
          %s233 = smul.addr %s232, 4
          %s234 = scalar_lea.vmem %s0, %s233
          %s235 = smul.u32 2, %s20
        $region36: #{dgcnn_forward.11} parent=31 // pred_fallthru
          _
        // Predicated region
        $region37: #{dgcnn_forward.11} parent=31 // pred_check
          %p236 = pneg %p74
        $region38: #{dgcnn_forward.11} parent=31 // pred_check_branch
          %238 = sbr.rel (%p236) target = $region40
        $region39: #{dgcnn_forward.11} parent=31 // pred_region
          %s239 = smul.u32 2, %s20
          %p240 = scmp.lt.s32.totalorder %s19, 1
          %s241 = scalar_select %p240, %s19, 1
          %p242 = scmp.lt.s32.totalorder %s239, 1
          %s243 = scalar_select %p242, %s239, 1
          %s244 = smul.addr %s241, 2
          %s245 = sadd.s32 %s243, %s244
          %s246 = smul.addr %s245, 4
          %s247 = scalar_lea.vmem %s1, %s246
          %s248 = smul.u32 2, %s20
        $region40: #{dgcnn_forward.11} parent=31 // pred_fallthru
          _
      $region32: #{dgcnn_forward.11} parent=5 // pred_fallthru
        _
      %p249 = scmp.le.s32.totalorder 1, %s12
      %p250 = scmp.lt.s32.totalorder %s12, 3
      %p251 = pnand %p249, %p250
      %p252 = pneg %p251
      // Predicated region
      $region41: #{dgcnn_forward.11} parent=5 // pred_check
        _
      $region42: #{dgcnn_forward.11} parent=5 // pred_check_branch
        %254 = sbr.rel (%p251) target = $region44
      $region43: #{dgcnn_forward.11} parent=5 // pred_region
        %s255 = ssub.s32 %s12, 1
        %s256 = smul.u32 2, %s22
        %p257 = scmp.lt.s32.totalorder %s21, 1
        %s258 = scalar_select %p257, %s21, 1
        %p259 = scmp.lt.s32.totalorder %s256, 1
        %s260 = scalar_select %p259, %s256, 1
        %s261 = smul.addr %s258, 8
        %s262 = sadd.s32 %s260, %s261
        %s263 = smul.addr %s262, 4
        %s264 = scalar_lea.vmem %s0, %s263
        %p265 = pneg %p52
        %p266 = pneg %p49
        %s267 = smul.u32 2, %s22
        %p268 = scmp.lt.s32.totalorder %s21, 1
        %s269 = scalar_select %p268, %s21, 1
        %p270 = scmp.lt.s32.totalorder %s267, 1
        %s271 = scalar_select %p270, %s267, 1
        %s272 = smul.addr %s269, 2
        %s273 = sadd.s32 %s271, %s272
        %s274 = smul.addr %s273, 4
        %s275 = scalar_lea.vmem %s1, %s274
        %p276 = pneg %p80
        %p277 = pneg %p77
        %p278 = pneg %p101
        %p279 = pneg %p98
        %p280 = pneg %p122
        %p281 = pneg %p119
        %p282 = pneg %p143
        %p283 = pneg %p140
        %p284 = pneg %p164
        %p285 = pneg %p161
        %p286 = pneg %p192
        %p287 = pneg %p189
        %s288 = sand.u32 %s179, 1
        %s289 = sand.u32 %s179, 1
        %s290 = smul.addr %s289, 8
        %s291 = scalar_lea.vmem [#allocation2], %s290
        %s292 = smul.u32 2, %s22
        %p293 = scmp.lt.s32.totalorder %s21, 1
        %s294 = scalar_select %p293, %s21, 1
        %p295 = scmp.lt.s32.totalorder %s292, 1
        %s296 = scalar_select %p295, %s292, 1
        %s297 = smul.addr %s294, 8
        %s298 = sadd.s32 %s296, %s297
        %s299 = smul.addr %s298, 4
        %s300 = scalar_lea.vmem %s0, %s299
        %s301 = smul.u32 2, %s22
        %s302 = smul.u32 2, %s22
        %p303 = scmp.lt.s32.totalorder %s21, 1
        %s304 = scalar_select %p303, %s21, 1
        %p305 = scmp.lt.s32.totalorder %s302, 1
        %s306 = scalar_select %p305, %s302, 1
        %s307 = smul.addr %s304, 2
        %s308 = sadd.s32 %s306, %s307
        %s309 = smul.addr %s308, 4
        %s310 = scalar_lea.vmem %s1, %s309
        %s311 = smul.u32 2, %s22
        %s312 = smul.u32 2, %s22
        %v314 = vld [vmem:[%s300] sm:$0xf]
        %v315 = vld [vmem:[%s300 + $0x4] sm:$0xf]
        %v316 = vld [vmem:[%s300 + $0x8] sm:$0xf]
        %v317 = vld [vmem:[%s300 + $0xc] sm:$0xf]
        %v318 = vld [vmem:[%s300 + $0x10] sm:$0xf]
        %v319 = vld [vmem:[%s300 + $0x14] sm:$0xf]
        %v320 = vld [vmem:[%s300 + $0x18] sm:$0xf]
        %v321 = vld [vmem:[%s300 + $0x1c] sm:$0xf]
        %v322 = vld [vmem:[%s2] sm:$0x3]
        %v331 = vunpack.c.l.b16 %v314
        %v332 = vunpack.c.l.b16 %v315
        %v333 = vunpack.c.l.b16 %v316
        %v334 = vunpack.c.l.b16 %v317
        %v335 = vunpack.c.l.b16 %v318
        %v336 = vunpack.c.l.b16 %v319
        %v337 = vunpack.c.l.b16 %v320
        %v338 = vunpack.c.l.b16 %v321
        %v339 = vpack.c.b16 %v332, %v331
        %v340 = vpack.c.b16 %v334, %v333
        %v341 = vpack.c.b16 %v336, %v335
        %v342 = vpack.c.b16 %v338, %v337
        %vm343 = vcmask 23552
        %v345 = vsel %vm343, %v339, 0
        %v348 = vsel %vm343, %v340, 0
        %v351 = vsel %vm343, %v341, 0
        %v354 = vsel %vm343, %v342, 0
        %vm356 = vcmask 1040384
        %vm357 = vcmask 1041408
        %v358 = vsel %vm356, 4294967295, 65535
        %v359 = vsel %vm357, %v358, 0
        %v361 = vand.u32 %v322, %v359
        %363 = vmatpush.bf16.msra.mxu0 0
        %364 = vmatpush.bf16.msra.mxu0 0
        %365 = vmatpush.bf16.msra.mxu0 0
        %366 = vmatpush.bf16.msra.mxu0 0
        %367 = vmatpush.bf16.msra.mxu0 0
        %368 = vmatpush.bf16.msra.mxu0 0
        %369 = vmatpush.bf16.msra.mxu0 0
        %370 = vmatpush.bf16.msra.mxu0 %v361
        %371 = vmatmul.bf16.gmra.mxu0 %v345
        %v372 = vpop.f32.mrf.mxu0
        %v373 = vadd.f32 0.0, %v372
        %v374 = vpop.f32.mrf.mxu0
        %v375 = vadd.f32 0.0, %v374
        %376 = vmatmul.bf16.gmra.mxu0 %v348
        %v377 = vpop.f32.mrf.mxu0
        %v378 = vadd.f32 0.0, %v377
        %v379 = vpop.f32.mrf.mxu0
        %v380 = vadd.f32 0.0, %v379
        %381 = vmatmul.bf16.gmra.mxu0 %v351
        %v382 = vpop.f32.mrf.mxu0
        %v383 = vadd.f32 0.0, %v382
        %v384 = vpop.f32.mrf.mxu0
        %v385 = vadd.f32 0.0, %v384
        %386 = vmatmul.bf16.gmra.mxu0 %v354
        %v387 = vpop.f32.mrf.mxu0
        %v388 = vadd.f32 0.0, %v387
        %v389 = vpop.f32.mrf.mxu0
        %v390 = vadd.f32 0.0, %v389
        %391 = vdwg.mxu0
        %v392 = vld [vmem:[%s310] sm:$0xf]
        %v393 = vld [vmem:[%s310 + $0x4] sm:$0xf]
        %v394 = vld [vmem:[%s3] sm:$0x3]
        %v397 = vunpack.c.l.b16 %v392
        %v398 = vunpack.c.l.b16 %v393
        %v399 = vpack.c.b16 %v398, %v397
        %v401 = vsel %vm343, %v399, 0
        %v404 = vand.u32 %v394, %v359
        %406 = vmatpush.bf16.msra.mxu0 0
        %407 = vmatpush.bf16.msra.mxu0 0
        %408 = vmatpush.bf16.msra.mxu0 0
        %409 = vmatpush.bf16.msra.mxu0 0
        %410 = vmatpush.bf16.msra.mxu0 0
        %411 = vmatpush.bf16.msra.mxu0 0
        %412 = vmatpush.bf16.msra.mxu0 0
        %413 = vmatpush.bf16.msra.mxu0 %v404
        %414 = vmatmul.bf16.gmra.mxu0 %v401
        %v415 = vpop.f32.mrf.mxu0
        %v416 = vadd.f32 0.0, %v415
        %v417 = vpop.f32.mrf.mxu0
        %v418 = vadd.f32 0.0, %v417
        %419 = vdwg.mxu0
        %v420 = vadd.f32 %v373, %v416
        %v421 = vadd.f32 %v375, %v418
        %v422 = vadd.f32 %v378, %v416
        %v423 = vadd.f32 %v380, %v418
        %v424 = vadd.f32 %v383, %v416
        %v425 = vadd.f32 %v385, %v418
        %v426 = vadd.f32 %v388, %v416
        %v427 = vadd.f32 %v390, %v418
        %v428 = vmax.f32 %v420, %v424
        %v429 = vmax.f32 %v422, %v426
        %v430 = vmax.f32 %v428, %v429
        %v431 = vmax.f32 %v421, %v425
        %v432 = vmax.f32 %v423, %v427
        %v433 = vmax.f32 %v431, %v432
        %v434 = vld [vmem:[%s4] sm:$0x1]
        %v436 = vperm.slane %v434, 0
        %v438 = vmul.f32 %v430, %v436
        %v439 = vmul.f32 %v433, %v436
        %v440 = vld [vmem:[%s5] sm:$0x1]
        %v442 = vperm.slane %v440, 0
        %v444 = vadd.f32 %v438, %v442
        %v445 = vadd.f32 %v439, %v442
        %vm446 = vcmp.gt.f32.partialorder %v444, 0.0
        %vm447 = vcmp.gt.f32.partialorder %v445, 0.0
        %v448 = vmul.f32 %v444, 0.2
        %v449 = vmul.f32 %v445, 0.2
        %v450 = vsel %vm446, %v444, %v448
        %v451 = vsel %vm447, %v445, %v449
        %v452 = vpack.c.bf16 %v450, %v450
        %v453 = vpack.c.bf16 %v451, %v451
        %454 = vst [vmem:[%s291] sm:$0xf] %v452
        %455 = vst [vmem:[%s291 + $0x4] sm:$0xf] %v453
        %s456 = sand.u32 %s179, 1
        %s457 = sand.u32 %s179, 1
        %s458 = smul.addr %s457, 8
        %s459 = scalar_lea.vmem [#allocation2], %s458
        // Predicated region
        $region45: #{dgcnn_forward.11} parent=43 // pred_check
          %p460 = pneg %p189
        $region46: #{dgcnn_forward.11} parent=43 // pred_check_branch
          %462 = sbr.rel (%p460) target = $region48
        $region47: #{dgcnn_forward.11} parent=43 // pred_region
          %s463 = smul.u32 2, %s22
          %s464 = smul.addr %s463, 5
          %s465 = sadd.s32 3, %s464
          %s466 = smul.addr %s21, 10
          %s467 = sadd.s32 %s465, %s466
          %s468 = smul.addr %s467, 4
          %s469 = scalar_lea.vmem %s6, %s468
          // Predicated region
          $region49: #{dgcnn_forward.11} parent=47 // pred_check
            _
          $region50: #{dgcnn_forward.11} parent=47 // pred_check_branch
            %471 = sbr.rel (0) target = $region52
          $region51: #{dgcnn_forward.11} parent=47 // pred_region
            // Predicated region
            $region53: #{dgcnn_forward.11} parent=51 // pred_check
              _
            $region54: #{dgcnn_forward.11} parent=51 // pred_check_branch
              %473 = sbr.rel target = $region56
            $region55: #{dgcnn_forward.11} parent=51 // pred_region
              // Predicated region
              $region68: #{dgcnn_forward.11} parent=55 // pred_check
                _
              $region69: #{dgcnn_forward.11} parent=55 // pred_check_branch
                %491 = sbr.rel (0) target = $region71
              $region70: #{dgcnn_forward.11} parent=55 // pred_region
                loop: start=0, step=1, limit=1
                $region72: #{dgcnn_forward.11} parent=70 // loop_pre_header
                  _
                $region73: #{dgcnn_forward.11} parent=70 // loop_header
                  %s493 = sphi 0, %s497
                  %p494 = scmp.ge.s32.totalorder %s493, 1
                  %s498 = sphi %s459, %s459
                  %s499 = sphi %s469, %s469
                $region74: #{dgcnn_forward.11} parent=70 // loop_header_branch
                  %496 = sbr.rel (%p494) target = $region78
                $region75: #{dgcnn_forward.11} parent=70 // loop_body
                  _
                $region76: #{dgcnn_forward.11} parent=70 // loop_footer
                  %s497 = sadd.s32 1, %s493
                $region77: #{dgcnn_forward.11} parent=70 // loop_footer_branch
                  %492 = sbr.rel target = $region73
                $region78: #{dgcnn_forward.11} parent=70 // loop_exit
                  _
                %s501 = ssub.s32 16, 1
                loop: start=0, step=1, limit=1
                $region79: #{dgcnn_forward.11} parent=70 // loop_pre_header
                  _
                $region80: #{dgcnn_forward.11} parent=70 // loop_header
                  %s503 = sphi 0, %s507
                  %p504 = scmp.ge.s32.totalorder %s503, 1
                  %s508 = sphi %s459, %s459
                  %s509 = sphi %s469, %s469
                $region81: #{dgcnn_forward.11} parent=70 // loop_header_branch
                  %506 = sbr.rel (%p504) target = $region85
                $region82: #{dgcnn_forward.11} parent=70 // loop_body
                  %v510 = vld [vmem:[%s508] sm:%s501]
                  %511 = vst [vmem:[%s509] sm:%s501] %v510
                  %v512 = vld [vmem:[%s508 + $0x4] sm:%s501]
                  %513 = vst [vmem:[%s509 + $0x14] sm:%s501] %v512
                $region83: #{dgcnn_forward.11} parent=70 // loop_footer
                  %s507 = sadd.s32 1, %s503
                $region84: #{dgcnn_forward.11} parent=70 // loop_footer_branch
                  %502 = sbr.rel target = $region80
                $region85: #{dgcnn_forward.11} parent=70 // loop_exit
                  _
              $region71: #{dgcnn_forward.11} parent=55 // pred_fallthru
                _
            $region56: #{dgcnn_forward.11} parent=51 // pred_fallthru
              _
            // Predicated region
            $region57: #{dgcnn_forward.11} parent=51 // pred_check
              _
            $region58: #{dgcnn_forward.11} parent=51 // pred_check_branch
              %475 = sbr.rel (0) target = $region60
            $region59: #{dgcnn_forward.11} parent=51 // pred_region
              %s477 = ssub.s32 16, 1
              loop: start=0, step=1, limit=1
              $region61: #{dgcnn_forward.11} parent=59 // loop_pre_header
                _
              $region62: #{dgcnn_forward.11} parent=59 // loop_header
                %s479 = sphi 0, %s483
                %p480 = scmp.ge.s32.totalorder %s479, 1
                %s484 = sphi %s459, %s459
                %s485 = sphi %s469, %s469
              $region63: #{dgcnn_forward.11} parent=59 // loop_header_branch
                %482 = sbr.rel (%p480) target = $region67
              $region64: #{dgcnn_forward.11} parent=59 // loop_body
                %v486 = vld [vmem:[%s484] sm:%s477]
                %487 = vst [vmem:[%s485] sm:%s477] %v486
                %v488 = vld [vmem:[%s484 + $0x4] sm:%s477]
                %489 = vst [vmem:[%s485 + $0x14] sm:%s477] %v488
              $region65: #{dgcnn_forward.11} parent=59 // loop_footer
                %s483 = sadd.s32 1, %s479
              $region66: #{dgcnn_forward.11} parent=59 // loop_footer_branch
                %478 = sbr.rel target = $region62
              $region67: #{dgcnn_forward.11} parent=59 // loop_exit
                _
            $region60: #{dgcnn_forward.11} parent=51 // pred_fallthru
              _
          $region52: #{dgcnn_forward.11} parent=47 // pred_fallthru
            _
          %514 = vnop
        $region48: #{dgcnn_forward.11} parent=43 // pred_fallthru
          _
      $region44: #{dgcnn_forward.11} parent=5 // pred_fallthru
        _
      %p515 = scmp.le.s32.totalorder 2, %s12
      // Predicated region
      $region86: #{dgcnn_forward.11} parent=5 // pred_check
        %p516 = pneg %p515
      $region87: #{dgcnn_forward.11} parent=5 // pred_check_branch
        %518 = sbr.rel (%p516) target = $region89
      $region88: #{dgcnn_forward.11} parent=5 // pred_region
        %s519 = ssub.s32 %s12, 2
        // Predicated region
        $region90: #{dgcnn_forward.11} parent=88 // pred_check
          %p520 = pneg %p195
        $region91: #{dgcnn_forward.11} parent=88 // pred_check_branch
          %522 = sbr.rel (%p520) target = $region93
        $region92: #{dgcnn_forward.11} parent=88 // pred_region
          %s523 = sand.u32 %s180, 1
          %s524 = sand.u32 %s180, 1
          %s525 = smul.addr %s524, 8
          %s526 = scalar_lea.vmem [#allocation2], %s525
        $region93: #{dgcnn_forward.11} parent=88 // pred_fallthru
          _
      $region89: #{dgcnn_forward.11} parent=5 // pred_fallthru
        _
    $region6: #{dgcnn_forward.11} parent=1 // loop_footer
      %s16 = sadd.s32 1, %s12
    $region7: #{dgcnn_forward.11} parent=1 // loop_footer_branch
      %11 = sbr.rel target = $region3
    $region8: #{dgcnn_forward.11} parent=1 // loop_exit
      _

// kernel: dgcnn_forward.13
$region0: #{dgcnn_forward.13}
  #allocation0 [shape = 'u32[]', space=smem, size = 0x4, offset = 0x4, fixed_abs, tag = 'smem constant byte address 0x4 - core index']
  #allocation1 [shape = 'u32[72,128]{1,0:T(1,128)}', space=vmem, size = 0x9000, scoped, tag = 'internal scratch']
  %s0 = inlined_call_operand.vmem [shape: bf16[2,4,16,64], index: 0, kind: input, shape index: {}]
  %s1 = inlined_call_operand.vmem [shape: bf16[2,16,64], index: 1, kind: input, shape index: {}]
  %s2 = inlined_call_operand.vmem [shape: bf16[64,128], index: 2, kind: input, shape index: {}]
  %s3 = inlined_call_operand.vmem [shape: bf16[64,128], index: 3, kind: input, shape index: {}]
  %s4 = inlined_call_operand.vmem [shape: f32[1,128], index: 4, kind: input, shape index: {}]
  %s5 = inlined_call_operand.vmem [shape: f32[1,128], index: 5, kind: input, shape index: {}]
  %s6 = inlined_call_operand.vmem [shape: bf16[2,16,640], index: 6, kind: input, shape index: {}, may-alias: {6,7}]
  %s7 = inlined_call_operand.vmem [shape: bf16[2,16,640], index: 7, kind: output, shape index: {}, may-alias: {6,7}]
  %s8 = sld [smem:[#allocation0]]
  $region139: #{dgcnn_forward.13} parent=0
    _
  %s10 = ssub.s32 1, %s8
  %s11 = scalar_select 0, %s10, %s8
  $region1: #{dgcnn_forward.13} parent=0
    #allocation2 [shape = 'u8[8192]{0}', space=vmem, size = 0x2000, scoped, tag = 'input window, operand 6']
    #allocation3 [shape = 'u8[8192]{0}', space=vmem, size = 0x2000, scoped, tag = 'output window, operand 0']
    loop: start=0, step=1, limit=4
    $region2: #{dgcnn_forward.13} parent=1 // loop_pre_header
      _
    $region3: #{dgcnn_forward.13} parent=1 // loop_header
      %s13 = sphi 0, %s17
      %p14 = scmp.ge.s32.totalorder %s13, 4
      %s20 = sphi 0, %s32
      %s21 = sphi 0, %s28
      %s22 = sphi 0, %s20
      %s23 = sphi 0, %s21
      %s24 = sphi 0, %s22
      %s25 = sphi 0, %s23
      %s37 = sphi 0, %s39
      %s40 = sphi 0, %s37
      %s41 = sphi 0, %s40
      %s57 = sphi 0, %s41
      %s65 = sphi 0, %s67
      %s68 = sphi 0, %s65
      %s69 = sphi 0, %s68
      %s85 = sphi 0, %s69
      %s89 = sphi 0, %s89
      %s91 = sphi 0, %s89
      %s92 = sphi 0, %s91
      %s106 = sphi 0, %s92
      %s110 = sphi 0, %s110
      %s112 = sphi 0, %s110
      %s113 = sphi 0, %s112
      %s127 = sphi 0, %s113
      %s131 = sphi 0, %s131
      %s133 = sphi 0, %s131
      %s134 = sphi 0, %s133
      %s148 = sphi 0, %s134
      %s152 = sphi 0, %s152
      %s154 = sphi 0, %s152
      %s155 = sphi 0, %s154
      %s169 = sphi 0, %s155
      %s177 = sphi 0, %s179
      %s180 = sphi 0, %s177
      %s181 = sphi 0, %s180
      %s197 = sphi 0, %s181
      %s205 = sphi 0, %s207
      %s208 = sphi 0, %s205
      %s209 = sphi 0, %s208
      %s225 = sphi 0, %s209
    $region4: #{dgcnn_forward.13} parent=1 // loop_header_branch
      %16 = sbr.rel (%p14) target = $region8
    $region5: #{dgcnn_forward.13} parent=1 // loop_body
      %s18 = ssub.s32 %s13, 1
      %s19 = ssub.s32 %s13, 2
      %s26 = sadd.s32 1, %s21
      %p27 = scmp.ge.s32.totalorder %s26, 1
      %s28 = scalar_select %p27, 0, %s26
      %s29 = sadd.s32 1, %s20
      %s30 = scalar_select %p27, %s29, %s20
      %p31 = scmp.ge.s32.totalorder %s30, 2
      %s32 = scalar_select %p31, 0, %s30
      %s33 = ssub.s32 %s20, %s32
      %s34 = ssub.s32 %s21, %s28
      %s35 = sor.u32 %s33, %s34
      %p36 = scmp.eq.s32.totalorder %s35, 0
      %s38 = sadd.s32 %s37, 1
      %s39 = scalar_select %p36, %s37, %s38
      %p42 = pneg %p36
      %p43 = scmp.eq.s32.totalorder %s13, 1
      %p44 = por %p42, %p43
      %p45 = scmp.ne.s32.totalorder %s37, %s40
      %p46 = scmp.eq.s32.totalorder %s13, 0
      %p47 = por %p45, %p46
      %p48 = scmp.ne.s32.totalorder %s37, %s40
      %p49 = scmp.eq.s32.totalorder %s18, 1
      %p50 = por %p48, %p49
      %p51 = scmp.ne.s32.totalorder %s40, %s41
      %p52 = scmp.eq.s32.totalorder %s18, 0
      %p53 = por %p51, %p52
      %p54 = scmp.ne.s32.totalorder %s40, %s41
      %p55 = scmp.eq.s32.totalorder %s19, 1
      %p56 = por %p54, %p55
      %p58 = scmp.ne.s32.totalorder %s41, %s57
      %p59 = scmp.eq.s32.totalorder %s19, 0
      %p60 = por %p58, %p59
      %s61 = ssub.s32 %s20, %s32
      %s62 = ssub.s32 %s21, %s28
      %s63 = sor.u32 %s61, %s62
      %p64 = scmp.eq.s32.totalorder %s63, 0
      %s66 = sadd.s32 %s65, 1
      %s67 = scalar_select %p64, %s65, %s66
      %p70 = pneg %p64
      %p71 = scmp.eq.s32.totalorder %s13, 1
      %p72 = por %p70, %p71
      %p73 = scmp.ne.s32.totalorder %s65, %s68
      %p74 = scmp.eq.s32.totalorder %s13, 0
      %p75 = por %p73, %p74
      %p76 = scmp.ne.s32.totalorder %s65, %s68
      %p77 = scmp.eq.s32.totalorder %s18, 1
      %p78 = por %p76, %p77
      %p79 = scmp.ne.s32.totalorder %s68, %s69
      %p80 = scmp.eq.s32.totalorder %s18, 0
      %p81 = por %p79, %p80
      %p82 = scmp.ne.s32.totalorder %s68, %s69
      %p83 = scmp.eq.s32.totalorder %s19, 1
      %p84 = por %p82, %p83
      %p86 = scmp.ne.s32.totalorder %s69, %s85
      %p87 = scmp.eq.s32.totalorder %s19, 0
      %p88 = por %p86, %p87
      %s90 = sadd.s32 %s89, 1
      %p93 = scmp.eq.s32.totalorder %s13, 1
      %p94 = scmp.ne.s32.totalorder %s89, %s91
      %p95 = scmp.eq.s32.totalorder %s13, 0
      %p96 = por %p94, %p95
      %p97 = scmp.ne.s32.totalorder %s89, %s91
      %p98 = scmp.eq.s32.totalorder %s18, 1
      %p99 = por %p97, %p98
      %p100 = scmp.ne.s32.totalorder %s91, %s92
      %p101 = scmp.eq.s32.totalorder %s18, 0
      %p102 = por %p100, %p101
      %p103 = scmp.ne.s32.totalorder %s91, %s92
      %p104 = scmp.eq.s32.totalorder %s19, 1
      %p105 = por %p103, %p104
      %p107 = scmp.ne.s32.totalorder %s92, %s106
      %p108 = scmp.eq.s32.totalorder %s19, 0
      %p109 = por %p107, %p108
      %s111 = sadd.s32 %s110, 1
      %p114 = scmp.eq.s32.totalorder %s13, 1
      %p115 = scmp.ne.s32.totalorder %s110, %s112
      %p116 = scmp.eq.s32.totalorder %s13, 0
      %p117 = por %p115, %p116
      %p118 = scmp.ne.s32.totalorder %s110, %s112
      %p119 = scmp.eq.s32.totalorder %s18, 1
      %p120 = por %p118, %p119
      %p121 = scmp.ne.s32.totalorder %s112, %s113
      %p122 = scmp.eq.s32.totalorder %s18, 0
      %p123 = por %p121, %p122
      %p124 = scmp.ne.s32.totalorder %s112, %s113
      %p125 = scmp.eq.s32.totalorder %s19, 1
      %p126 = por %p124, %p125
      %p128 = scmp.ne.s32.totalorder %s113, %s127
      %p129 = scmp.eq.s32.totalorder %s19, 0
      %p130 = por %p128, %p129
      %s132 = sadd.s32 %s131, 1
      %p135 = scmp.eq.s32.totalorder %s13, 1
      %p136 = scmp.ne.s32.totalorder %s131, %s133
      %p137 = scmp.eq.s32.totalorder %s13, 0
      %p138 = por %p136, %p137
      %p139 = scmp.ne.s32.totalorder %s131, %s133
      %p140 = scmp.eq.s32.totalorder %s18, 1
      %p141 = por %p139, %p140
      %p142 = scmp.ne.s32.totalorder %s133, %s134
      %p143 = scmp.eq.s32.totalorder %s18, 0
      %p144 = por %p142, %p143
      %p145 = scmp.ne.s32.totalorder %s133, %s134
      %p146 = scmp.eq.s32.totalorder %s19, 1
      %p147 = por %p145, %p146
      %p149 = scmp.ne.s32.totalorder %s134, %s148
      %p150 = scmp.eq.s32.totalorder %s19, 0
      %p151 = por %p149, %p150
      %s153 = sadd.s32 %s152, 1
      %p156 = scmp.eq.s32.totalorder %s13, 1
      %p157 = scmp.ne.s32.totalorder %s152, %s154
      %p158 = scmp.eq.s32.totalorder %s13, 0
      %p159 = por %p157, %p158
      %p160 = scmp.ne.s32.totalorder %s152, %s154
      %p161 = scmp.eq.s32.totalorder %s18, 1
      %p162 = por %p160, %p161
      %p163 = scmp.ne.s32.totalorder %s154, %s155
      %p164 = scmp.eq.s32.totalorder %s18, 0
      %p165 = por %p163, %p164
      %p166 = scmp.ne.s32.totalorder %s154, %s155
      %p167 = scmp.eq.s32.totalorder %s19, 1
      %p168 = por %p166, %p167
      %p170 = scmp.ne.s32.totalorder %s155, %s169
      %p171 = scmp.eq.s32.totalorder %s19, 0
      %p172 = por %p170, %p171
      %s173 = ssub.s32 %s20, %s32
      %s174 = ssub.s32 %s21, %s28
      %s175 = sor.u32 %s173, %s174
      %p176 = scmp.eq.s32.totalorder %s175, 0
      %s178 = sadd.s32 %s177, 1
      %s179 = scalar_select %p176, %s177, %s178
      %p182 = pneg %p176
      %p183 = scmp.eq.s32.totalorder %s13, 1
      %p184 = por %p182, %p183
      %p185 = scmp.ne.s32.totalorder %s177, %s180
      %p186 = scmp.eq.s32.totalorder %s13, 0
      %p187 = por %p185, %p186
      %p188 = scmp.ne.s32.totalorder %s177, %s180
      %p189 = scmp.eq.s32.totalorder %s18, 1
      %p190 = por %p188, %p189
      %p191 = scmp.ne.s32.totalorder %s180, %s181
      %p192 = scmp.eq.s32.totalorder %s18, 0
      %p193 = por %p191, %p192
      %p194 = scmp.ne.s32.totalorder %s180, %s181
      %p195 = scmp.eq.s32.totalorder %s19, 1
      %p196 = por %p194, %p195
      %p198 = scmp.ne.s32.totalorder %s181, %s197
      %p199 = scmp.eq.s32.totalorder %s19, 0
      %p200 = por %p198, %p199
      %s201 = ssub.s32 %s20, %s32
      %s202 = ssub.s32 %s21, %s28
      %s203 = sor.u32 %s201, %s202
      %p204 = scmp.eq.s32.totalorder %s203, 0
      %s206 = sadd.s32 %s205, 1
      %s207 = scalar_select %p204, %s205, %s206
      %p210 = pneg %p204
      %p211 = scmp.eq.s32.totalorder %s13, 1
      %p212 = por %p210, %p211
      %p213 = scmp.ne.s32.totalorder %s205, %s208
      %p214 = scmp.eq.s32.totalorder %s13, 0
      %p215 = por %p213, %p214
      %p216 = scmp.ne.s32.totalorder %s205, %s208
      %p217 = scmp.eq.s32.totalorder %s18, 1
      %p218 = por %p216, %p217
      %p219 = scmp.ne.s32.totalorder %s208, %s209
      %p220 = scmp.eq.s32.totalorder %s18, 0
      %p221 = por %p219, %p220
      %p222 = scmp.ne.s32.totalorder %s208, %s209
      %p223 = scmp.eq.s32.totalorder %s19, 1
      %p224 = por %p222, %p223
      %p226 = scmp.ne.s32.totalorder %s209, %s225
      %p227 = scmp.eq.s32.totalorder %s19, 0
      %p228 = por %p226, %p227
      %p229 = scmp.le.s32.totalorder 1, %s13
      %p230 = scmp.lt.s32.totalorder %s13, 3
      %p231 = pnand %p229, %p230
      %p232 = pneg %p231
      // Predicated region
      $region9: #{dgcnn_forward.13} parent=5 // pred_check
        _
      $region10: #{dgcnn_forward.13} parent=5 // pred_check_branch
        %234 = sbr.rel (%p231) target = $region12
      $region11: #{dgcnn_forward.13} parent=5 // pred_region
        %s235 = ssub.s32 %s13, 1
        // Predicated region
        $region13: #{dgcnn_forward.13} parent=11 // pred_check
          %p236 = pneg %p102
        $region14: #{dgcnn_forward.13} parent=11 // pred_check_branch
          %238 = sbr.rel (%p236) target = $region16
        $region15: #{dgcnn_forward.13} parent=11 // pred_region
          _
        $region16: #{dgcnn_forward.13} parent=11 // pred_fallthru
          _
        // Predicated region
        $region17: #{dgcnn_forward.13} parent=11 // pred_check
          %p239 = pneg %p123
        $region18: #{dgcnn_forward.13} parent=11 // pred_check_branch
          %241 = sbr.rel (%p239) target = $region20
        $region19: #{dgcnn_forward.13} parent=11 // pred_region
          _
        $region20: #{dgcnn_forward.13} parent=11 // pred_fallthru
          _
        // Predicated region
        $region21: #{dgcnn_forward.13} parent=11 // pred_check
          %p242 = pneg %p144
        $region22: #{dgcnn_forward.13} parent=11 // pred_check_branch
          %244 = sbr.rel (%p242) target = $region24
        $region23: #{dgcnn_forward.13} parent=11 // pred_region
          _
        $region24: #{dgcnn_forward.13} parent=11 // pred_fallthru
          _
        // Predicated region
        $region25: #{dgcnn_forward.13} parent=11 // pred_check
          %p245 = pneg %p165
        $region26: #{dgcnn_forward.13} parent=11 // pred_check_branch
          %247 = sbr.rel (%p245) target = $region28
        $region27: #{dgcnn_forward.13} parent=11 // pred_region
          _
        $region28: #{dgcnn_forward.13} parent=11 // pred_fallthru
          _
      $region12: #{dgcnn_forward.13} parent=5 // pred_fallthru
        _
      %p248 = scmp.lt.s32.totalorder %s13, 2
      // Predicated region
      $region29: #{dgcnn_forward.13} parent=5 // pred_check
        %p249 = pneg %p248
      $region30: #{dgcnn_forward.13} parent=5 // pred_check_branch
        %251 = sbr.rel (%p249) target = $region32
      $region31: #{dgcnn_forward.13} parent=5 // pred_region
        // Predicated region
        $region33: #{dgcnn_forward.13} parent=31 // pred_check
          %p252 = pneg %p47
        $region34: #{dgcnn_forward.13} parent=31 // pred_check_branch
          %254 = sbr.rel (%p252) target = $region36
        $region35: #{dgcnn_forward.13} parent=31 // pred_region
          %s255 = smul.u32 2, %s21
          %p256 = scmp.lt.s32.totalorder %s20, 1
          %s257 = scalar_select %p256, %s20, 1
          %p258 = scmp.lt.s32.totalorder %s255, 1
          %s259 = scalar_select %p258, %s255, 1
          %s260 = smul.addr %s257, 8
          %s261 = sadd.s32 %s259, %s260
          %s262 = smul.addr %s261, 4
          %s263 = scalar_lea.vmem %s0, %s262
          %s264 = smul.u32 2, %s21
        $region36: #{dgcnn_forward.13} parent=31 // pred_fallthru
          _
        // Predicated region
        $region37: #{dgcnn_forward.13} parent=31 // pred_check
          %p265 = pneg %p75
        $region38: #{dgcnn_forward.13} parent=31 // pred_check_branch
          %267 = sbr.rel (%p265) target = $region40
        $region39: #{dgcnn_forward.13} parent=31 // pred_region
          %s268 = smul.u32 2, %s21
          %p269 = scmp.lt.s32.totalorder %s20, 1
          %s270 = scalar_select %p269, %s20, 1
          %p271 = scmp.lt.s32.totalorder %s268, 1
          %s272 = scalar_select %p271, %s268, 1
          %s273 = smul.addr %s270, 2
          %s274 = sadd.s32 %s272, %s273
          %s275 = smul.addr %s274, 4
          %s276 = scalar_lea.vmem %s1, %s275
          %s277 = smul.u32 2, %s21
        $region40: #{dgcnn_forward.13} parent=31 // pred_fallthru
          _
        // Predicated region
        $region41: #{dgcnn_forward.13} parent=31 // pred_check
          %p278 = pneg %p187
        $region42: #{dgcnn_forward.13} parent=31 // pred_check_branch
          %280 = sbr.rel (%p278) target = $region44
        $region43: #{dgcnn_forward.13} parent=31 // pred_region
          %s281 = sand.u32 %s177, 1
          %s282 = sand.u32 %s177, 1
          %s283 = smul.addr %s282, 8
          %s284 = scalar_lea.vmem [#allocation2], %s283
          %s285 = smul.u32 2, %s21
          %s286 = smul.addr %s285, 5
          %s287 = sadd.s32 4, %s286
          %s288 = smul.addr %s20, 10
          %s289 = sadd.s32 %s287, %s288
          %s290 = smul.addr %s289, 4
          %s291 = scalar_lea.vmem %s6, %s290
          // Predicated region
          $region45: #{dgcnn_forward.13} parent=43 // pred_check
            _
          $region46: #{dgcnn_forward.13} parent=43 // pred_check_branch
            %293 = sbr.rel (0) target = $region48
          $region47: #{dgcnn_forward.13} parent=43 // pred_region
            // Predicated region
            $region49: #{dgcnn_forward.13} parent=47 // pred_check
              _
            $region50: #{dgcnn_forward.13} parent=47 // pred_check_branch
              %295 = sbr.rel target = $region52
            $region51: #{dgcnn_forward.13} parent=47 // pred_region
              // Predicated region
              $region64: #{dgcnn_forward.13} parent=51 // pred_check
                _
              $region65: #{dgcnn_forward.13} parent=51 // pred_check_branch
                %313 = sbr.rel (0) target = $region67
              $region66: #{dgcnn_forward.13} parent=51 // pred_region
                loop: start=0, step=1, limit=1
                $region68: #{dgcnn_forward.13} parent=66 // loop_pre_header
                  _
                $region69: #{dgcnn_forward.13} parent=66 // loop_header
                  %s315 = sphi 0, %s319
                  %p316 = scmp.ge.s32.totalorder %s315, 1
                  %s320 = sphi %s291, %s291
                  %s321 = sphi %s284, %s284
                $region70: #{dgcnn_forward.13} parent=66 // loop_header_branch
                  %318 = sbr.rel (%p316) target = $region74
                $region71: #{dgcnn_forward.13} parent=66 // loop_body
                  _
                $region72: #{dgcnn_forward.13} parent=66 // loop_footer
                  %s319 = sadd.s32 1, %s315
                $region73: #{dgcnn_forward.13} parent=66 // loop_footer_branch
                  %314 = sbr.rel target = $region69
                $region74: #{dgcnn_forward.13} parent=66 // loop_exit
                  _
                %s323 = ssub.s32 16, 1
                loop: start=0, step=1, limit=1
                $region75: #{dgcnn_forward.13} parent=66 // loop_pre_header
                  _
                $region76: #{dgcnn_forward.13} parent=66 // loop_header
                  %s325 = sphi 0, %s329
                  %p326 = scmp.ge.s32.totalorder %s325, 1
                  %s330 = sphi %s291, %s291
                  %s331 = sphi %s284, %s284
                $region77: #{dgcnn_forward.13} parent=66 // loop_header_branch
                  %328 = sbr.rel (%p326) target = $region81
                $region78: #{dgcnn_forward.13} parent=66 // loop_body
                  %v332 = vld [vmem:[%s330] sm:%s323]
                  %333 = vst [vmem:[%s331] sm:%s323] %v332
                  %v334 = vld [vmem:[%s330 + $0x14] sm:%s323]
                  %335 = vst [vmem:[%s331 + $0x4] sm:%s323] %v334
                $region79: #{dgcnn_forward.13} parent=66 // loop_footer
                  %s329 = sadd.s32 1, %s325
                $region80: #{dgcnn_forward.13} parent=66 // loop_footer_branch
                  %324 = sbr.rel target = $region76
                $region81: #{dgcnn_forward.13} parent=66 // loop_exit
                  _
              $region67: #{dgcnn_forward.13} parent=51 // pred_fallthru
                _
            $region52: #{dgcnn_forward.13} parent=47 // pred_fallthru
              _
            // Predicated region
            $region53: #{dgcnn_forward.13} parent=47 // pred_check
              _
            $region54: #{dgcnn_forward.13} parent=47 // pred_check_branch
              %297 = sbr.rel (0) target = $region56
            $region55: #{dgcnn_forward.13} parent=47 // pred_region
              %s299 = ssub.s32 16, 1
              loop: start=0, step=1, limit=1
              $region57: #{dgcnn_forward.13} parent=55 // loop_pre_header
                _
              $region58: #{dgcnn_forward.13} parent=55 // loop_header
                %s301 = sphi 0, %s305
                %p302 = scmp.ge.s32.totalorder %s301, 1
                %s306 = sphi %s291, %s291
                %s307 = sphi %s284, %s284
              $region59: #{dgcnn_forward.13} parent=55 // loop_header_branch
                %304 = sbr.rel (%p302) target = $region63
              $region60: #{dgcnn_forward.13} parent=55 // loop_body
                %v308 = vld [vmem:[%s306] sm:%s299]
                %309 = vst [vmem:[%s307] sm:%s299] %v308
                %v310 = vld [vmem:[%s306 + $0x14] sm:%s299]
                %311 = vst [vmem:[%s307 + $0x4] sm:%s299] %v310
              $region61: #{dgcnn_forward.13} parent=55 // loop_footer
                %s305 = sadd.s32 1, %s301
              $region62: #{dgcnn_forward.13} parent=55 // loop_footer_branch
                %300 = sbr.rel target = $region58
              $region63: #{dgcnn_forward.13} parent=55 // loop_exit
                _
            $region56: #{dgcnn_forward.13} parent=47 // pred_fallthru
              _
          $region48: #{dgcnn_forward.13} parent=43 // pred_fallthru
            _
          %336 = vnop
        $region44: #{dgcnn_forward.13} parent=31 // pred_fallthru
          _
      $region32: #{dgcnn_forward.13} parent=5 // pred_fallthru
        _
      %p337 = scmp.le.s32.totalorder 1, %s13
      %p338 = scmp.lt.s32.totalorder %s13, 3
      %p339 = pnand %p337, %p338
      %p340 = pneg %p339
      // Predicated region
      $region82: #{dgcnn_forward.13} parent=5 // pred_check
        _
      $region83: #{dgcnn_forward.13} parent=5 // pred_check_branch
        %342 = sbr.rel (%p339) target = $region85
      $region84: #{dgcnn_forward.13} parent=5 // pred_region
        %s343 = ssub.s32 %s13, 1
        %s344 = sand.u32 %s180, 1
        %s345 = sand.u32 %s180, 1
        %s346 = smul.addr %s345, 8
        %s347 = scalar_lea.vmem [#allocation2], %s346
        // Predicated region
        $region86: #{dgcnn_forward.13} parent=84 // pred_check
          %p348 = pneg %p193
        $region87: #{dgcnn_forward.13} parent=84 // pred_check_branch
          %350 = sbr.rel (%p348) target = $region89
        $region88: #{dgcnn_forward.13} parent=84 // pred_region
          _
        $region89: #{dgcnn_forward.13} parent=84 // pred_fallthru
          _
        %s351 = smul.u32 2, %s23
        %p352 = scmp.lt.s32.totalorder %s22, 1
        %s353 = scalar_select %p352, %s22, 1
        %p354 = scmp.lt.s32.totalorder %s351, 1
        %s355 = scalar_select %p354, %s351, 1
        %s356 = smul.addr %s353, 8
        %s357 = sadd.s32 %s355, %s356
        %s358 = smul.addr %s357, 4
        %s359 = scalar_lea.vmem %s0, %s358
        %p360 = pneg %p53
        %p361 = pneg %p50
        %s362 = smul.u32 2, %s23
        %p363 = scmp.lt.s32.totalorder %s22, 1
        %s364 = scalar_select %p363, %s22, 1
        %p365 = scmp.lt.s32.totalorder %s362, 1
        %s366 = scalar_select %p365, %s362, 1
        %s367 = smul.addr %s364, 2
        %s368 = sadd.s32 %s366, %s367
        %s369 = smul.addr %s368, 4
        %s370 = scalar_lea.vmem %s1, %s369
        %p371 = pneg %p81
        %p372 = pneg %p78
        %p373 = pneg %p102
        %p374 = pneg %p99
        %p375 = pneg %p123
        %p376 = pneg %p120
        %p377 = pneg %p144
        %p378 = pneg %p141
        %p379 = pneg %p165
        %p380 = pneg %p162
        %s381 = sand.u32 %s180, 1
        %s382 = sand.u32 %s180, 1
        %s383 = smul.addr %s382, 8
        %s384 = scalar_lea.vmem [#allocation2], %s383
        %p385 = pneg %p193
        %p386 = pneg %p190
        %p387 = pneg %p221
        %p388 = pneg %p218
        %s389 = sand.u32 %s208, 1
        %s390 = sand.u32 %s208, 1
        %s391 = smul.addr %s390, 8
        %s392 = scalar_lea.vmem [#allocation3], %s391
        %s393 = smul.u32 2, %s23
        %p394 = scmp.lt.s32.totalorder %s22, 1
        %s395 = scalar_select %p394, %s22, 1
        %p396 = scmp.lt.s32.totalorder %s393, 1
        %s397 = scalar_select %p396, %s393, 1
        %s398 = smul.addr %s395, 8
        %s399 = sadd.s32 %s397, %s398
        %s400 = smul.addr %s399, 4
        %s401 = scalar_lea.vmem %s0, %s400
        %s402 = smul.u32 2, %s23
        %s403 = smul.u32 2, %s23
        %p404 = scmp.lt.s32.totalorder %s22, 1
        %s405 = scalar_select %p404, %s22, 1
        %p406 = scmp.lt.s32.totalorder %s403, 1
        %s407 = scalar_select %p406, %s403, 1
        %s408 = smul.addr %s405, 2
        %s409 = sadd.s32 %s407, %s408
        %s410 = smul.addr %s409, 4
        %s411 = scalar_lea.vmem %s1, %s410
        %s412 = smul.u32 2, %s23
        %s413 = smul.u32 2, %s23
        %s414 = smul.u32 2, %s23
        %v416 = vld [vmem:[%s401] sm:$0xf]
        %v417 = vld [vmem:[%s401 + $0x4] sm:$0xf]
        %v418 = vld [vmem:[%s401 + $0x8] sm:$0xf]
        %v419 = vld [vmem:[%s401 + $0xc] sm:$0xf]
        %v420 = vld [vmem:[%s401 + $0x10] sm:$0xf]
        %v421 = vld [vmem:[%s401 + $0x14] sm:$0xf]
        %v422 = vld [vmem:[%s401 + $0x18] sm:$0xf]
        %v423 = vld [vmem:[%s401 + $0x1c] sm:$0xf]
        %v424 = vld [vmem:[%s2] sm:$0xf]
        %v425 = vld [vmem:[%s2 + $0x4] sm:$0xf]
        %v426 = vld [vmem:[%s2 + $0x8] sm:$0xf]
        %v427 = vld [vmem:[%s2 + $0xc] sm:$0xf]
        %v428 = vld [vmem:[%s2 + $0x10] sm:$0xf]
        %v429 = vld [vmem:[%s2 + $0x14] sm:$0xf]
        %v430 = vld [vmem:[%s2 + $0x18] sm:$0xf]
        %v431 = vld [vmem:[%s2 + $0x1c] sm:$0xf]
        %v440 = vunpack.c.l.b16 %v416
        %v441 = vunpack.c.l.b16 %v417
        %v442 = vunpack.c.l.b16 %v418
        %v443 = vunpack.c.l.b16 %v419
        %v444 = vunpack.c.l.b16 %v420
        %v445 = vunpack.c.l.b16 %v421
        %v446 = vunpack.c.l.b16 %v422
        %v447 = vunpack.c.l.b16 %v423
        %v448 = vpack.c.b16 %v441, %v440
        %v449 = vpack.c.b16 %v443, %v442
        %v450 = vpack.c.b16 %v445, %v444
        %v451 = vpack.c.b16 %v447, %v446
        %v460 = vunpack.c.l.b16 %v424
        %v461 = vunpack.c.l.b16 %v425
        %v462 = vunpack.c.l.b16 %v426
        %v463 = vunpack.c.l.b16 %v427
        %v464 = vunpack.c.l.b16 %v428
        %v465 = vunpack.c.l.b16 %v429
        %v466 = vunpack.c.l.b16 %v430
        %v467 = vunpack.c.l.b16 %v431
        %v468 = vpack.c.b16 %v461, %v460
        %v469 = vpack.c.b16 %v463, %v462
        %v470 = vpack.c.b16 %v465, %v464
        %v471 = vpack.c.b16 %v467, %v466
        %vm476 = vcmask 523264
        %v478 = vsel %vm476, %v448, 0
        %v481 = vsel %vm476, %v449, 0
        %v484 = vsel %vm476, %v450, 0
        %v487 = vsel %vm476, %v451, 0
        %489 = vmatpush.bf16.msra.mxu0 0
        %490 = vmatpush.bf16.msra.mxu0 0
        %491 = vmatpush.bf16.msra.mxu0 0
        %492 = vmatpush.bf16.msra.mxu0 0
        %493 = vmatpush.bf16.msra.mxu0 %v471
        %494 = vmatpush.bf16.msra.mxu0 %v470
        %495 = vmatpush.bf16.msra.mxu0 %v469
        %496 = vmatpush.bf16.msra.mxu0 %v468
        %497 = vmatmul.bf16.gmra.mxu0 %v478
        %v498 = vpop.f32.mrf.mxu0
        %v499 = vadd.f32 0.0, %v498
        %v500 = vpop.f32.mrf.mxu0
        %v501 = vadd.f32 0.0, %v500
        %502 = vmatmul.bf16.gmra.mxu0 %v481
        %v503 = vpop.f32.mrf.mxu0
        %v504 = vadd.f32 0.0, %v503
        %v505 = vpop.f32.mrf.mxu0
        %v506 = vadd.f32 0.0, %v505
        %507 = vmatmul.bf16.gmra.mxu0 %v484
        %v508 = vpop.f32.mrf.mxu0
        %v509 = vadd.f32 0.0, %v508
        %v510 = vpop.f32.mrf.mxu0
        %v511 = vadd.f32 0.0, %v510
        %512 = vmatmul.bf16.gmra.mxu0 %v487
        %v513 = vpop.f32.mrf.mxu0
        %v514 = vadd.f32 0.0, %v513
        %v515 = vpop.f32.mrf.mxu0
        %v516 = vadd.f32 0.0, %v515
        %517 = vdwg.mxu0
        %v518 = vld [vmem:[%s411] sm:$0xf]
        %v519 = vld [vmem:[%s411 + $0x4] sm:$0xf]
        %v520 = vld [vmem:[%s3] sm:$0xf]
        %v521 = vld [vmem:[%s3 + $0x4] sm:$0xf]
        %v522 = vld [vmem:[%s3 + $0x8] sm:$0xf]
        %v523 = vld [vmem:[%s3 + $0xc] sm:$0xf]
        %v524 = vld [vmem:[%s3 + $0x10] sm:$0xf]
        %v525 = vld [vmem:[%s3 + $0x14] sm:$0xf]
        %v526 = vld [vmem:[%s3 + $0x18] sm:$0xf]
        %v527 = vld [vmem:[%s3 + $0x1c] sm:$0xf]
        %v530 = vunpack.c.l.b16 %v518
        %v531 = vunpack.c.l.b16 %v519
        %v532 = vpack.c.b16 %v531, %v530
        %v541 = vunpack.c.l.b16 %v520
        %v542 = vunpack.c.l.b16 %v521
        %v543 = vunpack.c.l.b16 %v522
        %v544 = vunpack.c.l.b16 %v523
        %v545 = vunpack.c.l.b16 %v524
        %v546 = vunpack.c.l.b16 %v525
        %v547 = vunpack.c.l.b16 %v526
        %v548 = vunpack.c.l.b16 %v527
        %v549 = vpack.c.b16 %v542, %v541
        %v550 = vpack.c.b16 %v544, %v543
        %v551 = vpack.c.b16 %v546, %v545
        %v552 = vpack.c.b16 %v548, %v547
        %v558 = vsel %vm476, %v532, 0
        %560 = vmatpush.bf16.msra.mxu0 0
        %561 = vmatpush.bf16.msra.mxu0 0
        %562 = vmatpush.bf16.msra.mxu0 0
        %563 = vmatpush.bf16.msra.mxu0 0
        %564 = vmatpush.bf16.msra.mxu0 %v552
        %565 = vmatpush.bf16.msra.mxu0 %v551
        %566 = vmatpush.bf16.msra.mxu0 %v550
        %567 = vmatpush.bf16.msra.mxu0 %v549
        %568 = vmatmul.bf16.gmra.mxu0 %v558
        %v569 = vpop.f32.mrf.mxu0
        %v570 = vadd.f32 0.0, %v569
        %v571 = vpop.f32.mrf.mxu0
        %v572 = vadd.f32 0.0, %v571
        %573 = vdwg.mxu0
        %v574 = vadd.f32 %v499, %v570
        %v575 = vadd.f32 %v501, %v572
        %v576 = vadd.f32 %v504, %v570
        %v577 = vadd.f32 %v506, %v572
        %v578 = vadd.f32 %v509, %v570
        %v579 = vadd.f32 %v511, %v572
        %v580 = vadd.f32 %v514, %v570
        %v581 = vadd.f32 %v516, %v572
        %v582 = vmax.f32 %v574, %v578
        %v583 = vmax.f32 %v576, %v580
        %v584 = vmax.f32 %v582, %v583
        %v585 = vmax.f32 %v575, %v579
        %v586 = vmax.f32 %v577, %v581
        %v587 = vmax.f32 %v585, %v586
        %v588 = vld [vmem:[%s4] sm:$0x1]
        %v590 = vperm.slane %v588, 0
        %v592 = vmul.f32 %v584, %v590
        %v593 = vmul.f32 %v587, %v590
        %v594 = vld [vmem:[%s5] sm:$0x1]
        %v596 = vperm.slane %v594, 0
        %v598 = vadd.f32 %v592, %v596
        %v599 = vadd.f32 %v593, %v596
        %vm600 = vcmp.gt.f32.partialorder %v598, 0.0
        %vm601 = vcmp.gt.f32.partialorder %v599, 0.0
        %v602 = vmul.f32 %v598, 0.2
        %v603 = vmul.f32 %v599, 0.2
        %v604 = vsel %vm600, %v598, %v602
        %v605 = vsel %vm601, %v599, %v603
        %v606 = vpack.c.bf16 %v604, %v604
        %v607 = vpack.c.bf16 %v605, %v605
        %608 = vst [vmem:[%s392] sm:$0xf] %v606
        %609 = vst [vmem:[%s392 + $0x4] sm:$0xf] %v607
        %s610 = sand.u32 %s208, 1
        %s611 = sand.u32 %s208, 1
        %s612 = smul.addr %s611, 8
        %s613 = scalar_lea.vmem [#allocation3], %s612
        // Predicated region
        $region90: #{dgcnn_forward.13} parent=84 // pred_check
          %p614 = pneg %p218
        $region91: #{dgcnn_forward.13} parent=84 // pred_check_branch
          %616 = sbr.rel (%p614) target = $region93
        $region92: #{dgcnn_forward.13} parent=84 // pred_region
          %s617 = smul.u32 2, %s23
          %s618 = smul.addr %s617, 5
          %s619 = sadd.s32 4, %s618
          %s620 = smul.addr %s22, 10
          %s621 = sadd.s32 %s619, %s620
          %s622 = smul.addr %s621, 4
          %s623 = scalar_lea.vmem %s7, %s622
          // Predicated region
          $region94: #{dgcnn_forward.13} parent=92 // pred_check
            _
          $region95: #{dgcnn_forward.13} parent=92 // pred_check_branch
            %625 = sbr.rel (0) target = $region97
          $region96: #{dgcnn_forward.13} parent=92 // pred_region
            // Predicated region
            $region98: #{dgcnn_forward.13} parent=96 // pred_check
              _
            $region99: #{dgcnn_forward.13} parent=96 // pred_check_branch
              %627 = sbr.rel target = $region101
            $region100: #{dgcnn_forward.13} parent=96 // pred_region
              // Predicated region
              $region113: #{dgcnn_forward.13} parent=100 // pred_check
                _
              $region114: #{dgcnn_forward.13} parent=100 // pred_check_branch
                %645 = sbr.rel (0) target = $region116
              $region115: #{dgcnn_forward.13} parent=100 // pred_region
                loop: start=0, step=1, limit=1
                $region117: #{dgcnn_forward.13} parent=115 // loop_pre_header
                  _
                $region118: #{dgcnn_forward.13} parent=115 // loop_header
                  %s647 = sphi 0, %s651
                  %p648 = scmp.ge.s32.totalorder %s647, 1
                  %s652 = sphi %s613, %s613
                  %s653 = sphi %s623, %s623
                $region119: #{dgcnn_forward.13} parent=115 // loop_header_branch
                  %650 = sbr.rel (%p648) target = $region123
                $region120: #{dgcnn_forward.13} parent=115 // loop_body
                  _
                $region121: #{dgcnn_forward.13} parent=115 // loop_footer
                  %s651 = sadd.s32 1, %s647
                $region122: #{dgcnn_forward.13} parent=115 // loop_footer_branch
                  %646 = sbr.rel target = $region118
                $region123: #{dgcnn_forward.13} parent=115 // loop_exit
                  _
                %s655 = ssub.s32 16, 1
                loop: start=0, step=1, limit=1
                $region124: #{dgcnn_forward.13} parent=115 // loop_pre_header
                  _
                $region125: #{dgcnn_forward.13} parent=115 // loop_header
                  %s657 = sphi 0, %s661
                  %p658 = scmp.ge.s32.totalorder %s657, 1
                  %s662 = sphi %s613, %s613
                  %s663 = sphi %s623, %s623
                $region126: #{dgcnn_forward.13} parent=115 // loop_header_branch
                  %660 = sbr.rel (%p658) target = $region130
                $region127: #{dgcnn_forward.13} parent=115 // loop_body
                  %v664 = vld [vmem:[%s662] sm:%s655]
                  %665 = vst [vmem:[%s663] sm:%s655] %v664
                  %v666 = vld [vmem:[%s662 + $0x4] sm:%s655]
                  %667 = vst [vmem:[%s663 + $0x14] sm:%s655] %v666
                $region128: #{dgcnn_forward.13} parent=115 // loop_footer
                  %s661 = sadd.s32 1, %s657
                $region129: #{dgcnn_forward.13} parent=115 // loop_footer_branch
                  %656 = sbr.rel target = $region125
                $region130: #{dgcnn_forward.13} parent=115 // loop_exit
                  _
              $region116: #{dgcnn_forward.13} parent=100 // pred_fallthru
                _
            $region101: #{dgcnn_forward.13} parent=96 // pred_fallthru
              _
            // Predicated region
            $region102: #{dgcnn_forward.13} parent=96 // pred_check
              _
            $region103: #{dgcnn_forward.13} parent=96 // pred_check_branch
              %629 = sbr.rel (0) target = $region105
            $region104: #{dgcnn_forward.13} parent=96 // pred_region
              %s631 = ssub.s32 16, 1
              loop: start=0, step=1, limit=1
              $region106: #{dgcnn_forward.13} parent=104 // loop_pre_header
                _
              $region107: #{dgcnn_forward.13} parent=104 // loop_header
                %s633 = sphi 0, %s637
                %p634 = scmp.ge.s32.totalorder %s633, 1
                %s638 = sphi %s613, %s613
                %s639 = sphi %s623, %s623
              $region108: #{dgcnn_forward.13} parent=104 // loop_header_branch
                %636 = sbr.rel (%p634) target = $region112
              $region109: #{dgcnn_forward.13} parent=104 // loop_body
                %v640 = vld [vmem:[%s638] sm:%s631]
                %641 = vst [vmem:[%s639] sm:%s631] %v640
                %v642 = vld [vmem:[%s638 + $0x4] sm:%s631]
                %643 = vst [vmem:[%s639 + $0x14] sm:%s631] %v642
              $region110: #{dgcnn_forward.13} parent=104 // loop_footer
                %s637 = sadd.s32 1, %s633
              $region111: #{dgcnn_forward.13} parent=104 // loop_footer_branch
                %632 = sbr.rel target = $region107
              $region112: #{dgcnn_forward.13} parent=104 // loop_exit
                _
            $region105: #{dgcnn_forward.13} parent=96 // pred_fallthru
              _
          $region97: #{dgcnn_forward.13} parent=92 // pred_fallthru
            _
          %668 = vnop
        $region93: #{dgcnn_forward.13} parent=84 // pred_fallthru
          _
      $region85: #{dgcnn_forward.13} parent=5 // pred_fallthru
        _
      %p669 = scmp.le.s32.totalorder 2, %s13
      // Predicated region
      $region131: #{dgcnn_forward.13} parent=5 // pred_check
        %p670 = pneg %p669
      $region132: #{dgcnn_forward.13} parent=5 // pred_check_branch
        %672 = sbr.rel (%p670) target = $region134
      $region133: #{dgcnn_forward.13} parent=5 // pred_region
        %s673 = ssub.s32 %s13, 2
        // Predicated region
        $region135: #{dgcnn_forward.13} parent=133 // pred_check
          %p674 = pneg %p224
        $region136: #{dgcnn_forward.13} parent=133 // pred_check_branch
          %676 = sbr.rel (%p674) target = $region138
        $region137: #{dgcnn_forward.13} parent=133 // pred_region
          %s677 = sand.u32 %s209, 1
          %s678 = sand.u32 %s209, 1
          %s679 = smul.addr %s678, 8
          %s680 = scalar_lea.vmem [#allocation3], %s679
        $region138: #{dgcnn_forward.13} parent=133 // pred_fallthru
          _
      $region134: #{dgcnn_forward.13} parent=5 // pred_fallthru
        _
    $region6: #{dgcnn_forward.13} parent=1 // loop_footer
      %s17 = sadd.s32 1, %s13
    $region7: #{dgcnn_forward.13} parent=1 // loop_footer_branch
      %12 = sbr.rel target = $region3
    $region8: #{dgcnn_forward.13} parent=1 // loop_exit
      _

// kernel: dgcnn_forward.15
$region0: #{dgcnn_forward.15}
  #allocation0 [shape = 'u32[]', space=smem, size = 0x4, offset = 0x4, fixed_abs, tag = 'smem constant byte address 0x4 - core index']
  #allocation1 [shape = 'u32[72,128]{1,0:T(1,128)}', space=vmem, size = 0x9000, scoped, tag = 'internal scratch']
  %s0 = inlined_call_operand.vmem [shape: bf16[2,4,16,64], index: 0, kind: input, shape index: {}]
  %s1 = inlined_call_operand.vmem [shape: bf16[2,16,64], index: 1, kind: input, shape index: {}]
  %s2 = inlined_call_operand.vmem [shape: bf16[64,128], index: 2, kind: input, shape index: {}]
  %s3 = inlined_call_operand.vmem [shape: bf16[64,128], index: 3, kind: input, shape index: {}]
  %s4 = inlined_call_operand.vmem [shape: f32[1,128], index: 4, kind: input, shape index: {}]
  %s5 = inlined_call_operand.vmem [shape: f32[1,128], index: 5, kind: input, shape index: {}]
  %s6 = inlined_call_operand.vmem [shape: bf16[2,16,640], index: 6, kind: input, shape index: {}, may-alias: {6,7}]
  %s7 = inlined_call_operand.vmem [shape: bf16[2,16,640], index: 7, kind: output, shape index: {}, may-alias: {6,7}]
  %s8 = sld [smem:[#allocation0]]
  $region139: #{dgcnn_forward.15} parent=0
    _
  %s10 = ssub.s32 1, %s8
  %s11 = scalar_select 0, %s10, %s8
  $region1: #{dgcnn_forward.15} parent=0
    #allocation2 [shape = 'u8[8192]{0}', space=vmem, size = 0x2000, scoped, tag = 'input window, operand 6']
    #allocation3 [shape = 'u8[8192]{0}', space=vmem, size = 0x2000, scoped, tag = 'output window, operand 0']
    loop: start=0, step=1, limit=4
    $region2: #{dgcnn_forward.15} parent=1 // loop_pre_header
      _
    $region3: #{dgcnn_forward.15} parent=1 // loop_header
      %s13 = sphi 0, %s17
      %p14 = scmp.ge.s32.totalorder %s13, 4
      %s20 = sphi 0, %s32
      %s21 = sphi 0, %s28
      %s22 = sphi 0, %s20
      %s23 = sphi 0, %s21
      %s24 = sphi 0, %s22
      %s25 = sphi 0, %s23
      %s37 = sphi 0, %s39
      %s40 = sphi 0, %s37
      %s41 = sphi 0, %s40
      %s57 = sphi 0, %s41
      %s65 = sphi 0, %s67
      %s68 = sphi 0, %s65
      %s69 = sphi 0, %s68
      %s85 = sphi 0, %s69
      %s89 = sphi 0, %s89
      %s91 = sphi 0, %s89
      %s92 = sphi 0, %s91
      %s106 = sphi 0, %s92
      %s110 = sphi 0, %s110
      %s112 = sphi 0, %s110
      %s113 = sphi 0, %s112
      %s127 = sphi 0, %s113
      %s131 = sphi 0, %s131
      %s133 = sphi 0, %s131
      %s134 = sphi 0, %s133
      %s148 = sphi 0, %s134
      %s152 = sphi 0, %s152
      %s154 = sphi 0, %s152
      %s155 = sphi 0, %s154
      %s169 = sphi 0, %s155
      %s177 = sphi 0, %s179
      %s180 = sphi 0, %s177
      %s181 = sphi 0, %s180
      %s197 = sphi 0, %s181
      %s205 = sphi 0, %s207
      %s208 = sphi 0, %s205
      %s209 = sphi 0, %s208
      %s225 = sphi 0, %s209
    $region4: #{dgcnn_forward.15} parent=1 // loop_header_branch
      %16 = sbr.rel (%p14) target = $region8
    $region5: #{dgcnn_forward.15} parent=1 // loop_body
      %s18 = ssub.s32 %s13, 1
      %s19 = ssub.s32 %s13, 2
      %s26 = sadd.s32 1, %s21
      %p27 = scmp.ge.s32.totalorder %s26, 1
      %s28 = scalar_select %p27, 0, %s26
      %s29 = sadd.s32 1, %s20
      %s30 = scalar_select %p27, %s29, %s20
      %p31 = scmp.ge.s32.totalorder %s30, 2
      %s32 = scalar_select %p31, 0, %s30
      %s33 = ssub.s32 %s20, %s32
      %s34 = ssub.s32 %s21, %s28
      %s35 = sor.u32 %s33, %s34
      %p36 = scmp.eq.s32.totalorder %s35, 0
      %s38 = sadd.s32 %s37, 1
      %s39 = scalar_select %p36, %s37, %s38
      %p42 = pneg %p36
      %p43 = scmp.eq.s32.totalorder %s13, 1
      %p44 = por %p42, %p43
      %p45 = scmp.ne.s32.totalorder %s37, %s40
      %p46 = scmp.eq.s32.totalorder %s13, 0
      %p47 = por %p45, %p46
      %p48 = scmp.ne.s32.totalorder %s37, %s40
      %p49 = scmp.eq.s32.totalorder %s18, 1
      %p50 = por %p48, %p49
      %p51 = scmp.ne.s32.totalorder %s40, %s41
      %p52 = scmp.eq.s32.totalorder %s18, 0
      %p53 = por %p51, %p52
      %p54 = scmp.ne.s32.totalorder %s40, %s41
      %p55 = scmp.eq.s32.totalorder %s19, 1
      %p56 = por %p54, %p55
      %p58 = scmp.ne.s32.totalorder %s41, %s57
      %p59 = scmp.eq.s32.totalorder %s19, 0
      %p60 = por %p58, %p59
      %s61 = ssub.s32 %s20, %s32
      %s62 = ssub.s32 %s21, %s28
      %s63 = sor.u32 %s61, %s62
      %p64 = scmp.eq.s32.totalorder %s63, 0
      %s66 = sadd.s32 %s65, 1
      %s67 = scalar_select %p64, %s65, %s66
      %p70 = pneg %p64
      %p71 = scmp.eq.s32.totalorder %s13, 1
      %p72 = por %p70, %p71
      %p73 = scmp.ne.s32.totalorder %s65, %s68
      %p74 = scmp.eq.s32.totalorder %s13, 0
      %p75 = por %p73, %p74
      %p76 = scmp.ne.s32.totalorder %s65, %s68
      %p77 = scmp.eq.s32.totalorder %s18, 1
      %p78 = por %p76, %p77
      %p79 = scmp.ne.s32.totalorder %s68, %s69
      %p80 = scmp.eq.s32.totalorder %s18, 0
      %p81 = por %p79, %p80
      %p82 = scmp.ne.s32.totalorder %s68, %s69
      %p83 = scmp.eq.s32.totalorder %s19, 1
      %p84 = por %p82, %p83
      %p86 = scmp.ne.s32.totalorder %s69, %s85
      %p87 = scmp.eq.s32.totalorder %s19, 0
      %p88 = por %p86, %p87
      %s90 = sadd.s32 %s89, 1
      %p93 = scmp.eq.s32.totalorder %s13, 1
      %p94 = scmp.ne.s32.totalorder %s89, %s91
      %p95 = scmp.eq.s32.totalorder %s13, 0
      %p96 = por %p94, %p95
      %p97 = scmp.ne.s32.totalorder %s89, %s91
      %p98 = scmp.eq.s32.totalorder %s18, 1
      %p99 = por %p97, %p98
      %p100 = scmp.ne.s32.totalorder %s91, %s92
      %p101 = scmp.eq.s32.totalorder %s18, 0
      %p102 = por %p100, %p101
      %p103 = scmp.ne.s32.totalorder %s91, %s92
      %p104 = scmp.eq.s32.totalorder %s19, 1
      %p105 = por %p103, %p104
      %p107 = scmp.ne.s32.totalorder %s92, %s106
      %p108 = scmp.eq.s32.totalorder %s19, 0
      %p109 = por %p107, %p108
      %s111 = sadd.s32 %s110, 1
      %p114 = scmp.eq.s32.totalorder %s13, 1
      %p115 = scmp.ne.s32.totalorder %s110, %s112
      %p116 = scmp.eq.s32.totalorder %s13, 0
      %p117 = por %p115, %p116
      %p118 = scmp.ne.s32.totalorder %s110, %s112
      %p119 = scmp.eq.s32.totalorder %s18, 1
      %p120 = por %p118, %p119
      %p121 = scmp.ne.s32.totalorder %s112, %s113
      %p122 = scmp.eq.s32.totalorder %s18, 0
      %p123 = por %p121, %p122
      %p124 = scmp.ne.s32.totalorder %s112, %s113
      %p125 = scmp.eq.s32.totalorder %s19, 1
      %p126 = por %p124, %p125
      %p128 = scmp.ne.s32.totalorder %s113, %s127
      %p129 = scmp.eq.s32.totalorder %s19, 0
      %p130 = por %p128, %p129
      %s132 = sadd.s32 %s131, 1
      %p135 = scmp.eq.s32.totalorder %s13, 1
      %p136 = scmp.ne.s32.totalorder %s131, %s133
      %p137 = scmp.eq.s32.totalorder %s13, 0
      %p138 = por %p136, %p137
      %p139 = scmp.ne.s32.totalorder %s131, %s133
      %p140 = scmp.eq.s32.totalorder %s18, 1
      %p141 = por %p139, %p140
      %p142 = scmp.ne.s32.totalorder %s133, %s134
      %p143 = scmp.eq.s32.totalorder %s18, 0
      %p144 = por %p142, %p143
      %p145 = scmp.ne.s32.totalorder %s133, %s134
      %p146 = scmp.eq.s32.totalorder %s19, 1
      %p147 = por %p145, %p146
      %p149 = scmp.ne.s32.totalorder %s134, %s148
      %p150 = scmp.eq.s32.totalorder %s19, 0
      %p151 = por %p149, %p150
      %s153 = sadd.s32 %s152, 1
      %p156 = scmp.eq.s32.totalorder %s13, 1
      %p157 = scmp.ne.s32.totalorder %s152, %s154
      %p158 = scmp.eq.s32.totalorder %s13, 0
      %p159 = por %p157, %p158
      %p160 = scmp.ne.s32.totalorder %s152, %s154
      %p161 = scmp.eq.s32.totalorder %s18, 1
      %p162 = por %p160, %p161
      %p163 = scmp.ne.s32.totalorder %s154, %s155
      %p164 = scmp.eq.s32.totalorder %s18, 0
      %p165 = por %p163, %p164
      %p166 = scmp.ne.s32.totalorder %s154, %s155
      %p167 = scmp.eq.s32.totalorder %s19, 1
      %p168 = por %p166, %p167
      %p170 = scmp.ne.s32.totalorder %s155, %s169
      %p171 = scmp.eq.s32.totalorder %s19, 0
      %p172 = por %p170, %p171
      %s173 = ssub.s32 %s20, %s32
      %s174 = ssub.s32 %s21, %s28
      %s175 = sor.u32 %s173, %s174
      %p176 = scmp.eq.s32.totalorder %s175, 0
      %s178 = sadd.s32 %s177, 1
      %s179 = scalar_select %p176, %s177, %s178
      %p182 = pneg %p176
      %p183 = scmp.eq.s32.totalorder %s13, 1
      %p184 = por %p182, %p183
      %p185 = scmp.ne.s32.totalorder %s177, %s180
      %p186 = scmp.eq.s32.totalorder %s13, 0
      %p187 = por %p185, %p186
      %p188 = scmp.ne.s32.totalorder %s177, %s180
      %p189 = scmp.eq.s32.totalorder %s18, 1
      %p190 = por %p188, %p189
      %p191 = scmp.ne.s32.totalorder %s180, %s181
      %p192 = scmp.eq.s32.totalorder %s18, 0
      %p193 = por %p191, %p192
      %p194 = scmp.ne.s32.totalorder %s180, %s181
      %p195 = scmp.eq.s32.totalorder %s19, 1
      %p196 = por %p194, %p195
      %p198 = scmp.ne.s32.totalorder %s181, %s197
      %p199 = scmp.eq.s32.totalorder %s19, 0
      %p200 = por %p198, %p199
      %s201 = ssub.s32 %s20, %s32
      %s202 = ssub.s32 %s21, %s28
      %s203 = sor.u32 %s201, %s202
      %p204 = scmp.eq.s32.totalorder %s203, 0
      %s206 = sadd.s32 %s205, 1
      %s207 = scalar_select %p204, %s205, %s206
      %p210 = pneg %p204
      %p211 = scmp.eq.s32.totalorder %s13, 1
      %p212 = por %p210, %p211
      %p213 = scmp.ne.s32.totalorder %s205, %s208
      %p214 = scmp.eq.s32.totalorder %s13, 0
      %p215 = por %p213, %p214
      %p216 = scmp.ne.s32.totalorder %s205, %s208
      %p217 = scmp.eq.s32.totalorder %s18, 1
      %p218 = por %p216, %p217
      %p219 = scmp.ne.s32.totalorder %s208, %s209
      %p220 = scmp.eq.s32.totalorder %s18, 0
      %p221 = por %p219, %p220
      %p222 = scmp.ne.s32.totalorder %s208, %s209
      %p223 = scmp.eq.s32.totalorder %s19, 1
      %p224 = por %p222, %p223
      %p226 = scmp.ne.s32.totalorder %s209, %s225
      %p227 = scmp.eq.s32.totalorder %s19, 0
      %p228 = por %p226, %p227
      %p229 = scmp.le.s32.totalorder 1, %s13
      %p230 = scmp.lt.s32.totalorder %s13, 3
      %p231 = pnand %p229, %p230
      %p232 = pneg %p231
      // Predicated region
      $region9: #{dgcnn_forward.15} parent=5 // pred_check
        _
      $region10: #{dgcnn_forward.15} parent=5 // pred_check_branch
        %234 = sbr.rel (%p231) target = $region12
      $region11: #{dgcnn_forward.15} parent=5 // pred_region
        %s235 = ssub.s32 %s13, 1
        // Predicated region
        $region13: #{dgcnn_forward.15} parent=11 // pred_check
          %p236 = pneg %p102
        $region14: #{dgcnn_forward.15} parent=11 // pred_check_branch
          %238 = sbr.rel (%p236) target = $region16
        $region15: #{dgcnn_forward.15} parent=11 // pred_region
          _
        $region16: #{dgcnn_forward.15} parent=11 // pred_fallthru
          _
        // Predicated region
        $region17: #{dgcnn_forward.15} parent=11 // pred_check
          %p239 = pneg %p123
        $region18: #{dgcnn_forward.15} parent=11 // pred_check_branch
          %241 = sbr.rel (%p239) target = $region20
        $region19: #{dgcnn_forward.15} parent=11 // pred_region
          _
        $region20: #{dgcnn_forward.15} parent=11 // pred_fallthru
          _
        // Predicated region
        $region21: #{dgcnn_forward.15} parent=11 // pred_check
          %p242 = pneg %p144
        $region22: #{dgcnn_forward.15} parent=11 // pred_check_branch
          %244 = sbr.rel (%p242) target = $region24
        $region23: #{dgcnn_forward.15} parent=11 // pred_region
          _
        $region24: #{dgcnn_forward.15} parent=11 // pred_fallthru
          _
        // Predicated region
        $region25: #{dgcnn_forward.15} parent=11 // pred_check
          %p245 = pneg %p165
        $region26: #{dgcnn_forward.15} parent=11 // pred_check_branch
          %247 = sbr.rel (%p245) target = $region28
        $region27: #{dgcnn_forward.15} parent=11 // pred_region
          _
        $region28: #{dgcnn_forward.15} parent=11 // pred_fallthru
          _
      $region12: #{dgcnn_forward.15} parent=5 // pred_fallthru
        _
      %p248 = scmp.lt.s32.totalorder %s13, 2
      // Predicated region
      $region29: #{dgcnn_forward.15} parent=5 // pred_check
        %p249 = pneg %p248
      $region30: #{dgcnn_forward.15} parent=5 // pred_check_branch
        %251 = sbr.rel (%p249) target = $region32
      $region31: #{dgcnn_forward.15} parent=5 // pred_region
        // Predicated region
        $region33: #{dgcnn_forward.15} parent=31 // pred_check
          %p252 = pneg %p47
        $region34: #{dgcnn_forward.15} parent=31 // pred_check_branch
          %254 = sbr.rel (%p252) target = $region36
        $region35: #{dgcnn_forward.15} parent=31 // pred_region
          %s255 = smul.u32 2, %s21
          %p256 = scmp.lt.s32.totalorder %s20, 1
          %s257 = scalar_select %p256, %s20, 1
          %p258 = scmp.lt.s32.totalorder %s255, 1
          %s259 = scalar_select %p258, %s255, 1
          %s260 = smul.addr %s257, 8
          %s261 = sadd.s32 %s259, %s260
          %s262 = smul.addr %s261, 4
          %s263 = scalar_lea.vmem %s0, %s262
          %s264 = smul.u32 2, %s21
        $region36: #{dgcnn_forward.15} parent=31 // pred_fallthru
          _
        // Predicated region
        $region37: #{dgcnn_forward.15} parent=31 // pred_check
          %p265 = pneg %p75
        $region38: #{dgcnn_forward.15} parent=31 // pred_check_branch
          %267 = sbr.rel (%p265) target = $region40
        $region39: #{dgcnn_forward.15} parent=31 // pred_region
          %s268 = smul.u32 2, %s21
          %p269 = scmp.lt.s32.totalorder %s20, 1
          %s270 = scalar_select %p269, %s20, 1
          %p271 = scmp.lt.s32.totalorder %s268, 1
          %s272 = scalar_select %p271, %s268, 1
          %s273 = smul.addr %s270, 2
          %s274 = sadd.s32 %s272, %s273
          %s275 = smul.addr %s274, 4
          %s276 = scalar_lea.vmem %s1, %s275
          %s277 = smul.u32 2, %s21
        $region40: #{dgcnn_forward.15} parent=31 // pred_fallthru
          _
        // Predicated region
        $region41: #{dgcnn_forward.15} parent=31 // pred_check
          %p278 = pneg %p187
        $region42: #{dgcnn_forward.15} parent=31 // pred_check_branch
          %280 = sbr.rel (%p278) target = $region44
        $region43: #{dgcnn_forward.15} parent=31 // pred_region
          %s281 = sand.u32 %s177, 1
          %s282 = sand.u32 %s177, 1
          %s283 = smul.addr %s282, 8
          %s284 = scalar_lea.vmem [#allocation2], %s283
          %s285 = smul.u32 2, %s21
          %s286 = smul.addr %s285, 5
          %s287 = sadd.s32 2, %s286
          %s288 = smul.addr %s20, 10
          %s289 = sadd.s32 %s287, %s288
          %s290 = smul.addr %s289, 4
          %s291 = scalar_lea.vmem %s6, %s290
          // Predicated region
          $region45: #{dgcnn_forward.15} parent=43 // pred_check
            _
          $region46: #{dgcnn_forward.15} parent=43 // pred_check_branch
            %293 = sbr.rel (0) target = $region48
          $region47: #{dgcnn_forward.15} parent=43 // pred_region
            // Predicated region
            $region49: #{dgcnn_forward.15} parent=47 // pred_check
              _
            $region50: #{dgcnn_forward.15} parent=47 // pred_check_branch
              %295 = sbr.rel target = $region52
            $region51: #{dgcnn_forward.15} parent=47 // pred_region
              // Predicated region
              $region64: #{dgcnn_forward.15} parent=51 // pred_check
                _
              $region65: #{dgcnn_forward.15} parent=51 // pred_check_branch
                %313 = sbr.rel (0) target = $region67
              $region66: #{dgcnn_forward.15} parent=51 // pred_region
                loop: start=0, step=1, limit=1
                $region68: #{dgcnn_forward.15} parent=66 // loop_pre_header
                  _
                $region69: #{dgcnn_forward.15} parent=66 // loop_header
                  %s315 = sphi 0, %s319
                  %p316 = scmp.ge.s32.totalorder %s315, 1
                  %s320 = sphi %s291, %s291
                  %s321 = sphi %s284, %s284
                $region70: #{dgcnn_forward.15} parent=66 // loop_header_branch
                  %318 = sbr.rel (%p316) target = $region74
                $region71: #{dgcnn_forward.15} parent=66 // loop_body
                  _
                $region72: #{dgcnn_forward.15} parent=66 // loop_footer
                  %s319 = sadd.s32 1, %s315
                $region73: #{dgcnn_forward.15} parent=66 // loop_footer_branch
                  %314 = sbr.rel target = $region69
                $region74: #{dgcnn_forward.15} parent=66 // loop_exit
                  _
                %s323 = ssub.s32 16, 1
                loop: start=0, step=1, limit=1
                $region75: #{dgcnn_forward.15} parent=66 // loop_pre_header
                  _
                $region76: #{dgcnn_forward.15} parent=66 // loop_header
                  %s325 = sphi 0, %s329
                  %p326 = scmp.ge.s32.totalorder %s325, 1
                  %s330 = sphi %s291, %s291
                  %s331 = sphi %s284, %s284
                $region77: #{dgcnn_forward.15} parent=66 // loop_header_branch
                  %328 = sbr.rel (%p326) target = $region81
                $region78: #{dgcnn_forward.15} parent=66 // loop_body
                  %v332 = vld [vmem:[%s330] sm:%s323]
                  %333 = vst [vmem:[%s331] sm:%s323] %v332
                  %v334 = vld [vmem:[%s330 + $0x14] sm:%s323]
                  %335 = vst [vmem:[%s331 + $0x4] sm:%s323] %v334
                $region79: #{dgcnn_forward.15} parent=66 // loop_footer
                  %s329 = sadd.s32 1, %s325
                $region80: #{dgcnn_forward.15} parent=66 // loop_footer_branch
                  %324 = sbr.rel target = $region76
                $region81: #{dgcnn_forward.15} parent=66 // loop_exit
                  _
              $region67: #{dgcnn_forward.15} parent=51 // pred_fallthru
                _
            $region52: #{dgcnn_forward.15} parent=47 // pred_fallthru
              _
            // Predicated region
            $region53: #{dgcnn_forward.15} parent=47 // pred_check
              _
            $region54: #{dgcnn_forward.15} parent=47 // pred_check_branch
              %297 = sbr.rel (0) target = $region56
            $region55: #{dgcnn_forward.15} parent=47 // pred_region
              %s299 = ssub.s32 16, 1
              loop: start=0, step=1, limit=1
              $region57: #{dgcnn_forward.15} parent=55 // loop_pre_header
                _
              $region58: #{dgcnn_forward.15} parent=55 // loop_header
                %s301 = sphi 0, %s305
                %p302 = scmp.ge.s32.totalorder %s301, 1
                %s306 = sphi %s291, %s291
                %s307 = sphi %s284, %s284
              $region59: #{dgcnn_forward.15} parent=55 // loop_header_branch
                %304 = sbr.rel (%p302) target = $region63
              $region60: #{dgcnn_forward.15} parent=55 // loop_body
                %v308 = vld [vmem:[%s306] sm:%s299]
                %309 = vst [vmem:[%s307] sm:%s299] %v308
                %v310 = vld [vmem:[%s306 + $0x14] sm:%s299]
                %311 = vst [vmem:[%s307 + $0x4] sm:%s299] %v310
              $region61: #{dgcnn_forward.15} parent=55 // loop_footer
                %s305 = sadd.s32 1, %s301
              $region62: #{dgcnn_forward.15} parent=55 // loop_footer_branch
                %300 = sbr.rel target = $region58
              $region63: #{dgcnn_forward.15} parent=55 // loop_exit
                _
            $region56: #{dgcnn_forward.15} parent=47 // pred_fallthru
              _
          $region48: #{dgcnn_forward.15} parent=43 // pred_fallthru
            _
          %336 = vnop
        $region44: #{dgcnn_forward.15} parent=31 // pred_fallthru
          _
      $region32: #{dgcnn_forward.15} parent=5 // pred_fallthru
        _
      %p337 = scmp.le.s32.totalorder 1, %s13
      %p338 = scmp.lt.s32.totalorder %s13, 3
      %p339 = pnand %p337, %p338
      %p340 = pneg %p339
      // Predicated region
      $region82: #{dgcnn_forward.15} parent=5 // pred_check
        _
      $region83: #{dgcnn_forward.15} parent=5 // pred_check_branch
        %342 = sbr.rel (%p339) target = $region85
      $region84: #{dgcnn_forward.15} parent=5 // pred_region
        %s343 = ssub.s32 %s13, 1
        %s344 = sand.u32 %s180, 1
        %s345 = sand.u32 %s180, 1
        %s346 = smul.addr %s345, 8
        %s347 = scalar_lea.vmem [#allocation2], %s346
        // Predicated region
        $region86: #{dgcnn_forward.15} parent=84 // pred_check
          %p348 = pneg %p193
        $region87: #{dgcnn_forward.15} parent=84 // pred_check_branch
          %350 = sbr.rel (%p348) target = $region89
        $region88: #{dgcnn_forward.15} parent=84 // pred_region
          _
        $region89: #{dgcnn_forward.15} parent=84 // pred_fallthru
          _
        %s351 = smul.u32 2, %s23
        %p352 = scmp.lt.s32.totalorder %s22, 1
        %s353 = scalar_select %p352, %s22, 1
        %p354 = scmp.lt.s32.totalorder %s351, 1
        %s355 = scalar_select %p354, %s351, 1
        %s356 = smul.addr %s353, 8
        %s357 = sadd.s32 %s355, %s356
        %s358 = smul.addr %s357, 4
        %s359 = scalar_lea.vmem %s0, %s358
        %p360 = pneg %p53
        %p361 = pneg %p50
        %s362 = smul.u32 2, %s23
        %p363 = scmp.lt.s32.totalorder %s22, 1
        %s364 = scalar_select %p363, %s22, 1
        %p365 = scmp.lt.s32.totalorder %s362, 1
        %s366 = scalar_select %p365, %s362, 1
        %s367 = smul.addr %s364, 2
        %s368 = sadd.s32 %s366, %s367
        %s369 = smul.addr %s368, 4
        %s370 = scalar_lea.vmem %s1, %s369
        %p371 = pneg %p81
        %p372 = pneg %p78
        %p373 = pneg %p102
        %p374 = pneg %p99
        %p375 = pneg %p123
        %p376 = pneg %p120
        %p377 = pneg %p144
        %p378 = pneg %p141
        %p379 = pneg %p165
        %p380 = pneg %p162
        %s381 = sand.u32 %s180, 1
        %s382 = sand.u32 %s180, 1
        %s383 = smul.addr %s382, 8
        %s384 = scalar_lea.vmem [#allocation2], %s383
        %p385 = pneg %p193
        %p386 = pneg %p190
        %p387 = pneg %p221
        %p388 = pneg %p218
        %s389 = sand.u32 %s208, 1
        %s390 = sand.u32 %s208, 1
        %s391 = smul.addr %s390, 8
        %s392 = scalar_lea.vmem [#allocation3], %s391
        %s393 = smul.u32 2, %s23
        %p394 = scmp.lt.s32.totalorder %s22, 1
        %s395 = scalar_select %p394, %s22, 1
        %p396 = scmp.lt.s32.totalorder %s393, 1
        %s397 = scalar_select %p396, %s393, 1
        %s398 = smul.addr %s395, 8
        %s399 = sadd.s32 %s397, %s398
        %s400 = smul.addr %s399, 4
        %s401 = scalar_lea.vmem %s0, %s400
        %s402 = smul.u32 2, %s23
        %s403 = smul.u32 2, %s23
        %p404 = scmp.lt.s32.totalorder %s22, 1
        %s405 = scalar_select %p404, %s22, 1
        %p406 = scmp.lt.s32.totalorder %s403, 1
        %s407 = scalar_select %p406, %s403, 1
        %s408 = smul.addr %s405, 2
        %s409 = sadd.s32 %s407, %s408
        %s410 = smul.addr %s409, 4
        %s411 = scalar_lea.vmem %s1, %s410
        %s412 = smul.u32 2, %s23
        %s413 = smul.u32 2, %s23
        %s414 = smul.u32 2, %s23
        %v416 = vld [vmem:[%s401] sm:$0xf]
        %v417 = vld [vmem:[%s401 + $0x4] sm:$0xf]
        %v418 = vld [vmem:[%s401 + $0x8] sm:$0xf]
        %v419 = vld [vmem:[%s401 + $0xc] sm:$0xf]
        %v420 = vld [vmem:[%s401 + $0x10] sm:$0xf]
        %v421 = vld [vmem:[%s401 + $0x14] sm:$0xf]
        %v422 = vld [vmem:[%s401 + $0x18] sm:$0xf]
        %v423 = vld [vmem:[%s401 + $0x1c] sm:$0xf]
        %v424 = vld [vmem:[%s2] sm:$0xf]
        %v425 = vld [vmem:[%s2 + $0x4] sm:$0xf]
        %v426 = vld [vmem:[%s2 + $0x8] sm:$0xf]
        %v427 = vld [vmem:[%s2 + $0xc] sm:$0xf]
        %v428 = vld [vmem:[%s2 + $0x10] sm:$0xf]
        %v429 = vld [vmem:[%s2 + $0x14] sm:$0xf]
        %v430 = vld [vmem:[%s2 + $0x18] sm:$0xf]
        %v431 = vld [vmem:[%s2 + $0x1c] sm:$0xf]
        %v440 = vunpack.c.l.b16 %v416
        %v441 = vunpack.c.l.b16 %v417
        %v442 = vunpack.c.l.b16 %v418
        %v443 = vunpack.c.l.b16 %v419
        %v444 = vunpack.c.l.b16 %v420
        %v445 = vunpack.c.l.b16 %v421
        %v446 = vunpack.c.l.b16 %v422
        %v447 = vunpack.c.l.b16 %v423
        %v448 = vpack.c.b16 %v441, %v440
        %v449 = vpack.c.b16 %v443, %v442
        %v450 = vpack.c.b16 %v445, %v444
        %v451 = vpack.c.b16 %v447, %v446
        %v460 = vunpack.c.l.b16 %v424
        %v461 = vunpack.c.l.b16 %v425
        %v462 = vunpack.c.l.b16 %v426
        %v463 = vunpack.c.l.b16 %v427
        %v464 = vunpack.c.l.b16 %v428
        %v465 = vunpack.c.l.b16 %v429
        %v466 = vunpack.c.l.b16 %v430
        %v467 = vunpack.c.l.b16 %v431
        %v468 = vpack.c.b16 %v461, %v460
        %v469 = vpack.c.b16 %v463, %v462
        %v470 = vpack.c.b16 %v465, %v464
        %v471 = vpack.c.b16 %v467, %v466
        %vm476 = vcmask 523264
        %v478 = vsel %vm476, %v448, 0
        %v481 = vsel %vm476, %v449, 0
        %v484 = vsel %vm476, %v450, 0
        %v487 = vsel %vm476, %v451, 0
        %489 = vmatpush.bf16.msra.mxu0 0
        %490 = vmatpush.bf16.msra.mxu0 0
        %491 = vmatpush.bf16.msra.mxu0 0
        %492 = vmatpush.bf16.msra.mxu0 0
        %493 = vmatpush.bf16.msra.mxu0 %v471
        %494 = vmatpush.bf16.msra.mxu0 %v470
        %495 = vmatpush.bf16.msra.mxu0 %v469
        %496 = vmatpush.bf16.msra.mxu0 %v468
        %497 = vmatmul.bf16.gmra.mxu0 %v478
        %v498 = vpop.f32.mrf.mxu0
        %v499 = vadd.f32 0.0, %v498
        %v500 = vpop.f32.mrf.mxu0
        %v501 = vadd.f32 0.0, %v500
        %502 = vmatmul.bf16.gmra.mxu0 %v481
        %v503 = vpop.f32.mrf.mxu0
        %v504 = vadd.f32 0.0, %v503
        %v505 = vpop.f32.mrf.mxu0
        %v506 = vadd.f32 0.0, %v505
        %507 = vmatmul.bf16.gmra.mxu0 %v484
        %v508 = vpop.f32.mrf.mxu0
        %v509 = vadd.f32 0.0, %v508
        %v510 = vpop.f32.mrf.mxu0
        %v511 = vadd.f32 0.0, %v510
        %512 = vmatmul.bf16.gmra.mxu0 %v487
        %v513 = vpop.f32.mrf.mxu0
        %v514 = vadd.f32 0.0, %v513
        %v515 = vpop.f32.mrf.mxu0
        %v516 = vadd.f32 0.0, %v515
        %517 = vdwg.mxu0
        %v518 = vld [vmem:[%s411] sm:$0xf]
        %v519 = vld [vmem:[%s411 + $0x4] sm:$0xf]
        %v520 = vld [vmem:[%s3] sm:$0xf]
        %v521 = vld [vmem:[%s3 + $0x4] sm:$0xf]
        %v522 = vld [vmem:[%s3 + $0x8] sm:$0xf]
        %v523 = vld [vmem:[%s3 + $0xc] sm:$0xf]
        %v524 = vld [vmem:[%s3 + $0x10] sm:$0xf]
        %v525 = vld [vmem:[%s3 + $0x14] sm:$0xf]
        %v526 = vld [vmem:[%s3 + $0x18] sm:$0xf]
        %v527 = vld [vmem:[%s3 + $0x1c] sm:$0xf]
        %v530 = vunpack.c.l.b16 %v518
        %v531 = vunpack.c.l.b16 %v519
        %v532 = vpack.c.b16 %v531, %v530
        %v541 = vunpack.c.l.b16 %v520
        %v542 = vunpack.c.l.b16 %v521
        %v543 = vunpack.c.l.b16 %v522
        %v544 = vunpack.c.l.b16 %v523
        %v545 = vunpack.c.l.b16 %v524
        %v546 = vunpack.c.l.b16 %v525
        %v547 = vunpack.c.l.b16 %v526
        %v548 = vunpack.c.l.b16 %v527
        %v549 = vpack.c.b16 %v542, %v541
        %v550 = vpack.c.b16 %v544, %v543
        %v551 = vpack.c.b16 %v546, %v545
        %v552 = vpack.c.b16 %v548, %v547
        %v558 = vsel %vm476, %v532, 0
        %560 = vmatpush.bf16.msra.mxu0 0
        %561 = vmatpush.bf16.msra.mxu0 0
        %562 = vmatpush.bf16.msra.mxu0 0
        %563 = vmatpush.bf16.msra.mxu0 0
        %564 = vmatpush.bf16.msra.mxu0 %v552
        %565 = vmatpush.bf16.msra.mxu0 %v551
        %566 = vmatpush.bf16.msra.mxu0 %v550
        %567 = vmatpush.bf16.msra.mxu0 %v549
        %568 = vmatmul.bf16.gmra.mxu0 %v558
        %v569 = vpop.f32.mrf.mxu0
        %v570 = vadd.f32 0.0, %v569
        %v571 = vpop.f32.mrf.mxu0
        %v572 = vadd.f32 0.0, %v571
        %573 = vdwg.mxu0
        %v574 = vadd.f32 %v499, %v570
        %v575 = vadd.f32 %v501, %v572
        %v576 = vadd.f32 %v504, %v570
        %v577 = vadd.f32 %v506, %v572
        %v578 = vadd.f32 %v509, %v570
        %v579 = vadd.f32 %v511, %v572
        %v580 = vadd.f32 %v514, %v570
        %v581 = vadd.f32 %v516, %v572
        %v582 = vmax.f32 %v574, %v578
        %v583 = vmax.f32 %v576, %v580
        %v584 = vmax.f32 %v582, %v583
        %v585 = vmax.f32 %v575, %v579
        %v586 = vmax.f32 %v577, %v581
        %v587 = vmax.f32 %v585, %v586
        %v588 = vld [vmem:[%s4] sm:$0x1]
        %v590 = vperm.slane %v588, 0
        %v592 = vmul.f32 %v584, %v590
        %v593 = vmul.f32 %v587, %v590
        %v594 = vld [vmem:[%s5] sm:$0x1]
        %v596 = vperm.slane %v594, 0
        %v598 = vadd.f32 %v592, %v596
        %v599 = vadd.f32 %v593, %v596
        %vm600 = vcmp.gt.f32.partialorder %v598, 0.0
        %vm601 = vcmp.gt.f32.partialorder %v599, 0.0
        %v602 = vmul.f32 %v598, 0.2
        %v603 = vmul.f32 %v599, 0.2
        %v604 = vsel %vm600, %v598, %v602
        %v605 = vsel %vm601, %v599, %v603
        %v606 = vpack.c.bf16 %v604, %v604
        %v607 = vpack.c.bf16 %v605, %v605
        %608 = vst [vmem:[%s392] sm:$0xf] %v606
        %609 = vst [vmem:[%s392 + $0x4] sm:$0xf] %v607
        %s610 = sand.u32 %s208, 1
        %s611 = sand.u32 %s208, 1
        %s612 = smul.addr %s611, 8
        %s613 = scalar_lea.vmem [#allocation3], %s612
        // Predicated region
        $region90: #{dgcnn_forward.15} parent=84 // pred_check
          %p614 = pneg %p218
        $region91: #{dgcnn_forward.15} parent=84 // pred_check_branch
          %616 = sbr.rel (%p614) target = $region93
        $region92: #{dgcnn_forward.15} parent=84 // pred_region
          %s617 = smul.u32 2, %s23
          %s618 = smul.addr %s617, 5
          %s619 = sadd.s32 2, %s618
          %s620 = smul.addr %s22, 10
          %s621 = sadd.s32 %s619, %s620
          %s622 = smul.addr %s621, 4
          %s623 = scalar_lea.vmem %s7, %s622
          // Predicated region
          $region94: #{dgcnn_forward.15} parent=92 // pred_check
            _
          $region95: #{dgcnn_forward.15} parent=92 // pred_check_branch
            %625 = sbr.rel (0) target = $region97
          $region96: #{dgcnn_forward.15} parent=92 // pred_region
            // Predicated region
            $region98: #{dgcnn_forward.15} parent=96 // pred_check
              _
            $region99: #{dgcnn_forward.15} parent=96 // pred_check_branch
              %627 = sbr.rel target = $region101
            $region100: #{dgcnn_forward.15} parent=96 // pred_region
              // Predicated region
              $region113: #{dgcnn_forward.15} parent=100 // pred_check
                _
              $region114: #{dgcnn_forward.15} parent=100 // pred_check_branch
                %645 = sbr.rel (0) target = $region116
              $region115: #{dgcnn_forward.15} parent=100 // pred_region
                loop: start=0, step=1, limit=1
                $region117: #{dgcnn_forward.15} parent=115 // loop_pre_header
                  _
                $region118: #{dgcnn_forward.15} parent=115 // loop_header
                  %s647 = sphi 0, %s651
                  %p648 = scmp.ge.s32.totalorder %s647, 1
                  %s652 = sphi %s613, %s613
                  %s653 = sphi %s623, %s623
                $region119: #{dgcnn_forward.15} parent=115 // loop_header_branch
                  %650 = sbr.rel (%p648) target = $region123
                $region120: #{dgcnn_forward.15} parent=115 // loop_body
                  _
                $region121: #{dgcnn_forward.15} parent=115 // loop_footer
                  %s651 = sadd.s32 1, %s647
                $region122: #{dgcnn_forward.15} parent=115 // loop_footer_branch
                  %646 = sbr.rel target = $region118
                $region123: #{dgcnn_forward.15} parent=115 // loop_exit
                  _
                %s655 = ssub.s32 16, 1
                loop: start=0, step=1, limit=1
                $region124: #{dgcnn_forward.15} parent=115 // loop_pre_header
                  _
                $region125: #{dgcnn_forward.15} parent=115 // loop_header
                  %s657 = sphi 0, %s661
                  %p658 = scmp.ge.s32.totalorder %s657, 1
                  %s662 = sphi %s613, %s613
                  %s663 = sphi %s623, %s623
                $region126: #{dgcnn_forward.15} parent=115 // loop_header_branch
                  %660 = sbr.rel (%p658) target = $region130
                $region127: #{dgcnn_forward.15} parent=115 // loop_body
                  %v664 = vld [vmem:[%s662] sm:%s655]
                  %665 = vst [vmem:[%s663] sm:%s655] %v664
                  %v666 = vld [vmem:[%s662 + $0x4] sm:%s655]
                  %667 = vst [vmem:[%s663 + $0x14] sm:%s655] %v666
                $region128: #{dgcnn_forward.15} parent=115 // loop_footer
                  %s661 = sadd.s32 1, %s657
                $region129: #{dgcnn_forward.15} parent=115 // loop_footer_branch
                  %656 = sbr.rel target = $region125
                $region130: #{dgcnn_forward.15} parent=115 // loop_exit
                  _
              $region116: #{dgcnn_forward.15} parent=100 // pred_fallthru
                _
            $region101: #{dgcnn_forward.15} parent=96 // pred_fallthru
              _
            // Predicated region
            $region102: #{dgcnn_forward.15} parent=96 // pred_check
              _
            $region103: #{dgcnn_forward.15} parent=96 // pred_check_branch
              %629 = sbr.rel (0) target = $region105
            $region104: #{dgcnn_forward.15} parent=96 // pred_region
              %s631 = ssub.s32 16, 1
              loop: start=0, step=1, limit=1
              $region106: #{dgcnn_forward.15} parent=104 // loop_pre_header
                _
              $region107: #{dgcnn_forward.15} parent=104 // loop_header
                %s633 = sphi 0, %s637
                %p634 = scmp.ge.s32.totalorder %s633, 1
                %s638 = sphi %s613, %s613
                %s639 = sphi %s623, %s623
              $region108: #{dgcnn_forward.15} parent=104 // loop_header_branch
                %636 = sbr.rel (%p634) target = $region112
              $region109: #{dgcnn_forward.15} parent=104 // loop_body
                %v640 = vld [vmem:[%s638] sm:%s631]
                %641 = vst [vmem:[%s639] sm:%s631] %v640
                %v642 = vld [vmem:[%s638 + $0x4] sm:%s631]
                %643 = vst [vmem:[%s639 + $0x14] sm:%s631] %v642
              $region110: #{dgcnn_forward.15} parent=104 // loop_footer
                %s637 = sadd.s32 1, %s633
              $region111: #{dgcnn_forward.15} parent=104 // loop_footer_branch
                %632 = sbr.rel target = $region107
              $region112: #{dgcnn_forward.15} parent=104 // loop_exit
                _
            $region105: #{dgcnn_forward.15} parent=96 // pred_fallthru
              _
          $region97: #{dgcnn_forward.15} parent=92 // pred_fallthru
            _
          %668 = vnop
        $region93: #{dgcnn_forward.15} parent=84 // pred_fallthru
          _
      $region85: #{dgcnn_forward.15} parent=5 // pred_fallthru
        _
      %p669 = scmp.le.s32.totalorder 2, %s13
      // Predicated region
      $region131: #{dgcnn_forward.15} parent=5 // pred_check
        %p670 = pneg %p669
      $region132: #{dgcnn_forward.15} parent=5 // pred_check_branch
        %672 = sbr.rel (%p670) target = $region134
      $region133: #{dgcnn_forward.15} parent=5 // pred_region
        %s673 = ssub.s32 %s13, 2
        // Predicated region
        $region135: #{dgcnn_forward.15} parent=133 // pred_check
          %p674 = pneg %p224
        $region136: #{dgcnn_forward.15} parent=133 // pred_check_branch
          %676 = sbr.rel (%p674) target = $region138
        $region137: #{dgcnn_forward.15} parent=133 // pred_region
          %s677 = sand.u32 %s209, 1
          %s678 = sand.u32 %s209, 1
          %s679 = smul.addr %s678, 8
          %s680 = scalar_lea.vmem [#allocation3], %s679
        $region138: #{dgcnn_forward.15} parent=133 // pred_fallthru
          _
      $region134: #{dgcnn_forward.15} parent=5 // pred_fallthru
        _
    $region6: #{dgcnn_forward.15} parent=1 // loop_footer
      %s17 = sadd.s32 1, %s13
    $region7: #{dgcnn_forward.15} parent=1 // loop_footer_branch
      %12 = sbr.rel target = $region3
    $region8: #{dgcnn_forward.15} parent=1 // loop_exit
      _

// kernel: dgcnn_forward.16
$region0: #{dgcnn_forward.16}
  #allocation0 [shape = 'u32[]', space=smem, size = 0x4, offset = 0x4, fixed_abs, tag = 'smem constant byte address 0x4 - core index']
  #allocation1 [shape = 'u32[72,128]{1,0:T(1,128)}', space=vmem, size = 0x9000, scoped, tag = 'internal scratch']
  %s0 = inlined_call_operand.vmem [shape: bf16[2,16,128], index: 0, kind: input, shape index: {}]
  %s1 = inlined_call_operand.vmem [shape: bf16[2,128,16], index: 1, kind: input, shape index: {}]
  %s2 = inlined_call_operand.vmem [shape: f32[2,1,16], index: 2, kind: input, shape index: {}]
  %s3 = inlined_call_operand.vmem [shape: s32[2,16,4], index: 3, kind: output, shape index: {}]
  %s4 = sld [smem:[#allocation0]]
  $region45: #{dgcnn_forward.16} parent=0
    _
  %s6 = ssub.s32 1, %s4
  %s7 = scalar_select 0, %s6, %s4
  loop: start=0, step=1, limit=4
  $region2: #{dgcnn_forward.16} parent=0 // loop_pre_header
    _
  $region3: #{dgcnn_forward.16} parent=0 // loop_header
    %s9 = sphi 0, %s13
    %p10 = scmp.ge.s32.totalorder %s9, 4
    %s16 = sphi 0, %s28
    %s17 = sphi 0, %s24
    %s18 = sphi 0, %s16
    %s19 = sphi 0, %s17
    %s20 = sphi 0, %s18
    %s21 = sphi 0, %s19
    %s33 = sphi 0, %s35
    %s36 = sphi 0, %s33
    %s37 = sphi 0, %s36
    %s53 = sphi 0, %s37
    %s59 = sphi 0, %s61
    %s62 = sphi 0, %s59
    %s63 = sphi 0, %s62
    %s79 = sphi 0, %s63
    %s85 = sphi 0, %s87
    %s88 = sphi 0, %s85
    %s89 = sphi 0, %s88
    %s105 = sphi 0, %s89
    %s113 = sphi 0, %s115
    %s116 = sphi 0, %s113
    %s117 = sphi 0, %s116
    %s133 = sphi 0, %s117
  $region4: #{dgcnn_forward.16} parent=0 // loop_header_branch
    %12 = sbr.rel (%p10) target = $region8
  $region5: #{dgcnn_forward.16} parent=0 // loop_body
    %s14 = ssub.s32 %s9, 1
    %s15 = ssub.s32 %s9, 2
    %s22 = sadd.s32 1, %s17
    %p23 = scmp.ge.s32.totalorder %s22, 1
    %s24 = scalar_select %p23, 0, %s22
    %s25 = sadd.s32 1, %s16
    %s26 = scalar_select %p23, %s25, %s16
    %p27 = scmp.ge.s32.totalorder %s26, 2
    %s28 = scalar_select %p27, 0, %s26
    %s29 = ssub.s32 %s16, %s28
    %s30 = ssub.s32 %s17, %s24
    %s31 = sor.u32 %s29, %s30
    %p32 = scmp.eq.s32.totalorder %s31, 0
    %s34 = sadd.s32 %s33, 1
    %s35 = scalar_select %p32, %s33, %s34
    %p38 = pneg %p32
    %p39 = scmp.eq.s32.totalorder %s9, 1
    %p40 = por %p38, %p39
    %p41 = scmp.ne.s32.totalorder %s33, %s36
    %p42 = scmp.eq.s32.totalorder %s9, 0
    %p43 = por %p41, %p42
    %p44 = scmp.ne.s32.totalorder %s33, %s36
    %p45 = scmp.eq.s32.totalorder %s14, 1
    %p46 = por %p44, %p45
    %p47 = scmp.ne.s32.totalorder %s36, %s37
    %p48 = scmp.eq.s32.totalorder %s14, 0
    %p49 = por %p47, %p48
    %p50 = scmp.ne.s32.totalorder %s36, %s37
    %p51 = scmp.eq.s32.totalorder %s15, 1
    %p52 = por %p50, %p51
    %p54 = scmp.ne.s32.totalorder %s37, %s53
    %p55 = scmp.eq.s32.totalorder %s15, 0
    %p56 = por %p54, %p55
    %s57 = ssub.s32 %s16, %s28
    %p58 = scmp.eq.s32.totalorder %s57, 0
    %s60 = sadd.s32 %s59, 1
    %s61 = scalar_select %p58, %s59, %s60
    %p64 = pneg %p58
    %p65 = scmp.eq.s32.totalorder %s9, 1
    %p66 = por %p64, %p65
    %p67 = scmp.ne.s32.totalorder %s59, %s62
    %p68 = scmp.eq.s32.totalorder %s9, 0
    %p69 = por %p67, %p68
    %p70 = scmp.ne.s32.totalorder %s59, %s62
    %p71 = scmp.eq.s32.totalorder %s14, 1
    %p72 = por %p70, %p71
    %p73 = scmp.ne.s32.totalorder %s62, %s63
    %p74 = scmp.eq.s32.totalorder %s14, 0
    %p75 = por %p73, %p74
    %p76 = scmp.ne.s32.totalorder %s62, %s63
    %p77 = scmp.eq.s32.totalorder %s15, 1
    %p78 = por %p76, %p77
    %p80 = scmp.ne.s32.totalorder %s63, %s79
    %p81 = scmp.eq.s32.totalorder %s15, 0
    %p82 = por %p80, %p81
    %s83 = ssub.s32 %s16, %s28
    %p84 = scmp.eq.s32.totalorder %s83, 0
    %s86 = sadd.s32 %s85, 1
    %s87 = scalar_select %p84, %s85, %s86
    %p90 = pneg %p84
    %p91 = scmp.eq.s32.totalorder %s9, 1
    %p92 = por %p90, %p91
    %p93 = scmp.ne.s32.totalorder %s85, %s88
    %p94 = scmp.eq.s32.totalorder %s9, 0
    %p95 = por %p93, %p94
    %p96 = scmp.ne.s32.totalorder %s85, %s88
    %p97 = scmp.eq.s32.totalorder %s14, 1
    %p98 = por %p96, %p97
    %p99 = scmp.ne.s32.totalorder %s88, %s89
    %p100 = scmp.eq.s32.totalorder %s14, 0
    %p101 = por %p99, %p100
    %p102 = scmp.ne.s32.totalorder %s88, %s89
    %p103 = scmp.eq.s32.totalorder %s15, 1
    %p104 = por %p102, %p103
    %p106 = scmp.ne.s32.totalorder %s89, %s105
    %p107 = scmp.eq.s32.totalorder %s15, 0
    %p108 = por %p106, %p107
    %s109 = ssub.s32 %s16, %s28
    %s110 = ssub.s32 %s17, %s24
    %s111 = sor.u32 %s109, %s110
    %p112 = scmp.eq.s32.totalorder %s111, 0
    %s114 = sadd.s32 %s113, 1
    %s115 = scalar_select %p112, %s113, %s114
    %p118 = pneg %p112
    %p119 = scmp.eq.s32.totalorder %s9, 1
    %p120 = por %p118, %p119
    %p121 = scmp.ne.s32.totalorder %s113, %s116
    %p122 = scmp.eq.s32.totalorder %s9, 0
    %p123 = por %p121, %p122
    %p124 = scmp.ne.s32.totalorder %s113, %s116
    %p125 = scmp.eq.s32.totalorder %s14, 1
    %p126 = por %p124, %p125
    %p127 = scmp.ne.s32.totalorder %s116, %s117
    %p128 = scmp.eq.s32.totalorder %s14, 0
    %p129 = por %p127, %p128
    %p130 = scmp.ne.s32.totalorder %s116, %s117
    %p131 = scmp.eq.s32.totalorder %s15, 1
    %p132 = por %p130, %p131
    %p134 = scmp.ne.s32.totalorder %s117, %s133
    %p135 = scmp.eq.s32.totalorder %s15, 0
    %p136 = por %p134, %p135
    %p137 = scmp.le.s32.totalorder 1, %s9
    %p138 = scmp.lt.s32.totalorder %s9, 3
    %p139 = pnand %p137, %p138
    %p140 = pneg %p139
    // Predicated region
    $region9: #{dgcnn_forward.16} parent=5 // pred_check
      _
    $region10: #{dgcnn_forward.16} parent=5 // pred_check_branch
      %142 = sbr.rel (%p139) target = $region12
    $region11: #{dgcnn_forward.16} parent=5 // pred_region
      %s143 = ssub.s32 %s9, 1
    $region12: #{dgcnn_forward.16} parent=5 // pred_fallthru
      _
    %p144 = scmp.lt.s32.totalorder %s9, 2
    // Predicated region
    $region13: #{dgcnn_forward.16} parent=5 // pred_check
      %p145 = pneg %p144
    $region14: #{dgcnn_forward.16} parent=5 // pred_check_branch
      %147 = sbr.rel (%p145) target = $region16
    $region15: #{dgcnn_forward.16} parent=5 // pred_region
      // Predicated region
      $region17: #{dgcnn_forward.16} parent=15 // pred_check
        %p148 = pneg %p43
      $region18: #{dgcnn_forward.16} parent=15 // pred_check_branch
        %150 = sbr.rel (%p148) target = $region20
      $region19: #{dgcnn_forward.16} parent=15 // pred_region
        %s151 = smul.u32 2, %s17
        %p152 = scmp.lt.s32.totalorder %s16, 1
        %s153 = scalar_select %p152, %s16, 1
        %p154 = scmp.lt.s32.totalorder %s151, 1
        %s155 = scalar_select %p154, %s151, 1
        %s156 = smul.addr %s153, 2
        %s157 = sadd.s32 %s155, %s156
        %s158 = smul.addr %s157, 4
        %s159 = scalar_lea.vmem %s0, %s158
        %s160 = smul.u32 2, %s17
      $region20: #{dgcnn_forward.16} parent=15 // pred_fallthru
        _
      // Predicated region
      $region21: #{dgcnn_forward.16} parent=15 // pred_check
        %p161 = pneg %p69
      $region22: #{dgcnn_forward.16} parent=15 // pred_check_branch
        %163 = sbr.rel (%p161) target = $region24
      $region23: #{dgcnn_forward.16} parent=15 // pred_region
        %p164 = scmp.lt.s32.totalorder %s16, 1
        %s165 = scalar_select %p164, %s16, 1
        %s166 = smul.addr %s165, 16
        %s167 = smul.addr %s166, 4
        %s168 = scalar_lea.vmem %s1, %s167
      $region24: #{dgcnn_forward.16} parent=15 // pred_fallthru
        _
      // Predicated region
      $region25: #{dgcnn_forward.16} parent=15 // pred_check
        %p169 = pneg %p95
      $region26: #{dgcnn_forward.16} parent=15 // pred_check_branch
        %171 = sbr.rel (%p169) target = $region28
      $region27: #{dgcnn_forward.16} parent=15 // pred_region
        %p172 = scmp.lt.s32.totalorder %s16, 1
        %s173 = scalar_select %p172, %s16, 1
        %s174 = scalar_lea.vmem %s2, %s173
      $region28: #{dgcnn_forward.16} parent=15 // pred_fallthru
        _
    $region16: #{dgcnn_forward.16} parent=5 // pred_fallthru
      _
    %p175 = scmp.le.s32.totalorder 1, %s9
    %p176 = scmp.lt.s32.totalorder %s9, 3
    %p177 = pnand %p175, %p176
    %p178 = pneg %p177
    // Predicated region
    $region29: #{dgcnn_forward.16} parent=5 // pred_check
      _
    $region30: #{dgcnn_forward.16} parent=5 // pred_check_branch
      %180 = sbr.rel (%p177) target = $region32
    $region31: #{dgcnn_forward.16} parent=5 // pred_region
      %s181 = ssub.s32 %s9, 1
      %s182 = smul.u32 2, %s19
      %p183 = scmp.lt.s32.totalorder %s18, 1
      %s184 = scalar_select %p183, %s18, 1
      %p185 = scmp.lt.s32.totalorder %s182, 1
      %s186 = scalar_select %p185, %s182, 1
      %s187 = smul.addr %s184, 2
      %s188 = sadd.s32 %s186, %s187
      %s189 = smul.addr %s188, 4
      %s190 = scalar_lea.vmem %s0, %s189
      %p191 = pneg %p49
      %p192 = pneg %p46
      %p193 = scmp.lt.s32.totalorder %s18, 1
      %s194 = scalar_select %p193, %s18, 1
      %s195 = smul.addr %s194, 16
      %s196 = smul.addr %s195, 4
      %s197 = scalar_lea.vmem %s1, %s196
      %p198 = pneg %p75
      %p199 = pneg %p72
      %p200 = scmp.lt.s32.totalorder %s18, 1
      %s201 = scalar_select %p200, %s18, 1
      %s202 = scalar_lea.vmem %s2, %s201
      %p203 = pneg %p101
      %p204 = pneg %p98
      %p205 = pneg %p129
      %p206 = pneg %p126
      %s207 = smul.u32 2, %s19
      %p208 = scmp.lt.s32.totalorder %s18, 1
      %s209 = scalar_select %p208, %s18, 1
      %p210 = scmp.lt.s32.totalorder %s207, 1
      %s211 = scalar_select %p210, %s207, 1
      %s212 = smul.addr %s209, 2
      %s213 = sadd.s32 %s211, %s212
      %s214 = smul.addr %s213, 8
      %s215 = scalar_lea.vmem %s3, %s214
      %s216 = smul.u32 2, %s19
      %p217 = scmp.lt.s32.totalorder %s18, 1
      %s218 = scalar_select %p217, %s18, 1
      %p219 = scmp.lt.s32.totalorder %s216, 1
      %s220 = scalar_select %p219, %s216, 1
      %s221 = smul.addr %s218, 2
      %s222 = sadd.s32 %s220, %s221
      %s223 = smul.addr %s222, 4
      %s224 = scalar_lea.vmem %s0, %s223
      %s225 = smul.u32 2, %s19
      %p226 = scmp.lt.s32.totalorder %s18, 1
      %s227 = scalar_select %p226, %s18, 1
      %s228 = smul.addr %s227, 16
      %s229 = smul.addr %s228, 4
      %s230 = scalar_lea.vmem %s1, %s229
      %p231 = scmp.lt.s32.totalorder %s18, 1
      %s232 = scalar_select %p231, %s18, 1
      %s233 = scalar_lea.vmem %s2, %s232
      %s234 = smul.u32 2, %s19
      %p235 = scmp.lt.s32.totalorder %s18, 1
      %s236 = scalar_select %p235, %s18, 1
      %p237 = scmp.lt.s32.totalorder %s234, 1
      %s238 = scalar_select %p237, %s234, 1
      %s239 = smul.addr %s236, 2
      %s240 = sadd.s32 %s238, %s239
      %s241 = smul.addr %s240, 8
      %s242 = scalar_lea.vmem %s3, %s241
      %s243 = smul.u32 2, %s19
      %v244 = vld [vmem:[%s224] sm:$0xf]
      %v245 = vld [vmem:[%s224 + $0x4] sm:$0xf]
      %v246 = vld [vmem:[%s230] sm:$0xf]
      %v247 = vld [vmem:[%s230 + $0x4] sm:$0xf]
      %v248 = vld [vmem:[%s230 + $0x8] sm:$0xf]
      %v249 = vld [vmem:[%s230 + $0xc] sm:$0xf]
      %v250 = vld [vmem:[%s230 + $0x10] sm:$0xf]
      %v251 = vld [vmem:[%s230 + $0x14] sm:$0xf]
      %v252 = vld [vmem:[%s230 + $0x18] sm:$0xf]
      %v253 = vld [vmem:[%s230 + $0x1c] sm:$0xf]
      %v254 = vld [vmem:[%s230 + $0x20] sm:$0xf]
      %v255 = vld [vmem:[%s230 + $0x24] sm:$0xf]
      %v256 = vld [vmem:[%s230 + $0x28] sm:$0xf]
      %v257 = vld [vmem:[%s230 + $0x2c] sm:$0xf]
      %v258 = vld [vmem:[%s230 + $0x30] sm:$0xf]
      %v259 = vld [vmem:[%s230 + $0x34] sm:$0xf]
      %v260 = vld [vmem:[%s230 + $0x38] sm:$0xf]
      %v261 = vld [vmem:[%s230 + $0x3c] sm:$0xf]
      %v264 = vunpack.c.l.b16 %v244
      %v265 = vunpack.c.l.b16 %v245
      %v266 = vpack.c.b16 %v265, %v264
      %v284 = vunpack.c.l.b16 %v246
      %v285 = vunpack.c.l.b16 %v247
      %v286 = vunpack.c.l.b16 %v248
      %v287 = vunpack.c.l.b16 %v249
      %v288 = vunpack.c.l.b16 %v250
      %v289 = vunpack.c.l.b16 %v251
      %v290 = vunpack.c.l.b16 %v252
      %v291 = vunpack.c.l.b16 %v253
      %v292 = vunpack.c.l.b16 %v254
      %v293 = vunpack.c.l.b16 %v255
      %v294 = vunpack.c.l.b16 %v256
      %v295 = vunpack.c.l.b16 %v257
      %v296 = vunpack.c.l.b16 %v258
      %v297 = vunpack.c.l.b16 %v259
      %v298 = vunpack.c.l.b16 %v260
      %v299 = vunpack.c.l.b16 %v261
      %v300 = vpack.c.b16 %v285, %v284
      %v301 = vpack.c.b16 %v287, %v286
      %v302 = vpack.c.b16 %v289, %v288
      %v303 = vpack.c.b16 %v291, %v290
      %v304 = vpack.c.b16 %v293, %v292
      %v305 = vpack.c.b16 %v295, %v294
      %v306 = vpack.c.b16 %v297, %v296
      %v307 = vpack.c.b16 %v299, %v298
      %316 = vmatpush.bf16.msra.mxu0 %v307
      %317 = vmatpush.bf16.msra.mxu0 %v306
      %318 = vmatpush.bf16.msra.mxu0 %v305
      %319 = vmatpush.bf16.msra.mxu0 %v304
      %320 = vmatpush.bf16.msra.mxu0 %v303
      %321 = vmatpush.bf16.msra.mxu0 %v302
      %322 = vmatpush.bf16.msra.mxu0 %v301
      %323 = vmatpush.bf16.msra.mxu0 %v300
      %324 = vmatmul.bf16.gmra.mxu0 %v266
      %v325 = vpop.f32.mrf.mxu0
      %v326 = vadd.f32 0.0, %v325
      %v327 = vpop.f32.mrf.mxu0
      %v328 = vadd.f32 0.0, %v327
      %329 = vdwg.mxu0
      %v330 = vld [vmem:[%s233] sm:$0x1]
      %v332 = vperm.slane %v330, 0
      %v334 = vsub.f32 %v326, %v332
      %v335 = vsub.f32 %v328, %v332
      %vm338 = vcmp.lt.s32.totalorder %v334, 0
      %vm339 = vcmp.lt.s32.totalorder %v335, 0
      %v340 = vxor.u32 %v334, 2147483647
      %v341 = vxor.u32 %v335, 2147483647
      %v342 = vsel %vm338, %v340, %v334
      %v343 = vsel %vm339, %v341, %v335
      %v344 = vlaneseq
      %v345 = vand.u32 %v344, 127
      %v346 = vand.u32 %v342, 4294967280
      %v347 = vand.u32 %v343, 4294967280
      %v348 = vsub.s32 15, %v345
      %v349 = vor.u32 %v346, %v348
      %v350 = vor.u32 %v347, %v348
      %vm351 = vcmask 130048
      %v352 = vsel %vm351, %v349, 2147483648
      %v353 = vand.u32 %v352, 65535
      %v354 = vshra.s32 %v352, 16
      %v355 = vcvt.s32.f32 %v353
      %v356 = vcvt.s32.f32 %v354
      %357 = vmax.xlane.f32.xlu0 %v356
      %v358 = vpop.xlane.xlu0 %357
      %vm359 = vcmp.eq.f32.partialorder %v356, %v358
      %v360 = vsel %vm359, %v355, -inf
      %361 = vmax.xlane.f32.xlu0 %v360
      %v362 = vpop.xlane.xlu0 %361
      %v363 = vcvt.f32.s32 %v362
      %v364 = vcvt.f32.s32 %v358
      %v365 = vshll.u32 %v364, 16
      %v366 = vadd.s32 %v365, %v363
      %v367 = vsel %vm351, %v350, 2147483648
      %v368 = vand.u32 %v367, 65535
      %v369 = vshra.s32 %v367, 16
      %v370 = vcvt.s32.f32 %v368
      %v371 = vcvt.s32.f32 %v369
      %372 = vmax.xlane.f32.xlu0 %v371
      %v373 = vpop.xlane.xlu0 %372
      %vm374 = vcmp.eq.f32.partialorder %v371, %v373
      %v375 = vsel %vm374, %v370, -inf
      %376 = vmax.xlane.f32.xlu0 %v375
      %v377 = vpop.xlane.xlu0 %376
      %v378 = vcvt.f32.s32 %v377
      %v379 = vcvt.f32.s32 %v373
      %v380 = vshll.u32 %v379, 16
      %v381 = vadd.s32 %v380, %v378
      %v382 = vand.u32 %v366, 15
      %v383 = vand.u32 %v381, 15
      %v384 = vsub.s32 15, %v382
      %v385 = vsub.s32 15, %v383
      %vm386 = vcmp.eq.s32.totalorder %v345, 0
      %v387 = vsel %vm386, %v384, 0
      %v388 = vsel %vm386, %v385, 0
      %vm389 = vcmp.eq.s32.totalorder %v345, %v384
      %vm390 = vcmp.eq.s32.totalorder %v345, %v385
      %v391 = vsel %vm389, 2147483648, %v349
      %v392 = vsel %vm390, 2147483648, %v350
      %v393 = vsel %vm351, %v391, 2147483648
      %v394 = vand.u32 %v393, 65535
      %v395 = vshra.s32 %v393, 16
      %v396 = vcvt.s32.f32 %v394
      %v397 = vcvt.s32.f32 %v395
      %398 = vmax.xlane.f32.xlu0 %v397
      %v399 = vpop.xlane.xlu0 %398
      %vm400 = vcmp.eq.f32.partialorder %v397, %v399
      %v401 = vsel %vm400, %v396, -inf
      %402 = vmax.xlane.f32.xlu0 %v401
      %v403 = vpop.xlane.xlu0 %402
      %v404 = vcvt.f32.s32 %v403
      %v405 = vcvt.f32.s32 %v399
      %v406 = vshll.u32 %v405, 16
      %v407 = vadd.s32 %v406, %v404
      %v408 = vsel %vm351, %v392, 2147483648
      %v409 = vand.u32 %v408, 65535
      %v410 = vshra.s32 %v408, 16
      %v411 = vcvt.s32.f32 %v409
      %v412 = vcvt.s32.f32 %v410
      %413 = vmax.xlane.f32.xlu0 %v412
      %v414 = vpop.xlane.xlu0 %413
      %vm415 = vcmp.eq.f32.partialorder %v412, %v414
      %v416 = vsel %vm415, %v411, -inf
      %417 = vmax.xlane.f32.xlu0 %v416
      %v418 = vpop.xlane.xlu0 %417
      %v419 = vcvt.f32.s32 %v418
      %v420 = vcvt.f32.s32 %v414
      %v421 = vshll.u32 %v420, 16
      %v422 = vadd.s32 %v421, %v419
      %v423 = vand.u32 %v407, 15
      %v424 = vand.u32 %v422, 15
      %v425 = vsub.s32 15, %v423
      %v426 = vsub.s32 15, %v424
      %vm427 = vcmp.eq.s32.totalorder %v345, 1
      %v428 = vsel %vm427, %v425, %v387
      %v429 = vsel %vm427, %v426, %v388
      %vm430 = vcmp.eq.s32.totalorder %v345, %v425
      %vm431 = vcmp.eq.s32.totalorder %v345, %v426
      %v432 = vsel %vm430, 2147483648, %v391
      %v433 = vsel %vm431, 2147483648, %v392
      %v434 = vsel %vm351, %v432, 2147483648
      %v435 = vand.u32 %v434, 65535
      %v436 = vshra.s32 %v434, 16
      %v437 = vcvt.s32.f32 %v435
      %v438 = vcvt.s32.f32 %v436
      %439 = vmax.xlane.f32.xlu0 %v438
      %v440 = vpop.xlane.xlu0 %439
      %vm441 = vcmp.eq.f32.partialorder %v438, %v440
      %v442 = vsel %vm441, %v437, -inf
      %443 = vmax.xlane.f32.xlu0 %v442
      %v444 = vpop.xlane.xlu0 %443
      %v445 = vcvt.f32.s32 %v444
      %v446 = vcvt.f32.s32 %v440
      %v447 = vshll.u32 %v446, 16
      %v448 = vadd.s32 %v447, %v445
      %v449 = vsel %vm351, %v433, 2147483648
      %v450 = vand.u32 %v449, 65535
      %v451 = vshra.s32 %v449, 16
      %v452 = vcvt.s32.f32 %v450
      %v453 = vcvt.s32.f32 %v451
      %454 = vmax.xlane.f32.xlu0 %v453
      %v455 = vpop.xlane.xlu0 %454
      %vm456 = vcmp.eq.f32.partialorder %v453, %v455
      %v457 = vsel %vm456, %v452, -inf
      %458 = vmax.xlane.f32.xlu0 %v457
      %v459 = vpop.xlane.xlu0 %458
      %v460 = vcvt.f32.s32 %v459
      %v461 = vcvt.f32.s32 %v455
      %v462 = vshll.u32 %v461, 16
      %v463 = vadd.s32 %v462, %v460
      %v464 = vand.u32 %v448, 15
      %v465 = vand.u32 %v463, 15
      %v466 = vsub.s32 15, %v464
      %v467 = vsub.s32 15, %v465
      %vm468 = vcmp.eq.s32.totalorder %v345, 2
      %v469 = vsel %vm468, %v466, %v428
      %v470 = vsel %vm468, %v467, %v429
      %vm471 = vcmp.eq.s32.totalorder %v345, %v466
      %vm472 = vcmp.eq.s32.totalorder %v345, %v467
      %v473 = vsel %vm471, 2147483648, %v432
      %v474 = vsel %vm472, 2147483648, %v433
      %v475 = vsel %vm351, %v473, 2147483648
      %v476 = vand.u32 %v475, 65535
      %v477 = vshra.s32 %v475, 16
      %v478 = vcvt.s32.f32 %v476
      %v479 = vcvt.s32.f32 %v477
      %480 = vmax.xlane.f32.xlu0 %v479
      %v481 = vpop.xlane.xlu0 %480
      %vm482 = vcmp.eq.f32.partialorder %v479, %v481
      %v483 = vsel %vm482, %v478, -inf
      %484 = vmax.xlane.f32.xlu0 %v483
      %v485 = vpop.xlane.xlu0 %484
      %v486 = vcvt.f32.s32 %v485
      %v487 = vcvt.f32.s32 %v481
      %v488 = vshll.u32 %v487, 16
      %v489 = vadd.s32 %v488, %v486
      %v490 = vsel %vm351, %v474, 2147483648
      %v491 = vand.u32 %v490, 65535
      %v492 = vshra.s32 %v490, 16
      %v493 = vcvt.s32.f32 %v491
      %v494 = vcvt.s32.f32 %v492
      %495 = vmax.xlane.f32.xlu0 %v494
      %v496 = vpop.xlane.xlu0 %495
      %vm497 = vcmp.eq.f32.partialorder %v494, %v496
      %v498 = vsel %vm497, %v493, -inf
      %499 = vmax.xlane.f32.xlu0 %v498
      %v500 = vpop.xlane.xlu0 %499
      %v501 = vcvt.f32.s32 %v500
      %v502 = vcvt.f32.s32 %v496
      %v503 = vshll.u32 %v502, 16
      %v504 = vadd.s32 %v503, %v501
      %v505 = vand.u32 %v489, 15
      %v506 = vand.u32 %v504, 15
      %v507 = vsub.s32 15, %v505
      %v508 = vsub.s32 15, %v506
      %vm509 = vcmp.eq.s32.totalorder %v345, 3
      %v510 = vsel %vm509, %v507, %v469
      %v511 = vsel %vm509, %v508, %v470
      %vm512 = vcmask 31744
      %513 = vst.msk [vmem:[%s242] sm:$0xff] %vm512, %v510
      %514 = vst.msk [vmem:[%s242 + $0x8] sm:$0xff] %vm512, %v511
      %s515 = smul.u32 2, %s19
      %p516 = scmp.lt.s32.totalorder %s18, 1
      %s517 = scalar_select %p516, %s18, 1
      %p518 = scmp.lt.s32.totalorder %s515, 1
      %s519 = scalar_select %p518, %s515, 1
      %s520 = smul.addr %s517, 2
      %s521 = sadd.s32 %s519, %s520
      %s522 = smul.addr %s521, 8
      %s523 = scalar_lea.vmem %s3, %s522
      // Predicated region
      $region33: #{dgcnn_forward.16} parent=31 // pred_check
        %p524 = pneg %p126
      $region34: #{dgcnn_forward.16} parent=31 // pred_check_branch
        %526 = sbr.rel (%p524) target = $region36
      $region35: #{dgcnn_forward.16} parent=31 // pred_region
        %s527 = smul.u32 2, %s19
      $region36: #{dgcnn_forward.16} parent=31 // pred_fallthru
        _
    $region32: #{dgcnn_forward.16} parent=5 // pred_fallthru
      _
    %p528 = scmp.le.s32.totalorder 2, %s9
    // Predicated region
    $region37: #{dgcnn_forward.16} parent=5 // pred_check
      %p529 = pneg %p528
    $region38: #{dgcnn_forward.16} parent=5 // pred_check_branch
      %531 = sbr.rel (%p529) target = $region40
    $region39: #{dgcnn_forward.16} parent=5 // pred_region
      %s532 = ssub.s32 %s9, 2
      // Predicated region
      $region41: #{dgcnn_forward.16} parent=39 // pred_check
        %p533 = pneg %p132
      $region42: #{dgcnn_forward.16} parent=39 // pred_check_branch
        %535 = sbr.rel (%p533) target = $region44
      $region43: #{dgcnn_forward.16} parent=39 // pred_region
        %s536 = smul.u32 2, %s21
        %p537 = scmp.lt.s32.totalorder %s20, 1
        %s538 = scalar_select %p537, %s20, 1
        %p539 = scmp.lt.s32.totalorder %s536, 1
        %s540 = scalar_select %p539, %s536, 1
        %s541 = smul.addr %s538, 2
        %s542 = sadd.s32 %s540, %s541
        %s543 = smul.addr %s542, 8
        %s544 = scalar_lea.vmem %s3, %s543
      $region44: #{dgcnn_forward.16} parent=39 // pred_fallthru
        _
    $region40: #{dgcnn_forward.16} parent=5 // pred_fallthru
      _
  $region6: #{dgcnn_forward.16} parent=0 // loop_footer
    %s13 = sadd.s32 1, %s9
  $region7: #{dgcnn_forward.16} parent=0 // loop_footer_branch
    %8 = sbr.rel target = $region3
  $region8: #{dgcnn_forward.16} parent=0 // loop_exit
    _

// kernel: dgcnn_forward.17
$region0: #{dgcnn_forward.17}
  #allocation0 [shape = 'u32[]', space=smem, size = 0x4, offset = 0x4, fixed_abs, tag = 'smem constant byte address 0x4 - core index']
  #allocation1 [shape = 'u32[72,128]{1,0:T(1,128)}', space=vmem, size = 0x9000, scoped, tag = 'internal scratch']
  %s0 = inlined_call_operand.vmem [shape: bf16[2,4,16,128], index: 0, kind: input, shape index: {}]
  %s1 = inlined_call_operand.vmem [shape: bf16[2,16,128], index: 1, kind: input, shape index: {}]
  %s2 = inlined_call_operand.vmem [shape: bf16[128,256], index: 2, kind: input, shape index: {}]
  %s3 = inlined_call_operand.vmem [shape: bf16[128,256], index: 3, kind: input, shape index: {}]
  %s4 = inlined_call_operand.vmem [shape: f32[1,256], index: 4, kind: input, shape index: {}]
  %s5 = inlined_call_operand.vmem [shape: f32[1,256], index: 5, kind: input, shape index: {}]
  %s6 = inlined_call_operand.vmem [shape: bf16[2,16,640], index: 6, kind: input, shape index: {}, may-alias: {6,7}]
  %s7 = inlined_call_operand.vmem [shape: bf16[2,16,640], index: 7, kind: output, shape index: {}, may-alias: {6,7}]
  %s8 = sld [smem:[#allocation0]]
  $region133: #{dgcnn_forward.17} parent=0
    _
  %s10 = ssub.s32 1, %s8
  %s11 = scalar_select 0, %s10, %s8
  $region1: #{dgcnn_forward.17} parent=0
    #allocation2 [shape = 'u8[16384]{0}', space=vmem, size = 0x4000, scoped, tag = 'input window, operand 6']
    #allocation3 [shape = 'u8[16384]{0}', space=vmem, size = 0x4000, scoped, tag = 'output window, operand 0']
    loop: start=0, step=1, limit=4
    $region2: #{dgcnn_forward.17} parent=1 // loop_pre_header
      _
    $region3: #{dgcnn_forward.17} parent=1 // loop_header
      %s13 = sphi 0, %s17
      %p14 = scmp.ge.s32.totalorder %s13, 4
      %s20 = sphi 0, %s32
      %s21 = sphi 0, %s28
      %s22 = sphi 0, %s20
      %s23 = sphi 0, %s21
      %s24 = sphi 0, %s22
      %s25 = sphi 0, %s23
      %s37 = sphi 0, %s39
      %s40 = sphi 0, %s37
      %s41 = sphi 0, %s40
      %s57 = sphi 0, %s41
      %s65 = sphi 0, %s67
      %s68 = sphi 0, %s65
      %s69 = sphi 0, %s68
      %s85 = sphi 0, %s69
      %s89 = sphi 0, %s89
      %s91 = sphi 0, %s89
      %s92 = sphi 0, %s91
      %s106 = sphi 0, %s92
      %s110 = sphi 0, %s110
      %s112 = sphi 0, %s110
      %s113 = sphi 0, %s112
      %s127 = sphi 0, %s113
      %s131 = sphi 0, %s131
      %s133 = sphi 0, %s131
      %s134 = sphi 0, %s133
      %s148 = sphi 0, %s134
      %s152 = sphi 0, %s152
      %s154 = sphi 0, %s152
      %s155 = sphi 0, %s154
      %s169 = sphi 0, %s155
      %s177 = sphi 0, %s179
      %s180 = sphi 0, %s177
      %s181 = sphi 0, %s180
      %s197 = sphi 0, %s181
      %s205 = sphi 0, %s207
      %s208 = sphi 0, %s205
      %s209 = sphi 0, %s208
      %s225 = sphi 0, %s209
    $region4: #{dgcnn_forward.17} parent=1 // loop_header_branch
      %16 = sbr.rel (%p14) target = $region8
    $region5: #{dgcnn_forward.17} parent=1 // loop_body
      %s18 = ssub.s32 %s13, 1
      %s19 = ssub.s32 %s13, 2
      %s26 = sadd.s32 1, %s21
      %p27 = scmp.ge.s32.totalorder %s26, 1
      %s28 = scalar_select %p27, 0, %s26
      %s29 = sadd.s32 1, %s20
      %s30 = scalar_select %p27, %s29, %s20
      %p31 = scmp.ge.s32.totalorder %s30, 2
      %s32 = scalar_select %p31, 0, %s30
      %s33 = ssub.s32 %s20, %s32
      %s34 = ssub.s32 %s21, %s28
      %s35 = sor.u32 %s33, %s34
      %p36 = scmp.eq.s32.totalorder %s35, 0
      %s38 = sadd.s32 %s37, 1
      %s39 = scalar_select %p36, %s37, %s38
      %p42 = pneg %p36
      %p43 = scmp.eq.s32.totalorder %s13, 1
      %p44 = por %p42, %p43
      %p45 = scmp.ne.s32.totalorder %s37, %s40
      %p46 = scmp.eq.s32.totalorder %s13, 0
      %p47 = por %p45, %p46
      %p48 = scmp.ne.s32.totalorder %s37, %s40
      %p49 = scmp.eq.s32.totalorder %s18, 1
      %p50 = por %p48, %p49
      %p51 = scmp.ne.s32.totalorder %s40, %s41
      %p52 = scmp.eq.s32.totalorder %s18, 0
      %p53 = por %p51, %p52
      %p54 = scmp.ne.s32.totalorder %s40, %s41
      %p55 = scmp.eq.s32.totalorder %s19, 1
      %p56 = por %p54, %p55
      %p58 = scmp.ne.s32.totalorder %s41, %s57
      %p59 = scmp.eq.s32.totalorder %s19, 0
      %p60 = por %p58, %p59
      %s61 = ssub.s32 %s20, %s32
      %s62 = ssub.s32 %s21, %s28
      %s63 = sor.u32 %s61, %s62
      %p64 = scmp.eq.s32.totalorder %s63, 0
      %s66 = sadd.s32 %s65, 1
      %s67 = scalar_select %p64, %s65, %s66
      %p70 = pneg %p64
      %p71 = scmp.eq.s32.totalorder %s13, 1
      %p72 = por %p70, %p71
      %p73 = scmp.ne.s32.totalorder %s65, %s68
      %p74 = scmp.eq.s32.totalorder %s13, 0
      %p75 = por %p73, %p74
      %p76 = scmp.ne.s32.totalorder %s65, %s68
      %p77 = scmp.eq.s32.totalorder %s18, 1
      %p78 = por %p76, %p77
      %p79 = scmp.ne.s32.totalorder %s68, %s69
      %p80 = scmp.eq.s32.totalorder %s18, 0
      %p81 = por %p79, %p80
      %p82 = scmp.ne.s32.totalorder %s68, %s69
      %p83 = scmp.eq.s32.totalorder %s19, 1
      %p84 = por %p82, %p83
      %p86 = scmp.ne.s32.totalorder %s69, %s85
      %p87 = scmp.eq.s32.totalorder %s19, 0
      %p88 = por %p86, %p87
      %s90 = sadd.s32 %s89, 1
      %p93 = scmp.eq.s32.totalorder %s13, 1
      %p94 = scmp.ne.s32.totalorder %s89, %s91
      %p95 = scmp.eq.s32.totalorder %s13, 0
      %p96 = por %p94, %p95
      %p97 = scmp.ne.s32.totalorder %s89, %s91
      %p98 = scmp.eq.s32.totalorder %s18, 1
      %p99 = por %p97, %p98
      %p100 = scmp.ne.s32.totalorder %s91, %s92
      %p101 = scmp.eq.s32.totalorder %s18, 0
      %p102 = por %p100, %p101
      %p103 = scmp.ne.s32.totalorder %s91, %s92
      %p104 = scmp.eq.s32.totalorder %s19, 1
      %p105 = por %p103, %p104
      %p107 = scmp.ne.s32.totalorder %s92, %s106
      %p108 = scmp.eq.s32.totalorder %s19, 0
      %p109 = por %p107, %p108
      %s111 = sadd.s32 %s110, 1
      %p114 = scmp.eq.s32.totalorder %s13, 1
      %p115 = scmp.ne.s32.totalorder %s110, %s112
      %p116 = scmp.eq.s32.totalorder %s13, 0
      %p117 = por %p115, %p116
      %p118 = scmp.ne.s32.totalorder %s110, %s112
      %p119 = scmp.eq.s32.totalorder %s18, 1
      %p120 = por %p118, %p119
      %p121 = scmp.ne.s32.totalorder %s112, %s113
      %p122 = scmp.eq.s32.totalorder %s18, 0
      %p123 = por %p121, %p122
      %p124 = scmp.ne.s32.totalorder %s112, %s113
      %p125 = scmp.eq.s32.totalorder %s19, 1
      %p126 = por %p124, %p125
      %p128 = scmp.ne.s32.totalorder %s113, %s127
      %p129 = scmp.eq.s32.totalorder %s19, 0
      %p130 = por %p128, %p129
      %s132 = sadd.s32 %s131, 1
      %p135 = scmp.eq.s32.totalorder %s13, 1
      %p136 = scmp.ne.s32.totalorder %s131, %s133
      %p137 = scmp.eq.s32.totalorder %s13, 0
      %p138 = por %p136, %p137
      %p139 = scmp.ne.s32.totalorder %s131, %s133
      %p140 = scmp.eq.s32.totalorder %s18, 1
      %p141 = por %p139, %p140
      %p142 = scmp.ne.s32.totalorder %s133, %s134
      %p143 = scmp.eq.s32.totalorder %s18, 0
      %p144 = por %p142, %p143
      %p145 = scmp.ne.s32.totalorder %s133, %s134
      %p146 = scmp.eq.s32.totalorder %s19, 1
      %p147 = por %p145, %p146
      %p149 = scmp.ne.s32.totalorder %s134, %s148
      %p150 = scmp.eq.s32.totalorder %s19, 0
      %p151 = por %p149, %p150
      %s153 = sadd.s32 %s152, 1
      %p156 = scmp.eq.s32.totalorder %s13, 1
      %p157 = scmp.ne.s32.totalorder %s152, %s154
      %p158 = scmp.eq.s32.totalorder %s13, 0
      %p159 = por %p157, %p158
      %p160 = scmp.ne.s32.totalorder %s152, %s154
      %p161 = scmp.eq.s32.totalorder %s18, 1
      %p162 = por %p160, %p161
      %p163 = scmp.ne.s32.totalorder %s154, %s155
      %p164 = scmp.eq.s32.totalorder %s18, 0
      %p165 = por %p163, %p164
      %p166 = scmp.ne.s32.totalorder %s154, %s155
      %p167 = scmp.eq.s32.totalorder %s19, 1
      %p168 = por %p166, %p167
      %p170 = scmp.ne.s32.totalorder %s155, %s169
      %p171 = scmp.eq.s32.totalorder %s19, 0
      %p172 = por %p170, %p171
      %s173 = ssub.s32 %s20, %s32
      %s174 = ssub.s32 %s21, %s28
      %s175 = sor.u32 %s173, %s174
      %p176 = scmp.eq.s32.totalorder %s175, 0
      %s178 = sadd.s32 %s177, 1
      %s179 = scalar_select %p176, %s177, %s178
      %p182 = pneg %p176
      %p183 = scmp.eq.s32.totalorder %s13, 1
      %p184 = por %p182, %p183
      %p185 = scmp.ne.s32.totalorder %s177, %s180
      %p186 = scmp.eq.s32.totalorder %s13, 0
      %p187 = por %p185, %p186
      %p188 = scmp.ne.s32.totalorder %s177, %s180
      %p189 = scmp.eq.s32.totalorder %s18, 1
      %p190 = por %p188, %p189
      %p191 = scmp.ne.s32.totalorder %s180, %s181
      %p192 = scmp.eq.s32.totalorder %s18, 0
      %p193 = por %p191, %p192
      %p194 = scmp.ne.s32.totalorder %s180, %s181
      %p195 = scmp.eq.s32.totalorder %s19, 1
      %p196 = por %p194, %p195
      %p198 = scmp.ne.s32.totalorder %s181, %s197
      %p199 = scmp.eq.s32.totalorder %s19, 0
      %p200 = por %p198, %p199
      %s201 = ssub.s32 %s20, %s32
      %s202 = ssub.s32 %s21, %s28
      %s203 = sor.u32 %s201, %s202
      %p204 = scmp.eq.s32.totalorder %s203, 0
      %s206 = sadd.s32 %s205, 1
      %s207 = scalar_select %p204, %s205, %s206
      %p210 = pneg %p204
      %p211 = scmp.eq.s32.totalorder %s13, 1
      %p212 = por %p210, %p211
      %p213 = scmp.ne.s32.totalorder %s205, %s208
      %p214 = scmp.eq.s32.totalorder %s13, 0
      %p215 = por %p213, %p214
      %p216 = scmp.ne.s32.totalorder %s205, %s208
      %p217 = scmp.eq.s32.totalorder %s18, 1
      %p218 = por %p216, %p217
      %p219 = scmp.ne.s32.totalorder %s208, %s209
      %p220 = scmp.eq.s32.totalorder %s18, 0
      %p221 = por %p219, %p220
      %p222 = scmp.ne.s32.totalorder %s208, %s209
      %p223 = scmp.eq.s32.totalorder %s19, 1
      %p224 = por %p222, %p223
      %p226 = scmp.ne.s32.totalorder %s209, %s225
      %p227 = scmp.eq.s32.totalorder %s19, 0
      %p228 = por %p226, %p227
      %p229 = scmp.le.s32.totalorder 1, %s13
      %p230 = scmp.lt.s32.totalorder %s13, 3
      %p231 = pnand %p229, %p230
      %p232 = pneg %p231
      // Predicated region
      $region9: #{dgcnn_forward.17} parent=5 // pred_check
        _
      $region10: #{dgcnn_forward.17} parent=5 // pred_check_branch
        %234 = sbr.rel (%p231) target = $region12
      $region11: #{dgcnn_forward.17} parent=5 // pred_region
        %s235 = ssub.s32 %s13, 1
        // Predicated region
        $region13: #{dgcnn_forward.17} parent=11 // pred_check
          %p236 = pneg %p102
        $region14: #{dgcnn_forward.17} parent=11 // pred_check_branch
          %238 = sbr.rel (%p236) target = $region16
        $region15: #{dgcnn_forward.17} parent=11 // pred_region
          _
        $region16: #{dgcnn_forward.17} parent=11 // pred_fallthru
          _
        // Predicated region
        $region17: #{dgcnn_forward.17} parent=11 // pred_check
          %p239 = pneg %p123
        $region18: #{dgcnn_forward.17} parent=11 // pred_check_branch
          %241 = sbr.rel (%p239) target = $region20
        $region19: #{dgcnn_forward.17} parent=11 // pred_region
          _
        $region20: #{dgcnn_forward.17} parent=11 // pred_fallthru
          _
        // Predicated region
        $region21: #{dgcnn_forward.17} parent=11 // pred_check
          %p242 = pneg %p144
        $region22: #{dgcnn_forward.17} parent=11 // pred_check_branch
          %244 = sbr.rel (%p242) target = $region24
        $region23: #{dgcnn_forward.17} parent=11 // pred_region
          _
        $region24: #{dgcnn_forward.17} parent=11 // pred_fallthru
          _
        // Predicated region
        $region25: #{dgcnn_forward.17} parent=11 // pred_check
          %p245 = pneg %p165
        $region26: #{dgcnn_forward.17} parent=11 // pred_check_branch
          %247 = sbr.rel (%p245) target = $region28
        $region27: #{dgcnn_forward.17} parent=11 // pred_region
          _
        $region28: #{dgcnn_forward.17} parent=11 // pred_fallthru
          _
      $region12: #{dgcnn_forward.17} parent=5 // pred_fallthru
        _
      %p248 = scmp.lt.s32.totalorder %s13, 2
      // Predicated region
      $region29: #{dgcnn_forward.17} parent=5 // pred_check
        %p249 = pneg %p248
      $region30: #{dgcnn_forward.17} parent=5 // pred_check_branch
        %251 = sbr.rel (%p249) target = $region32
      $region31: #{dgcnn_forward.17} parent=5 // pred_region
        // Predicated region
        $region33: #{dgcnn_forward.17} parent=31 // pred_check
          %p252 = pneg %p47
        $region34: #{dgcnn_forward.17} parent=31 // pred_check_branch
          %254 = sbr.rel (%p252) target = $region36
        $region35: #{dgcnn_forward.17} parent=31 // pred_region
          %s255 = smul.u32 2, %s21
          %p256 = scmp.lt.s32.totalorder %s20, 1
          %s257 = scalar_select %p256, %s20, 1
          %p258 = scmp.lt.s32.totalorder %s255, 1
          %s259 = scalar_select %p258, %s255, 1
          %s260 = smul.addr %s257, 8
          %s261 = sadd.s32 %s259, %s260
          %s262 = smul.addr %s261, 4
          %s263 = scalar_lea.vmem %s0, %s262
          %s264 = smul.u32 2, %s21
        $region36: #{dgcnn_forward.17} parent=31 // pred_fallthru
          _
        // Predicated region
        $region37: #{dgcnn_forward.17} parent=31 // pred_check
          %p265 = pneg %p75
        $region38: #{dgcnn_forward.17} parent=31 // pred_check_branch
          %267 = sbr.rel (%p265) target = $region40
        $region39: #{dgcnn_forward.17} parent=31 // pred_region
          %s268 = smul.u32 2, %s21
          %p269 = scmp.lt.s32.totalorder %s20, 1
          %s270 = scalar_select %p269, %s20, 1
          %p271 = scmp.lt.s32.totalorder %s268, 1
          %s272 = scalar_select %p271, %s268, 1
          %s273 = smul.addr %s270, 2
          %s274 = sadd.s32 %s272, %s273
          %s275 = smul.addr %s274, 4
          %s276 = scalar_lea.vmem %s1, %s275
          %s277 = smul.u32 2, %s21
        $region40: #{dgcnn_forward.17} parent=31 // pred_fallthru
          _
        // Predicated region
        $region41: #{dgcnn_forward.17} parent=31 // pred_check
          %p278 = pneg %p187
        $region42: #{dgcnn_forward.17} parent=31 // pred_check_branch
          %280 = sbr.rel (%p278) target = $region44
        $region43: #{dgcnn_forward.17} parent=31 // pred_region
          %s281 = sand.u32 %s177, 1
          %s282 = sand.u32 %s177, 1
          %s283 = smul.addr %s282, 16
          %s284 = scalar_lea.vmem [#allocation2], %s283
          %s285 = smul.u32 2, %s21
          %s286 = smul.addr %s285, 5
          %s287 = smul.addr %s20, 10
          %s288 = sadd.s32 %s286, %s287
          %s289 = smul.addr %s288, 4
          %s290 = scalar_lea.vmem %s6, %s289
          // Predicated region
          $region45: #{dgcnn_forward.17} parent=43 // pred_check
            _
          $region46: #{dgcnn_forward.17} parent=43 // pred_check_branch
            %292 = sbr.rel (0) target = $region48
          $region47: #{dgcnn_forward.17} parent=43 // pred_region
            // Predicated region
            $region49: #{dgcnn_forward.17} parent=47 // pred_check
              _
            $region50: #{dgcnn_forward.17} parent=47 // pred_check_branch
              %294 = sbr.rel (0) target = $region52
            $region51: #{dgcnn_forward.17} parent=47 // pred_region
              // Predicated region
              $region64: #{dgcnn_forward.17} parent=51 // pred_check
                _
              $region65: #{dgcnn_forward.17} parent=51 // pred_check_branch
                %312 = sbr.rel (0) target = $region67
              $region66: #{dgcnn_forward.17} parent=51 // pred_region
                loop: start=0, step=1, limit=1
                $region68: #{dgcnn_forward.17} parent=66 // loop_pre_header
                  _
                $region69: #{dgcnn_forward.17} parent=66 // loop_header
                  %s314 = sphi 0, %s318
                  %p315 = scmp.ge.s32.totalorder %s314, 1
                  %s319 = sphi %s290, %s290
                  %s320 = sphi %s284, %s284
                $region70: #{dgcnn_forward.17} parent=66 // loop_header_branch
                  %317 = sbr.rel (%p315) target = $region74
                $region71: #{dgcnn_forward.17} parent=66 // loop_body
                  %v321 = vld [vmem:[%s319] sm:$0xff]
                  %322 = vst [vmem:[%s320] sm:$0xff] %v321
                  %v323 = vld [vmem:[%s319 + $0x14] sm:$0xff]
                  %324 = vst [vmem:[%s320 + $0x8] sm:$0xff] %v323
                $region72: #{dgcnn_forward.17} parent=66 // loop_footer
                  %s318 = sadd.s32 1, %s314
                $region73: #{dgcnn_forward.17} parent=66 // loop_footer_branch
                  %313 = sbr.rel target = $region69
                $region74: #{dgcnn_forward.17} parent=66 // loop_exit
                  _
              $region67: #{dgcnn_forward.17} parent=51 // pred_fallthru
                _
              // Predicated region
              $region75: #{dgcnn_forward.17} parent=51 // pred_check
                _
              $region76: #{dgcnn_forward.17} parent=51 // pred_check_branch
                %326 = sbr.rel target = $region78
              $region77: #{dgcnn_forward.17} parent=51 // pred_region
                _
              $region78: #{dgcnn_forward.17} parent=51 // pred_fallthru
                _
            $region52: #{dgcnn_forward.17} parent=47 // pred_fallthru
              _
            // Predicated region
            $region53: #{dgcnn_forward.17} parent=47 // pred_check
              _
            $region54: #{dgcnn_forward.17} parent=47 // pred_check_branch
              %296 = sbr.rel target = $region56
            $region55: #{dgcnn_forward.17} parent=47 // pred_region
              %s298 = ssub.s32 256, 1
              loop: start=0, step=1, limit=1
              $region57: #{dgcnn_forward.17} parent=55 // loop_pre_header
                _
              $region58: #{dgcnn_forward.17} parent=55 // loop_header
                %s300 = sphi 0, %s304
                %p301 = scmp.ge.s32.totalorder %s300, 1
                %s305 = sphi %s290, %s290
                %s306 = sphi %s284, %s284
              $region59: #{dgcnn_forward.17} parent=55 // loop_header_branch
                %303 = sbr.rel (%p301) target = $region63
              $region60: #{dgcnn_forward.17} parent=55 // loop_body
                %v307 = vld [vmem:[%s305] sm:%s298]
                %308 = vst [vmem:[%s306] sm:%s298] %v307
                %v309 = vld [vmem:[%s305 + $0x14] sm:%s298]
                %310 = vst [vmem:[%s306 + $0x8] sm:%s298] %v309
              $region61: #{dgcnn_forward.17} parent=55 // loop_footer
                %s304 = sadd.s32 1, %s300
              $region62: #{dgcnn_forward.17} parent=55 // loop_footer_branch
                %299 = sbr.rel target = $region58
              $region63: #{dgcnn_forward.17} parent=55 // loop_exit
                _
            $region56: #{dgcnn_forward.17} parent=47 // pred_fallthru
              _
          $region48: #{dgcnn_forward.17} parent=43 // pred_fallthru
            _
          %327 = vnop
        $region44: #{dgcnn_forward.17} parent=31 // pred_fallthru
          _
      $region32: #{dgcnn_forward.17} parent=5 // pred_fallthru
        _
      %p328 = scmp.le.s32.totalorder 1, %s13
      %p329 = scmp.lt.s32.totalorder %s13, 3
      %p330 = pnand %p328, %p329
      %p331 = pneg %p330
      // Predicated region
      $region79: #{dgcnn_forward.17} parent=5 // pred_check
        _
      $region80: #{dgcnn_forward.17} parent=5 // pred_check_branch
        %333 = sbr.rel (%p330) target = $region82
      $region81: #{dgcnn_forward.17} parent=5 // pred_region
        %s334 = ssub.s32 %s13, 1
        %s335 = sand.u32 %s180, 1
        %s336 = sand.u32 %s180, 1
        %s337 = smul.addr %s336, 16
        %s338 = scalar_lea.vmem [#allocation2], %s337
        // Predicated region
        $region83: #{dgcnn_forward.17} parent=81 // pred_check
          %p339 = pneg %p193
        $region84: #{dgcnn_forward.17} parent=81 // pred_check_branch
          %341 = sbr.rel (%p339) target = $region86
        $region85: #{dgcnn_forward.17} parent=81 // pred_region
          _
        $region86: #{dgcnn_forward.17} parent=81 // pred_fallthru
          _
        %s342 = smul.u32 2, %s23
        %p343 = scmp.lt.s32.totalorder %s22, 1
        %s344 = scalar_select %p343, %s22, 1
        %p345 = scmp.lt.s32.totalorder %s342, 1
        %s346 = scalar_select %p345, %s342, 1
        %s347 = smul.addr %s344, 8
        %s348 = sadd.s32 %s346, %s347
        %s349 = smul.addr %s348, 4
        %s350 = scalar_lea.vmem %s0, %s349
        %p351 = pneg %p53
        %p352 = pneg %p50
        %s353 = smul.u32 2, %s23
        %p354 = scmp.lt.s32.totalorder %s22, 1
        %s355 = scalar_select %p354, %s22, 1
        %p356 = scmp.lt.s32.totalorder %s353, 1
        %s357 = scalar_select %p356, %s353, 1
        %s358 = smul.addr %s355, 2
        %s359 = sadd.s32 %s357, %s358
        %s360 = smul.addr %s359, 4
        %s361 = scalar_lea.vmem %s1, %s360
        %p362 = pneg %p81
        %p363 = pneg %p78
        %p364 = pneg %p102
        %p365 = pneg %p99
        %p366 = pneg %p123
        %p367 = pneg %p120
        %p368 = pneg %p144
        %p369 = pneg %p141
        %p370 = pneg %p165
        %p371 = pneg %p162
        %s372 = sand.u32 %s180, 1
        %s373 = sand.u32 %s180, 1
        %s374 = smul.addr %s373, 16
        %s375 = scalar_lea.vmem [#allocation2], %s374
        %p376 = pneg %p193
        %p377 = pneg %p190
        %p378 = pneg %p221
        %p379 = pneg %p218
        %s380 = sand.u32 %s208, 1
        %s381 = sand.u32 %s208, 1
        %s382 = smul.addr %s381, 16
        %s383 = scalar_lea.vmem [#allocation3], %s382
        %s384 = smul.u32 2, %s23
        %p385 = scmp.lt.s32.totalorder %s22, 1
        %s386 = scalar_select %p385, %s22, 1
        %p387 = scmp.lt.s32.totalorder %s384, 1
        %s388 = scalar_select %p387, %s384, 1
        %s389 = smul.addr %s386, 8
        %s390 = sadd.s32 %s388, %s389
        %s391 = smul.addr %s390, 4
        %s392 = scalar_lea.vmem %s0, %s391
        %s393 = smul.u32 2, %s23
        %s394 = smul.u32 2, %s23
        %p395 = scmp.lt.s32.totalorder %s22, 1
        %s396 = scalar_select %p395, %s22, 1
        %p397 = scmp.lt.s32.totalorder %s394, 1
        %s398 = scalar_select %p397, %s394, 1
        %s399 = smul.addr %s396, 2
        %s400 = sadd.s32 %s398, %s399
        %s401 = smul.addr %s400, 4
        %s402 = scalar_lea.vmem %s1, %s401
        %s403 = smul.u32 2, %s23
        %s404 = smul.u32 2, %s23
        %s405 = smul.u32 2, %s23
        %v406 = vld [vmem:[%s392] sm:$0xf]
        %v407 = vld [vmem:[%s392 + $0x4] sm:$0xf]
        %v408 = vld [vmem:[%s392 + $0x8] sm:$0xf]
        %v409 = vld [vmem:[%s392 + $0xc] sm:$0xf]
        %v410 = vld [vmem:[%s392 + $0x10] sm:$0xf]
        %v411 = vld [vmem:[%s392 + $0x14] sm:$0xf]
        %v412 = vld [vmem:[%s392 + $0x18] sm:$0xf]
        %v413 = vld [vmem:[%s392 + $0x1c] sm:$0xf]
        %v414 = vld [vmem:[%s2] sm:$0xff]
        %v415 = vld [vmem:[%s2 + $0x8] sm:$0xff]
        %v416 = vld [vmem:[%s2 + $0x10] sm:$0xff]
        %v417 = vld [vmem:[%s2 + $0x18] sm:$0xff]
        %v418 = vld [vmem:[%s2 + $0x20] sm:$0xff]
        %v419 = vld [vmem:[%s2 + $0x28] sm:$0xff]
        %v420 = vld [vmem:[%s2 + $0x30] sm:$0xff]
        %v421 = vld [vmem:[%s2 + $0x38] sm:$0xff]
        %v422 = vld [vmem:[%s2 + $0x40] sm:$0xff]
        %v423 = vld [vmem:[%s2 + $0x48] sm:$0xff]
        %v424 = vld [vmem:[%s2 + $0x50] sm:$0xff]
        %v425 = vld [vmem:[%s2 + $0x58] sm:$0xff]
        %v426 = vld [vmem:[%s2 + $0x60] sm:$0xff]
        %v427 = vld [vmem:[%s2 + $0x68] sm:$0xff]
        %v428 = vld [vmem:[%s2 + $0x70] sm:$0xff]
        %v429 = vld [vmem:[%s2 + $0x78] sm:$0xff]
        %v438 = vunpack.c.l.b16 %v406
        %v439 = vunpack.c.l.b16 %v407
        %v440 = vunpack.c.l.b16 %v408
        %v441 = vunpack.c.l.b16 %v409
        %v442 = vunpack.c.l.b16 %v410
        %v443 = vunpack.c.l.b16 %v411
        %v444 = vunpack.c.l.b16 %v412
        %v445 = vunpack.c.l.b16 %v413
        %v446 = vpack.c.b16 %v439, %v438
        %v447 = vpack.c.b16 %v441, %v440
        %v448 = vpack.c.b16 %v443, %v442
        %v449 = vpack.c.b16 %v445, %v444
        %v470 = vunpack.c.l.b16 %v414
        %v471 = vunpack.c.h.b16 %v414
        %v472 = vunpack.c.l.b16 %v415
        %v473 = vunpack.c.h.b16 %v415
        %v474 = vunpack.c.l.b16 %v416
        %v475 = vunpack.c.h.b16 %v416
        %v476 = vunpack.c.l.b16 %v417
        %v477 = vunpack.c.h.b16 %v417
        %v478 = vunpack.c.l.b16 %v418
        %v479 = vunpack.c.h.b16 %v418
        %v480 = vunpack.c.l.b16 %v419
        %v481 = vunpack.c.h.b16 %v419
        %v482 = vunpack.c.l.b16 %v420
        %v483 = vunpack.c.h.b16 %v420
        %v484 = vunpack.c.l.b16 %v421
        %v485 = vunpack.c.h.b16 %v421
        %v486 = vunpack.c.l.b16 %v422
        %v487 = vunpack.c.h.b16 %v422
        %v488 = vunpack.c.l.b16 %v423
        %v489 = vunpack.c.h.b16 %v423
        %v490 = vunpack.c.l.b16 %v424
        %v491 = vunpack.c.h.b16 %v424
        %v492 = vunpack.c.l.b16 %v425
        %v493 = vunpack.c.h.b16 %v425
        %v494 = vunpack.c.l.b16 %v426
        %v495 = vunpack.c.h.b16 %v426
        %v496 = vunpack.c.l.b16 %v427
        %v497 = vunpack.c.h.b16 %v427
        %v498 = vunpack.c.l.b16 %v428
        %v499 = vunpack.c.h.b16 %v428
        %v500 = vunpack.c.l.b16 %v429
        %v501 = vunpack.c.h.b16 %v429
        %v502 = vpack.c.b16 %v472, %v470
        %v503 = vpack.c.b16 %v473, %v471
        %v504 = vpack.c.b16 %v476, %v474
        %v505 = vpack.c.b16 %v477, %v475
        %v506 = vpack.c.b16 %v480, %v478
        %v507 = vpack.c.b16 %v481, %v479
        %v508 = vpack.c.b16 %v484, %v482
        %v509 = vpack.c.b16 %v485, %v483
        %v510 = vpack.c.b16 %v488, %v486
        %v511 = vpack.c.b16 %v489, %v487
        %v512 = vpack.c.b16 %v492, %v490
        %v513 = vpack.c.b16 %v493, %v491
        %v514 = vpack.c.b16 %v496, %v494
        %v515 = vpack.c.b16 %v497, %v495
        %v516 = vpack.c.b16 %v500, %v498
        %v517 = vpack.c.b16 %v501, %v499
        %534 = vmatpush.bf16.msra.mxu0 %v516
        %535 = vmatpush.bf16.msra.mxu0 %v514
        %536 = vmatpush.bf16.msra.mxu0 %v512
        %537 = vmatpush.bf16.msra.mxu0 %v510
        %538 = vmatpush.bf16.msra.mxu0 %v508
        %539 = vmatpush.bf16.msra.mxu0 %v506
        %540 = vmatpush.bf16.msra.mxu0 %v504
        %541 = vmatpush.bf16.msra.mxu0 %v502
        %542 = vmatmul.bf16.gmra.mxu0 %v446
        %v543 = vpop.f32.mrf.mxu0
        %v544 = vadd.f32 0.0, %v543
        %v545 = vpop.f32.mrf.mxu0
        %v546 = vadd.f32 0.0, %v545
        %547 = vmatmul.bf16.gmra.mxu0 %v447
        %v548 = vpop.f32.mrf.mxu0
        %v549 = vadd.f32 0.0, %v548
        %v550 = vpop.f32.mrf.mxu0
        %v551 = vadd.f32 0.0, %v550
        %552 = vmatmul.bf16.gmra.mxu0 %v448
        %v553 = vpop.f32.mrf.mxu0
        %v554 = vadd.f32 0.0, %v553
        %v555 = vpop.f32.mrf.mxu0
        %v556 = vadd.f32 0.0, %v555
        %557 = vmatmul.bf16.gmra.mxu0 %v449
        %v558 = vpop.f32.mrf.mxu0
        %v559 = vadd.f32 0.0, %v558
        %v560 = vpop.f32.mrf.mxu0
        %v561 = vadd.f32 0.0, %v560
        %562 = vdwg.mxu0
        %563 = vmatpush.bf16.msra.mxu0 %v517
        %564 = vmatpush.bf16.msra.mxu0 %v515
        %565 = vmatpush.bf16.msra.mxu0 %v513
        %566 = vmatpush.bf16.msra.mxu0 %v511
        %567 = vmatpush.bf16.msra.mxu0 %v509
        %568 = vmatpush.bf16.msra.mxu0 %v507
        %569 = vmatpush.bf16.msra.mxu0 %v505
        %570 = vmatpush.bf16.msra.mxu0 %v503
        %571 = vmatmul.bf16.gmra.mxu0 %v446
        %v572 = vpop.f32.mrf.mxu0
        %v573 = vadd.f32 0.0, %v572
        %v574 = vpop.f32.mrf.mxu0
        %v575 = vadd.f32 0.0, %v574
        %576 = vmatmul.bf16.gmra.mxu0 %v447
        %v577 = vpop.f32.mrf.mxu0
        %v578 = vadd.f32 0.0, %v577
        %v579 = vpop.f32.mrf.mxu0
        %v580 = vadd.f32 0.0, %v579
        %581 = vmatmul.bf16.gmra.mxu0 %v448
        %v582 = vpop.f32.mrf.mxu0
        %v583 = vadd.f32 0.0, %v582
        %v584 = vpop.f32.mrf.mxu0
        %v585 = vadd.f32 0.0, %v584
        %586 = vmatmul.bf16.gmra.mxu0 %v449
        %v587 = vpop.f32.mrf.mxu0
        %v588 = vadd.f32 0.0, %v587
        %v589 = vpop.f32.mrf.mxu0
        %v590 = vadd.f32 0.0, %v589
        %591 = vdwg.mxu0
        %v592 = vld [vmem:[%s402] sm:$0xf]
        %v593 = vld [vmem:[%s402 + $0x4] sm:$0xf]
        %v594 = vld [vmem:[%s3] sm:$0xff]
        %v595 = vld [vmem:[%s3 + $0x8] sm:$0xff]
        %v596 = vld [vmem:[%s3 + $0x10] sm:$0xff]
        %v597 = vld [vmem:[%s3 + $0x18] sm:$0xff]
        %v598 = vld [vmem:[%s3 + $0x20] sm:$0xff]
        %v599 = vld [vmem:[%s3 + $0x28] sm:$0xff]
        %v600 = vld [vmem:[%s3 + $0x30] sm:$0xff]
        %v601 = vld [vmem:[%s3 + $0x38] sm:$0xff]
        %v602 = vld [vmem:[%s3 + $0x40] sm:$0xff]
        %v603 = vld [vmem:[%s3 + $0x48] sm:$0xff]
        %v604 = vld [vmem:[%s3 + $0x50] sm:$0xff]
        %v605 = vld [vmem:[%s3 + $0x58] sm:$0xff]
        %v606 = vld [vmem:[%s3 + $0x60] sm:$0xff]
        %v607 = vld [vmem:[%s3 + $0x68] sm:$0xff]
        %v608 = vld [vmem:[%s3 + $0x70] sm:$0xff]
        %v609 = vld [vmem:[%s3 + $0x78] sm:$0xff]
        %v612 = vunpack.c.l.b16 %v592
        %v613 = vunpack.c.l.b16 %v593
        %v614 = vpack.c.b16 %v613, %v612
        %v632 = vunpack.c.l.b16 %v594
        %v633 = vunpack.c.h.b16 %v594
        %v634 = vunpack.c.l.b16 %v595
        %v635 = vunpack.c.h.b16 %v595
        %v636 = vunpack.c.l.b16 %v596
        %v637 = vunpack.c.h.b16 %v596
        %v638 = vunpack.c.l.b16 %v597
        %v639 = vunpack.c.h.b16 %v597
        %v640 = vunpack.c.l.b16 %v598
        %v641 = vunpack.c.h.b16 %v598
        %v642 = vunpack.c.l.b16 %v599
        %v643 = vunpack.c.h.b16 %v599
        %v644 = vunpack.c.l.b16 %v600
        %v645 = vunpack.c.h.b16 %v600
        %v646 = vunpack.c.l.b16 %v601
        %v647 = vunpack.c.h.b16 %v601
        %v648 = vunpack.c.l.b16 %v602
        %v649 = vunpack.c.h.b16 %v602
        %v650 = vunpack.c.l.b16 %v603
        %v651 = vunpack.c.h.b16 %v603
        %v652 = vunpack.c.l.b16 %v604
        %v653 = vunpack.c.h.b16 %v604
        %v654 = vunpack.c.l.b16 %v605
        %v655 = vunpack.c.h.b16 %v605
        %v656 = vunpack.c.l.b16 %v606
        %v657 = vunpack.c.h.b16 %v606
        %v658 = vunpack.c.l.b16 %v607
        %v659 = vunpack.c.h.b16 %v607
        %v660 = vunpack.c.l.b16 %v608
        %v661 = vunpack.c.h.b16 %v608
        %v662 = vunpack.c.l.b16 %v609
        %v663 = vunpack.c.h.b16 %v609
        %v664 = vpack.c.b16 %v634, %v632
        %v665 = vpack.c.b16 %v635, %v633
        %v666 = vpack.c.b16 %v638, %v636
        %v667 = vpack.c.b16 %v639, %v637
        %v668 = vpack.c.b16 %v642, %v640
        %v669 = vpack.c.b16 %v643, %v641
        %v670 = vpack.c.b16 %v646, %v644
        %v671 = vpack.c.b16 %v647, %v645
        %v672 = vpack.c.b16 %v650, %v648
        %v673 = vpack.c.b16 %v651, %v649
        %v674 = vpack.c.b16 %v654, %v652
        %v675 = vpack.c.b16 %v655, %v653
        %v676 = vpack.c.b16 %v658, %v656
        %v677 = vpack.c.b16 %v659, %v657
        %v678 = vpack.c.b16 %v662, %v660
        %v679 = vpack.c.b16 %v663, %v661
        %696 = vmatpush.bf16.msra.mxu0 %v678
        %697 = vmatpush.bf16.msra.mxu0 %v676
        %698 = vmatpush.bf16.msra.mxu0 %v674
        %699 = vmatpush.bf16.msra.mxu0 %v672
        %700 = vmatpush.bf16.msra.mxu0 %v670
        %701 = vmatpush.bf16.msra.mxu0 %v668
        %702 = vmatpush.bf16.msra.mxu0 %v666
        %703 = vmatpush.bf16.msra.mxu0 %v664
        %704 = vmatmul.bf16.gmra.mxu0 %v614
        %v705 = vpop.f32.mrf.mxu0
        %v706 = vadd.f32 0.0, %v705
        %v707 = vpop.f32.mrf.mxu0
        %v708 = vadd.f32 0.0, %v707
        %709 = vdwg.mxu0
        %710 = vmatpush.bf16.msra.mxu0 %v679
        %711 = vmatpush.bf16.msra.mxu0 %v677
        %712 = vmatpush.bf16.msra.mxu0 %v675
        %713 = vmatpush.bf16.msra.mxu0 %v673
        %714 = vmatpush.bf16.msra.mxu0 %v671
        %715 = vmatpush.bf16.msra.mxu0 %v669
        %716 = vmatpush.bf16.msra.mxu0 %v667
        %717 = vmatpush.bf16.msra.mxu0 %v665
        %718 = vmatmul.bf16.gmra.mxu0 %v614
        %v719 = vpop.f32.mrf.mxu0
        %v720 = vadd.f32 0.0, %v719
        %v721 = vpop.f32.mrf.mxu0
        %v722 = vadd.f32 0.0, %v721
        %723 = vdwg.mxu0
        %v724 = vadd.f32 %v544, %v706
        %v725 = vadd.f32 %v573, %v720
        %v726 = vadd.f32 %v546, %v708
        %v727 = vadd.f32 %v575, %v722
        %v728 = vadd.f32 %v549, %v706
        %v729 = vadd.f32 %v578, %v720
        %v730 = vadd.f32 %v551, %v708
        %v731 = vadd.f32 %v580, %v722
        %v732 = vadd.f32 %v554, %v706
        %v733 = vadd.f32 %v583, %v720
        %v734 = vadd.f32 %v556, %v708
        %v735 = vadd.f32 %v585, %v722
        %v736 = vadd.f32 %v559, %v706
        %v737 = vadd.f32 %v588, %v720
        %v738 = vadd.f32 %v561, %v708
        %v739 = vadd.f32 %v590, %v722
        %v740 = vmax.f32 %v724, %v728
        %v741 = vmax.f32 %v740, %v732
        %v742 = vmax.f32 %v741, %v736
        %v743 = vmax.f32 %v725, %v729
        %v744 = vmax.f32 %v743, %v733
        %v745 = vmax.f32 %v744, %v737
        %v746 = vmax.f32 %v726, %v730
        %v747 = vmax.f32 %v746, %v734
        %v748 = vmax.f32 %v747, %v738
        %v749 = vmax.f32 %v727, %v731
        %v750 = vmax.f32 %v749, %v735
        %v751 = vmax.f32 %v750, %v739
        %v752 = vld [vmem:[%s4] sm:$0x3]
        %v754 = vperm.slane %v752, 0
        %v755 = vperm.slane %v752, 1
        %v758 = vmul.f32 %v742, %v754
        %v759 = vmul.f32 %v745, %v755
        %v760 = vmul.f32 %v748, %v754
        %v761 = vmul.f32 %v751, %v755
        %v762 = vld [vmem:[%s5] sm:$0x3]
        %v764 = vperm.slane %v762, 0
        %v765 = vperm.slane %v762, 1
        %v768 = vadd.f32 %v758, %v764
        %v769 = vadd.f32 %v759, %v765
        %v770 = vadd.f32 %v760, %v764
        %v771 = vadd.f32 %v761, %v765
        %vm772 = vcmp.gt.f32.partialorder %v768, 0.0
        %vm773 = vcmp.gt.f32.partialorder %v769, 0.0
        %vm774 = vcmp.gt.f32.partialorder %v770, 0.0
        %vm775 = vcmp.gt.f32.partialorder %v771, 0.0
        %v776 = vmul.f32 %v768, 0.2
        %v777 = vmul.f32 %v769, 0.2
        %v778 = vmul.f32 %v770, 0.2
        %v779 = vmul.f32 %v771, 0.2
        %v780 = vsel %vm772, %v768, %v776
        %v781 = vsel %vm773, %v769, %v777
        %v782 = vsel %vm774, %v770, %v778
        %v783 = vsel %vm775, %v771, %v779
        %v784 = vpack.c.bf16 %v781, %v780
        %v785 = vpack.c.bf16 %v783, %v782
        %786 = vst [vmem:[%s383] sm:$0xff] %v784
        %787 = vst [vmem:[%s383 + $0x8] sm:$0xff] %v785
        %s788 = sand.u32 %s208, 1
        %s789 = sand.u32 %s208, 1
        %s790 = smul.addr %s789, 16
        %s791 = scalar_lea.vmem [#allocation3], %s790
        // Predicated region
        $region87: #{dgcnn_forward.17} parent=81 // pred_check
          %p792 = pneg %p218
        $region88: #{dgcnn_forward.17} parent=81 // pred_check_branch
          %794 = sbr.rel (%p792) target = $region90
        $region89: #{dgcnn_forward.17} parent=81 // pred_region
          %s795 = smul.u32 2, %s23
          %s796 = smul.addr %s795, 5
          %s797 = smul.addr %s22, 10
          %s798 = sadd.s32 %s796, %s797
          %s799 = smul.addr %s798, 4
          %s800 = scalar_lea.vmem %s7, %s799
          // Predicated region
          $region91: #{dgcnn_forward.17} parent=89 // pred_check
            _
          $region92: #{dgcnn_forward.17} parent=89 // pred_check_branch
            %802 = sbr.rel (0) target = $region94
          $region93: #{dgcnn_forward.17} parent=89 // pred_region
            // Predicated region
            $region95: #{dgcnn_forward.17} parent=93 // pred_check
              _
            $region96: #{dgcnn_forward.17} parent=93 // pred_check_branch
              %804 = sbr.rel (0) target = $region98
            $region97: #{dgcnn_forward.17} parent=93 // pred_region
              // Predicated region
              $region110: #{dgcnn_forward.17} parent=97 // pred_check
                _
              $region111: #{dgcnn_forward.17} parent=97 // pred_check_branch
                %822 = sbr.rel (0) target = $region113
              $region112: #{dgcnn_forward.17} parent=97 // pred_region
                loop: start=0, step=1, limit=1
                $region114: #{dgcnn_forward.17} parent=112 // loop_pre_header
                  _
                $region115: #{dgcnn_forward.17} parent=112 // loop_header
                  %s824 = sphi 0, %s828
                  %p825 = scmp.ge.s32.totalorder %s824, 1
                  %s829 = sphi %s791, %s791
                  %s830 = sphi %s800, %s800
                $region116: #{dgcnn_forward.17} parent=112 // loop_header_branch
                  %827 = sbr.rel (%p825) target = $region120
                $region117: #{dgcnn_forward.17} parent=112 // loop_body
                  %v831 = vld [vmem:[%s829] sm:$0xff]
                  %832 = vst [vmem:[%s830] sm:$0xff] %v831
                  %v833 = vld [vmem:[%s829 + $0x8] sm:$0xff]
                  %834 = vst [vmem:[%s830 + $0x14] sm:$0xff] %v833
                $region118: #{dgcnn_forward.17} parent=112 // loop_footer
                  %s828 = sadd.s32 1, %s824
                $region119: #{dgcnn_forward.17} parent=112 // loop_footer_branch
                  %823 = sbr.rel target = $region115
                $region120: #{dgcnn_forward.17} parent=112 // loop_exit
                  _
              $region113: #{dgcnn_forward.17} parent=97 // pred_fallthru
                _
              // Predicated region
              $region121: #{dgcnn_forward.17} parent=97 // pred_check
                _
              $region122: #{dgcnn_forward.17} parent=97 // pred_check_branch
                %836 = sbr.rel target = $region124
              $region123: #{dgcnn_forward.17} parent=97 // pred_region
                _
              $region124: #{dgcnn_forward.17} parent=97 // pred_fallthru
                _
            $region98: #{dgcnn_forward.17} parent=93 // pred_fallthru
              _
            // Predicated region
            $region99: #{dgcnn_forward.17} parent=93 // pred_check
              _
            $region100: #{dgcnn_forward.17} parent=93 // pred_check_branch
              %806 = sbr.rel target = $region102
            $region101: #{dgcnn_forward.17} parent=93 // pred_region
              %s808 = ssub.s32 256, 1
              loop: start=0, step=1, limit=1
              $region103: #{dgcnn_forward.17} parent=101 // loop_pre_header
                _
              $region104: #{dgcnn_forward.17} parent=101 // loop_header
                %s810 = sphi 0, %s814
                %p811 = scmp.ge.s32.totalorder %s810, 1
                %s815 = sphi %s791, %s791
                %s816 = sphi %s800, %s800
              $region105: #{dgcnn_forward.17} parent=101 // loop_header_branch
                %813 = sbr.rel (%p811) target = $region109
              $region106: #{dgcnn_forward.17} parent=101 // loop_body
                %v817 = vld [vmem:[%s815] sm:%s808]
                %818 = vst [vmem:[%s816] sm:%s808] %v817
                %v819 = vld [vmem:[%s815 + $0x8] sm:%s808]
                %820 = vst [vmem:[%s816 + $0x14] sm:%s808] %v819
              $region107: #{dgcnn_forward.17} parent=101 // loop_footer
                %s814 = sadd.s32 1, %s810
              $region108: #{dgcnn_forward.17} parent=101 // loop_footer_branch
                %809 = sbr.rel target = $region104
              $region109: #{dgcnn_forward.17} parent=101 // loop_exit
                _
            $region102: #{dgcnn_forward.17} parent=93 // pred_fallthru
              _
          $region94: #{dgcnn_forward.17} parent=89 // pred_fallthru
            _
          %837 = vnop
        $region90: #{dgcnn_forward.17} parent=81 // pred_fallthru
          _
      $region82: #{dgcnn_forward.17} parent=5 // pred_fallthru
        _
      %p838 = scmp.le.s32.totalorder 2, %s13
      // Predicated region
      $region125: #{dgcnn_forward.17} parent=5 // pred_check
        %p839 = pneg %p838
      $region126: #{dgcnn_forward.17} parent=5 // pred_check_branch
        %841 = sbr.rel (%p839) target = $region128
      $region127: #{dgcnn_forward.17} parent=5 // pred_region
        %s842 = ssub.s32 %s13, 2
        // Predicated region
        $region129: #{dgcnn_forward.17} parent=127 // pred_check
          %p843 = pneg %p224
        $region130: #{dgcnn_forward.17} parent=127 // pred_check_branch
          %845 = sbr.rel (%p843) target = $region132
        $region131: #{dgcnn_forward.17} parent=127 // pred_region
          %s846 = sand.u32 %s209, 1
          %s847 = sand.u32 %s209, 1
          %s848 = smul.addr %s847, 16
          %s849 = scalar_lea.vmem [#allocation3], %s848
        $region132: #{dgcnn_forward.17} parent=127 // pred_fallthru
          _
      $region128: #{dgcnn_forward.17} parent=5 // pred_fallthru
        _
    $region6: #{dgcnn_forward.17} parent=1 // loop_footer
      %s17 = sadd.s32 1, %s13
    $region7: #{dgcnn_forward.17} parent=1 // loop_footer_branch
      %12 = sbr.rel target = $region3
    $region8: #{dgcnn_forward.17} parent=1 // loop_exit
      _

// kernel: dgcnn_forward.18
$region0: #{dgcnn_forward.18}
  #allocation0 [shape = 'u32[]', space=smem, size = 0x4, offset = 0x4, fixed_abs, tag = 'smem constant byte address 0x4 - core index']
  #allocation1 [shape = 'u32[72,128]{1,0:T(1,128)}', space=vmem, size = 0x9000, scoped, tag = 'internal scratch']
  #allocation2 [shape = 'f32[1,64]{1,0:T(1,128)}', space=vmem, size = 0x200, scoped, tag = 'scratch operand']
  #allocation3 [shape = 'f32[1,64]{1,0:T(1,128)}', space=vmem, size = 0x200, scoped, tag = 'scratch operand']
  %s0 = inlined_call_operand.vmem [shape: bf16[2,16,640], index: 0, kind: input, shape index: {}]
  %s1 = inlined_call_operand.vmem [shape: bf16[640,64], index: 1, kind: input, shape index: {}]
  %s2 = inlined_call_operand.vmem [shape: f32[1,64], index: 2, kind: input, shape index: {}]
  %s3 = inlined_call_operand.vmem [shape: f32[1,64], index: 3, kind: input, shape index: {}]
  %s4 = inlined_call_operand.vmem [shape: bf16[2,1,128], index: 4, kind: output, shape index: {}]
  %s5 = sld [smem:[#allocation0]]
  $region57: #{dgcnn_forward.18} parent=0
    _
  %s7 = ssub.s32 1, %s5
  %s8 = scalar_select 0, %s7, %s5
  loop: start=0, step=1, limit=4
  $region2: #{dgcnn_forward.18} parent=0 // loop_pre_header
    _
  $region3: #{dgcnn_forward.18} parent=0 // loop_header
    %s10 = sphi 0, %s14
    %p11 = scmp.ge.s32.totalorder %s10, 4
    %s17 = sphi 0, %s29
    %s18 = sphi 0, %s25
    %s19 = sphi 0, %s17
    %s20 = sphi 0, %s18
    %s21 = sphi 0, %s19
    %s22 = sphi 0, %s20
    %s34 = sphi 0, %s36
    %s37 = sphi 0, %s34
    %s38 = sphi 0, %s37
    %s54 = sphi 0, %s38
    %s58 = sphi 0, %s58
    %s60 = sphi 0, %s58
    %s61 = sphi 0, %s60
    %s75 = sphi 0, %s61
    %s79 = sphi 0, %s79
    %s81 = sphi 0, %s79
    %s82 = sphi 0, %s81
    %s96 = sphi 0, %s82
    %s100 = sphi 0, %s100
    %s102 = sphi 0, %s100
    %s103 = sphi 0, %s102
    %s117 = sphi 0, %s103
    %s123 = sphi 0, %s125
    %s126 = sphi 0, %s123
    %s127 = sphi 0, %s126
    %s143 = sphi 0, %s127
  $region4: #{dgcnn_forward.18} parent=0 // loop_header_branch
    %13 = sbr.rel (%p11) target = $region8
  $region5: #{dgcnn_forward.18} parent=0 // loop_body
    %s15 = ssub.s32 %s10, 1
    %s16 = ssub.s32 %s10, 2
    %s23 = sadd.s32 1, %s18
    %p24 = scmp.ge.s32.totalorder %s23, 1
    %s25 = scalar_select %p24, 0, %s23
    %s26 = sadd.s32 1, %s17
    %s27 = scalar_select %p24, %s26, %s17
    %p28 = scmp.ge.s32.totalorder %s27, 2
    %s29 = scalar_select %p28, 0, %s27
    %s30 = ssub.s32 %s17, %s29
    %s31 = ssub.s32 %s18, %s25
    %s32 = sor.u32 %s30, %s31
    %p33 = scmp.eq.s32.totalorder %s32, 0
    %s35 = sadd.s32 %s34, 1
    %s36 = scalar_select %p33, %s34, %s35
    %p39 = pneg %p33
    %p40 = scmp.eq.s32.totalorder %s10, 1
    %p41 = por %p39, %p40
    %p42 = scmp.ne.s32.totalorder %s34, %s37
    %p43 = scmp.eq.s32.totalorder %s10, 0
    %p44 = por %p42, %p43
    %p45 = scmp.ne.s32.totalorder %s34, %s37
    %p46 = scmp.eq.s32.totalorder %s15, 1
    %p47 = por %p45, %p46
    %p48 = scmp.ne.s32.totalorder %s37, %s38
    %p49 = scmp.eq.s32.totalorder %s15, 0
    %p50 = por %p48, %p49
    %p51 = scmp.ne.s32.totalorder %s37, %s38
    %p52 = scmp.eq.s32.totalorder %s16, 1
    %p53 = por %p51, %p52
    %p55 = scmp.ne.s32.totalorder %s38, %s54
    %p56 = scmp.eq.s32.totalorder %s16, 0
    %p57 = por %p55, %p56
    %s59 = sadd.s32 %s58, 1
    %p62 = scmp.eq.s32.totalorder %s10, 1
    %p63 = scmp.ne.s32.totalorder %s58, %s60
    %p64 = scmp.eq.s32.totalorder %s10, 0
    %p65 = por %p63, %p64
    %p66 = scmp.ne.s32.totalorder %s58, %s60
    %p67 = scmp.eq.s32.totalorder %s15, 1
    %p68 = por %p66, %p67
    %p69 = scmp.ne.s32.totalorder %s60, %s61
    %p70 = scmp.eq.s32.totalorder %s15, 0
    %p71 = por %p69, %p70
    %p72 = scmp.ne.s32.totalorder %s60, %s61
    %p73 = scmp.eq.s32.totalorder %s16, 1
    %p74 = por %p72, %p73
    %p76 = scmp.ne.s32.totalorder %s61, %s75
    %p77 = scmp.eq.s32.totalorder %s16, 0
    %p78 = por %p76, %p77
    %s80 = sadd.s32 %s79, 1
    %p83 = scmp.eq.s32.totalorder %s10, 1
    %p84 = scmp.ne.s32.totalorder %s79, %s81
    %p85 = scmp.eq.s32.totalorder %s10, 0
    %p86 = por %p84, %p85
    %p87 = scmp.ne.s32.totalorder %s79, %s81
    %p88 = scmp.eq.s32.totalorder %s15, 1
    %p89 = por %p87, %p88
    %p90 = scmp.ne.s32.totalorder %s81, %s82
    %p91 = scmp.eq.s32.totalorder %s15, 0
    %p92 = por %p90, %p91
    %p93 = scmp.ne.s32.totalorder %s81, %s82
    %p94 = scmp.eq.s32.totalorder %s16, 1
    %p95 = por %p93, %p94
    %p97 = scmp.ne.s32.totalorder %s82, %s96
    %p98 = scmp.eq.s32.totalorder %s16, 0
    %p99 = por %p97, %p98
    %s101 = sadd.s32 %s100, 1
    %p104 = scmp.eq.s32.totalorder %s10, 1
    %p105 = scmp.ne.s32.totalorder %s100, %s102
    %p106 = scmp.eq.s32.totalorder %s10, 0
    %p107 = por %p105, %p106
    %p108 = scmp.ne.s32.totalorder %s100, %s102
    %p109 = scmp.eq.s32.totalorder %s15, 1
    %p110 = por %p108, %p109
    %p111 = scmp.ne.s32.totalorder %s102, %s103
    %p112 = scmp.eq.s32.totalorder %s15, 0
    %p113 = por %p111, %p112
    %p114 = scmp.ne.s32.totalorder %s102, %s103
    %p115 = scmp.eq.s32.totalorder %s16, 1
    %p116 = por %p114, %p115
    %p118 = scmp.ne.s32.totalorder %s103, %s117
    %p119 = scmp.eq.s32.totalorder %s16, 0
    %p120 = por %p118, %p119
    %s121 = ssub.s32 %s17, %s29
    %p122 = scmp.eq.s32.totalorder %s121, 0
    %s124 = sadd.s32 %s123, 1
    %s125 = scalar_select %p122, %s123, %s124
    %p128 = pneg %p122
    %p129 = scmp.eq.s32.totalorder %s10, 1
    %p130 = por %p128, %p129
    %p131 = scmp.ne.s32.totalorder %s123, %s126
    %p132 = scmp.eq.s32.totalorder %s10, 0
    %p133 = por %p131, %p132
    %p134 = scmp.ne.s32.totalorder %s123, %s126
    %p135 = scmp.eq.s32.totalorder %s15, 1
    %p136 = por %p134, %p135
    %p137 = scmp.ne.s32.totalorder %s126, %s127
    %p138 = scmp.eq.s32.totalorder %s15, 0
    %p139 = por %p137, %p138
    %p140 = scmp.ne.s32.totalorder %s126, %s127
    %p141 = scmp.eq.s32.totalorder %s16, 1
    %p142 = por %p140, %p141
    %p144 = scmp.ne.s32.totalorder %s127, %s143
    %p145 = scmp.eq.s32.totalorder %s16, 0
    %p146 = por %p144, %p145
    %p147 = scmp.le.s32.totalorder 1, %s10
    %p148 = scmp.lt.s32.totalorder %s10, 3
    %p149 = pnand %p147, %p148
    %p150 = pneg %p149
    // Predicated region
    $region9: #{dgcnn_forward.18} parent=5 // pred_check
      _
    $region10: #{dgcnn_forward.18} parent=5 // pred_check_branch
      %152 = sbr.rel (%p149) target = $region12
    $region11: #{dgcnn_forward.18} parent=5 // pred_region
      %s153 = ssub.s32 %s10, 1
      // Predicated region
      $region13: #{dgcnn_forward.18} parent=11 // pred_check
        %p154 = pneg %p71
      $region14: #{dgcnn_forward.18} parent=11 // pred_check_branch
        %156 = sbr.rel (%p154) target = $region16
      $region15: #{dgcnn_forward.18} parent=11 // pred_region
        _
      $region16: #{dgcnn_forward.18} parent=11 // pred_fallthru
        _
      // Predicated region
      $region17: #{dgcnn_forward.18} parent=11 // pred_check
        %p157 = pneg %p92
      $region18: #{dgcnn_forward.18} parent=11 // pred_check_branch
        %159 = sbr.rel (%p157) target = $region20
      $region19: #{dgcnn_forward.18} parent=11 // pred_region
        _
      $region20: #{dgcnn_forward.18} parent=11 // pred_fallthru
        _
      // Predicated region
      $region21: #{dgcnn_forward.18} parent=11 // pred_check
        %p160 = pneg %p113
      $region22: #{dgcnn_forward.18} parent=11 // pred_check_branch
        %162 = sbr.rel (%p160) target = $region24
      $region23: #{dgcnn_forward.18} parent=11 // pred_region
        _
      $region24: #{dgcnn_forward.18} parent=11 // pred_fallthru
        _
    $region12: #{dgcnn_forward.18} parent=5 // pred_fallthru
      _
    %p163 = scmp.lt.s32.totalorder %s10, 2
    // Predicated region
    $region25: #{dgcnn_forward.18} parent=5 // pred_check
      %p164 = pneg %p163
    $region26: #{dgcnn_forward.18} parent=5 // pred_check_branch
      %166 = sbr.rel (%p164) target = $region28
    $region27: #{dgcnn_forward.18} parent=5 // pred_region
      // Predicated region
      $region29: #{dgcnn_forward.18} parent=27 // pred_check
        %p167 = pneg %p44
      $region30: #{dgcnn_forward.18} parent=27 // pred_check_branch
        %169 = sbr.rel (%p167) target = $region32
      $region31: #{dgcnn_forward.18} parent=27 // pred_region
        %s170 = smul.u32 2, %s18
        %p171 = scmp.lt.s32.totalorder %s17, 1
        %s172 = scalar_select %p171, %s17, 1
        %p173 = scmp.lt.s32.totalorder %s170, 1
        %s174 = scalar_select %p173, %s170, 1
        %s175 = smul.addr %s174, 5
        %s176 = smul.addr %s172, 10
        %s177 = sadd.s32 %s175, %s176
        %s178 = smul.addr %s177, 4
        %s179 = scalar_lea.vmem %s0, %s178
        %s180 = smul.u32 2, %s18
      $region32: #{dgcnn_forward.18} parent=27 // pred_fallthru
        _
    $region28: #{dgcnn_forward.18} parent=5 // pred_fallthru
      _
    %p181 = scmp.le.s32.totalorder 1, %s10
    %p182 = scmp.lt.s32.totalorder %s10, 3
    %p183 = pnand %p181, %p182
    %p184 = pneg %p183
    // Predicated region
    $region33: #{dgcnn_forward.18} parent=5 // pred_check
      _
    $region34: #{dgcnn_forward.18} parent=5 // pred_check_branch
      %186 = sbr.rel (%p183) target = $region36
    $region35: #{dgcnn_forward.18} parent=5 // pred_region
      %s187 = ssub.s32 %s10, 1
      %s188 = smul.u32 2, %s20
      %p189 = scmp.lt.s32.totalorder %s19, 1
      %s190 = scalar_select %p189, %s19, 1
      %p191 = scmp.lt.s32.totalorder %s188, 1
      %s192 = scalar_select %p191, %s188, 1
      %s193 = smul.addr %s192, 5
      %s194 = smul.addr %s190, 10
      %s195 = sadd.s32 %s193, %s194
      %s196 = smul.addr %s195, 4
      %s197 = scalar_lea.vmem %s0, %s196
      %p198 = pneg %p50
      %p199 = pneg %p47
      %p200 = pneg %p71
      %p201 = pneg %p68
      %p202 = pneg %p92
      %p203 = pneg %p89
      %p204 = pneg %p113
      %p205 = pneg %p110
      %p206 = pneg %p139
      %p207 = pneg %p136
      %p208 = scmp.lt.s32.totalorder %s19, 1
      %s209 = scalar_select %p208, %s19, 1
      %s210 = scalar_lea.vmem %s4, %s209
      %s211 = smul.u32 2, %s20
      %p212 = scmp.lt.s32.totalorder %s19, 1
      %s213 = scalar_select %p212, %s19, 1
      %p214 = scmp.lt.s32.totalorder %s211, 1
      %s215 = scalar_select %p214, %s211, 1
      %s216 = smul.addr %s215, 5
      %s217 = smul.addr %s213, 10
      %s218 = sadd.s32 %s216, %s217
      %s219 = smul.addr %s218, 4
      %s220 = scalar_lea.vmem %s0, %s219
      %s221 = smul.u32 2, %s20
      %p222 = scmp.lt.s32.totalorder %s19, 1
      %s223 = scalar_select %p222, %s19, 1
      %s224 = scalar_lea.vmem %s4, %s223
      %p225 = scmp.eq.s32.totalorder %s20, 0
      // Predicated region
      $region37: #{dgcnn_forward.18} parent=35 // pred_check
        %p226 = pneg %p225
      $region38: #{dgcnn_forward.18} parent=35 // pred_check_branch
        %228 = sbr.rel (%p226) target = $region40
      $region39: #{dgcnn_forward.18} parent=35 // pred_region
        %vm229 = vcmask 516096
        %230 = vst.msk [vmem:[#allocation2] sm:$0x1] %vm229, -inf
        %231 = vst.msk [vmem:[#allocation3] sm:$0x1] %vm229, 0.0
      $region40: #{dgcnn_forward.18} parent=35 // pred_fallthru
        _
      %v232 = vld [vmem:[%s220] sm:$0xff]
      %v233 = vld [vmem:[%s220 + $0x8] sm:$0xff]
      %v234 = vld [vmem:[%s220 + $0x10] sm:$0xf]
      %v235 = vld [vmem:[%s220 + $0x14] sm:$0xff]
      %v236 = vld [vmem:[%s220 + $0x1c] sm:$0xff]
      %v237 = vld [vmem:[%s220 + $0x24] sm:$0xf]
      %v238 = vld [vmem:[%s1] sm:$0xf]
      %v239 = vld [vmem:[%s1 + $0x4] sm:$0xf]
      %v240 = vld [vmem:[%s1 + $0x8] sm:$0xf]
      %v241 = vld [vmem:[%s1 + $0xc] sm:$0xf]
      %v242 = vld [vmem:[%s1 + $0x10] sm:$0xf]
      %v243 = vld [vmem:[%s1 + $0x14] sm:$0xf]
      %v244 = vld [vmem:[%s1 + $0x18] sm:$0xf]
      %v245 = vld [vmem:[%s1 + $0x1c] sm:$0xf]
      %v246 = vld [vmem:[%s1 + $0x20] sm:$0xf]
      %v247 = vld [vmem:[%s1 + $0x24] sm:$0xf]
      %v248 = vld [vmem:[%s1 + $0x28] sm:$0xf]
      %v249 = vld [vmem:[%s1 + $0x2c] sm:$0xf]
      %v250 = vld [vmem:[%s1 + $0x30] sm:$0xf]
      %v251 = vld [vmem:[%s1 + $0x34] sm:$0xf]
      %v252 = vld [vmem:[%s1 + $0x38] sm:$0xf]
      %v253 = vld [vmem:[%s1 + $0x3c] sm:$0xf]
      %v254 = vld [vmem:[%s1 + $0x40] sm:$0xf]
      %v255 = vld [vmem:[%s1 + $0x44] sm:$0xf]
      %v256 = vld [vmem:[%s1 + $0x48] sm:$0xf]
      %v257 = vld [vmem:[%s1 + $0x4c] sm:$0xf]
      %v258 = vld [vmem:[%s1 + $0x50] sm:$0xf]
      %v259 = vld [vmem:[%s1 + $0x54] sm:$0xf]
      %v260 = vld [vmem:[%s1 + $0x58] sm:$0xf]
      %v261 = vld [vmem:[%s1 + $0x5c] sm:$0xf]
      %v262 = vld [vmem:[%s1 + $0x60] sm:$0xf]
      %v263 = vld [vmem:[%s1 + $0x64] sm:$0xf]
      %v264 = vld [vmem:[%s1 + $0x68] sm:$0xf]
      %v265 = vld [vmem:[%s1 + $0x6c] sm:$0xf]
      %v266 = vld [vmem:[%s1 + $0x70] sm:$0xf]
      %v267 = vld [vmem:[%s1 + $0x74] sm:$0xf]
      %v268 = vld [vmem:[%s1 + $0x78] sm:$0xf]
      %v269 = vld [vmem:[%s1 + $0x7c] sm:$0xf]
      %v270 = vld [vmem:[%s1 + $0x80] sm:$0xf]
      %v271 = vld [vmem:[%s1 + $0x84] sm:$0xf]
      %v272 = vld [vmem:[%s1 + $0x88] sm:$0xf]
      %v273 = vld [vmem:[%s1 + $0x8c] sm:$0xf]
      %v274 = vld [vmem:[%s1 + $0x90] sm:$0xf]
      %v275 = vld [vmem:[%s1 + $0x94] sm:$0xf]
      %v276 = vld [vmem:[%s1 + $0x98] sm:$0xf]
      %v277 = vld [vmem:[%s1 + $0x9c] sm:$0xf]
      %v278 = vld [vmem:[%s1 + $0xa0] sm:$0xf]
      %v279 = vld [vmem:[%s1 + $0xa4] sm:$0xf]
      %v280 = vld [vmem:[%s1 + $0xa8] sm:$0xf]
      %v281 = vld [vmem:[%s1 + $0xac] sm:$0xf]
      %v282 = vld [vmem:[%s1 + $0xb0] sm:$0xf]
      %v283 = vld [vmem:[%s1 + $0xb4] sm:$0xf]
      %v284 = vld [vmem:[%s1 + $0xb8] sm:$0xf]
      %v285 = vld [vmem:[%s1 + $0xbc] sm:$0xf]
      %v286 = vld [vmem:[%s1 + $0xc0] sm:$0xf]
      %v287 = vld [vmem:[%s1 + $0xc4] sm:$0xf]
      %v288 = vld [vmem:[%s1 + $0xc8] sm:$0xf]
      %v289 = vld [vmem:[%s1 + $0xcc] sm:$0xf]
      %v290 = vld [vmem:[%s1 + $0xd0] sm:$0xf]
      %v291 = vld [vmem:[%s1 + $0xd4] sm:$0xf]
      %v292 = vld [vmem:[%s1 + $0xd8] sm:$0xf]
      %v293 = vld [vmem:[%s1 + $0xdc] sm:$0xf]
      %v294 = vld [vmem:[%s1 + $0xe0] sm:$0xf]
      %v295 = vld [vmem:[%s1 + $0xe4] sm:$0xf]
      %v296 = vld [vmem:[%s1 + $0xe8] sm:$0xf]
      %v297 = vld [vmem:[%s1 + $0xec] sm:$0xf]
      %v298 = vld [vmem:[%s1 + $0xf0] sm:$0xf]
      %v299 = vld [vmem:[%s1 + $0xf4] sm:$0xf]
      %v300 = vld [vmem:[%s1 + $0xf8] sm:$0xf]
      %v301 = vld [vmem:[%s1 + $0xfc] sm:$0xf]
      %v302 = vld [vmem:[%s1 + $0x100] sm:$0xf]
      %v303 = vld [vmem:[%s1 + $0x104] sm:$0xf]
      %v304 = vld [vmem:[%s1 + $0x108] sm:$0xf]
      %v305 = vld [vmem:[%s1 + $0x10c] sm:$0xf]
      %v306 = vld [vmem:[%s1 + $0x110] sm:$0xf]
      %v307 = vld [vmem:[%s1 + $0x114] sm:$0xf]
      %v308 = vld [vmem:[%s1 + $0x118] sm:$0xf]
      %v309 = vld [vmem:[%s1 + $0x11c] sm:$0xf]
      %v310 = vld [vmem:[%s1 + $0x120] sm:$0xf]
      %v311 = vld [vmem:[%s1 + $0x124] sm:$0xf]
      %v312 = vld [vmem:[%s1 + $0x128] sm:$0xf]
      %v313 = vld [vmem:[%s1 + $0x12c] sm:$0xf]
      %v314 = vld [vmem:[%s1 + $0x130] sm:$0xf]
      %v315 = vld [vmem:[%s1 + $0x134] sm:$0xf]
      %v316 = vld [vmem:[%s1 + $0x138] sm:$0xf]
      %v317 = vld [vmem:[%s1 + $0x13c] sm:$0xf]
      %v324 = vunpack.c.l.b16 %v232
      %v325 = vunpack.c.h.b16 %v232
      %v326 = vunpack.c.l.b16 %v233
      %v327 = vunpack.c.h.b16 %v233
      %v328 = vunpack.c.l.b16 %v234
      %v329 = vunpack.c.l.b16 %v235
      %v330 = vunpack.c.h.b16 %v235
      %v331 = vunpack.c.l.b16 %v236
      %v332 = vunpack.c.h.b16 %v236
      %v333 = vunpack.c.l.b16 %v237
      %v334 = vpack.c.b16 %v329, %v324
      %v335 = vpack.c.b16 %v330, %v325
      %v336 = vpack.c.b16 %v331, %v326
      %v337 = vpack.c.b16 %v332, %v327
      %v338 = vpack.c.b16 %v333, %v328
      %v424 = vunpack.c.l.b16 %v238
      %v425 = vunpack.c.l.b16 %v239
      %v426 = vunpack.c.l.b16 %v240
      %v427 = vunpack.c.l.b16 %v241
      %v428 = vunpack.c.l.b16 %v242
      %v429 = vunpack.c.l.b16 %v243
      %v430 = vunpack.c.l.b16 %v244
      %v431 = vunpack.c.l.b16 %v245
      %v432 = vunpack.c.l.b16 %v246
      %v433 = vunpack.c.l.b16 %v247
      %v434 = vunpack.c.l.b16 %v248
      %v435 = vunpack.c.l.b16 %v249
      %v436 = vunpack.c.l.b16 %v250
      %v437 = vunpack.c.l.b16 %v251
      %v438 = vunpack.c.l.b16 %v252
      %v439 = vunpack.c.l.b16 %v253
      %v440 = vunpack.c.l.b16 %v254
      %v441 = vunpack.c.l.b16 %v255
      %v442 = vunpack.c.l.b16 %v256
      %v443 = vunpack.c.l.b16 %v257
      %v444 = vunpack.c.l.b16 %v258
      %v445 = vunpack.c.l.b16 %v259
      %v446 = vunpack.c.l.b16 %v260
      %v447 = vunpack.c.l.b16 %v261
      %v448 = vunpack.c.l.b16 %v262
      %v449 = vunpack.c.l.b16 %v263
      %v450 = vunpack.c.l.b16 %v264
      %v451 = vunpack.c.l.b16 %v265
      %v452 = vunpack.c.l.b16 %v266
      %v453 = vunpack.c.l.b16 %v267
      %v454 = vunpack.c.l.b16 %v268
      %v455 = vunpack.c.l.b16 %v269
      %v456 = vunpack.c.l.b16 %v270
      %v457 = vunpack.c.l.b16 %v271
      %v458 = vunpack.c.l.b16 %v272
      %v459 = vunpack.c.l.b16 %v273
      %v460 = vunpack.c.l.b16 %v274
      %v461 = vunpack.c.l.b16 %v275
      %v462 = vunpack.c.l.b16 %v276
      %v463 = vunpack.c.l.b16 %v277
      %v464 = vunpack.c.l.b16 %v278
      %v465 = vunpack.c.l.b16 %v279
      %v466 = vunpack.c.l.b16 %v280
      %v467 = vunpack.c.l.b16 %v281
      %v468 = vunpack.c.l.b16 %v282
      %v469 = vunpack.c.l.b16 %v283
      %v470 = vunpack.c.l.b16 %v284
      %v471 = vunpack.c.l.b16 %v285
      %v472 = vunpack.c.l.b16 %v286
      %v473 = vunpack.c.l.b16 %v287
      %v474 = vunpack.c.l.b16 %v288
      %v475 = vunpack.c.l.b16 %v289
      %v476 = vunpack.c.l.b16 %v290
      %v477 = vunpack.c.l.b16 %v291
      %v478 = vunpack.c.l.b16 %v292
      %v479 = vunpack.c.l.b16 %v293
      %v480 = vunpack.c.l.b16 %v294
      %v481 = vunpack.c.l.b16 %v295
      %v482 = vunpack.c.l.b16 %v296
      %v483 = vunpack.c.l.b16 %v297
      %v484 = vunpack.c.l.b16 %v298
      %v485 = vunpack.c.l.b16 %v299
      %v486 = vunpack.c.l.b16 %v300
      %v487 = vunpack.c.l.b16 %v301
      %v488 = vunpack.c.l.b16 %v302
      %v489 = vunpack.c.l.b16 %v303
      %v490 = vunpack.c.l.b16 %v304
      %v491 = vunpack.c.l.b16 %v305
      %v492 = vunpack.c.l.b16 %v306
      %v493 = vunpack.c.l.b16 %v307
      %v494 = vunpack.c.l.b16 %v308
      %v495 = vunpack.c.l.b16 %v309
      %v496 = vunpack.c.l.b16 %v310
      %v497 = vunpack.c.l.b16 %v311
      %v498 = vunpack.c.l.b16 %v312
      %v499 = vunpack.c.l.b16 %v313
      %v500 = vunpack.c.l.b16 %v314
      %v501 = vunpack.c.l.b16 %v315
      %v502 = vunpack.c.l.b16 %v316
      %v503 = vunpack.c.l.b16 %v317
      %v504 = vpack.c.b16 %v425, %v424
      %v505 = vpack.c.b16 %v427, %v426
      %v506 = vpack.c.b16 %v429, %v428
      %v507 = vpack.c.b16 %v431, %v430
      %v508 = vpack.c.b16 %v433, %v432
      %v509 = vpack.c.b16 %v435, %v434
      %v510 = vpack.c.b16 %v437, %v436
      %v511 = vpack.c.b16 %v439, %v438
      %v512 = vpack.c.b16 %v441, %v440
      %v513 = vpack.c.b16 %v443, %v442
      %v514 = vpack.c.b16 %v445, %v444
      %v515 = vpack.c.b16 %v447, %v446
      %v516 = vpack.c.b16 %v449, %v448
      %v517 = vpack.c.b16 %v451, %v450
      %v518 = vpack.c.b16 %v453, %v452
      %v519 = vpack.c.b16 %v455, %v454
      %v520 = vpack.c.b16 %v457, %v456
      %v521 = vpack.c.b16 %v459, %v458
      %v522 = vpack.c.b16 %v461, %v460
      %v523 = vpack.c.b16 %v463, %v462
      %v524 = vpack.c.b16 %v465, %v464
      %v525 = vpack.c.b16 %v467, %v466
      %v526 = vpack.c.b16 %v469, %v468
      %v527 = vpack.c.b16 %v471, %v470
      %v528 = vpack.c.b16 %v473, %v472
      %v529 = vpack.c.b16 %v475, %v474
      %v530 = vpack.c.b16 %v477, %v476
      %v531 = vpack.c.b16 %v479, %v478
      %v532 = vpack.c.b16 %v481, %v480
      %v533 = vpack.c.b16 %v483, %v482
      %v534 = vpack.c.b16 %v485, %v484
      %v535 = vpack.c.b16 %v487, %v486
      %v536 = vpack.c.b16 %v489, %v488
      %v537 = vpack.c.b16 %v491, %v490
      %v538 = vpack.c.b16 %v493, %v492
      %v539 = vpack.c.b16 %v495, %v494
      %v540 = vpack.c.b16 %v497, %v496
      %v541 = vpack.c.b16 %v499, %v498
      %v542 = vpack.c.b16 %v501, %v500
      %v543 = vpack.c.b16 %v503, %v502
      %584 = vmatpush.bf16.msra.mxu0 %v511
      %585 = vmatpush.bf16.msra.mxu0 %v510
      %586 = vmatpush.bf16.msra.mxu0 %v509
      %587 = vmatpush.bf16.msra.mxu0 %v508
      %588 = vmatpush.bf16.msra.mxu0 %v507
      %589 = vmatpush.bf16.msra.mxu0 %v506
      %590 = vmatpush.bf16.msra.mxu0 %v505
      %591 = vmatpush.bf16.msra.mxu0 %v504
      %592 = vmatmul.bf16.gmra.mxu0 %v334
      %v593 = vpop.f32.mrf.mxu0
      %v594 = vadd.f32 0.0, %v593
      %v595 = vpop.f32.mrf.mxu0
      %v596 = vadd.f32 0.0, %v595
      %597 = vdwg.mxu0
      %598 = vmatpush.bf16.msra.mxu0 %v519
      %599 = vmatpush.bf16.msra.mxu0 %v518
      %600 = vmatpush.bf16.msra.mxu0 %v517
      %601 = vmatpush.bf16.msra.mxu0 %v516
      %602 = vmatpush.bf16.msra.mxu0 %v515
      %603 = vmatpush.bf16.msra.mxu0 %v514
      %604 = vmatpush.bf16.msra.mxu0 %v513
      %605 = vmatpush.bf16.msra.mxu0 %v512
      %606 = vmatmul.bf16.gmra.mxu0 %v335
      %v607 = vpop.f32.mrf.mxu0
      %v608 = vadd.f32 %v594, %v607
      %v609 = vpop.f32.mrf.mxu0
      %v610 = vadd.f32 %v596, %v609
      %611 = vdwg.mxu0
      %612 = vmatpush.bf16.msra.mxu0 %v527
      %613 = vmatpush.bf16.msra.mxu0 %v526
      %614 = vmatpush.bf16.msra.mxu0 %v525
      %615 = vmatpush.bf16.msra.mxu0 %v524
      %616 = vmatpush.bf16.msra.mxu0 %v523
      %617 = vmatpush.bf16.msra.mxu0 %v522
      %618 = vmatpush.bf16.msra.mxu0 %v521
      %619 = vmatpush.bf16.msra.mxu0 %v520
      %620 = vmatmul.bf16.gmra.mxu0 %v336
      %v621 = vpop.f32.mrf.mxu0
      %v622 = vadd.f32 %v608, %v621
      %v623 = vpop.f32.mrf.mxu0
      %v624 = vadd.f32 %v610, %v623
      %625 = vdwg.mxu0
      %626 = vmatpush.bf16.msra.mxu0 %v535
      %627 = vmatpush.bf16.msra.mxu0 %v534
      %628 = vmatpush.bf16.msra.mxu0 %v533
      %629 = vmatpush.bf16.msra.mxu0 %v532
      %630 = vmatpush.bf16.msra.mxu0 %v531
      %631 = vmatpush.bf16.msra.mxu0 %v530
      %632 = vmatpush.bf16.msra.mxu0 %v529
      %633 = vmatpush.bf16.msra.mxu0 %v528
      %634 = vmatmul.bf16.gmra.mxu0 %v337
      %v635 = vpop.f32.mrf.mxu0
      %v636 = vadd.f32 %v622, %v635
      %v637 = vpop.f32.mrf.mxu0
      %v638 = vadd.f32 %v624, %v637
      %639 = vdwg.mxu0
      %640 = vmatpush.bf16.msra.mxu0 %v543
      %641 = vmatpush.bf16.msra.mxu0 %v542
      %642 = vmatpush.bf16.msra.mxu0 %v541
      %643 = vmatpush.bf16.msra.mxu0 %v540
      %644 = vmatpush.bf16.msra.mxu0 %v539
      %645 = vmatpush.bf16.msra.mxu0 %v538
      %646 = vmatpush.bf16.msra.mxu0 %v537
      %647 = vmatpush.bf16.msra.mxu0 %v536
      %648 = vmatmul.bf16.gmra.mxu0 %v338
      %v649 = vpop.f32.mrf.mxu0
      %v650 = vadd.f32 %v636, %v649
      %v651 = vpop.f32.mrf.mxu0
      %v652 = vadd.f32 %v638, %v651
      %653 = vdwg.mxu0
      %v654 = vld [vmem:[%s2] sm:$0x1]
      %v656 = vperm.slane %v654, 0
      %v658 = vmul.f32 %v650, %v656
      %v659 = vmul.f32 %v652, %v656
      %v660 = vld [vmem:[%s3] sm:$0x1]
      %v662 = vperm.slane %v660, 0
      %v664 = vadd.f32 %v658, %v662
      %v665 = vadd.f32 %v659, %v662
      %vm666 = vcmp.gt.f32.partialorder %v664, 0.0
      %vm667 = vcmp.gt.f32.partialorder %v665, 0.0
      %v668 = vmul.f32 %v664, 0.2
      %v669 = vmul.f32 %v665, 0.2
      %v670 = vsel %vm666, %v664, %v668
      %v671 = vsel %vm667, %v665, %v669
      %s672 = smul.u32 %s20, 16
      %v673 = vlaneseq
      %v674 = vshrl.u32 %v673, 7
      %v675 = vadd.s32 %v674, 8
      %v676 = vstv %s672
      %v677 = vadd.s32 %v676, %v674
      %v678 = vadd.s32 %v676, %v675
      %vm679 = vcmp.lt.s32.totalorder %v677, 16
      %vm680 = vcmp.lt.s32.totalorder %v678, 16
      %v681 = vld [vmem:[#allocation2] sm:$0x1]
      %v682 = vsel %vm679, 1, 0
      %v683 = vsel %vm680, 1, 0
      %vm684 = vcmp.eq.s32.totalorder %v682, 1
      %vm685 = vcmp.eq.s32.totalorder %v683, 1
      %v686 = vsel %vm684, %v670, -inf
      %v687 = vsel %vm685, %v671, -inf
      %vm688 = vcmask 523264
      %v689 = vsel %vm688, %v686, -inf
      %v690 = vsel %vm688, %v687, -inf
      %v691 = vmax.f32 %v689, %v690
      %v692 = vrot.slane %v691, 4
      %v693 = vmax.f32 %v691, %v692
      %v694 = vrot.slane %v693, 2
      %v695 = vmax.f32 %v693, %v694
      %v696 = vrot.slane %v695, 1
      %v697 = vmax.f32 %v695, %v696
      %v698 = vmax.f32 %v681, %v697
      %vm699 = vcmask 516096
      %700 = vst.msk [vmem:[#allocation2] sm:$0x1] %vm699, %v698
      %v701 = vld [vmem:[#allocation3] sm:$0x1]
      %v702 = vsel %vm684, %v670, 0.0
      %v703 = vsel %vm685, %v671, 0.0
      %v704 = vsel %vm688, %v702, 0.0
      %v705 = vsel %vm688, %v703, 0.0
      %v706 = vadd.f32 %v704, %v705
      %v707 = vrot.slane %v706, 4
      %v708 = vadd.f32 %v706, %v707
      %v709 = vrot.slane %v708, 2
      %v710 = vadd.f32 %v708, %v709
      %v711 = vrot.slane %v710, 1
      %v712 = vadd.f32 %v710, %v711
      %v713 = vadd.f32 %v701, %v712
      %714 = vst.msk [vmem:[#allocation3] sm:$0x1] %vm699, %v713
      // Predicated region
      $region41: #{dgcnn_forward.18} parent=35 // pred_check
        %p715 = pneg %p225
      $region42: #{dgcnn_forward.18} parent=35 // pred_check_branch
        %717 = sbr.rel (%p715) target = $region44
      $region43: #{dgcnn_forward.18} parent=35 // pred_region
        %v718 = vld [vmem:[#allocation2] sm:$0x1]
        %v719 = vld [vmem:[#allocation3] sm:$0x1]
        %v720 = vmul.f32 %v719, 0.0625
        %v722 = vperm.slane %v720, 0
        %723 = vrot.lane.b32.xlu0 %v722, 64
        %v724 = vpop.permute.xlu0 %723
        %v726 = vsel %vm688, %v718, %v724
        %v727 = vpack.c.bf16 %v726, %v726
        %vm728 = vcmask 1040384
        %vm729 = vsmask.f32 256
        %vm730 = vmand %vm728, %vm729
        %v731 = vld [vmem:[%s224] sm:$0x1]
        %v732 = vsel %vm730, %v727, %v731
        %733 = vst [vmem:[%s224] sm:$0x1] %v732
      $region44: #{dgcnn_forward.18} parent=35 // pred_fallthru
        _
      %p734 = scmp.lt.s32.totalorder %s19, 1
      %s735 = scalar_select %p734, %s19, 1
      %s736 = scalar_lea.vmem %s4, %s735
      // Predicated region
      $region45: #{dgcnn_forward.18} parent=35 // pred_check
        %p737 = pneg %p136
      $region46: #{dgcnn_forward.18} parent=35 // pred_check_branch
        %739 = sbr.rel (%p737) target = $region48
      $region47: #{dgcnn_forward.18} parent=35 // pred_region
        _
      $region48: #{dgcnn_forward.18} parent=35 // pred_fallthru
        _
    $region36: #{dgcnn_forward.18} parent=5 // pred_fallthru
      _
    %p740 = scmp.le.s32.totalorder 2, %s10
    // Predicated region
    $region49: #{dgcnn_forward.18} parent=5 // pred_check
      %p741 = pneg %p740
    $region50: #{dgcnn_forward.18} parent=5 // pred_check_branch
      %743 = sbr.rel (%p741) target = $region52
    $region51: #{dgcnn_forward.18} parent=5 // pred_region
      %s744 = ssub.s32 %s10, 2
      // Predicated region
      $region53: #{dgcnn_forward.18} parent=51 // pred_check
        %p745 = pneg %p142
      $region54: #{dgcnn_forward.18} parent=51 // pred_check_branch
        %747 = sbr.rel (%p745) target = $region56
      $region55: #{dgcnn_forward.18} parent=51 // pred_region
        %p748 = scmp.lt.s32.totalorder %s21, 1
        %s749 = scalar_select %p748, %s21, 1
        %s750 = scalar_lea.vmem %s4, %s749
      $region56: #{dgcnn_forward.18} parent=51 // pred_fallthru
        _
    $region52: #{dgcnn_forward.18} parent=5 // pred_fallthru
      _
  $region6: #{dgcnn_forward.18} parent=0 // loop_footer
    %s14 = sadd.s32 1, %s10
  $region7: #{dgcnn_forward.18} parent=0 // loop_footer_branch
    %9 = sbr.rel target = $region3
  $region8: #{dgcnn_forward.18} parent=0 // loop_exit
    _

// kernel: dgcnn_forward.19
$region0: #{dgcnn_forward.19}
  #allocation0 [shape = 'u32[]', space=smem, size = 0x4, offset = 0x4, fixed_abs, tag = 'smem constant byte address 0x4 - core index']
  #allocation1 [shape = 'u32[72,128]{1,0:T(1,128)}', space=vmem, size = 0x9000, scoped, tag = 'internal scratch']
  %s0 = inlined_call_operand.vmem [shape: bf16[2,128], index: 0, kind: input, shape index: {}]
  %s1 = inlined_call_operand.vmem [shape: bf16[128,512], index: 1, kind: input, shape index: {}]
  %s2 = inlined_call_operand.vmem [shape: f32[1,512], index: 2, kind: input, shape index: {}]
  %s3 = inlined_call_operand.vmem [shape: f32[1,512], index: 3, kind: input, shape index: {}]
  %s4 = inlined_call_operand.vmem [shape: bf16[512,256], index: 4, kind: input, shape index: {}]
  %s5 = inlined_call_operand.vmem [shape: f32[1,256], index: 5, kind: input, shape index: {}]
  %s6 = inlined_call_operand.vmem [shape: f32[1,256], index: 6, kind: input, shape index: {}]
  %s7 = inlined_call_operand.vmem [shape: bf16[256,8], index: 7, kind: input, shape index: {}]
  %s8 = inlined_call_operand.vmem [shape: f32[1,8], index: 8, kind: input, shape index: {}]
  %s9 = inlined_call_operand.vmem [shape: f32[1,8], index: 9, kind: input, shape index: {}]
  %s10 = inlined_call_operand.hbm [shape: f32[2,8], index: 10, kind: output, shape index: {}]
  %s11 = sld [smem:[#allocation0]]
  $region50: #{dgcnn_forward.19} parent=0
    _
  %s13 = ssub.s32 1, %s11
  %s14 = scalar_select 0, %s13, %s11
  $region1: #{dgcnn_forward.19} parent=0
    #allocation2 [shape = 'u8[1024]{0}', space=vmem, size = 0x400, scoped, tag = 'output window, operand 0, single buffered']
    #allocation3 [shape = 's32[1]{0}', space=sflag, size = 0x4, scoped, tag = 'scoped memory for dgcnn_forward.19']
    %15 = vsyncpa [#allocation3], 0
    // Predicated region
    $region2: #{dgcnn_forward.19} parent=1 // pred_check
      _
    $region3: #{dgcnn_forward.19} parent=1 // pred_check_branch
      %17 = sbr.rel (0) target = $region5
    $region4: #{dgcnn_forward.19} parent=1 // pred_region
      _
    $region5: #{dgcnn_forward.19} parent=1 // pred_fallthru
      _
    // Predicated region
    $region6: #{dgcnn_forward.19} parent=1 // pred_check
      _
    $region7: #{dgcnn_forward.19} parent=1 // pred_check_branch
      %19 = sbr.rel (0) target = $region9
    $region8: #{dgcnn_forward.19} parent=1 // pred_region
      _
    $region9: #{dgcnn_forward.19} parent=1 // pred_fallthru
      _
    // Predicated region
    $region10: #{dgcnn_forward.19} parent=1 // pred_check
      _
    $region11: #{dgcnn_forward.19} parent=1 // pred_check_branch
      %21 = sbr.rel (0) target = $region13
    $region12: #{dgcnn_forward.19} parent=1 // pred_region
      _
    $region13: #{dgcnn_forward.19} parent=1 // pred_fallthru
      _
    // Predicated region
    $region14: #{dgcnn_forward.19} parent=1 // pred_check
      _
    $region15: #{dgcnn_forward.19} parent=1 // pred_check_branch
      %23 = sbr.rel (0) target = $region17
    $region16: #{dgcnn_forward.19} parent=1 // pred_region
      _
    $region17: #{dgcnn_forward.19} parent=1 // pred_fallthru
      _
    // Predicated region
    $region18: #{dgcnn_forward.19} parent=1 // pred_check
      _
    $region19: #{dgcnn_forward.19} parent=1 // pred_check_branch
      %25 = sbr.rel (0) target = $region21
    $region20: #{dgcnn_forward.19} parent=1 // pred_region
      _
    $region21: #{dgcnn_forward.19} parent=1 // pred_fallthru
      _
    // Predicated region
    $region22: #{dgcnn_forward.19} parent=1 // pred_check
      _
    $region23: #{dgcnn_forward.19} parent=1 // pred_check_branch
      %27 = sbr.rel (0) target = $region25
    $region24: #{dgcnn_forward.19} parent=1 // pred_region
      _
    $region25: #{dgcnn_forward.19} parent=1 // pred_fallthru
      _
    // Predicated region
    $region26: #{dgcnn_forward.19} parent=1 // pred_check
      _
    $region27: #{dgcnn_forward.19} parent=1 // pred_check_branch
      %29 = sbr.rel (0) target = $region29
    $region28: #{dgcnn_forward.19} parent=1 // pred_region
      _
    $region29: #{dgcnn_forward.19} parent=1 // pred_fallthru
      _
    // Predicated region
    $region30: #{dgcnn_forward.19} parent=1 // pred_check
      _
    $region31: #{dgcnn_forward.19} parent=1 // pred_check_branch
      %31 = sbr.rel (0) target = $region33
    $region32: #{dgcnn_forward.19} parent=1 // pred_region
      _
    $region33: #{dgcnn_forward.19} parent=1 // pred_fallthru
      _
    // Predicated region
    $region34: #{dgcnn_forward.19} parent=1 // pred_check
      _
    $region35: #{dgcnn_forward.19} parent=1 // pred_check_branch
      %33 = sbr.rel (0) target = $region37
    $region36: #{dgcnn_forward.19} parent=1 // pred_region
      _
    $region37: #{dgcnn_forward.19} parent=1 // pred_fallthru
      _
    // Predicated region
    $region38: #{dgcnn_forward.19} parent=1 // pred_check
      _
    $region39: #{dgcnn_forward.19} parent=1 // pred_check_branch
      %35 = sbr.rel (0) target = $region41
    $region40: #{dgcnn_forward.19} parent=1 // pred_region
      _
    $region41: #{dgcnn_forward.19} parent=1 // pred_fallthru
      _
    %v36 = vld [vmem:[%s0] sm:$0x1]
    %v37 = vld [vmem:[%s1] sm:$0xff]
    %v38 = vld [vmem:[%s1 + $0x8] sm:$0xff]
    %v39 = vld [vmem:[%s1 + $0x10] sm:$0xff]
    %v40 = vld [vmem:[%s1 + $0x18] sm:$0xff]
    %v41 = vld [vmem:[%s1 + $0x20] sm:$0xff]
    %v42 = vld [vmem:[%s1 + $0x28] sm:$0xff]
    %v43 = vld [vmem:[%s1 + $0x30] sm:$0xff]
    %v44 = vld [vmem:[%s1 + $0x38] sm:$0xff]
    %v45 = vld [vmem:[%s1 + $0x40] sm:$0xff]
    %v46 = vld [vmem:[%s1 + $0x48] sm:$0xff]
    %v47 = vld [vmem:[%s1 + $0x50] sm:$0xff]
    %v48 = vld [vmem:[%s1 + $0x58] sm:$0xff]
    %v49 = vld [vmem:[%s1 + $0x60] sm:$0xff]
    %v50 = vld [vmem:[%s1 + $0x68] sm:$0xff]
    %v51 = vld [vmem:[%s1 + $0x70] sm:$0xff]
    %v52 = vld [vmem:[%s1 + $0x78] sm:$0xff]
    %v53 = vld [vmem:[%s1 + $0x80] sm:$0xff]
    %v54 = vld [vmem:[%s1 + $0x88] sm:$0xff]
    %v55 = vld [vmem:[%s1 + $0x90] sm:$0xff]
    %v56 = vld [vmem:[%s1 + $0x98] sm:$0xff]
    %v57 = vld [vmem:[%s1 + $0xa0] sm:$0xff]
    %v58 = vld [vmem:[%s1 + $0xa8] sm:$0xff]
    %v59 = vld [vmem:[%s1 + $0xb0] sm:$0xff]
    %v60 = vld [vmem:[%s1 + $0xb8] sm:$0xff]
    %v61 = vld [vmem:[%s1 + $0xc0] sm:$0xff]
    %v62 = vld [vmem:[%s1 + $0xc8] sm:$0xff]
    %v63 = vld [vmem:[%s1 + $0xd0] sm:$0xff]
    %v64 = vld [vmem:[%s1 + $0xd8] sm:$0xff]
    %v65 = vld [vmem:[%s1 + $0xe0] sm:$0xff]
    %v66 = vld [vmem:[%s1 + $0xe8] sm:$0xff]
    %v67 = vld [vmem:[%s1 + $0xf0] sm:$0xff]
    %v68 = vld [vmem:[%s1 + $0xf8] sm:$0xff]
    %v101 = vunpack.c.l.b16 %v37
    %v102 = vunpack.c.h.b16 %v37
    %v103 = vunpack.c.l.b16 %v38
    %v104 = vunpack.c.h.b16 %v38
    %v105 = vunpack.c.l.b16 %v39
    %v106 = vunpack.c.h.b16 %v39
    %v107 = vunpack.c.l.b16 %v40
    %v108 = vunpack.c.h.b16 %v40
    %v109 = vunpack.c.l.b16 %v41
    %v110 = vunpack.c.h.b16 %v41
    %v111 = vunpack.c.l.b16 %v42
    %v112 = vunpack.c.h.b16 %v42
    %v113 = vunpack.c.l.b16 %v43
    %v114 = vunpack.c.h.b16 %v43
    %v115 = vunpack.c.l.b16 %v44
    %v116 = vunpack.c.h.b16 %v44
    %v117 = vunpack.c.l.b16 %v45
    %v118 = vunpack.c.h.b16 %v45
    %v119 = vunpack.c.l.b16 %v46
    %v120 = vunpack.c.h.b16 %v46
    %v121 = vunpack.c.l.b16 %v47
    %v122 = vunpack.c.h.b16 %v47
    %v123 = vunpack.c.l.b16 %v48
    %v124 = vunpack.c.h.b16 %v48
    %v125 = vunpack.c.l.b16 %v49
    %v126 = vunpack.c.h.b16 %v49
    %v127 = vunpack.c.l.b16 %v50
    %v128 = vunpack.c.h.b16 %v50
    %v129 = vunpack.c.l.b16 %v51
    %v130 = vunpack.c.h.b16 %v51
    %v131 = vunpack.c.l.b16 %v52
    %v132 = vunpack.c.h.b16 %v52
    %v133 = vunpack.c.l.b16 %v53
    %v134 = vunpack.c.h.b16 %v53
    %v135 = vunpack.c.l.b16 %v54
    %v136 = vunpack.c.h.b16 %v54
    %v137 = vunpack.c.l.b16 %v55
    %v138 = vunpack.c.h.b16 %v55
    %v139 = vunpack.c.l.b16 %v56
    %v140 = vunpack.c.h.b16 %v56
    %v141 = vunpack.c.l.b16 %v57
    %v142 = vunpack.c.h.b16 %v57
    %v143 = vunpack.c.l.b16 %v58
    %v144 = vunpack.c.h.b16 %v58
    %v145 = vunpack.c.l.b16 %v59
    %v146 = vunpack.c.h.b16 %v59
    %v147 = vunpack.c.l.b16 %v60
    %v148 = vunpack.c.h.b16 %v60
    %v149 = vunpack.c.l.b16 %v61
    %v150 = vunpack.c.h.b16 %v61
    %v151 = vunpack.c.l.b16 %v62
    %v152 = vunpack.c.h.b16 %v62
    %v153 = vunpack.c.l.b16 %v63
    %v154 = vunpack.c.h.b16 %v63
    %v155 = vunpack.c.l.b16 %v64
    %v156 = vunpack.c.h.b16 %v64
    %v157 = vunpack.c.l.b16 %v65
    %v158 = vunpack.c.h.b16 %v65
    %v159 = vunpack.c.l.b16 %v66
    %v160 = vunpack.c.h.b16 %v66
    %v161 = vunpack.c.l.b16 %v67
    %v162 = vunpack.c.h.b16 %v67
    %v163 = vunpack.c.l.b16 %v68
    %v164 = vunpack.c.h.b16 %v68
    %v165 = vpack.c.b16 %v105, %v101
    %v166 = vpack.c.b16 %v106, %v102
    %v167 = vpack.c.b16 %v107, %v103
    %v168 = vpack.c.b16 %v108, %v104
    %v169 = vpack.c.b16 %v113, %v109
    %v170 = vpack.c.b16 %v114, %v110
    %v171 = vpack.c.b16 %v115, %v111
    %v172 = vpack.c.b16 %v116, %v112
    %v173 = vpack.c.b16 %v121, %v117
    %v174 = vpack.c.b16 %v122, %v118
    %v175 = vpack.c.b16 %v123, %v119
    %v176 = vpack.c.b16 %v124, %v120
    %v177 = vpack.c.b16 %v129, %v125
    %v178 = vpack.c.b16 %v130, %v126
    %v179 = vpack.c.b16 %v131, %v127
    %v180 = vpack.c.b16 %v132, %v128
    %v181 = vpack.c.b16 %v137, %v133
    %v182 = vpack.c.b16 %v138, %v134
    %v183 = vpack.c.b16 %v139, %v135
    %v184 = vpack.c.b16 %v140, %v136
    %v185 = vpack.c.b16 %v145, %v141
    %v186 = vpack.c.b16 %v146, %v142
    %v187 = vpack.c.b16 %v147, %v143
    %v188 = vpack.c.b16 %v148, %v144
    %v189 = vpack.c.b16 %v153, %v149
    %v190 = vpack.c.b16 %v154, %v150
    %v191 = vpack.c.b16 %v155, %v151
    %v192 = vpack.c.b16 %v156, %v152
    %v193 = vpack.c.b16 %v161, %v157
    %v194 = vpack.c.b16 %v162, %v158
    %v195 = vpack.c.b16 %v163, %v159
    %v196 = vpack.c.b16 %v164, %v160
    %229 = vmatpush.bf16.msra.mxu0 %v193
    %230 = vmatpush.bf16.msra.mxu0 %v189
    %231 = vmatpush.bf16.msra.mxu0 %v185
    %232 = vmatpush.bf16.msra.mxu0 %v181
    %233 = vmatpush.bf16.msra.mxu0 %v177
    %234 = vmatpush.bf16.msra.mxu0 %v173
    %235 = vmatpush.bf16.msra.mxu0 %v169
    %236 = vmatpush.bf16.msra.mxu0 %v165
    %237 = vmatmul.bf16.gmra.mxu0 %v36
    %v238 = vpop.f32.mrf.mxu0
    %v239 = vadd.f32 0.0, %v238
    %v240 = vpop.f32.mrf.mxu0
    %241 = vdwg.mxu0
    %242 = vmatpush.bf16.msra.mxu0 %v194
    %243 = vmatpush.bf16.msra.mxu0 %v190
    %244 = vmatpush.bf16.msra.mxu0 %v186
    %245 = vmatpush.bf16.msra.mxu0 %v182
    %246 = vmatpush.bf16.msra.mxu0 %v178
    %247 = vmatpush.bf16.msra.mxu0 %v174
    %248 = vmatpush.bf16.msra.mxu0 %v170
    %249 = vmatpush.bf16.msra.mxu0 %v166
    %250 = vmatmul.bf16.gmra.mxu0 %v36
    %v251 = vpop.f32.mrf.mxu0
    %v252 = vadd.f32 0.0, %v251
    %v253 = vpop.f32.mrf.mxu0
    %254 = vdwg.mxu0
    %255 = vmatpush.bf16.msra.mxu0 %v195
    %256 = vmatpush.bf16.msra.mxu0 %v191
    %257 = vmatpush.bf16.msra.mxu0 %v187
    %258 = vmatpush.bf16.msra.mxu0 %v183
    %259 = vmatpush.bf16.msra.mxu0 %v179
    %260 = vmatpush.bf16.msra.mxu0 %v175
    %261 = vmatpush.bf16.msra.mxu0 %v171
    %262 = vmatpush.bf16.msra.mxu0 %v167
    %263 = vmatmul.bf16.gmra.mxu0 %v36
    %v264 = vpop.f32.mrf.mxu0
    %v265 = vadd.f32 0.0, %v264
    %v266 = vpop.f32.mrf.mxu0
    %267 = vdwg.mxu0
    %268 = vmatpush.bf16.msra.mxu0 %v196
    %269 = vmatpush.bf16.msra.mxu0 %v192
    %270 = vmatpush.bf16.msra.mxu0 %v188
    %271 = vmatpush.bf16.msra.mxu0 %v184
    %272 = vmatpush.bf16.msra.mxu0 %v180
    %273 = vmatpush.bf16.msra.mxu0 %v176
    %274 = vmatpush.bf16.msra.mxu0 %v172
    %275 = vmatpush.bf16.msra.mxu0 %v168
    %276 = vmatmul.bf16.gmra.mxu0 %v36
    %v277 = vpop.f32.mrf.mxu0
    %v278 = vadd.f32 0.0, %v277
    %v279 = vpop.f32.mrf.mxu0
    %280 = vdwg.mxu0
    %v281 = vld [vmem:[%s2] sm:$0xf]
    %v283 = vperm.slane %v281, 0
    %v284 = vperm.slane %v281, 1
    %v285 = vperm.slane %v281, 2
    %v286 = vperm.slane %v281, 3
    %v291 = vmul.f32 %v239, %v283
    %v292 = vmul.f32 %v252, %v284
    %v293 = vmul.f32 %v265, %v285
    %v294 = vmul.f32 %v278, %v286
    %v295 = vld [vmem:[%s3] sm:$0xf]
    %v297 = vperm.slane %v295, 0
    %v298 = vperm.slane %v295, 1
    %v299 = vperm.slane %v295, 2
    %v300 = vperm.slane %v295, 3
    %v305 = vadd.f32 %v291, %v297
    %v306 = vadd.f32 %v292, %v298
    %v307 = vadd.f32 %v293, %v299
    %v308 = vadd.f32 %v294, %v300
    %vm309 = vcmp.gt.f32.partialorder %v305, 0.0
    %vm310 = vcmp.gt.f32.partialorder %v306, 0.0
    %vm311 = vcmp.gt.f32.partialorder %v307, 0.0
    %vm312 = vcmp.gt.f32.partialorder %v308, 0.0
    %v313 = vmul.f32 %v305, 0.2
    %v314 = vmul.f32 %v306, 0.2
    %v315 = vmul.f32 %v307, 0.2
    %v316 = vmul.f32 %v308, 0.2
    %v317 = vsel %vm309, %v305, %v313
    %v318 = vsel %vm310, %v306, %v314
    %v319 = vsel %vm311, %v307, %v315
    %v320 = vsel %vm312, %v308, %v316
    %v321 = vpack.c.bf16 %v317, %v317
    %v322 = vpack.c.bf16 %v318, %v318
    %v323 = vpack.c.bf16 %v319, %v319
    %v324 = vpack.c.bf16 %v320, %v320
    %v325 = vld [vmem:[%s4] sm:$0xff]
    %v326 = vld [vmem:[%s4 + $0x8] sm:$0xff]
    %v327 = vld [vmem:[%s4 + $0x10] sm:$0xff]
    %v328 = vld [vmem:[%s4 + $0x18] sm:$0xff]
    %v329 = vld [vmem:[%s4 + $0x20] sm:$0xff]
    %v330 = vld [vmem:[%s4 + $0x28] sm:$0xff]
    %v331 = vld [vmem:[%s4 + $0x30] sm:$0xff]
    %v332 = vld [vmem:[%s4 + $0x38] sm:$0xff]
    %v333 = vld [vmem:[%s4 + $0x40] sm:$0xff]
    %v334 = vld [vmem:[%s4 + $0x48] sm:$0xff]
    %v335 = vld [vmem:[%s4 + $0x50] sm:$0xff]
    %v336 = vld [vmem:[%s4 + $0x58] sm:$0xff]
    %v337 = vld [vmem:[%s4 + $0x60] sm:$0xff]
    %v338 = vld [vmem:[%s4 + $0x68] sm:$0xff]
    %v339 = vld [vmem:[%s4 + $0x70] sm:$0xff]
    %v340 = vld [vmem:[%s4 + $0x78] sm:$0xff]
    %v341 = vld [vmem:[%s4 + $0x80] sm:$0xff]
    %v342 = vld [vmem:[%s4 + $0x88] sm:$0xff]
    %v343 = vld [vmem:[%s4 + $0x90] sm:$0xff]
    %v344 = vld [vmem:[%s4 + $0x98] sm:$0xff]
    %v345 = vld [vmem:[%s4 + $0xa0] sm:$0xff]
    %v346 = vld [vmem:[%s4 + $0xa8] sm:$0xff]
    %v347 = vld [vmem:[%s4 + $0xb0] sm:$0xff]
    %v348 = vld [vmem:[%s4 + $0xb8] sm:$0xff]
    %v349 = vld [vmem:[%s4 + $0xc0] sm:$0xff]
    %v350 = vld [vmem:[%s4 + $0xc8] sm:$0xff]
    %v351 = vld [vmem:[%s4 + $0xd0] sm:$0xff]
    %v352 = vld [vmem:[%s4 + $0xd8] sm:$0xff]
    %v353 = vld [vmem:[%s4 + $0xe0] sm:$0xff]
    %v354 = vld [vmem:[%s4 + $0xe8] sm:$0xff]
    %v355 = vld [vmem:[%s4 + $0xf0] sm:$0xff]
    %v356 = vld [vmem:[%s4 + $0xf8] sm:$0xff]
    %v357 = vld [vmem:[%s4 + $0x100] sm:$0xff]
    %v358 = vld [vmem:[%s4 + $0x108] sm:$0xff]
    %v359 = vld [vmem:[%s4 + $0x110] sm:$0xff]
    %v360 = vld [vmem:[%s4 + $0x118] sm:$0xff]
    %v361 = vld [vmem:[%s4 + $0x120] sm:$0xff]
    %v362 = vld [vmem:[%s4 + $0x128] sm:$0xff]
    %v363 = vld [vmem:[%s4 + $0x130] sm:$0xff]
    %v364 = vld [vmem:[%s4 + $0x138] sm:$0xff]
    %v365 = vld [vmem:[%s4 + $0x140] sm:$0xff]
    %v366 = vld [vmem:[%s4 + $0x148] sm:$0xff]
    %v367 = vld [vmem:[%s4 + $0x150] sm:$0xff]
    %v368 = vld [vmem:[%s4 + $0x158] sm:$0xff]
    %v369 = vld [vmem:[%s4 + $0x160] sm:$0xff]
    %v370 = vld [vmem:[%s4 + $0x168] sm:$0xff]
    %v371 = vld [vmem:[%s4 + $0x170] sm:$0xff]
    %v372 = vld [vmem:[%s4 + $0x178] sm:$0xff]
    %v373 = vld [vmem:[%s4 + $0x180] sm:$0xff]
    %v374 = vld [vmem:[%s4 + $0x188] sm:$0xff]
    %v375 = vld [vmem:[%s4 + $0x190] sm:$0xff]
    %v376 = vld [vmem:[%s4 + $0x198] sm:$0xff]
    %v377 = vld [vmem:[%s4 + $0x1a0] sm:$0xff]
    %v378 = vld [vmem:[%s4 + $0x1a8] sm:$0xff]
    %v379 = vld [vmem:[%s4 + $0x1b0] sm:$0xff]
    %v380 = vld [vmem:[%s4 + $0x1b8] sm:$0xff]
    %v381 = vld [vmem:[%s4 + $0x1c0] sm:$0xff]
    %v382 = vld [vmem:[%s4 + $0x1c8] sm:$0xff]
    %v383 = vld [vmem:[%s4 + $0x1d0] sm:$0xff]
    %v384 = vld [vmem:[%s4 + $0x1d8] sm:$0xff]
    %v385 = vld [vmem:[%s4 + $0x1e0] sm:$0xff]
    %v386 = vld [vmem:[%s4 + $0x1e8] sm:$0xff]
    %v387 = vld [vmem:[%s4 + $0x1f0] sm:$0xff]
    %v388 = vld [vmem:[%s4 + $0x1f8] sm:$0xff]
    %v453 = vunpack.c.l.b16 %v325
    %v454 = vunpack.c.h.b16 %v325
    %v455 = vunpack.c.l.b16 %v326
    %v456 = vunpack.c.h.b16 %v326
    %v457 = vunpack.c.l.b16 %v327
    %v458 = vunpack.c.h.b16 %v327
    %v459 = vunpack.c.l.b16 %v328
    %v460 = vunpack.c.h.b16 %v328
    %v461 = vunpack.c.l.b16 %v329
    %v462 = vunpack.c.h.b16 %v329
    %v463 = vunpack.c.l.b16 %v330
    %v464 = vunpack.c.h.b16 %v330
    %v465 = vunpack.c.l.b16 %v331
    %v466 = vunpack.c.h.b16 %v331
    %v467 = vunpack.c.l.b16 %v332
    %v468 = vunpack.c.h.b16 %v332
    %v469 = vunpack.c.l.b16 %v333
    %v470 = vunpack.c.h.b16 %v333
    %v471 = vunpack.c.l.b16 %v334
    %v472 = vunpack.c.h.b16 %v334
    %v473 = vunpack.c.l.b16 %v335
    %v474 = vunpack.c.h.b16 %v335
    %v475 = vunpack.c.l.b16 %v336
    %v476 = vunpack.c.h.b16 %v336
    %v477 = vunpack.c.l.b16 %v337
    %v478 = vunpack.c.h.b16 %v337
    %v479 = vunpack.c.l.b16 %v338
    %v480 = vunpack.c.h.b16 %v338
    %v481 = vunpack.c.l.b16 %v339
    %v482 = vunpack.c.h.b16 %v339
    %v483 = vunpack.c.l.b16 %v340
    %v484 = vunpack.c.h.b16 %v340
    %v485 = vunpack.c.l.b16 %v341
    %v486 = vunpack.c.h.b16 %v341
    %v487 = vunpack.c.l.b16 %v342
    %v488 = vunpack.c.h.b16 %v342
    %v489 = vunpack.c.l.b16 %v343
    %v490 = vunpack.c.h.b16 %v343
    %v491 = vunpack.c.l.b16 %v344
    %v492 = vunpack.c.h.b16 %v344
    %v493 = vunpack.c.l.b16 %v345
    %v494 = vunpack.c.h.b16 %v345
    %v495 = vunpack.c.l.b16 %v346
    %v496 = vunpack.c.h.b16 %v346
    %v497 = vunpack.c.l.b16 %v347
    %v498 = vunpack.c.h.b16 %v347
    %v499 = vunpack.c.l.b16 %v348
    %v500 = vunpack.c.h.b16 %v348
    %v501 = vunpack.c.l.b16 %v349
    %v502 = vunpack.c.h.b16 %v349
    %v503 = vunpack.c.l.b16 %v350
    %v504 = vunpack.c.h.b16 %v350
    %v505 = vunpack.c.l.b16 %v351
    %v506 = vunpack.c.h.b16 %v351
    %v507 = vunpack.c.l.b16 %v352
    %v508 = vunpack.c.h.b16 %v352
    %v509 = vunpack.c.l.b16 %v353
    %v510 = vunpack.c.h.b16 %v353
    %v511 = vunpack.c.l.b16 %v354
    %v512 = vunpack.c.h.b16 %v354
    %v513 = vunpack.c.l.b16 %v355
    %v514 = vunpack.c.h.b16 %v355
    %v515 = vunpack.c.l.b16 %v356
    %v516 = vunpack.c.h.b16 %v356
    %v517 = vunpack.c.l.b16 %v357
    %v518 = vunpack.c.h.b16 %v357
    %v519 = vunpack.c.l.b16 %v358
    %v520 = vunpack.c.h.b16 %v358
    %v521 = vunpack.c.l.b16 %v359
    %v522 = vunpack.c.h.b16 %v359
    %v523 = vunpack.c.l.b16 %v360
    %v524 = vunpack.c.h.b16 %v360
    %v525 = vunpack.c.l.b16 %v361
    %v526 = vunpack.c.h.b16 %v361
    %v527 = vunpack.c.l.b16 %v362
    %v528 = vunpack.c.h.b16 %v362
    %v529 = vunpack.c.l.b16 %v363
    %v530 = vunpack.c.h.b16 %v363
    %v531 = vunpack.c.l.b16 %v364
    %v532 = vunpack.c.h.b16 %v364
    %v533 = vunpack.c.l.b16 %v365
    %v534 = vunpack.c.h.b16 %v365
    %v535 = vunpack.c.l.b16 %v366
    %v536 = vunpack.c.h.b16 %v366
    %v537 = vunpack.c.l.b16 %v367
    %v538 = vunpack.c.h.b16 %v367
    %v539 = vunpack.c.l.b16 %v368
    %v540 = vunpack.c.h.b16 %v368
    %v541 = vunpack.c.l.b16 %v369
    %v542 = vunpack.c.h.b16 %v369
    %v543 = vunpack.c.l.b16 %v370
    %v544 = vunpack.c.h.b16 %v370
    %v545 = vunpack.c.l.b16 %v371
    %v546 = vunpack.c.h.b16 %v371
    %v547 = vunpack.c.l.b16 %v372
    %v548 = vunpack.c.h.b16 %v372
    %v549 = vunpack.c.l.b16 %v373
    %v550 = vunpack.c.h.b16 %v373
    %v551 = vunpack.c.l.b16 %v374
    %v552 = vunpack.c.h.b16 %v374
    %v553 = vunpack.c.l.b16 %v375
    %v554 = vunpack.c.h.b16 %v375
    %v555 = vunpack.c.l.b16 %v376
    %v556 = vunpack.c.h.b16 %v376
    %v557 = vunpack.c.l.b16 %v377
    %v558 = vunpack.c.h.b16 %v377
    %v559 = vunpack.c.l.b16 %v378
    %v560 = vunpack.c.h.b16 %v378
    %v561 = vunpack.c.l.b16 %v379
    %v562 = vunpack.c.h.b16 %v379
    %v563 = vunpack.c.l.b16 %v380
    %v564 = vunpack.c.h.b16 %v380
    %v565 = vunpack.c.l.b16 %v381
    %v566 = vunpack.c.h.b16 %v381
    %v567 = vunpack.c.l.b16 %v382
    %v568 = vunpack.c.h.b16 %v382
    %v569 = vunpack.c.l.b16 %v383
    %v570 = vunpack.c.h.b16 %v383
    %v571 = vunpack.c.l.b16 %v384
    %v572 = vunpack.c.h.b16 %v384
    %v573 = vunpack.c.l.b16 %v385
    %v574 = vunpack.c.h.b16 %v385
    %v575 = vunpack.c.l.b16 %v386
    %v576 = vunpack.c.h.b16 %v386
    %v577 = vunpack.c.l.b16 %v387
    %v578 = vunpack.c.h.b16 %v387
    %v579 = vunpack.c.l.b16 %v388
    %v580 = vunpack.c.h.b16 %v388
    %v581 = vpack.c.b16 %v455, %v453
    %v582 = vpack.c.b16 %v456, %v454
    %v583 = vpack.c.b16 %v459, %v457
    %v584 = vpack.c.b16 %v460, %v458
    %v585 = vpack.c.b16 %v463, %v461
    %v586 = vpack.c.b16 %v464, %v462
    %v587 = vpack.c.b16 %v467, %v465
    %v588 = vpack.c.b16 %v468, %v466
    %v589 = vpack.c.b16 %v471, %v469
    %v590 = vpack.c.b16 %v472, %v470
    %v591 = vpack.c.b16 %v475, %v473
    %v592 = vpack.c.b16 %v476, %v474
    %v593 = vpack.c.b16 %v479, %v477
    %v594 = vpack.c.b16 %v480, %v478
    %v595 = vpack.c.b16 %v483, %v481
    %v596 = vpack.c.b16 %v484, %v482
    %v597 = vpack.c.b16 %v487, %v485
    %v598 = vpack.c.b16 %v488, %v486
    %v599 = vpack.c.b16 %v491, %v489
    %v600 = vpack.c.b16 %v492, %v490
    %v601 = vpack.c.b16 %v495, %v493
    %v602 = vpack.c.b16 %v496, %v494
    %v603 = vpack.c.b16 %v499, %v497
    %v604 = vpack.c.b16 %v500, %v498
    %v605 = vpack.c.b16 %v503, %v501
    %v606 = vpack.c.b16 %v504, %v502
    %v607 = vpack.c.b16 %v507, %v505
    %v608 = vpack.c.b16 %v508, %v506
    %v609 = vpack.c.b16 %v511, %v509
    %v610 = vpack.c.b16 %v512, %v510
    %v611 = vpack.c.b16 %v515, %v513
    %v612 = vpack.c.b16 %v516, %v514
    %v613 = vpack.c.b16 %v519, %v517
    %v614 = vpack.c.b16 %v520, %v518
    %v615 = vpack.c.b16 %v523, %v521
    %v616 = vpack.c.b16 %v524, %v522
    %v617 = vpack.c.b16 %v527, %v525
    %v618 = vpack.c.b16 %v528, %v526
    %v619 = vpack.c.b16 %v531, %v529
    %v620 = vpack.c.b16 %v532, %v530
    %v621 = vpack.c.b16 %v535, %v533
    %v622 = vpack.c.b16 %v536, %v534
    %v623 = vpack.c.b16 %v539, %v537
    %v624 = vpack.c.b16 %v540, %v538
    %v625 = vpack.c.b16 %v543, %v541
    %v626 = vpack.c.b16 %v544, %v542
    %v627 = vpack.c.b16 %v547, %v545
    %v628 = vpack.c.b16 %v548, %v546
    %v629 = vpack.c.b16 %v551, %v549
    %v630 = vpack.c.b16 %v552, %v550
    %v631 = vpack.c.b16 %v555, %v553
    %v632 = vpack.c.b16 %v556, %v554
    %v633 = vpack.c.b16 %v559, %v557
    %v634 = vpack.c.b16 %v560, %v558
    %v635 = vpack.c.b16 %v563, %v561
    %v636 = vpack.c.b16 %v564, %v562
    %v637 = vpack.c.b16 %v567, %v565
    %v638 = vpack.c.b16 %v568, %v566
    %v639 = vpack.c.b16 %v571, %v569
    %v640 = vpack.c.b16 %v572, %v570
    %v641 = vpack.c.b16 %v575, %v573
    %v642 = vpack.c.b16 %v576, %v574
    %v643 = vpack.c.b16 %v579, %v577
    %v644 = vpack.c.b16 %v580, %v578
    %709 = vmatpush.bf16.msra.mxu0 %v595
    %710 = vmatpush.bf16.msra.mxu0 %v593
    %711 = vmatpush.bf16.msra.mxu0 %v591
    %712 = vmatpush.bf16.msra.mxu0 %v589
    %713 = vmatpush.bf16.msra.mxu0 %v587
    %714 = vmatpush.bf16.msra.mxu0 %v585
    %715 = vmatpush.bf16.msra.mxu0 %v583
    %716 = vmatpush.bf16.msra.mxu0 %v581
    %717 = vmatmul.bf16.gmra.mxu0 %v321
    %v718 = vpop.f32.mrf.mxu0
    %v719 = vadd.f32 0.0, %v718
    %v720 = vpop.f32.mrf.mxu0
    %721 = vdwg.mxu0
    %722 = vmatpush.bf16.msra.mxu0 %v611
    %723 = vmatpush.bf16.msra.mxu0 %v609
    %724 = vmatpush.bf16.msra.mxu0 %v607
    %725 = vmatpush.bf16.msra.mxu0 %v605
    %726 = vmatpush.bf16.msra.mxu0 %v603
    %727 = vmatpush.bf16.msra.mxu0 %v601
    %728 = vmatpush.bf16.msra.mxu0 %v599
    %729 = vmatpush.bf16.msra.mxu0 %v597
    %730 = vmatmul.bf16.gmra.mxu0 %v322
    %v731 = vpop.f32.mrf.mxu0
    %v732 = vadd.f32 %v719, %v731
    %v733 = vpop.f32.mrf.mxu0
    %734 = vdwg.mxu0
    %735 = vmatpush.bf16.msra.mxu0 %v627
    %736 = vmatpush.bf16.msra.mxu0 %v625
    %737 = vmatpush.bf16.msra.mxu0 %v623
    %738 = vmatpush.bf16.msra.mxu0 %v621
    %739 = vmatpush.bf16.msra.mxu0 %v619
    %740 = vmatpush.bf16.msra.mxu0 %v617
    %741 = vmatpush.bf16.msra.mxu0 %v615
    %742 = vmatpush.bf16.msra.mxu0 %v613
    %743 = vmatmul.bf16.gmra.mxu0 %v323
    %v744 = vpop.f32.mrf.mxu0
    %v745 = vadd.f32 %v732, %v744
    %v746 = vpop.f32.mrf.mxu0
    %747 = vdwg.mxu0
    %748 = vmatpush.bf16.msra.mxu0 %v643
    %749 = vmatpush.bf16.msra.mxu0 %v641
    %750 = vmatpush.bf16.msra.mxu0 %v639
    %751 = vmatpush.bf16.msra.mxu0 %v637
    %752 = vmatpush.bf16.msra.mxu0 %v635
    %753 = vmatpush.bf16.msra.mxu0 %v633
    %754 = vmatpush.bf16.msra.mxu0 %v631
    %755 = vmatpush.bf16.msra.mxu0 %v629
    %756 = vmatmul.bf16.gmra.mxu0 %v324
    %v757 = vpop.f32.mrf.mxu0
    %v758 = vadd.f32 %v745, %v757
    %v759 = vpop.f32.mrf.mxu0
    %760 = vdwg.mxu0
    %761 = vmatpush.bf16.msra.mxu0 %v596
    %762 = vmatpush.bf16.msra.mxu0 %v594
    %763 = vmatpush.bf16.msra.mxu0 %v592
    %764 = vmatpush.bf16.msra.mxu0 %v590
    %765 = vmatpush.bf16.msra.mxu0 %v588
    %766 = vmatpush.bf16.msra.mxu0 %v586
    %767 = vmatpush.bf16.msra.mxu0 %v584
    %768 = vmatpush.bf16.msra.mxu0 %v582
    %769 = vmatmul.bf16.gmra.mxu0 %v321
    %v770 = vpop.f32.mrf.mxu0
    %v771 = vadd.f32 0.0, %v770
    %v772 = vpop.f32.mrf.mxu0
    %773 = vdwg.mxu0
    %774 = vmatpush.bf16.msra.mxu0 %v612
    %775 = vmatpush.bf16.msra.mxu0 %v610
    %776 = vmatpush.bf16.msra.mxu0 %v608
    %777 = vmatpush.bf16.msra.mxu0 %v606
    %778 = vmatpush.bf16.msra.mxu0 %v604
    %779 = vmatpush.bf16.msra.mxu0 %v602
    %780 = vmatpush.bf16.msra.mxu0 %v600
    %781 = vmatpush.bf16.msra.mxu0 %v598
    %782 = vmatmul.bf16.gmra.mxu0 %v322
    %v783 = vpop.f32.mrf.mxu0
    %v784 = vadd.f32 %v771, %v783
    %v785 = vpop.f32.mrf.mxu0
    %786 = vdwg.mxu0
    %787 = vmatpush.bf16.msra.mxu0 %v628
    %788 = vmatpush.bf16.msra.mxu0 %v626
    %789 = vmatpush.bf16.msra.mxu0 %v624
    %790 = vmatpush.bf16.msra.mxu0 %v622
    %791 = vmatpush.bf16.msra.mxu0 %v620
    %792 = vmatpush.bf16.msra.mxu0 %v618
    %793 = vmatpush.bf16.msra.mxu0 %v616
    %794 = vmatpush.bf16.msra.mxu0 %v614
    %795 = vmatmul.bf16.gmra.mxu0 %v323
    %v796 = vpop.f32.mrf.mxu0
    %v797 = vadd.f32 %v784, %v796
    %v798 = vpop.f32.mrf.mxu0
    %799 = vdwg.mxu0
    %800 = vmatpush.bf16.msra.mxu0 %v644
    %801 = vmatpush.bf16.msra.mxu0 %v642
    %802 = vmatpush.bf16.msra.mxu0 %v640
    %803 = vmatpush.bf16.msra.mxu0 %v638
    %804 = vmatpush.bf16.msra.mxu0 %v636
    %805 = vmatpush.bf16.msra.mxu0 %v634
    %806 = vmatpush.bf16.msra.mxu0 %v632
    %807 = vmatpush.bf16.msra.mxu0 %v630
    %808 = vmatmul.bf16.gmra.mxu0 %v324
    %v809 = vpop.f32.mrf.mxu0
    %v810 = vadd.f32 %v797, %v809
    %v811 = vpop.f32.mrf.mxu0
    %812 = vdwg.mxu0
    %v813 = vld [vmem:[%s5] sm:$0x3]
    %v815 = vperm.slane %v813, 0
    %v816 = vperm.slane %v813, 1
    %v819 = vmul.f32 %v758, %v815
    %v820 = vmul.f32 %v810, %v816
    %v821 = vld [vmem:[%s6] sm:$0x3]
    %v823 = vperm.slane %v821, 0
    %v824 = vperm.slane %v821, 1
    %v827 = vadd.f32 %v819, %v823
    %v828 = vadd.f32 %v820, %v824
    %vm829 = vcmp.gt.f32.partialorder %v827, 0.0
    %vm830 = vcmp.gt.f32.partialorder %v828, 0.0
    %v831 = vmul.f32 %v827, 0.2
    %v832 = vmul.f32 %v828, 0.2
    %v833 = vsel %vm829, %v827, %v831
    %v834 = vsel %vm830, %v828, %v832
    %v835 = vpack.c.bf16 %v833, %v833
    %v836 = vpack.c.bf16 %v834, %v834
    %v837 = vld [vmem:[%s7] sm:$0xf]
    %v838 = vld [vmem:[%s7 + $0x4] sm:$0xf]
    %v839 = vld [vmem:[%s7 + $0x8] sm:$0xf]
    %v840 = vld [vmem:[%s7 + $0xc] sm:$0xf]
    %v841 = vld [vmem:[%s7 + $0x10] sm:$0xf]
    %v842 = vld [vmem:[%s7 + $0x14] sm:$0xf]
    %v843 = vld [vmem:[%s7 + $0x18] sm:$0xf]
    %v844 = vld [vmem:[%s7 + $0x1c] sm:$0xf]
    %v845 = vld [vmem:[%s7 + $0x20] sm:$0xf]
    %v846 = vld [vmem:[%s7 + $0x24] sm:$0xf]
    %v847 = vld [vmem:[%s7 + $0x28] sm:$0xf]
    %v848 = vld [vmem:[%s7 + $0x2c] sm:$0xf]
    %v849 = vld [vmem:[%s7 + $0x30] sm:$0xf]
    %v850 = vld [vmem:[%s7 + $0x34] sm:$0xf]
    %v851 = vld [vmem:[%s7 + $0x38] sm:$0xf]
    %v852 = vld [vmem:[%s7 + $0x3c] sm:$0xf]
    %v853 = vld [vmem:[%s7 + $0x40] sm:$0xf]
    %v854 = vld [vmem:[%s7 + $0x44] sm:$0xf]
    %v855 = vld [vmem:[%s7 + $0x48] sm:$0xf]
    %v856 = vld [vmem:[%s7 + $0x4c] sm:$0xf]
    %v857 = vld [vmem:[%s7 + $0x50] sm:$0xf]
    %v858 = vld [vmem:[%s7 + $0x54] sm:$0xf]
    %v859 = vld [vmem:[%s7 + $0x58] sm:$0xf]
    %v860 = vld [vmem:[%s7 + $0x5c] sm:$0xf]
    %v861 = vld [vmem:[%s7 + $0x60] sm:$0xf]
    %v862 = vld [vmem:[%s7 + $0x64] sm:$0xf]
    %v863 = vld [vmem:[%s7 + $0x68] sm:$0xf]
    %v864 = vld [vmem:[%s7 + $0x6c] sm:$0xf]
    %v865 = vld [vmem:[%s7 + $0x70] sm:$0xf]
    %v866 = vld [vmem:[%s7 + $0x74] sm:$0xf]
    %v867 = vld [vmem:[%s7 + $0x78] sm:$0xf]
    %v868 = vld [vmem:[%s7 + $0x7c] sm:$0xf]
    %v901 = vunpack.c.l.b16 %v837
    %v902 = vunpack.c.l.b16 %v838
    %v903 = vunpack.c.l.b16 %v839
    %v904 = vunpack.c.l.b16 %v840
    %v905 = vunpack.c.l.b16 %v841
    %v906 = vunpack.c.l.b16 %v842
    %v907 = vunpack.c.l.b16 %v843
    %v908 = vunpack.c.l.b16 %v844
    %v909 = vunpack.c.l.b16 %v845
    %v910 = vunpack.c.l.b16 %v846
    %v911 = vunpack.c.l.b16 %v847
    %v912 = vunpack.c.l.b16 %v848
    %v913 = vunpack.c.l.b16 %v849
    %v914 = vunpack.c.l.b16 %v850
    %v915 = vunpack.c.l.b16 %v851
    %v916 = vunpack.c.l.b16 %v852
    %v917 = vunpack.c.l.b16 %v853
    %v918 = vunpack.c.l.b16 %v854
    %v919 = vunpack.c.l.b16 %v855
    %v920 = vunpack.c.l.b16 %v856
    %v921 = vunpack.c.l.b16 %v857
    %v922 = vunpack.c.l.b16 %v858
    %v923 = vunpack.c.l.b16 %v859
    %v924 = vunpack.c.l.b16 %v860
    %v925 = vunpack.c.l.b16 %v861
    %v926 = vunpack.c.l.b16 %v862
    %v927 = vunpack.c.l.b16 %v863
    %v928 = vunpack.c.l.b16 %v864
    %v929 = vunpack.c.l.b16 %v865
    %v930 = vunpack.c.l.b16 %v866
    %v931 = vunpack.c.l.b16 %v867
    %v932 = vunpack.c.l.b16 %v868
    %v933 = vpack.c.b16 %v902, %v901
    %v934 = vpack.c.b16 %v904, %v903
    %v935 = vpack.c.b16 %v906, %v905
    %v936 = vpack.c.b16 %v908, %v907
    %v937 = vpack.c.b16 %v910, %v909
    %v938 = vpack.c.b16 %v912, %v911
    %v939 = vpack.c.b16 %v914, %v913
    %v940 = vpack.c.b16 %v916, %v915
    %v941 = vpack.c.b16 %v918, %v917
    %v942 = vpack.c.b16 %v920, %v919
    %v943 = vpack.c.b16 %v922, %v921
    %v944 = vpack.c.b16 %v924, %v923
    %v945 = vpack.c.b16 %v926, %v925
    %v946 = vpack.c.b16 %v928, %v927
    %v947 = vpack.c.b16 %v930, %v929
    %v948 = vpack.c.b16 %v932, %v931
    %965 = vmatpush.bf16.msra.mxu0 %v940
    %966 = vmatpush.bf16.msra.mxu0 %v939
    %967 = vmatpush.bf16.msra.mxu0 %v938
    %968 = vmatpush.bf16.msra.mxu0 %v937
    %969 = vmatpush.bf16.msra.mxu0 %v936
    %970 = vmatpush.bf16.msra.mxu0 %v935
    %971 = vmatpush.bf16.msra.mxu0 %v934
    %972 = vmatpush.bf16.msra.mxu0 %v933
    %973 = vmatmul.bf16.gmra.mxu0 %v835
    %v974 = vpop.f32.mrf.mxu0
    %v975 = vadd.f32 0.0, %v974
    %v976 = vpop.f32.mrf.mxu0
    %977 = vdwg.mxu0
    %978 = vmatpush.bf16.msra.mxu0 %v948
    %979 = vmatpush.bf16.msra.mxu0 %v947
    %980 = vmatpush.bf16.msra.mxu0 %v946
    %981 = vmatpush.bf16.msra.mxu0 %v945
    %982 = vmatpush.bf16.msra.mxu0 %v944
    %983 = vmatpush.bf16.msra.mxu0 %v943
    %984 = vmatpush.bf16.msra.mxu0 %v942
    %985 = vmatpush.bf16.msra.mxu0 %v941
    %986 = vmatmul.bf16.gmra.mxu0 %v836
    %v987 = vpop.f32.mrf.mxu0
    %v988 = vadd.f32 %v975, %v987
    %v989 = vpop.f32.mrf.mxu0
    %990 = vdwg.mxu0
    %v991 = vld [vmem:[%s8] sm:$0x1]
    %v993 = vperm.slane %v991, 0
    %v995 = vmul.f32 %v988, %v993
    %v996 = vld [vmem:[%s9] sm:$0x1]
    %v998 = vperm.slane %v996, 0
    %v1000 = vadd.f32 %v995, %v998
    %vm1001 = vcmask 58368
    %1002 = vst.msk [vmem:[#allocation2] sm:$0x3] %vm1001, %v1000
    // Predicated region
    $region42: #{dgcnn_forward.19} parent=1 // pred_check
      _
    $region43: #{dgcnn_forward.19} parent=1 // pred_check_branch
      %1004 = sbr.rel (0) target = $region45
    $region44: #{dgcnn_forward.19} parent=1 // pred_region
      %1006 = vsyncadd [#allocation3], 0
      %s1008 = sshll.u32 [#allocation2], 4
      %s1009 = int_to_ptr.vmem [resolvable:$true] %s1008
      %s1010 = sshll.u32 %s10, 4
      %s1011 = int_to_ptr.hbm [resolvable:$true] %s1010
      %1013 = dma.vmem_to_hbm [thread:$0]  %s1009, 32, %s1011, [#allocation3]
    $region45: #{dgcnn_forward.19} parent=1 // pred_fallthru
      _
    // Predicated region
    $region46: #{dgcnn_forward.19} parent=1 // pred_check
      _
    $region47: #{dgcnn_forward.19} parent=1 // pred_check_branch
      %1015 = sbr.rel (0) target = $region49
    $region48: #{dgcnn_forward.19} parent=1 // pred_region
      %1017 = dma.done [#allocation3], 32
    $region49: #{dgcnn_forward.19} parent=1 // pred_fallthru
      _
    %1018 = vsyncpa [#allocation3], 1

</llo_original>
